<compile_context>
chip_gen: v7x
topology: tpu7x:2x2x1
jax: 0.10.0
libtpu: 0.0.40
codegen_flags: <defaults>
</compile_context>

<pallas_src>
import functools

import jax
import jax.numpy as jnp
from jax import lax
from jax.experimental import pallas as pl
from jax.experimental.pallas import tpu as pltpu


C1_IN = 256   # conv1 in channels
C1_OUT = 256  # conv1 out channels
C2_OUT = 128  # conv2 out channels
C3_OUT = 128  # conv3 out channels

GUARD = 16    # zero guard rows at top/bottom of the flattened layout


def _round_up(v, m):
    return (v + m - 1) // m * m


def _netd_forward1_kernel(x_ref, w1_ref, w2_ref, w3_ref, ml_ref, mr_ref,
                          out_ref, a2_ref, a3_ref, *, H, W, Wr):
    """One image per grid step.

    Flattened padded layout for x_ref / a2_ref / a3_ref (shape (R, C)):
      rows [0, GUARD)             : zero
      rows [GUARD, GUARD+Wr)      : zero (top padding image row)
      image row h                 : rows [GUARD+(h+1)*Wr, GUARD+(h+2)*Wr)
      bottom padding image row    : zero
      rows [R-GUARD, R)           : zero
    with R = (H+2)*Wr + 2*GUARD.  When Wr > W, columns [W, Wr) of every image
    row are zero ("junk columns").
    """
    HWr = H * Wr
    S = GUARD                  # within-slab row of the dx=0 tap for pixel (0,0)
    VS = GUARD + Wr            # flattened row of image pixel (0, 0)
    R = a2_ref.shape[0]
    SLAB = HWr + 24            # covers rows [S-1, S+HWr+1); 2*Wr + SLAB <= R

    # Hoisted boundary masks (built once on the host, loaded once per step).
    mask_l = ml_ref[...]       # (HWr, 1) f32: 1 where 1 <= col <= W-1
    mask_r = mr_ref[...]       # (HWr, 1) f32: 1 where      col <= W-2

    def conv3x3(src_ref, w_ref, cout):
        # One wide matmul per ky (RHS = 3 kx taps concatenated along Cout),
        # accumulated over ky in f32; dx output shifts applied once at the end.
        acc = None
        for ky in range(3):                      # dy = ky - 1
            slab = src_ref[pl.ds(ky * Wr, SLAB), :]
            p = jnp.dot(slab, w_ref[ky], preferred_element_type=jnp.float32)
            acc = p if acc is None else acc + p
        center = lax.slice(acc, (S, cout), (S + HWr, 2 * cout))              # dx =  0
        left = lax.slice(acc, (S - 1, 0), (S - 1 + HWr, cout))               # dx = -1
        right = lax.slice(acc, (S + 1, 2 * cout), (S + 1 + HWr, 3 * cout))   # dx = +1
        # Masks zero the row-wrap-around reads of the dx=+/-1 taps (and, when
        # Wr > W, everything landing in the junk columns).
        res = center + left * mask_l + right * mask_r
        return jnp.maximum(res, 0.0)             # ReLU

    # Zero only the padding rows of the activation scratch; the valid rows
    # [VS, VS+HWr) are fully rewritten below.  Done every grid step so the
    # kernel stays correct when the "parallel" axis is split across cores.
    pad_lo = VS
    pad_hi = R - VS - HWr
    a2_ref[pl.ds(0, pad_lo), :] = jnp.zeros((pad_lo, C1_OUT), a2_ref.dtype)
    a2_ref[pl.ds(VS + HWr, pad_hi), :] = jnp.zeros((pad_hi, C1_OUT), a2_ref.dtype)
    a3_ref[pl.ds(0, pad_lo), :] = jnp.zeros((pad_lo, C2_OUT), a3_ref.dtype)
    a3_ref[pl.ds(VS + HWr, pad_hi), :] = jnp.zeros((pad_hi, C2_OUT), a3_ref.dtype)

    # conv1: 256 -> 256, ReLU
    h1 = conv3x3(x_ref, w1_ref, C1_OUT)
    a2_ref[pl.ds(VS, HWr), :] = h1.astype(a2_ref.dtype)

    # conv2: 256 -> 128, ReLU
    h2 = conv3x3(a2_ref, w2_ref, C2_OUT)
    a3_ref[pl.ds(VS, HWr), :] = h2.astype(a3_ref.dtype)

    # conv3: 128 -> 128, ReLU
    h3 = conv3x3(a3_ref, w3_ref, C3_OUT)

    # Global average pool over the H*W valid pixels (padding rows are zero).
    out_ref[...] = jnp.sum(h3, axis=0, keepdims=True) * (1.0 / (H * W))


def netd_forward1(x_nchw, w1, w2, w3):
    """x_nchw: (N, 256, H, W); w1 (256,256,3,3), w2 (128,256,3,3),
    w3 (128,128,3,3) are PyTorch OIHW conv weights (bias-free).
    Returns the global-average-pooled feature map, shape (N, 128, 1, 1)."""
    n, c, hh, ww = x_nchw.shape
    assert c == C1_IN
    # Exact row width when W is already a multiple of 8 (saves ~Wr/W of the MXU
    # rows and buffer bytes); otherwise pad W+1 up so junk columns provide the
    # right-hand zero padding.
    wr = ww if ww % 8 == 0 else _round_up(ww + 1, 8)
    r = (hh + 2) * wr + 2 * GUARD
    hwr = hh * wr

    # ---- layout prep (fused XLA copies): NCHW -> padded flattened NHWC, bf16
    xb = jnp.transpose(x_nchw.astype(jnp.bfloat16), (0, 2, 3, 1))      # (N,H,W,C)
    xb = jnp.pad(xb, ((0, 0), (1, 1), (0, wr - ww), (0, 0)))           # (N,H+2,Wr,C)
    xb = xb.reshape(n, (hh + 2) * wr, c)
    xb = jnp.pad(xb, ((0, 0), (GUARD, GUARD), (0, 0)))                 # (N,R,C)

    def prep_w(w):
        cout, cin = w.shape[0], w.shape[1]
        # OIHW (Cout, Cin, ky, kx) -> (ky, Cin, kx*Cout + o): wide RHS per ky
        wt = jnp.transpose(w, (2, 1, 3, 0))            # (ky, Cin, kx, Cout)
        return wt.reshape(3, cin, 3 * cout).astype(jnp.bfloat16)

    w1m, w2m, w3m = prep_w(w1), prep_w(w2), prep_w(w3)

    # Hoisted boundary masks over the flattened-row column index.
    col = jnp.arange(hwr, dtype=jnp.int32) % wr
    mask_l = ((col >= 1) & (col <= ww - 1)).astype(jnp.float32).reshape(hwr, 1)
    mask_r = (col <= ww - 2).astype(jnp.float32).reshape(hwr, 1)

    kernel = functools.partial(_netd_forward1_kernel, H=hh, W=ww, Wr=wr)

    flops = 2 * 9 * n * hh * ww * (C1_IN * C1_OUT + C1_OUT * C2_OUT + C2_OUT * C3_OUT)
    bytes_accessed = (xb.size + w1m.size + w2m.size + w3m.size) * 2 + n * C3_OUT * 4

    # Scoped-VMEM budget sized from the actual buffers (double-buffered inputs,
    # bf16 activation scratch, the wide f32 accumulators/terms that get
    # materialized), clamped to stay inside v7x's 64 MiB physical VMEM.
    slab = hwr + 24
    vmem_est = (2 * r * C1_IN * 2                                   # x block (2 bufs)
                + 2 * (w1m.size + w2m.size + w3m.size) * 2          # weights (2 bufs)
                + 2 * 2 * hwr * 128 * 4                             # masks (lane-padded)
                + r * (C1_OUT + C2_OUT) * 2                         # a2 / a3 scratch
                + 2 * slab * 3 * C1_OUT * 4                         # wide f32 accumulators
                + 3 * hwr * C1_OUT * 4)                             # sliced f32 terms
    vmem_limit = int(max(32 * 2**20, min(60 * 2**20, 2 * vmem_est)))

    out = pl.pallas_call(
        kernel,
        out_shape=jax.ShapeDtypeStruct((n, 1, C3_OUT), jnp.float32),
        grid_spec=pltpu.PrefetchScalarGridSpec(
            num_scalar_prefetch=0,
            grid=(n,),
            in_specs=[
                pl.BlockSpec((None, r, C1_IN), lambda i: (i, 0, 0)),
                pl.BlockSpec((3, C1_IN, 3 * C1_OUT), lambda i: (0, 0, 0)),
                pl.BlockSpec((3, C1_OUT, 3 * C2_OUT), lambda i: (0, 0, 0)),
                pl.BlockSpec((3, C2_OUT, 3 * C3_OUT), lambda i: (0, 0, 0)),
                pl.BlockSpec((hwr, 1), lambda i: (0, 0)),
                pl.BlockSpec((hwr, 1), lambda i: (0, 0)),
            ],
            out_specs=pl.BlockSpec((None, 1, C3_OUT), lambda i: (i, 0, 0)),
            scratch_shapes=[
                pltpu.VMEM((r, C1_OUT), jnp.bfloat16),   # padded conv1 output
                pltpu.VMEM((r, C2_OUT), jnp.bfloat16),   # padded conv2 output
            ],
        ),
        compiler_params=pltpu.CompilerParams(
            dimension_semantics=("parallel",),
            vmem_limit_bytes=vmem_limit),
        cost_estimate=pl.CostEstimate(
            flops=flops, transcendentals=0, bytes_accessed=bytes_accessed),
    )(xb, w1m, w2m, w3m, mask_l, mask_r)

    return out.reshape(n, C3_OUT, 1, 1)


def _reference(x, w1, w2, w3):
    """Pure-JAX (f32) reference reproducing the PyTorch forward."""
    def conv(h, w):
        return lax.conv_general_dilated(
            h, w, window_strides=(1, 1), padding=((1, 1), (1, 1)),
            dimension_numbers=("NCHW", "OIHW", "NCHW"))
    h = jax.nn.relu(conv(x, w1))
    h = jax.nn.relu(conv(h, w2))
    h = jax.nn.relu(conv(h, w3))
    return jnp.mean(h, axis=(2, 3), keepdims=True)   # avg_pool2d over full H,W


if __name__ == "__main__":
    key = jax.random.PRNGKey(0)
    kx, k1, k2, k3 = jax.random.split(key, 4)

    N, H, W = 2, 16, 16
    x = jax.random.normal(kx, (N, C1_IN, H, W), dtype=jnp.float32)

    # normal_init(m, 0, 0.01)
    w1 = 0.01 * jax.random.normal(k1, (C1_OUT, C1_IN, 3, 3), dtype=jnp.float32)
    w2 = 0.01 * jax.random.normal(k2, (C2_OUT, C1_OUT, 3, 3), dtype=jnp.float32)
    w3 = 0.01 * jax.random.normal(k3, (C3_OUT, C2_OUT, 3, 3), dtype=jnp.float32)

    out = jax.block_until_ready(jax.jit(netd_forward1)(x, w1, w2, w3))
    ref = _reference(x, w1, w2, w3)

    assert out.shape == (N, C3_OUT, 1, 1), out.shape
    max_err = float(jnp.max(jnp.abs(out - ref)))
    assert jnp.allclose(out, ref, atol=3e-3, rtol=5e-2), f"max |err| = {max_err}"

    print("KERNEL_OK")
</pallas_src>

<mosaic_0001>
module attributes {stable_mosaic.version = 11 : i64} {
  func.func @_netd_forward1_kernel(%arg0: i32, %arg1: memref<1x320x256xbf16, #tpu.memory_space<vmem>>, %arg2: memref<3x256x768xbf16, #tpu.memory_space<vmem>>, %arg3: memref<3x256x384xbf16, #tpu.memory_space<vmem>>, %arg4: memref<3x128x384xbf16, #tpu.memory_space<vmem>>, %arg5: memref<256x1xf32, #tpu.memory_space<vmem>>, %arg6: memref<256x1xf32, #tpu.memory_space<vmem>>, %arg7: memref<1x1x128xf32, #tpu.memory_space<vmem>>, %arg8: memref<320x256xbf16, #tpu.memory_space<vmem>>, %arg9: memref<320x128xbf16, #tpu.memory_space<vmem>>) attributes {dimension_semantics = [#tpu.dimension_semantics<parallel>], iteration_bounds = array<i64: 2>, scalar_prefetch = 0 : i64, scratch_operands = 2 : i64, tpu.core_type = #tpu.core_type<tc>, window_params = [{transform_indices = @transform_0, window_bounds = array<i64: 1, 320, 256>}, {pipeline_mode = #tpu.pipeline_mode<synchronous>, transform_indices = @transform_1, window_bounds = array<i64: 3, 256, 768>}, {pipeline_mode = #tpu.pipeline_mode<synchronous>, transform_indices = @transform_2, window_bounds = array<i64: 3, 256, 384>}, {pipeline_mode = #tpu.pipeline_mode<synchronous>, transform_indices = @transform_3, window_bounds = array<i64: 3, 128, 384>}, {pipeline_mode = #tpu.pipeline_mode<synchronous>, transform_indices = @transform_4, window_bounds = array<i64: 256, 1>}, {pipeline_mode = #tpu.pipeline_mode<synchronous>, transform_indices = @transform_5, window_bounds = array<i64: 256, 1>}, {transform_indices = @transform_6, window_bounds = array<i64: 1, 1, 128>}]} {
    %c0 = arith.constant 0 : index
    %c0_0 = arith.constant 0 : index
    %0 = vector.load %arg5[%c0, %c0_0] : memref<256x1xf32, #tpu.memory_space<vmem>>, vector<256x1xf32>
    %c0_1 = arith.constant 0 : index
    %c0_2 = arith.constant 0 : index
    %1 = vector.load %arg6[%c0_1, %c0_2] : memref<256x1xf32, #tpu.memory_space<vmem>>, vector<256x1xf32>
    %cst = arith.constant 0.000000e+00 : bf16
    %2 = vector.broadcast %cst : bf16 to vector<32x256xbf16>
    %c0_3 = arith.constant 0 : index
    %c0_4 = arith.constant 0 : index
    %3 = vector.load %arg8[%c0_3, %c0_4] : memref<320x256xbf16, #tpu.memory_space<vmem>>, vector<32x256xbf16>
    tpu.vector_store %arg8[%c0_3, %c0_4], %2 {strides = array<i32>} : memref<320x256xbf16, #tpu.memory_space<vmem>>, vector<32x256xbf16>,
    %cst_5 = arith.constant 0.000000e+00 : bf16
    %4 = vector.broadcast %cst_5 : bf16 to vector<32x256xbf16>
    %c288 = arith.constant 288 : index
    %c0_6 = arith.constant 0 : index
    %5 = vector.load %arg8[%c288, %c0_6] : memref<320x256xbf16, #tpu.memory_space<vmem>>, vector<32x256xbf16>
    tpu.vector_store %arg8[%c288, %c0_6], %4 {strides = array<i32>} : memref<320x256xbf16, #tpu.memory_space<vmem>>, vector<32x256xbf16>,
    %cst_7 = arith.constant 0.000000e+00 : bf16
    %6 = vector.broadcast %cst_7 : bf16 to vector<32x128xbf16>
    %c0_8 = arith.constant 0 : index
    %c0_9 = arith.constant 0 : index
    %7 = vector.load %arg9[%c0_8, %c0_9] : memref<320x128xbf16, #tpu.memory_space<vmem>>, vector<32x128xbf16>
    tpu.vector_store %arg9[%c0_8, %c0_9], %6 {strides = array<i32>} : memref<320x128xbf16, #tpu.memory_space<vmem>>, vector<32x128xbf16>,
    %cst_10 = arith.constant 0.000000e+00 : bf16
    %8 = vector.broadcast %cst_10 : bf16 to vector<32x128xbf16>
    %c288_11 = arith.constant 288 : index
    %c0_12 = arith.constant 0 : index
    %9 = vector.load %arg9[%c288_11, %c0_12] : memref<320x128xbf16, #tpu.memory_space<vmem>>, vector<32x128xbf16>
    tpu.vector_store %arg9[%c288_11, %c0_12], %8 {strides = array<i32>} : memref<320x128xbf16, #tpu.memory_space<vmem>>, vector<32x128xbf16>,
    %c0_13 = arith.constant 0 : index
    %c0_14 = arith.constant 0 : index
    %c0_15 = arith.constant 0 : index
    %10 = vector.load %arg1[%c0_13, %c0_14, %c0_15] : memref<1x320x256xbf16, #tpu.memory_space<vmem>>, vector<1x280x256xbf16>
    %11 = vector.shape_cast %10 : vector<1x280x256xbf16> to vector<280x256xbf16>
    %c0_16 = arith.constant 0 : index
    %c0_17 = arith.constant 0 : index
    %c0_18 = arith.constant 0 : index
    %12 = vector.load %arg2[%c0_16, %c0_17, %c0_18] : memref<3x256x768xbf16, #tpu.memory_space<vmem>>, vector<1x256x768xbf16>
    %13 = vector.shape_cast %12 : vector<1x256x768xbf16> to vector<256x768xbf16>
    %cst_19 = arith.constant dense<0.000000e+00> : vector<280x768xf32>
    %14 = tpu.matmul %11, %13, %cst_19 {dimension_numbers = #tpu.dot_dimension_numbers<[1], [0], [0], [1], [0, 0, 1, 1], [], []>} : vector<280x256xbf16>, vector<256x768xbf16>, vector<280x768xf32> -> vector<280x768xf32>
    %c0_20 = arith.constant 0 : index
    %c16 = arith.constant 16 : index
    %c0_21 = arith.constant 0 : index
    %15 = vector.load %arg1[%c0_20, %c16, %c0_21] : memref<1x320x256xbf16, #tpu.memory_space<vmem>>, vector<1x280x256xbf16>
    %16 = vector.shape_cast %15 : vector<1x280x256xbf16> to vector<280x256xbf16>
    %c1 = arith.constant 1 : index
    %c0_22 = arith.constant 0 : index
    %c0_23 = arith.constant 0 : index
    %17 = vector.load %arg2[%c1, %c0_22, %c0_23] : memref<3x256x768xbf16, #tpu.memory_space<vmem>>, vector<1x256x768xbf16>
    %18 = vector.shape_cast %17 : vector<1x256x768xbf16> to vector<256x768xbf16>
    %cst_24 = arith.constant dense<0.000000e+00> : vector<280x768xf32>
    %19 = tpu.matmul %16, %18, %cst_24 {dimension_numbers = #tpu.dot_dimension_numbers<[1], [0], [0], [1], [0, 0, 1, 1], [], []>} : vector<280x256xbf16>, vector<256x768xbf16>, vector<280x768xf32> -> vector<280x768xf32>
    %20 = arith.addf %14, %19 : vector<280x768xf32>
    %c0_25 = arith.constant 0 : index
    %c32 = arith.constant 32 : index
    %c0_26 = arith.constant 0 : index
    %21 = vector.load %arg1[%c0_25, %c32, %c0_26] : memref<1x320x256xbf16, #tpu.memory_space<vmem>>, vector<1x280x256xbf16>
    %22 = vector.shape_cast %21 : vector<1x280x256xbf16> to vector<280x256xbf16>
    %c2 = arith.constant 2 : index
    %c0_27 = arith.constant 0 : index
    %c0_28 = arith.constant 0 : index
    %23 = vector.load %arg2[%c2, %c0_27, %c0_28] : memref<3x256x768xbf16, #tpu.memory_space<vmem>>, vector<1x256x768xbf16>
    %24 = vector.shape_cast %23 : vector<1x256x768xbf16> to vector<256x768xbf16>
    %cst_29 = arith.constant dense<0.000000e+00> : vector<280x768xf32>
    %25 = tpu.matmul %22, %24, %cst_29 {dimension_numbers = #tpu.dot_dimension_numbers<[1], [0], [0], [1], [0, 0, 1, 1], [], []>} : vector<280x256xbf16>, vector<256x768xbf16>, vector<280x768xf32> -> vector<280x768xf32>
    %26 = arith.addf %20, %25 : vector<280x768xf32>
    %27 = vector.extract_strided_slice %26 {offsets = [16, 256], sizes = [256, 256], strides = [1, 1]} : vector<280x768xf32> to vector<256x256xf32>
    %28 = vector.extract_strided_slice %26 {offsets = [15, 0], sizes = [256, 256], strides = [1, 1]} : vector<280x768xf32> to vector<256x256xf32>
    %29 = vector.extract_strided_slice %26 {offsets = [17, 512], sizes = [256, 256], strides = [1, 1]} : vector<280x768xf32> to vector<256x256xf32>
    %30 = vector.broadcast %0 : vector<256x1xf32> to vector<256x256xf32>
    %31 = arith.mulf %28, %30 : vector<256x256xf32>
    %32 = arith.addf %27, %31 : vector<256x256xf32>
    %33 = vector.broadcast %1 : vector<256x1xf32> to vector<256x256xf32>
    %34 = arith.mulf %29, %33 : vector<256x256xf32>
    %35 = arith.addf %32, %34 : vector<256x256xf32>
    %cst_30 = arith.constant 0.000000e+00 : f32
    %36 = vector.broadcast %cst_30 : f32 to vector<256x256xf32>
    %37 = arith.maximumf %35, %36 : vector<256x256xf32>
    %38 = arith.truncf %37 : vector<256x256xf32> to vector<256x256xbf16>
    %c32_31 = arith.constant 32 : index
    %c0_32 = arith.constant 0 : index
    %39 = vector.load %arg8[%c32_31, %c0_32] : memref<320x256xbf16, #tpu.memory_space<vmem>>, vector<256x256xbf16>
    tpu.vector_store %arg8[%c32_31, %c0_32], %38 {strides = array<i32>} : memref<320x256xbf16, #tpu.memory_space<vmem>>, vector<256x256xbf16>,
    %c0_33 = arith.constant 0 : index
    %c0_34 = arith.constant 0 : index
    %40 = vector.load %arg8[%c0_33, %c0_34] : memref<320x256xbf16, #tpu.memory_space<vmem>>, vector<280x256xbf16>
    %c0_35 = arith.constant 0 : index
    %c0_36 = arith.constant 0 : index
    %c0_37 = arith.constant 0 : index
    %41 = vector.load %arg3[%c0_35, %c0_36, %c0_37] : memref<3x256x384xbf16, #tpu.memory_space<vmem>>, vector<1x256x384xbf16>
    %42 = vector.shape_cast %41 : vector<1x256x384xbf16> to vector<256x384xbf16>
    %cst_38 = arith.constant dense<0.000000e+00> : vector<280x384xf32>
    %43 = tpu.matmul %40, %42, %cst_38 {dimension_numbers = #tpu.dot_dimension_numbers<[1], [0], [0], [1], [0, 0, 1, 1], [], []>} : vector<280x256xbf16>, vector<256x384xbf16>, vector<280x384xf32> -> vector<280x384xf32>
    %c16_39 = arith.constant 16 : index
    %c0_40 = arith.constant 0 : index
    %44 = vector.load %arg8[%c16_39, %c0_40] : memref<320x256xbf16, #tpu.memory_space<vmem>>, vector<280x256xbf16>
    %c1_41 = arith.constant 1 : index
    %c0_42 = arith.constant 0 : index
    %c0_43 = arith.constant 0 : index
    %45 = vector.load %arg3[%c1_41, %c0_42, %c0_43] : memref<3x256x384xbf16, #tpu.memory_space<vmem>>, vector<1x256x384xbf16>
    %46 = vector.shape_cast %45 : vector<1x256x384xbf16> to vector<256x384xbf16>
    %cst_44 = arith.constant dense<0.000000e+00> : vector<280x384xf32>
    %47 = tpu.matmul %44, %46, %cst_44 {dimension_numbers = #tpu.dot_dimension_numbers<[1], [0], [0], [1], [0, 0, 1, 1], [], []>} : vector<280x256xbf16>, vector<256x384xbf16>, vector<280x384xf32> -> vector<280x384xf32>
    %48 = arith.addf %43, %47 : vector<280x384xf32>
    %c32_45 = arith.constant 32 : index
    %c0_46 = arith.constant 0 : index
    %49 = vector.load %arg8[%c32_45, %c0_46] : memref<320x256xbf16, #tpu.memory_space<vmem>>, vector<280x256xbf16>
    %c2_47 = arith.constant 2 : index
    %c0_48 = arith.constant 0 : index
    %c0_49 = arith.constant 0 : index
    %50 = vector.load %arg3[%c2_47, %c0_48, %c0_49] : memref<3x256x384xbf16, #tpu.memory_space<vmem>>, vector<1x256x384xbf16>
    %51 = vector.shape_cast %50 : vector<1x256x384xbf16> to vector<256x384xbf16>
    %cst_50 = arith.constant dense<0.000000e+00> : vector<280x384xf32>
    %52 = tpu.matmul %49, %51, %cst_50 {dimension_numbers = #tpu.dot_dimension_numbers<[1], [0], [0], [1], [0, 0, 1, 1], [], []>} : vector<280x256xbf16>, vector<256x384xbf16>, vector<280x384xf32> -> vector<280x384xf32>
    %53 = arith.addf %48, %52 : vector<280x384xf32>
    %54 = vector.extract_strided_slice %53 {offsets = [16, 128], sizes = [256, 128], strides = [1, 1]} : vector<280x384xf32> to vector<256x128xf32>
    %55 = vector.extract_strided_slice %53 {offsets = [15, 0], sizes = [256, 128], strides = [1, 1]} : vector<280x384xf32> to vector<256x128xf32>
    %56 = vector.extract_strided_slice %53 {offsets = [17, 256], sizes = [256, 128], strides = [1, 1]} : vector<280x384xf32> to vector<256x128xf32>
    %57 = vector.broadcast %0 : vector<256x1xf32> to vector<256x128xf32>
    %58 = arith.mulf %55, %57 : vector<256x128xf32>
    %59 = arith.addf %54, %58 : vector<256x128xf32>
    %60 = vector.broadcast %1 : vector<256x1xf32> to vector<256x128xf32>
    %61 = arith.mulf %56, %60 : vector<256x128xf32>
    %62 = arith.addf %59, %61 : vector<256x128xf32>
    %cst_51 = arith.constant 0.000000e+00 : f32
    %63 = vector.broadcast %cst_51 : f32 to vector<256x128xf32>
    %64 = arith.maximumf %62, %63 : vector<256x128xf32>
    %65 = arith.truncf %64 : vector<256x128xf32> to vector<256x128xbf16>
    %c32_52 = arith.constant 32 : index
    %c0_53 = arith.constant 0 : index
    %66 = vector.load %arg9[%c32_52, %c0_53] : memref<320x128xbf16, #tpu.memory_space<vmem>>, vector<256x128xbf16>
    tpu.vector_store %arg9[%c32_52, %c0_53], %65 {strides = array<i32>} : memref<320x128xbf16, #tpu.memory_space<vmem>>, vector<256x128xbf16>,
    %c0_54 = arith.constant 0 : index
    %c0_55 = arith.constant 0 : index
    %67 = vector.load %arg9[%c0_54, %c0_55] : memref<320x128xbf16, #tpu.memory_space<vmem>>, vector<280x128xbf16>
    %c0_56 = arith.constant 0 : index
    %c0_57 = arith.constant 0 : index
    %c0_58 = arith.constant 0 : index
    %68 = vector.load %arg4[%c0_56, %c0_57, %c0_58] : memref<3x128x384xbf16, #tpu.memory_space<vmem>>, vector<1x128x384xbf16>
    %69 = vector.shape_cast %68 : vector<1x128x384xbf16> to vector<128x384xbf16>
    %cst_59 = arith.constant dense<0.000000e+00> : vector<280x384xf32>
    %70 = tpu.matmul %67, %69, %cst_59 {dimension_numbers = #tpu.dot_dimension_numbers<[1], [0], [0], [1], [0, 0, 1, 1], [], []>} : vector<280x128xbf16>, vector<128x384xbf16>, vector<280x384xf32> -> vector<280x384xf32>
    %c16_60 = arith.constant 16 : index
    %c0_61 = arith.constant 0 : index
    %71 = vector.load %arg9[%c16_60, %c0_61] : memref<320x128xbf16, #tpu.memory_space<vmem>>, vector<280x128xbf16>
    %c1_62 = arith.constant 1 : index
    %c0_63 = arith.constant 0 : index
    %c0_64 = arith.constant 0 : index
    %72 = vector.load %arg4[%c1_62, %c0_63, %c0_64] : memref<3x128x384xbf16, #tpu.memory_space<vmem>>, vector<1x128x384xbf16>
    %73 = vector.shape_cast %72 : vector<1x128x384xbf16> to vector<128x384xbf16>
    %cst_65 = arith.constant dense<0.000000e+00> : vector<280x384xf32>
    %74 = tpu.matmul %71, %73, %cst_65 {dimension_numbers = #tpu.dot_dimension_numbers<[1], [0], [0], [1], [0, 0, 1, 1], [], []>} : vector<280x128xbf16>, vector<128x384xbf16>, vector<280x384xf32> -> vector<280x384xf32>
    %75 = arith.addf %70, %74 : vector<280x384xf32>
    %c32_66 = arith.constant 32 : index
    %c0_67 = arith.constant 0 : index
    %76 = vector.load %arg9[%c32_66, %c0_67] : memref<320x128xbf16, #tpu.memory_space<vmem>>, vector<280x128xbf16>
    %c2_68 = arith.constant 2 : index
    %c0_69 = arith.constant 0 : index
    %c0_70 = arith.constant 0 : index
    %77 = vector.load %arg4[%c2_68, %c0_69, %c0_70] : memref<3x128x384xbf16, #tpu.memory_space<vmem>>, vector<1x128x384xbf16>
    %78 = vector.shape_cast %77 : vector<1x128x384xbf16> to vector<128x384xbf16>
    %cst_71 = arith.constant dense<0.000000e+00> : vector<280x384xf32>
    %79 = tpu.matmul %76, %78, %cst_71 {dimension_numbers = #tpu.dot_dimension_numbers<[1], [0], [0], [1], [0, 0, 1, 1], [], []>} : vector<280x128xbf16>, vector<128x384xbf16>, vector<280x384xf32> -> vector<280x384xf32>
    %80 = arith.addf %75, %79 : vector<280x384xf32>
    %81 = vector.extract_strided_slice %80 {offsets = [16, 128], sizes = [256, 128], strides = [1, 1]} : vector<280x384xf32> to vector<256x128xf32>
    %82 = vector.extract_strided_slice %80 {offsets = [15, 0], sizes = [256, 128], strides = [1, 1]} : vector<280x384xf32> to vector<256x128xf32>
    %83 = vector.extract_strided_slice %80 {offsets = [17, 256], sizes = [256, 128], strides = [1, 1]} : vector<280x384xf32> to vector<256x128xf32>
    %84 = vector.broadcast %0 : vector<256x1xf32> to vector<256x128xf32>
    %85 = arith.mulf %82, %84 : vector<256x128xf32>
    %86 = arith.addf %81, %85 : vector<256x128xf32>
    %87 = vector.broadcast %1 : vector<256x1xf32> to vector<256x128xf32>
    %88 = arith.mulf %83, %87 : vector<256x128xf32>
    %89 = arith.addf %86, %88 : vector<256x128xf32>
    %cst_72 = arith.constant 0.000000e+00 : f32
    %90 = vector.broadcast %cst_72 : f32 to vector<256x128xf32>
    %91 = arith.maximumf %89, %90 : vector<256x128xf32>
    %cst_73 = arith.constant dense<0.000000e+00> : vector<128xf32>
    %92 = vector.multi_reduction <add>, %91, %cst_73 [0] : vector<256x128xf32> to vector<128xf32>
    %93 = vector.shape_cast %92 : vector<128xf32> to vector<1x128xf32>
    %cst_74 = arith.constant 3.906250e-03 : f32
    %94 = vector.broadcast %cst_74 : f32 to vector<1x128xf32>
    %95 = arith.mulf %93, %94 : vector<1x128xf32>
    %c0_75 = arith.constant 0 : index
    %c0_76 = arith.constant 0 : index
    %c0_77 = arith.constant 0 : index
    %96 = vector.load %arg7[%c0_75, %c0_76, %c0_77] : memref<1x1x128xf32, #tpu.memory_space<vmem>>, vector<1x1x128xf32>
    %97 = vector.shape_cast %96 : vector<1x1x128xf32> to vector<1x128xf32>
    %98 = vector.shape_cast %95 : vector<1x128xf32> to vector<1x1x128xf32>
    tpu.vector_store %arg7[%c0_75, %c0_76, %c0_77], %98 {strides = array<i32>} : memref<1x1x128xf32, #tpu.memory_space<vmem>>, vector<1x1x128xf32>,
    return
  }
  func.func @transform_0(%arg0: i32) -> (i32, i32, i32) {
    %c0_i32 = arith.constant 0 : i32
    %c0_i32_0 = arith.constant 0 : i32
    %c0_i32_1 = arith.constant 0 : i32
    return %arg0, %c0_i32, %c0_i32_0 : i32, i32, i32
  }
  func.func @transform_1(%arg0: i32) -> (i32, i32, i32) {
    %c0_i32 = arith.constant 0 : i32
    %c0_i32_0 = arith.constant 0 : i32
    %c0_i32_1 = arith.constant 0 : i32
    %c0_i32_2 = arith.constant 0 : i32
    return %c0_i32, %c0_i32_0, %c0_i32_1 : i32, i32, i32
  }
  func.func @transform_2(%arg0: i32) -> (i32, i32, i32) {
    %c0_i32 = arith.constant 0 : i32
    %c0_i32_0 = arith.constant 0 : i32
    %c0_i32_1 = arith.constant 0 : i32
    %c0_i32_2 = arith.constant 0 : i32
    return %c0_i32, %c0_i32_0, %c0_i32_1 : i32, i32, i32
  }
  func.func @transform_3(%arg0: i32) -> (i32, i32, i32) {
    %c0_i32 = arith.constant 0 : i32
    %c0_i32_0 = arith.constant 0 : i32
    %c0_i32_1 = arith.constant 0 : i32
    %c0_i32_2 = arith.constant 0 : i32
    return %c0_i32, %c0_i32_0, %c0_i32_1 : i32, i32, i32
  }
  func.func @transform_4(%arg0: i32) -> (i32, i32) {
    %c0_i32 = arith.constant 0 : i32
    %c0_i32_0 = arith.constant 0 : i32
    %c0_i32_1 = arith.constant 0 : i32
    return %c0_i32, %c0_i32_0 : i32, i32
  }
  func.func @transform_5(%arg0: i32) -> (i32, i32) {
    %c0_i32 = arith.constant 0 : i32
    %c0_i32_0 = arith.constant 0 : i32
    %c0_i32_1 = arith.constant 0 : i32
    return %c0_i32, %c0_i32_0 : i32, i32
  }
  func.func @transform_6(%arg0: i32) -> (i32, i32, i32) {
    %c0_i32 = arith.constant 0 : i32
    %c0_i32_0 = arith.constant 0 : i32
    %c0_i32_1 = arith.constant 0 : i32
    return %arg0, %c0_i32, %c0_i32_0 : i32, i32, i32
  }
}

</mosaic_0001>

<llo_original>
// kernel: netd_forward1.1
$region0: #{netd_forward1.1}
  #allocation0 [shape = 'u32[]', space=smem, size = 0x4, offset = 0x4, fixed_abs, tag = 'smem constant byte address 0x4 - core index']
  #allocation1 [shape = 'u32[144,128]{1,0:T(1,128)}', space=vmem, size = 0x12000, scoped, tag = 'internal scratch']
  #allocation2 [shape = 'bf16[320,256]{1,0:T(16,128)(2,1)}', space=vmem, size = 0x28000, scoped, tag = 'scratch operand']
  #allocation3 [shape = 'bf16[320,128]{1,0:T(16,128)(2,1)}', space=vmem, size = 0x14000, scoped, tag = 'scratch operand']
  %s0 = inlined_call_operand.vmem [shape: bf16[2,320,256], index: 0, kind: input, shape index: {}]
  %s1 = inlined_call_operand.vmem [shape: bf16[3,256,768], index: 1, kind: input, shape index: {}]
  %s2 = inlined_call_operand.vmem [shape: bf16[3,256,384], index: 2, kind: input, shape index: {}]
  %s3 = inlined_call_operand.vmem [shape: bf16[3,128,384], index: 3, kind: input, shape index: {}]
  %s4 = inlined_call_operand.vmem [shape: f32[256,1], index: 4, kind: input, shape index: {}]
  %s5 = inlined_call_operand.vmem [shape: f32[256,1], index: 5, kind: input, shape index: {}]
  %s6 = inlined_call_operand.hbm [shape: f32[2,1,128], index: 6, kind: output, shape index: {}]
  %s7 = sld [smem:[#allocation0]]
  $region57: #{netd_forward1.1} parent=0
    _
  %s9 = ssub.s32 1, %s7
  %s10 = scalar_select 0, %s9, %s7
  $region1: #{netd_forward1.1} parent=0
    #allocation4 [shape = 'u8[1024]{0}', space=vmem, size = 0x400, scoped, tag = 'output window, operand 0']
    #allocation5 [shape = 's32[2]{0}', space=sflag, size = 0x8, scoped, tag = 'scoped memory for netd_forward1.1']
    %11 = vsyncpa [#allocation5], 0
    %s12 = scalar_lea.sflag [#allocation5], 1
    %13 = vsyncpa %s12, 0
    loop: start=0, step=1, limit=4
    $region2: #{netd_forward1.1} parent=1 // loop_pre_header
      _
    $region3: #{netd_forward1.1} parent=1 // loop_header
      %s15 = sphi 0, %s19
      %p16 = scmp.ge.s32.totalorder %s15, 4
      %s25 = sphi 0, %s27
      %s28 = sphi 0, %s25
      %s29 = sphi 0, %s28
      %s45 = sphi 0, %s29
      %s49 = sphi 0, %s49
      %s51 = sphi 0, %s49
      %s52 = sphi 0, %s51
      %s66 = sphi 0, %s52
      %s70 = sphi 0, %s70
      %s72 = sphi 0, %s70
      %s73 = sphi 0, %s72
      %s87 = sphi 0, %s73
      %s91 = sphi 0, %s91
      %s93 = sphi 0, %s91
      %s94 = sphi 0, %s93
      %s108 = sphi 0, %s94
      %s112 = sphi 0, %s112
      %s114 = sphi 0, %s112
      %s115 = sphi 0, %s114
      %s129 = sphi 0, %s115
      %s133 = sphi 0, %s133
      %s135 = sphi 0, %s133
      %s136 = sphi 0, %s135
      %s150 = sphi 0, %s136
      %s156 = sphi 0, %s158
      %s159 = sphi 0, %s156
      %s160 = sphi 0, %s159
      %s176 = sphi 0, %s160
    $region4: #{netd_forward1.1} parent=1 // loop_header_branch
      %18 = sbr.rel (%p16) target = $region8
    $region5: #{netd_forward1.1} parent=1 // loop_body
      %s20 = ssub.s32 %s15, 1
      %s21 = ssub.s32 %s15, 2
      %s22 = sadd.s32 %s15, 1
      %s23 = ssub.s32 %s15, %s22
      %p24 = scmp.eq.s32.totalorder %s23, 0
      %s26 = sadd.s32 %s25, 1
      %s27 = scalar_select %p24, %s25, %s26
      %p30 = pneg %p24
      %p31 = scmp.eq.s32.totalorder %s15, 1
      %p32 = por %p30, %p31
      %p33 = scmp.ne.s32.totalorder %s25, %s28
      %p34 = scmp.eq.s32.totalorder %s15, 0
      %p35 = por %p33, %p34
      %p36 = scmp.ne.s32.totalorder %s25, %s28
      %p37 = scmp.eq.s32.totalorder %s20, 1
      %p38 = por %p36, %p37
      %p39 = scmp.ne.s32.totalorder %s28, %s29
      %p40 = scmp.eq.s32.totalorder %s20, 0
      %p41 = por %p39, %p40
      %p42 = scmp.ne.s32.totalorder %s28, %s29
      %p43 = scmp.eq.s32.totalorder %s21, 1
      %p44 = por %p42, %p43
      %p46 = scmp.ne.s32.totalorder %s29, %s45
      %p47 = scmp.eq.s32.totalorder %s21, 0
      %p48 = por %p46, %p47
      %s50 = sadd.s32 %s49, 1
      %p53 = scmp.eq.s32.totalorder %s15, 1
      %p54 = scmp.ne.s32.totalorder %s49, %s51
      %p55 = scmp.eq.s32.totalorder %s15, 0
      %p56 = por %p54, %p55
      %p57 = scmp.ne.s32.totalorder %s49, %s51
      %p58 = scmp.eq.s32.totalorder %s20, 1
      %p59 = por %p57, %p58
      %p60 = scmp.ne.s32.totalorder %s51, %s52
      %p61 = scmp.eq.s32.totalorder %s20, 0
      %p62 = por %p60, %p61
      %p63 = scmp.ne.s32.totalorder %s51, %s52
      %p64 = scmp.eq.s32.totalorder %s21, 1
      %p65 = por %p63, %p64
      %p67 = scmp.ne.s32.totalorder %s52, %s66
      %p68 = scmp.eq.s32.totalorder %s21, 0
      %p69 = por %p67, %p68
      %s71 = sadd.s32 %s70, 1
      %p74 = scmp.eq.s32.totalorder %s15, 1
      %p75 = scmp.ne.s32.totalorder %s70, %s72
      %p76 = scmp.eq.s32.totalorder %s15, 0
      %p77 = por %p75, %p76
      %p78 = scmp.ne.s32.totalorder %s70, %s72
      %p79 = scmp.eq.s32.totalorder %s20, 1
      %p80 = por %p78, %p79
      %p81 = scmp.ne.s32.totalorder %s72, %s73
      %p82 = scmp.eq.s32.totalorder %s20, 0
      %p83 = por %p81, %p82
      %p84 = scmp.ne.s32.totalorder %s72, %s73
      %p85 = scmp.eq.s32.totalorder %s21, 1
      %p86 = por %p84, %p85
      %p88 = scmp.ne.s32.totalorder %s73, %s87
      %p89 = scmp.eq.s32.totalorder %s21, 0
      %p90 = por %p88, %p89
      %s92 = sadd.s32 %s91, 1
      %p95 = scmp.eq.s32.totalorder %s15, 1
      %p96 = scmp.ne.s32.totalorder %s91, %s93
      %p97 = scmp.eq.s32.totalorder %s15, 0
      %p98 = por %p96, %p97
      %p99 = scmp.ne.s32.totalorder %s91, %s93
      %p100 = scmp.eq.s32.totalorder %s20, 1
      %p101 = por %p99, %p100
      %p102 = scmp.ne.s32.totalorder %s93, %s94
      %p103 = scmp.eq.s32.totalorder %s20, 0
      %p104 = por %p102, %p103
      %p105 = scmp.ne.s32.totalorder %s93, %s94
      %p106 = scmp.eq.s32.totalorder %s21, 1
      %p107 = por %p105, %p106
      %p109 = scmp.ne.s32.totalorder %s94, %s108
      %p110 = scmp.eq.s32.totalorder %s21, 0
      %p111 = por %p109, %p110
      %s113 = sadd.s32 %s112, 1
      %p116 = scmp.eq.s32.totalorder %s15, 1
      %p117 = scmp.ne.s32.totalorder %s112, %s114
      %p118 = scmp.eq.s32.totalorder %s15, 0
      %p119 = por %p117, %p118
      %p120 = scmp.ne.s32.totalorder %s112, %s114
      %p121 = scmp.eq.s32.totalorder %s20, 1
      %p122 = por %p120, %p121
      %p123 = scmp.ne.s32.totalorder %s114, %s115
      %p124 = scmp.eq.s32.totalorder %s20, 0
      %p125 = por %p123, %p124
      %p126 = scmp.ne.s32.totalorder %s114, %s115
      %p127 = scmp.eq.s32.totalorder %s21, 1
      %p128 = por %p126, %p127
      %p130 = scmp.ne.s32.totalorder %s115, %s129
      %p131 = scmp.eq.s32.totalorder %s21, 0
      %p132 = por %p130, %p131
      %s134 = sadd.s32 %s133, 1
      %p137 = scmp.eq.s32.totalorder %s15, 1
      %p138 = scmp.ne.s32.totalorder %s133, %s135
      %p139 = scmp.eq.s32.totalorder %s15, 0
      %p140 = por %p138, %p139
      %p141 = scmp.ne.s32.totalorder %s133, %s135
      %p142 = scmp.eq.s32.totalorder %s20, 1
      %p143 = por %p141, %p142
      %p144 = scmp.ne.s32.totalorder %s135, %s136
      %p145 = scmp.eq.s32.totalorder %s20, 0
      %p146 = por %p144, %p145
      %p147 = scmp.ne.s32.totalorder %s135, %s136
      %p148 = scmp.eq.s32.totalorder %s21, 1
      %p149 = por %p147, %p148
      %p151 = scmp.ne.s32.totalorder %s136, %s150
      %p152 = scmp.eq.s32.totalorder %s21, 0
      %p153 = por %p151, %p152
      %s154 = ssub.s32 %s15, %s22
      %p155 = scmp.eq.s32.totalorder %s154, 0
      %s157 = sadd.s32 %s156, 1
      %s158 = scalar_select %p155, %s156, %s157
      %p161 = pneg %p155
      %p162 = scmp.eq.s32.totalorder %s15, 1
      %p163 = por %p161, %p162
      %p164 = scmp.ne.s32.totalorder %s156, %s159
      %p165 = scmp.eq.s32.totalorder %s15, 0
      %p166 = por %p164, %p165
      %p167 = scmp.ne.s32.totalorder %s156, %s159
      %p168 = scmp.eq.s32.totalorder %s20, 1
      %p169 = por %p167, %p168
      %p170 = scmp.ne.s32.totalorder %s159, %s160
      %p171 = scmp.eq.s32.totalorder %s20, 0
      %p172 = por %p170, %p171
      %p173 = scmp.ne.s32.totalorder %s159, %s160
      %p174 = scmp.eq.s32.totalorder %s21, 1
      %p175 = por %p173, %p174
      %p177 = scmp.ne.s32.totalorder %s160, %s176
      %p178 = scmp.eq.s32.totalorder %s21, 0
      %p179 = por %p177, %p178
      %p180 = scmp.le.s32.totalorder 1, %s15
      %p181 = scmp.lt.s32.totalorder %s15, 3
      %p182 = pnand %p180, %p181
      %p183 = pneg %p182
      // Predicated region
      $region9: #{netd_forward1.1} parent=5 // pred_check
        _
      $region10: #{netd_forward1.1} parent=5 // pred_check_branch
        %185 = sbr.rel (%p182) target = $region12
      $region11: #{netd_forward1.1} parent=5 // pred_region
        %s186 = ssub.s32 %s15, 1
        // Predicated region
        $region13: #{netd_forward1.1} parent=11 // pred_check
          %p187 = pneg %p62
        $region14: #{netd_forward1.1} parent=11 // pred_check_branch
          %189 = sbr.rel (%p187) target = $region16
        $region15: #{netd_forward1.1} parent=11 // pred_region
          _
        $region16: #{netd_forward1.1} parent=11 // pred_fallthru
          _
        // Predicated region
        $region17: #{netd_forward1.1} parent=11 // pred_check
          %p190 = pneg %p83
        $region18: #{netd_forward1.1} parent=11 // pred_check_branch
          %192 = sbr.rel (%p190) target = $region20
        $region19: #{netd_forward1.1} parent=11 // pred_region
          _
        $region20: #{netd_forward1.1} parent=11 // pred_fallthru
          _
        // Predicated region
        $region21: #{netd_forward1.1} parent=11 // pred_check
          %p193 = pneg %p104
        $region22: #{netd_forward1.1} parent=11 // pred_check_branch
          %195 = sbr.rel (%p193) target = $region24
        $region23: #{netd_forward1.1} parent=11 // pred_region
          _
        $region24: #{netd_forward1.1} parent=11 // pred_fallthru
          _
        // Predicated region
        $region25: #{netd_forward1.1} parent=11 // pred_check
          %p196 = pneg %p125
        $region26: #{netd_forward1.1} parent=11 // pred_check_branch
          %198 = sbr.rel (%p196) target = $region28
        $region27: #{netd_forward1.1} parent=11 // pred_region
          _
        $region28: #{netd_forward1.1} parent=11 // pred_fallthru
          _
        // Predicated region
        $region29: #{netd_forward1.1} parent=11 // pred_check
          %p199 = pneg %p146
        $region30: #{netd_forward1.1} parent=11 // pred_check_branch
          %201 = sbr.rel (%p199) target = $region32
        $region31: #{netd_forward1.1} parent=11 // pred_region
          _
        $region32: #{netd_forward1.1} parent=11 // pred_fallthru
          _
      $region12: #{netd_forward1.1} parent=5 // pred_fallthru
        _
      %p202 = scmp.lt.s32.totalorder %s15, 2
      // Predicated region
      $region33: #{netd_forward1.1} parent=5 // pred_check
        %p203 = pneg %p202
      $region34: #{netd_forward1.1} parent=5 // pred_check_branch
        %205 = sbr.rel (%p203) target = $region36
      $region35: #{netd_forward1.1} parent=5 // pred_region
        // Predicated region
        $region37: #{netd_forward1.1} parent=35 // pred_check
          %p206 = pneg %p35
        $region38: #{netd_forward1.1} parent=35 // pred_check_branch
          %208 = sbr.rel (%p206) target = $region40
        $region39: #{netd_forward1.1} parent=35 // pred_region
          %p209 = scmp.lt.s32.totalorder %s15, 1
          %s210 = scalar_select %p209, %s15, 1
          %s211 = smul.addr %s210, 80
          %s212 = smul.addr %s211, 4
          %s213 = scalar_lea.vmem %s0, %s212
        $region40: #{netd_forward1.1} parent=35 // pred_fallthru
          _
      $region36: #{netd_forward1.1} parent=5 // pred_fallthru
        _
      %p214 = scmp.le.s32.totalorder 1, %s15
      %p215 = scmp.lt.s32.totalorder %s15, 3
      %p216 = pnand %p214, %p215
      %p217 = pneg %p216
      // Predicated region
      $region41: #{netd_forward1.1} parent=5 // pred_check
        _
      $region42: #{netd_forward1.1} parent=5 // pred_check_branch
        %219 = sbr.rel (%p216) target = $region44
      $region43: #{netd_forward1.1} parent=5 // pred_region
        %s220 = ssub.s32 %s15, 1
        %p221 = scmp.lt.s32.totalorder %s20, 1
        %s222 = scalar_select %p221, %s20, 1
        %s223 = smul.addr %s222, 80
        %s224 = smul.addr %s223, 4
        %s225 = scalar_lea.vmem %s0, %s224
        %p226 = pneg %p41
        %p227 = pneg %p38
        %p228 = pneg %p62
        %p229 = pneg %p59
        %p230 = pneg %p83
        %p231 = pneg %p80
        %p232 = pneg %p104
        %p233 = pneg %p101
        %p234 = pneg %p125
        %p235 = pneg %p122
        %p236 = pneg %p146
        %p237 = pneg %p143
        %p238 = pneg %p172
        %p239 = pneg %p169
        %s240 = sand.u32 %s159, 1
        %s241 = scalar_lea.sflag [#allocation5], %s240
        %s242 = sand.u32 %s159, 1
        %s243 = scalar_lea.vmem [#allocation4], %s242
        %p244 = scmp.lt.s32.totalorder %s20, 1
        %s245 = scalar_select %p244, %s20, 1
        %s246 = smul.addr %s245, 80
        %s247 = smul.addr %s246, 4
        %s248 = scalar_lea.vmem %s0, %s247
        %v250 = vld [vmem:[%s4] sm:$0xff]
        %v251 = vld [vmem:[%s4 + $0x8] sm:$0xff]
        %v252 = vld [vmem:[%s4 + $0x10] sm:$0xff]
        %v253 = vld [vmem:[%s4 + $0x18] sm:$0xff]
        %v254 = vld [vmem:[%s4 + $0x20] sm:$0xff]
        %v255 = vld [vmem:[%s4 + $0x28] sm:$0xff]
        %v256 = vld [vmem:[%s4 + $0x30] sm:$0xff]
        %v257 = vld [vmem:[%s4 + $0x38] sm:$0xff]
        %v258 = vld [vmem:[%s4 + $0x40] sm:$0xff]
        %v259 = vld [vmem:[%s4 + $0x48] sm:$0xff]
        %v260 = vld [vmem:[%s4 + $0x50] sm:$0xff]
        %v261 = vld [vmem:[%s4 + $0x58] sm:$0xff]
        %v262 = vld [vmem:[%s4 + $0x60] sm:$0xff]
        %v263 = vld [vmem:[%s4 + $0x68] sm:$0xff]
        %v264 = vld [vmem:[%s4 + $0x70] sm:$0xff]
        %v265 = vld [vmem:[%s4 + $0x78] sm:$0xff]
        %v266 = vld [vmem:[%s4 + $0x80] sm:$0xff]
        %v267 = vld [vmem:[%s4 + $0x88] sm:$0xff]
        %v268 = vld [vmem:[%s4 + $0x90] sm:$0xff]
        %v269 = vld [vmem:[%s4 + $0x98] sm:$0xff]
        %v270 = vld [vmem:[%s4 + $0xa0] sm:$0xff]
        %v271 = vld [vmem:[%s4 + $0xa8] sm:$0xff]
        %v272 = vld [vmem:[%s4 + $0xb0] sm:$0xff]
        %v273 = vld [vmem:[%s4 + $0xb8] sm:$0xff]
        %v274 = vld [vmem:[%s4 + $0xc0] sm:$0xff]
        %v275 = vld [vmem:[%s4 + $0xc8] sm:$0xff]
        %v276 = vld [vmem:[%s4 + $0xd0] sm:$0xff]
        %v277 = vld [vmem:[%s4 + $0xd8] sm:$0xff]
        %v278 = vld [vmem:[%s4 + $0xe0] sm:$0xff]
        %v279 = vld [vmem:[%s4 + $0xe8] sm:$0xff]
        %v280 = vld [vmem:[%s4 + $0xf0] sm:$0xff]
        %v281 = vld [vmem:[%s4 + $0xf8] sm:$0xff]
        %v282 = vld [vmem:[%s5] sm:$0xff]
        %v283 = vld [vmem:[%s5 + $0x8] sm:$0xff]
        %v284 = vld [vmem:[%s5 + $0x10] sm:$0xff]
        %v285 = vld [vmem:[%s5 + $0x18] sm:$0xff]
        %v286 = vld [vmem:[%s5 + $0x20] sm:$0xff]
        %v287 = vld [vmem:[%s5 + $0x28] sm:$0xff]
        %v288 = vld [vmem:[%s5 + $0x30] sm:$0xff]
        %v289 = vld [vmem:[%s5 + $0x38] sm:$0xff]
        %v290 = vld [vmem:[%s5 + $0x40] sm:$0xff]
        %v291 = vld [vmem:[%s5 + $0x48] sm:$0xff]
        %v292 = vld [vmem:[%s5 + $0x50] sm:$0xff]
        %v293 = vld [vmem:[%s5 + $0x58] sm:$0xff]
        %v294 = vld [vmem:[%s5 + $0x60] sm:$0xff]
        %v295 = vld [vmem:[%s5 + $0x68] sm:$0xff]
        %v296 = vld [vmem:[%s5 + $0x70] sm:$0xff]
        %v297 = vld [vmem:[%s5 + $0x78] sm:$0xff]
        %v298 = vld [vmem:[%s5 + $0x80] sm:$0xff]
        %v299 = vld [vmem:[%s5 + $0x88] sm:$0xff]
        %v300 = vld [vmem:[%s5 + $0x90] sm:$0xff]
        %v301 = vld [vmem:[%s5 + $0x98] sm:$0xff]
        %v302 = vld [vmem:[%s5 + $0xa0] sm:$0xff]
        %v303 = vld [vmem:[%s5 + $0xa8] sm:$0xff]
        %v304 = vld [vmem:[%s5 + $0xb0] sm:$0xff]
        %v305 = vld [vmem:[%s5 + $0xb8] sm:$0xff]
        %v306 = vld [vmem:[%s5 + $0xc0] sm:$0xff]
        %v307 = vld [vmem:[%s5 + $0xc8] sm:$0xff]
        %v308 = vld [vmem:[%s5 + $0xd0] sm:$0xff]
        %v309 = vld [vmem:[%s5 + $0xd8] sm:$0xff]
        %v310 = vld [vmem:[%s5 + $0xe0] sm:$0xff]
        %v311 = vld [vmem:[%s5 + $0xe8] sm:$0xff]
        %v312 = vld [vmem:[%s5 + $0xf0] sm:$0xff]
        %v313 = vld [vmem:[%s5 + $0xf8] sm:$0xff]
        %314 = vst [vmem:[#allocation2] sm:$0xff] 0
        %315 = vst [vmem:[#allocation2 + $0x8] sm:$0xff] 0
        %316 = vst [vmem:[#allocation2 + $0x10] sm:$0xff] 0
        %317 = vst [vmem:[#allocation2 + $0x18] sm:$0xff] 0
        %318 = vst [vmem:[#allocation2 + $0x120] sm:$0xff] 0
        %319 = vst [vmem:[#allocation2 + $0x128] sm:$0xff] 0
        %320 = vst [vmem:[#allocation2 + $0x130] sm:$0xff] 0
        %321 = vst [vmem:[#allocation2 + $0x138] sm:$0xff] 0
        %322 = vst [vmem:[#allocation3] sm:$0xff] 0
        %323 = vst [vmem:[#allocation3 + $0x8] sm:$0xff] 0
        %324 = vst [vmem:[#allocation3 + $0x90] sm:$0xff] 0
        %325 = vst [vmem:[#allocation3 + $0x98] sm:$0xff] 0
        %v326 = vld [vmem:[%s248] sm:$0xff]
        %v327 = vld [vmem:[%s248 + $0x8] sm:$0xff]
        %v328 = vld [vmem:[%s248 + $0x10] sm:$0xff]
        %v329 = vld [vmem:[%s248 + $0x18] sm:$0xff]
        %v330 = vld [vmem:[%s248 + $0x20] sm:$0xff]
        %v331 = vld [vmem:[%s248 + $0x28] sm:$0xff]
        %v332 = vld [vmem:[%s248 + $0x30] sm:$0xff]
        %v333 = vld [vmem:[%s248 + $0x38] sm:$0xff]
        %v334 = vld [vmem:[%s248 + $0x40] sm:$0xff]
        %v335 = vld [vmem:[%s248 + $0x48] sm:$0xff]
        %v336 = vld [vmem:[%s248 + $0x50] sm:$0xff]
        %v337 = vld [vmem:[%s248 + $0x58] sm:$0xff]
        %v338 = vld [vmem:[%s248 + $0x60] sm:$0xff]
        %v339 = vld [vmem:[%s248 + $0x68] sm:$0xff]
        %v340 = vld [vmem:[%s248 + $0x70] sm:$0xff]
        %v341 = vld [vmem:[%s248 + $0x78] sm:$0xff]
        %v342 = vld [vmem:[%s248 + $0x80] sm:$0xff]
        %v343 = vld [vmem:[%s248 + $0x88] sm:$0xff]
        %v344 = vld [vmem:[%s248 + $0x90] sm:$0xff]
        %v345 = vld [vmem:[%s248 + $0x98] sm:$0xff]
        %v346 = vld [vmem:[%s248 + $0xa0] sm:$0xff]
        %v347 = vld [vmem:[%s248 + $0xa8] sm:$0xff]
        %v348 = vld [vmem:[%s248 + $0xb0] sm:$0xff]
        %v349 = vld [vmem:[%s248 + $0xb8] sm:$0xff]
        %v350 = vld [vmem:[%s248 + $0xc0] sm:$0xff]
        %v351 = vld [vmem:[%s248 + $0xc8] sm:$0xff]
        %v352 = vld [vmem:[%s248 + $0xd0] sm:$0xff]
        %v353 = vld [vmem:[%s248 + $0xd8] sm:$0xff]
        %v354 = vld [vmem:[%s248 + $0xe0] sm:$0xff]
        %v355 = vld [vmem:[%s248 + $0xe8] sm:$0xff]
        %v356 = vld [vmem:[%s248 + $0xf0] sm:$0xff]
        %v357 = vld [vmem:[%s248 + $0xf8] sm:$0xff]
        %v358 = vld [vmem:[%s248 + $0x100] sm:$0xff]
        %v359 = vld [vmem:[%s248 + $0x108] sm:$0xff]
        %v360 = vld [vmem:[%s248 + $0x110] sm:$0xff]
        %v361 = vld [vmem:[%s1] sm:$0xff]
        %v362 = vld [vmem:[%s1 + $0x8] sm:$0xff]
        %v363 = vld [vmem:[%s1 + $0x10] sm:$0xff]
        %v364 = vld [vmem:[%s1 + $0x18] sm:$0xff]
        %v365 = vld [vmem:[%s1 + $0x20] sm:$0xff]
        %v366 = vld [vmem:[%s1 + $0x28] sm:$0xff]
        %v367 = vld [vmem:[%s1 + $0x30] sm:$0xff]
        %v368 = vld [vmem:[%s1 + $0x38] sm:$0xff]
        %v369 = vld [vmem:[%s1 + $0x40] sm:$0xff]
        %v370 = vld [vmem:[%s1 + $0x48] sm:$0xff]
        %v371 = vld [vmem:[%s1 + $0x50] sm:$0xff]
        %v372 = vld [vmem:[%s1 + $0x58] sm:$0xff]
        %v373 = vld [vmem:[%s1 + $0x60] sm:$0xff]
        %v374 = vld [vmem:[%s1 + $0x68] sm:$0xff]
        %v375 = vld [vmem:[%s1 + $0x70] sm:$0xff]
        %v376 = vld [vmem:[%s1 + $0x78] sm:$0xff]
        %v377 = vld [vmem:[%s1 + $0x80] sm:$0xff]
        %v378 = vld [vmem:[%s1 + $0x88] sm:$0xff]
        %v379 = vld [vmem:[%s1 + $0x90] sm:$0xff]
        %v380 = vld [vmem:[%s1 + $0x98] sm:$0xff]
        %v381 = vld [vmem:[%s1 + $0xa0] sm:$0xff]
        %v382 = vld [vmem:[%s1 + $0xa8] sm:$0xff]
        %v383 = vld [vmem:[%s1 + $0xb0] sm:$0xff]
        %v384 = vld [vmem:[%s1 + $0xb8] sm:$0xff]
        %v385 = vld [vmem:[%s1 + $0xc0] sm:$0xff]
        %v386 = vld [vmem:[%s1 + $0xc8] sm:$0xff]
        %v387 = vld [vmem:[%s1 + $0xd0] sm:$0xff]
        %v388 = vld [vmem:[%s1 + $0xd8] sm:$0xff]
        %v389 = vld [vmem:[%s1 + $0xe0] sm:$0xff]
        %v390 = vld [vmem:[%s1 + $0xe8] sm:$0xff]
        %v391 = vld [vmem:[%s1 + $0xf0] sm:$0xff]
        %v392 = vld [vmem:[%s1 + $0xf8] sm:$0xff]
        %v393 = vld [vmem:[%s1 + $0x100] sm:$0xff]
        %v394 = vld [vmem:[%s1 + $0x108] sm:$0xff]
        %v395 = vld [vmem:[%s1 + $0x110] sm:$0xff]
        %v396 = vld [vmem:[%s1 + $0x118] sm:$0xff]
        %v397 = vld [vmem:[%s1 + $0x120] sm:$0xff]
        %v398 = vld [vmem:[%s1 + $0x128] sm:$0xff]
        %v399 = vld [vmem:[%s1 + $0x130] sm:$0xff]
        %v400 = vld [vmem:[%s1 + $0x138] sm:$0xff]
        %v401 = vld [vmem:[%s1 + $0x140] sm:$0xff]
        %v402 = vld [vmem:[%s1 + $0x148] sm:$0xff]
        %v403 = vld [vmem:[%s1 + $0x150] sm:$0xff]
        %v404 = vld [vmem:[%s1 + $0x158] sm:$0xff]
        %v405 = vld [vmem:[%s1 + $0x160] sm:$0xff]
        %v406 = vld [vmem:[%s1 + $0x168] sm:$0xff]
        %v407 = vld [vmem:[%s1 + $0x170] sm:$0xff]
        %v408 = vld [vmem:[%s1 + $0x178] sm:$0xff]
        %v409 = vld [vmem:[%s1 + $0x180] sm:$0xff]
        %v410 = vld [vmem:[%s1 + $0x188] sm:$0xff]
        %v411 = vld [vmem:[%s1 + $0x190] sm:$0xff]
        %v412 = vld [vmem:[%s1 + $0x198] sm:$0xff]
        %v413 = vld [vmem:[%s1 + $0x1a0] sm:$0xff]
        %v414 = vld [vmem:[%s1 + $0x1a8] sm:$0xff]
        %v415 = vld [vmem:[%s1 + $0x1b0] sm:$0xff]
        %v416 = vld [vmem:[%s1 + $0x1b8] sm:$0xff]
        %v417 = vld [vmem:[%s1 + $0x1c0] sm:$0xff]
        %v418 = vld [vmem:[%s1 + $0x1c8] sm:$0xff]
        %v419 = vld [vmem:[%s1 + $0x1d0] sm:$0xff]
        %v420 = vld [vmem:[%s1 + $0x1d8] sm:$0xff]
        %v421 = vld [vmem:[%s1 + $0x1e0] sm:$0xff]
        %v422 = vld [vmem:[%s1 + $0x1e8] sm:$0xff]
        %v423 = vld [vmem:[%s1 + $0x1f0] sm:$0xff]
        %v424 = vld [vmem:[%s1 + $0x1f8] sm:$0xff]
        %v425 = vld [vmem:[%s1 + $0x200] sm:$0xff]
        %v426 = vld [vmem:[%s1 + $0x208] sm:$0xff]
        %v427 = vld [vmem:[%s1 + $0x210] sm:$0xff]
        %v428 = vld [vmem:[%s1 + $0x218] sm:$0xff]
        %v429 = vld [vmem:[%s1 + $0x220] sm:$0xff]
        %v430 = vld [vmem:[%s1 + $0x228] sm:$0xff]
        %v431 = vld [vmem:[%s1 + $0x230] sm:$0xff]
        %v432 = vld [vmem:[%s1 + $0x238] sm:$0xff]
        %v433 = vld [vmem:[%s1 + $0x240] sm:$0xff]
        %v434 = vld [vmem:[%s1 + $0x248] sm:$0xff]
        %v435 = vld [vmem:[%s1 + $0x250] sm:$0xff]
        %v436 = vld [vmem:[%s1 + $0x258] sm:$0xff]
        %v437 = vld [vmem:[%s1 + $0x260] sm:$0xff]
        %v438 = vld [vmem:[%s1 + $0x268] sm:$0xff]
        %v439 = vld [vmem:[%s1 + $0x270] sm:$0xff]
        %v440 = vld [vmem:[%s1 + $0x278] sm:$0xff]
        %v441 = vld [vmem:[%s1 + $0x280] sm:$0xff]
        %v442 = vld [vmem:[%s1 + $0x288] sm:$0xff]
        %v443 = vld [vmem:[%s1 + $0x290] sm:$0xff]
        %v444 = vld [vmem:[%s1 + $0x298] sm:$0xff]
        %v445 = vld [vmem:[%s1 + $0x2a0] sm:$0xff]
        %v446 = vld [vmem:[%s1 + $0x2a8] sm:$0xff]
        %v447 = vld [vmem:[%s1 + $0x2b0] sm:$0xff]
        %v448 = vld [vmem:[%s1 + $0x2b8] sm:$0xff]
        %v449 = vld [vmem:[%s1 + $0x2c0] sm:$0xff]
        %v450 = vld [vmem:[%s1 + $0x2c8] sm:$0xff]
        %v451 = vld [vmem:[%s1 + $0x2d0] sm:$0xff]
        %v452 = vld [vmem:[%s1 + $0x2d8] sm:$0xff]
        %v453 = vld [vmem:[%s1 + $0x2e0] sm:$0xff]
        %v454 = vld [vmem:[%s1 + $0x2e8] sm:$0xff]
        %v455 = vld [vmem:[%s1 + $0x2f0] sm:$0xff]
        %v456 = vld [vmem:[%s1 + $0x2f8] sm:$0xff]
        %v457 = vld [vmem:[%s248 + $0x118] sm:$0xff]
        %v458 = vld [vmem:[%s248 + $0x120] sm:$0xff]
        %s459 = scalar_lea.vmem %s1, 768
        %v460 = vld [vmem:[%s459] sm:$0xff]
        %v461 = vld [vmem:[%s459 + $0x8] sm:$0xff]
        %v462 = vld [vmem:[%s459 + $0x10] sm:$0xff]
        %v463 = vld [vmem:[%s459 + $0x18] sm:$0xff]
        %v464 = vld [vmem:[%s459 + $0x20] sm:$0xff]
        %v465 = vld [vmem:[%s459 + $0x28] sm:$0xff]
        %v466 = vld [vmem:[%s459 + $0x30] sm:$0xff]
        %v467 = vld [vmem:[%s459 + $0x38] sm:$0xff]
        %v468 = vld [vmem:[%s459 + $0x40] sm:$0xff]
        %v469 = vld [vmem:[%s459 + $0x48] sm:$0xff]
        %v470 = vld [vmem:[%s459 + $0x50] sm:$0xff]
        %v471 = vld [vmem:[%s459 + $0x58] sm:$0xff]
        %v472 = vld [vmem:[%s459 + $0x60] sm:$0xff]
        %v473 = vld [vmem:[%s459 + $0x68] sm:$0xff]
        %v474 = vld [vmem:[%s459 + $0x70] sm:$0xff]
        %v475 = vld [vmem:[%s459 + $0x78] sm:$0xff]
        %v476 = vld [vmem:[%s459 + $0x80] sm:$0xff]
        %v477 = vld [vmem:[%s459 + $0x88] sm:$0xff]
        %v478 = vld [vmem:[%s459 + $0x90] sm:$0xff]
        %v479 = vld [vmem:[%s459 + $0x98] sm:$0xff]
        %v480 = vld [vmem:[%s459 + $0xa0] sm:$0xff]
        %v481 = vld [vmem:[%s459 + $0xa8] sm:$0xff]
        %v482 = vld [vmem:[%s459 + $0xb0] sm:$0xff]
        %v483 = vld [vmem:[%s459 + $0xb8] sm:$0xff]
        %v484 = vld [vmem:[%s459 + $0xc0] sm:$0xff]
        %v485 = vld [vmem:[%s459 + $0xc8] sm:$0xff]
        %v486 = vld [vmem:[%s459 + $0xd0] sm:$0xff]
        %v487 = vld [vmem:[%s459 + $0xd8] sm:$0xff]
        %v488 = vld [vmem:[%s459 + $0xe0] sm:$0xff]
        %v489 = vld [vmem:[%s459 + $0xe8] sm:$0xff]
        %v490 = vld [vmem:[%s459 + $0xf0] sm:$0xff]
        %v491 = vld [vmem:[%s459 + $0xf8] sm:$0xff]
        %v492 = vld [vmem:[%s459 + $0x100] sm:$0xff]
        %v493 = vld [vmem:[%s459 + $0x108] sm:$0xff]
        %v494 = vld [vmem:[%s459 + $0x110] sm:$0xff]
        %v495 = vld [vmem:[%s459 + $0x118] sm:$0xff]
        %v496 = vld [vmem:[%s459 + $0x120] sm:$0xff]
        %v497 = vld [vmem:[%s459 + $0x128] sm:$0xff]
        %v498 = vld [vmem:[%s459 + $0x130] sm:$0xff]
        %v499 = vld [vmem:[%s459 + $0x138] sm:$0xff]
        %v500 = vld [vmem:[%s459 + $0x140] sm:$0xff]
        %v501 = vld [vmem:[%s459 + $0x148] sm:$0xff]
        %v502 = vld [vmem:[%s459 + $0x150] sm:$0xff]
        %v503 = vld [vmem:[%s459 + $0x158] sm:$0xff]
        %v504 = vld [vmem:[%s459 + $0x160] sm:$0xff]
        %v505 = vld [vmem:[%s459 + $0x168] sm:$0xff]
        %v506 = vld [vmem:[%s459 + $0x170] sm:$0xff]
        %v507 = vld [vmem:[%s459 + $0x178] sm:$0xff]
        %v508 = vld [vmem:[%s459 + $0x180] sm:$0xff]
        %v509 = vld [vmem:[%s459 + $0x188] sm:$0xff]
        %v510 = vld [vmem:[%s459 + $0x190] sm:$0xff]
        %v511 = vld [vmem:[%s459 + $0x198] sm:$0xff]
        %v512 = vld [vmem:[%s459 + $0x1a0] sm:$0xff]
        %v513 = vld [vmem:[%s459 + $0x1a8] sm:$0xff]
        %v514 = vld [vmem:[%s459 + $0x1b0] sm:$0xff]
        %v515 = vld [vmem:[%s459 + $0x1b8] sm:$0xff]
        %v516 = vld [vmem:[%s459 + $0x1c0] sm:$0xff]
        %v517 = vld [vmem:[%s459 + $0x1c8] sm:$0xff]
        %v518 = vld [vmem:[%s459 + $0x1d0] sm:$0xff]
        %v519 = vld [vmem:[%s459 + $0x1d8] sm:$0xff]
        %v520 = vld [vmem:[%s459 + $0x1e0] sm:$0xff]
        %v521 = vld [vmem:[%s459 + $0x1e8] sm:$0xff]
        %v522 = vld [vmem:[%s459 + $0x1f0] sm:$0xff]
        %v523 = vld [vmem:[%s459 + $0x1f8] sm:$0xff]
        %v524 = vld [vmem:[%s459 + $0x200] sm:$0xff]
        %v525 = vld [vmem:[%s459 + $0x208] sm:$0xff]
        %v526 = vld [vmem:[%s459 + $0x210] sm:$0xff]
        %v527 = vld [vmem:[%s459 + $0x218] sm:$0xff]
        %v528 = vld [vmem:[%s459 + $0x220] sm:$0xff]
        %v529 = vld [vmem:[%s459 + $0x228] sm:$0xff]
        %v530 = vld [vmem:[%s459 + $0x230] sm:$0xff]
        %v531 = vld [vmem:[%s459 + $0x238] sm:$0xff]
        %v532 = vld [vmem:[%s459 + $0x240] sm:$0xff]
        %v533 = vld [vmem:[%s459 + $0x248] sm:$0xff]
        %v534 = vld [vmem:[%s459 + $0x250] sm:$0xff]
        %v535 = vld [vmem:[%s459 + $0x258] sm:$0xff]
        %v536 = vld [vmem:[%s459 + $0x260] sm:$0xff]
        %v537 = vld [vmem:[%s459 + $0x268] sm:$0xff]
        %v538 = vld [vmem:[%s459 + $0x270] sm:$0xff]
        %v539 = vld [vmem:[%s459 + $0x278] sm:$0xff]
        %v540 = vld [vmem:[%s459 + $0x280] sm:$0xff]
        %v541 = vld [vmem:[%s459 + $0x288] sm:$0xff]
        %v542 = vld [vmem:[%s459 + $0x290] sm:$0xff]
        %v543 = vld [vmem:[%s459 + $0x298] sm:$0xff]
        %v544 = vld [vmem:[%s459 + $0x2a0] sm:$0xff]
        %v545 = vld [vmem:[%s459 + $0x2a8] sm:$0xff]
        %v546 = vld [vmem:[%s459 + $0x2b0] sm:$0xff]
        %v547 = vld [vmem:[%s459 + $0x2b8] sm:$0xff]
        %v548 = vld [vmem:[%s459 + $0x2c0] sm:$0xff]
        %v549 = vld [vmem:[%s459 + $0x2c8] sm:$0xff]
        %v550 = vld [vmem:[%s459 + $0x2d0] sm:$0xff]
        %v551 = vld [vmem:[%s459 + $0x2d8] sm:$0xff]
        %v552 = vld [vmem:[%s459 + $0x2e0] sm:$0xff]
        %v553 = vld [vmem:[%s459 + $0x2e8] sm:$0xff]
        %v554 = vld [vmem:[%s459 + $0x2f0] sm:$0xff]
        %v555 = vld [vmem:[%s459 + $0x2f8] sm:$0xff]
        %v591 = vunpack.c.l.b16 %v328
        %v592 = vunpack.c.h.b16 %v328
        %v593 = vunpack.c.l.b16 %v329
        %v594 = vunpack.c.h.b16 %v329
        %v595 = vunpack.c.l.b16 %v330
        %v596 = vunpack.c.h.b16 %v330
        %v597 = vunpack.c.l.b16 %v331
        %v598 = vunpack.c.h.b16 %v331
        %v599 = vunpack.c.l.b16 %v332
        %v600 = vunpack.c.h.b16 %v332
        %v601 = vunpack.c.l.b16 %v333
        %v602 = vunpack.c.h.b16 %v333
        %v603 = vunpack.c.l.b16 %v334
        %v604 = vunpack.c.h.b16 %v334
        %v605 = vunpack.c.l.b16 %v335
        %v606 = vunpack.c.h.b16 %v335
        %v607 = vunpack.c.l.b16 %v336
        %v608 = vunpack.c.h.b16 %v336
        %v609 = vunpack.c.l.b16 %v337
        %v610 = vunpack.c.h.b16 %v337
        %v611 = vunpack.c.l.b16 %v338
        %v612 = vunpack.c.h.b16 %v338
        %v613 = vunpack.c.l.b16 %v339
        %v614 = vunpack.c.h.b16 %v339
        %v615 = vunpack.c.l.b16 %v340
        %v616 = vunpack.c.h.b16 %v340
        %v617 = vunpack.c.l.b16 %v341
        %v618 = vunpack.c.h.b16 %v341
        %v619 = vunpack.c.l.b16 %v342
        %v620 = vunpack.c.h.b16 %v342
        %v621 = vunpack.c.l.b16 %v343
        %v622 = vunpack.c.h.b16 %v343
        %v623 = vunpack.c.l.b16 %v344
        %v624 = vunpack.c.h.b16 %v344
        %v625 = vunpack.c.l.b16 %v345
        %v626 = vunpack.c.h.b16 %v345
        %v627 = vunpack.c.l.b16 %v346
        %v628 = vunpack.c.h.b16 %v346
        %v629 = vunpack.c.l.b16 %v347
        %v630 = vunpack.c.h.b16 %v347
        %v631 = vunpack.c.l.b16 %v348
        %v632 = vunpack.c.h.b16 %v348
        %v633 = vunpack.c.l.b16 %v349
        %v634 = vunpack.c.h.b16 %v349
        %v635 = vunpack.c.l.b16 %v350
        %v636 = vunpack.c.h.b16 %v350
        %v637 = vunpack.c.l.b16 %v351
        %v638 = vunpack.c.h.b16 %v351
        %v639 = vunpack.c.l.b16 %v352
        %v640 = vunpack.c.h.b16 %v352
        %v641 = vunpack.c.l.b16 %v353
        %v642 = vunpack.c.h.b16 %v353
        %v643 = vunpack.c.l.b16 %v354
        %v644 = vunpack.c.h.b16 %v354
        %v645 = vunpack.c.l.b16 %v355
        %v646 = vunpack.c.h.b16 %v355
        %v647 = vunpack.c.l.b16 %v356
        %v648 = vunpack.c.h.b16 %v356
        %v649 = vunpack.c.l.b16 %v357
        %v650 = vunpack.c.h.b16 %v357
        %v651 = vunpack.c.l.b16 %v358
        %v652 = vunpack.c.h.b16 %v358
        %v653 = vunpack.c.l.b16 %v359
        %v654 = vunpack.c.h.b16 %v359
        %v655 = vunpack.c.l.b16 %v360
        %v656 = vunpack.c.h.b16 %v360
        %v657 = vunpack.c.l.b16 %v457
        %v658 = vunpack.c.h.b16 %v457
        %v659 = vunpack.c.l.b16 %v458
        %v660 = vunpack.c.h.b16 %v458
        %v661 = vpack.c.b16 %v593, %v591
        %v662 = vpack.c.b16 %v594, %v592
        %v663 = vpack.c.b16 %v597, %v595
        %v664 = vpack.c.b16 %v598, %v596
        %v665 = vpack.c.b16 %v601, %v599
        %v666 = vpack.c.b16 %v602, %v600
        %v667 = vpack.c.b16 %v605, %v603
        %v668 = vpack.c.b16 %v606, %v604
        %v669 = vpack.c.b16 %v609, %v607
        %v670 = vpack.c.b16 %v610, %v608
        %v671 = vpack.c.b16 %v613, %v611
        %v672 = vpack.c.b16 %v614, %v612
        %v673 = vpack.c.b16 %v617, %v615
        %v674 = vpack.c.b16 %v618, %v616
        %v675 = vpack.c.b16 %v621, %v619
        %v676 = vpack.c.b16 %v622, %v620
        %v677 = vpack.c.b16 %v625, %v623
        %v678 = vpack.c.b16 %v626, %v624
        %v679 = vpack.c.b16 %v629, %v627
        %v680 = vpack.c.b16 %v630, %v628
        %v681 = vpack.c.b16 %v633, %v631
        %v682 = vpack.c.b16 %v634, %v632
        %v683 = vpack.c.b16 %v637, %v635
        %v684 = vpack.c.b16 %v638, %v636
        %v685 = vpack.c.b16 %v641, %v639
        %v686 = vpack.c.b16 %v642, %v640
        %v687 = vpack.c.b16 %v645, %v643
        %v688 = vpack.c.b16 %v646, %v644
        %v689 = vpack.c.b16 %v649, %v647
        %v690 = vpack.c.b16 %v650, %v648
        %v691 = vpack.c.b16 %v653, %v651
        %v692 = vpack.c.b16 %v654, %v652
        %v693 = vpack.c.b16 %v657, %v655
        %v694 = vpack.c.b16 %v658, %v656
        %v695 = vpack.c.b16 %v659, %v659
        %v696 = vpack.c.b16 %v660, %v660
        %v829 = vunpack.c.l.b16 %v460
        %v830 = vunpack.c.h.b16 %v460
        %v831 = vunpack.c.l.b16 %v461
        %v832 = vunpack.c.h.b16 %v461
        %v833 = vunpack.c.l.b16 %v462
        %v834 = vunpack.c.h.b16 %v462
        %v835 = vunpack.c.l.b16 %v463
        %v836 = vunpack.c.h.b16 %v463
        %v837 = vunpack.c.l.b16 %v464
        %v838 = vunpack.c.h.b16 %v464
        %v839 = vunpack.c.l.b16 %v465
        %v840 = vunpack.c.h.b16 %v465
        %v841 = vunpack.c.l.b16 %v466
        %v842 = vunpack.c.h.b16 %v466
        %v843 = vunpack.c.l.b16 %v467
        %v844 = vunpack.c.h.b16 %v467
        %v845 = vunpack.c.l.b16 %v468
        %v846 = vunpack.c.h.b16 %v468
        %v847 = vunpack.c.l.b16 %v469
        %v848 = vunpack.c.h.b16 %v469
        %v849 = vunpack.c.l.b16 %v470
        %v850 = vunpack.c.h.b16 %v470
        %v851 = vunpack.c.l.b16 %v471
        %v852 = vunpack.c.h.b16 %v471
        %v853 = vunpack.c.l.b16 %v472
        %v854 = vunpack.c.h.b16 %v472
        %v855 = vunpack.c.l.b16 %v473
        %v856 = vunpack.c.h.b16 %v473
        %v857 = vunpack.c.l.b16 %v474
        %v858 = vunpack.c.h.b16 %v474
        %v859 = vunpack.c.l.b16 %v475
        %v860 = vunpack.c.h.b16 %v475
        %v861 = vunpack.c.l.b16 %v476
        %v862 = vunpack.c.h.b16 %v476
        %v863 = vunpack.c.l.b16 %v477
        %v864 = vunpack.c.h.b16 %v477
        %v865 = vunpack.c.l.b16 %v478
        %v866 = vunpack.c.h.b16 %v478
        %v867 = vunpack.c.l.b16 %v479
        %v868 = vunpack.c.h.b16 %v479
        %v869 = vunpack.c.l.b16 %v480
        %v870 = vunpack.c.h.b16 %v480
        %v871 = vunpack.c.l.b16 %v481
        %v872 = vunpack.c.h.b16 %v481
        %v873 = vunpack.c.l.b16 %v482
        %v874 = vunpack.c.h.b16 %v482
        %v875 = vunpack.c.l.b16 %v483
        %v876 = vunpack.c.h.b16 %v483
        %v877 = vunpack.c.l.b16 %v484
        %v878 = vunpack.c.h.b16 %v484
        %v879 = vunpack.c.l.b16 %v485
        %v880 = vunpack.c.h.b16 %v485
        %v881 = vunpack.c.l.b16 %v486
        %v882 = vunpack.c.h.b16 %v486
        %v883 = vunpack.c.l.b16 %v487
        %v884 = vunpack.c.h.b16 %v487
        %v885 = vunpack.c.l.b16 %v488
        %v886 = vunpack.c.h.b16 %v488
        %v887 = vunpack.c.l.b16 %v489
        %v888 = vunpack.c.h.b16 %v489
        %v889 = vunpack.c.l.b16 %v490
        %v890 = vunpack.c.h.b16 %v490
        %v891 = vunpack.c.l.b16 %v491
        %v892 = vunpack.c.h.b16 %v491
        %v893 = vunpack.c.l.b16 %v492
        %v894 = vunpack.c.h.b16 %v492
        %v895 = vunpack.c.l.b16 %v493
        %v896 = vunpack.c.h.b16 %v493
        %v897 = vunpack.c.l.b16 %v494
        %v898 = vunpack.c.h.b16 %v494
        %v899 = vunpack.c.l.b16 %v495
        %v900 = vunpack.c.h.b16 %v495
        %v901 = vunpack.c.l.b16 %v496
        %v902 = vunpack.c.h.b16 %v496
        %v903 = vunpack.c.l.b16 %v497
        %v904 = vunpack.c.h.b16 %v497
        %v905 = vunpack.c.l.b16 %v498
        %v906 = vunpack.c.h.b16 %v498
        %v907 = vunpack.c.l.b16 %v499
        %v908 = vunpack.c.h.b16 %v499
        %v909 = vunpack.c.l.b16 %v500
        %v910 = vunpack.c.h.b16 %v500
        %v911 = vunpack.c.l.b16 %v501
        %v912 = vunpack.c.h.b16 %v501
        %v913 = vunpack.c.l.b16 %v502
        %v914 = vunpack.c.h.b16 %v502
        %v915 = vunpack.c.l.b16 %v503
        %v916 = vunpack.c.h.b16 %v503
        %v917 = vunpack.c.l.b16 %v504
        %v918 = vunpack.c.h.b16 %v504
        %v919 = vunpack.c.l.b16 %v505
        %v920 = vunpack.c.h.b16 %v505
        %v921 = vunpack.c.l.b16 %v506
        %v922 = vunpack.c.h.b16 %v506
        %v923 = vunpack.c.l.b16 %v507
        %v924 = vunpack.c.h.b16 %v507
        %v925 = vunpack.c.l.b16 %v508
        %v926 = vunpack.c.h.b16 %v508
        %v927 = vunpack.c.l.b16 %v509
        %v928 = vunpack.c.h.b16 %v509
        %v929 = vunpack.c.l.b16 %v510
        %v930 = vunpack.c.h.b16 %v510
        %v931 = vunpack.c.l.b16 %v511
        %v932 = vunpack.c.h.b16 %v511
        %v933 = vunpack.c.l.b16 %v512
        %v934 = vunpack.c.h.b16 %v512
        %v935 = vunpack.c.l.b16 %v513
        %v936 = vunpack.c.h.b16 %v513
        %v937 = vunpack.c.l.b16 %v514
        %v938 = vunpack.c.h.b16 %v514
        %v939 = vunpack.c.l.b16 %v515
        %v940 = vunpack.c.h.b16 %v515
        %v941 = vunpack.c.l.b16 %v516
        %v942 = vunpack.c.h.b16 %v516
        %v943 = vunpack.c.l.b16 %v517
        %v944 = vunpack.c.h.b16 %v517
        %v945 = vunpack.c.l.b16 %v518
        %v946 = vunpack.c.h.b16 %v518
        %v947 = vunpack.c.l.b16 %v519
        %v948 = vunpack.c.h.b16 %v519
        %v949 = vunpack.c.l.b16 %v520
        %v950 = vunpack.c.h.b16 %v520
        %v951 = vunpack.c.l.b16 %v521
        %v952 = vunpack.c.h.b16 %v521
        %v953 = vunpack.c.l.b16 %v522
        %v954 = vunpack.c.h.b16 %v522
        %v955 = vunpack.c.l.b16 %v523
        %v956 = vunpack.c.h.b16 %v523
        %v957 = vunpack.c.l.b16 %v524
        %v958 = vunpack.c.h.b16 %v524
        %v959 = vunpack.c.l.b16 %v525
        %v960 = vunpack.c.h.b16 %v525
        %v961 = vunpack.c.l.b16 %v526
        %v962 = vunpack.c.h.b16 %v526
        %v963 = vunpack.c.l.b16 %v527
        %v964 = vunpack.c.h.b16 %v527
        %v965 = vunpack.c.l.b16 %v528
        %v966 = vunpack.c.h.b16 %v528
        %v967 = vunpack.c.l.b16 %v529
        %v968 = vunpack.c.h.b16 %v529
        %v969 = vunpack.c.l.b16 %v530
        %v970 = vunpack.c.h.b16 %v530
        %v971 = vunpack.c.l.b16 %v531
        %v972 = vunpack.c.h.b16 %v531
        %v973 = vunpack.c.l.b16 %v532
        %v974 = vunpack.c.h.b16 %v532
        %v975 = vunpack.c.l.b16 %v533
        %v976 = vunpack.c.h.b16 %v533
        %v977 = vunpack.c.l.b16 %v534
        %v978 = vunpack.c.h.b16 %v534
        %v979 = vunpack.c.l.b16 %v535
        %v980 = vunpack.c.h.b16 %v535
        %v981 = vunpack.c.l.b16 %v536
        %v982 = vunpack.c.h.b16 %v536
        %v983 = vunpack.c.l.b16 %v537
        %v984 = vunpack.c.h.b16 %v537
        %v985 = vunpack.c.l.b16 %v538
        %v986 = vunpack.c.h.b16 %v538
        %v987 = vunpack.c.l.b16 %v539
        %v988 = vunpack.c.h.b16 %v539
        %v989 = vunpack.c.l.b16 %v540
        %v990 = vunpack.c.h.b16 %v540
        %v991 = vunpack.c.l.b16 %v541
        %v992 = vunpack.c.h.b16 %v541
        %v993 = vunpack.c.l.b16 %v542
        %v994 = vunpack.c.h.b16 %v542
        %v995 = vunpack.c.l.b16 %v543
        %v996 = vunpack.c.h.b16 %v543
        %v997 = vunpack.c.l.b16 %v544
        %v998 = vunpack.c.h.b16 %v544
        %v999 = vunpack.c.l.b16 %v545
        %v1000 = vunpack.c.h.b16 %v545
        %v1001 = vunpack.c.l.b16 %v546
        %v1002 = vunpack.c.h.b16 %v546
        %v1003 = vunpack.c.l.b16 %v547
        %v1004 = vunpack.c.h.b16 %v547
        %v1005 = vunpack.c.l.b16 %v548
        %v1006 = vunpack.c.h.b16 %v548
        %v1007 = vunpack.c.l.b16 %v549
        %v1008 = vunpack.c.h.b16 %v549
        %v1009 = vunpack.c.l.b16 %v550
        %v1010 = vunpack.c.h.b16 %v550
        %v1011 = vunpack.c.l.b16 %v551
        %v1012 = vunpack.c.h.b16 %v551
        %v1013 = vunpack.c.l.b16 %v552
        %v1014 = vunpack.c.h.b16 %v552
        %v1015 = vunpack.c.l.b16 %v553
        %v1016 = vunpack.c.h.b16 %v553
        %v1017 = vunpack.c.l.b16 %v554
        %v1018 = vunpack.c.h.b16 %v554
        %v1019 = vunpack.c.l.b16 %v555
        %v1020 = vunpack.c.h.b16 %v555
        %v1021 = vpack.c.b16 %v835, %v829
        %v1022 = vpack.c.b16 %v836, %v830
        %v1023 = vpack.c.b16 %v837, %v831
        %v1024 = vpack.c.b16 %v838, %v832
        %v1025 = vpack.c.b16 %v839, %v833
        %v1026 = vpack.c.b16 %v840, %v834
        %v1027 = vpack.c.b16 %v847, %v841
        %v1028 = vpack.c.b16 %v848, %v842
        %v1029 = vpack.c.b16 %v849, %v843
        %v1030 = vpack.c.b16 %v850, %v844
        %v1031 = vpack.c.b16 %v851, %v845
        %v1032 = vpack.c.b16 %v852, %v846
        %v1033 = vpack.c.b16 %v859, %v853
        %v1034 = vpack.c.b16 %v860, %v854
        %v1035 = vpack.c.b16 %v861, %v855
        %v1036 = vpack.c.b16 %v862, %v856
        %v1037 = vpack.c.b16 %v863, %v857
        %v1038 = vpack.c.b16 %v864, %v858
        %v1039 = vpack.c.b16 %v871, %v865
        %v1040 = vpack.c.b16 %v872, %v866
        %v1041 = vpack.c.b16 %v873, %v867
        %v1042 = vpack.c.b16 %v874, %v868
        %v1043 = vpack.c.b16 %v875, %v869
        %v1044 = vpack.c.b16 %v876, %v870
        %v1045 = vpack.c.b16 %v883, %v877
        %v1046 = vpack.c.b16 %v884, %v878
        %v1047 = vpack.c.b16 %v885, %v879
        %v1048 = vpack.c.b16 %v886, %v880
        %v1049 = vpack.c.b16 %v887, %v881
        %v1050 = vpack.c.b16 %v888, %v882
        %v1051 = vpack.c.b16 %v895, %v889
        %v1052 = vpack.c.b16 %v896, %v890
        %v1053 = vpack.c.b16 %v897, %v891
        %v1054 = vpack.c.b16 %v898, %v892
        %v1055 = vpack.c.b16 %v899, %v893
        %v1056 = vpack.c.b16 %v900, %v894
        %v1057 = vpack.c.b16 %v907, %v901
        %v1058 = vpack.c.b16 %v908, %v902
        %v1059 = vpack.c.b16 %v909, %v903
        %v1060 = vpack.c.b16 %v910, %v904
        %v1061 = vpack.c.b16 %v911, %v905
        %v1062 = vpack.c.b16 %v912, %v906
        %v1063 = vpack.c.b16 %v919, %v913
        %v1064 = vpack.c.b16 %v920, %v914
        %v1065 = vpack.c.b16 %v921, %v915
        %v1066 = vpack.c.b16 %v922, %v916
        %v1067 = vpack.c.b16 %v923, %v917
        %v1068 = vpack.c.b16 %v924, %v918
        %v1069 = vpack.c.b16 %v931, %v925
        %v1070 = vpack.c.b16 %v932, %v926
        %v1071 = vpack.c.b16 %v933, %v927
        %v1072 = vpack.c.b16 %v934, %v928
        %v1073 = vpack.c.b16 %v935, %v929
        %v1074 = vpack.c.b16 %v936, %v930
        %v1075 = vpack.c.b16 %v943, %v937
        %v1076 = vpack.c.b16 %v944, %v938
        %v1077 = vpack.c.b16 %v945, %v939
        %v1078 = vpack.c.b16 %v946, %v940
        %v1079 = vpack.c.b16 %v947, %v941
        %v1080 = vpack.c.b16 %v948, %v942
        %v1081 = vpack.c.b16 %v955, %v949
        %v1082 = vpack.c.b16 %v956, %v950
        %v1083 = vpack.c.b16 %v957, %v951
        %v1084 = vpack.c.b16 %v958, %v952
        %v1085 = vpack.c.b16 %v959, %v953
        %v1086 = vpack.c.b16 %v960, %v954
        %v1087 = vpack.c.b16 %v967, %v961
        %v1088 = vpack.c.b16 %v968, %v962
        %v1089 = vpack.c.b16 %v969, %v963
        %v1090 = vpack.c.b16 %v970, %v964
        %v1091 = vpack.c.b16 %v971, %v965
        %v1092 = vpack.c.b16 %v972, %v966
        %v1093 = vpack.c.b16 %v979, %v973
        %v1094 = vpack.c.b16 %v980, %v974
        %v1095 = vpack.c.b16 %v981, %v975
        %v1096 = vpack.c.b16 %v982, %v976
        %v1097 = vpack.c.b16 %v983, %v977
        %v1098 = vpack.c.b16 %v984, %v978
        %v1099 = vpack.c.b16 %v991, %v985
        %v1100 = vpack.c.b16 %v992, %v986
        %v1101 = vpack.c.b16 %v993, %v987
        %v1102 = vpack.c.b16 %v994, %v988
        %v1103 = vpack.c.b16 %v995, %v989
        %v1104 = vpack.c.b16 %v996, %v990
        %v1105 = vpack.c.b16 %v1003, %v997
        %v1106 = vpack.c.b16 %v1004, %v998
        %v1107 = vpack.c.b16 %v1005, %v999
        %v1108 = vpack.c.b16 %v1006, %v1000
        %v1109 = vpack.c.b16 %v1007, %v1001
        %v1110 = vpack.c.b16 %v1008, %v1002
        %v1111 = vpack.c.b16 %v1015, %v1009
        %v1112 = vpack.c.b16 %v1016, %v1010
        %v1113 = vpack.c.b16 %v1017, %v1011
        %v1114 = vpack.c.b16 %v1018, %v1012
        %v1115 = vpack.c.b16 %v1019, %v1013
        %v1116 = vpack.c.b16 %v1020, %v1014
        %1213 = vmatprep.subr.bf16.mxu0 %v1022
        %1214 = vmatpush1.bf16.msra.mxu0 %v1021
        %1215 = vmatprep.subr.bf16.mxu0 %v1028
        %1216 = vmatpush1.bf16.msra.mxu0 %v1027
        %1217 = vmatprep.subr.bf16.mxu0 %v1034
        %1218 = vmatpush1.bf16.msra.mxu0 %v1033
        %1219 = vmatprep.subr.bf16.mxu0 %v1040
        %1220 = vmatpush1.bf16.msra.mxu0 %v1039
        %1221 = vmatprep.subr.bf16.mxu0 %v1046
        %1222 = vmatpush1.bf16.msra.mxu0 %v1045
        %1223 = vmatprep.subr.bf16.mxu0 %v1052
        %1224 = vmatpush1.bf16.msra.mxu0 %v1051
        %1225 = vmatprep.subr.bf16.mxu0 %v1058
        %1226 = vmatpush1.bf16.msra.mxu0 %v1057
        %1227 = vmatprep.subr.bf16.mxu0 %v1064
        %1228 = vmatpush1.bf16.msra.mxu0 %v1063
        %1229 = vmatprep.subr.bf16.mxu0 %v1070
        %1230 = vmatpush1.bf16.msra.mxu0 %v1069
        %1231 = vmatprep.subr.bf16.mxu0 %v1076
        %1232 = vmatpush1.bf16.msra.mxu0 %v1075
        %1233 = vmatprep.subr.bf16.mxu0 %v1082
        %1234 = vmatpush1.bf16.msra.mxu0 %v1081
        %1235 = vmatprep.subr.bf16.mxu0 %v1088
        %1236 = vmatpush1.bf16.msra.mxu0 %v1087
        %1237 = vmatprep.subr.bf16.mxu0 %v1094
        %1238 = vmatpush1.bf16.msra.mxu0 %v1093
        %1239 = vmatprep.subr.bf16.mxu0 %v1100
        %1240 = vmatpush1.bf16.msra.mxu0 %v1099
        %1241 = vmatprep.subr.bf16.mxu0 %v1106
        %1242 = vmatpush1.bf16.msra.mxu0 %v1105
        %1243 = vmatprep.subr.bf16.mxu0 %v1112
        %1244 = vmatpush1.bf16.msra.mxu0 %v1111
        %1245 = vmatprep.mubr.bf16.mxu0 %v662
        %1246 = vmatmul.mubr.bf16.gmra.mrb[0].mxu0 %v661
        %v1247 = vpop.f32.mrb[0].mxu0
        %v1248 = vpop.f32.mrb[0].mxu0
        %v1249 = vpop.f32.mrb[0].mxu0
        %v1250 = vadd.f32 0.0, %v1249
        %v1251 = vpop.f32.mrb[0].mxu0
        %v1252 = vadd.f32 0.0, %v1251
        %1253 = vmatprep.mubr.bf16.mxu0 %v664
        %1254 = vmatmul.mubr.bf16.gmra.mrb[0].mxu0 %v663
        %v1255 = vpop.f32.mrb[0].mxu0
        %v1256 = vadd.f32 0.0, %v1255
        %v1257 = vpop.f32.mrb[0].mxu0
        %v1258 = vadd.f32 0.0, %v1257
        %v1259 = vpop.f32.mrb[0].mxu0
        %v1260 = vadd.f32 0.0, %v1259
        %v1261 = vpop.f32.mrb[0].mxu0
        %v1262 = vadd.f32 0.0, %v1261
        %1263 = vmatprep.mubr.bf16.mxu0 %v666
        %1264 = vmatmul.mubr.bf16.gmra.mrb[0].mxu0 %v665
        %v1265 = vpop.f32.mrb[0].mxu0
        %v1266 = vadd.f32 0.0, %v1265
        %v1267 = vpop.f32.mrb[0].mxu0
        %v1268 = vadd.f32 0.0, %v1267
        %v1269 = vpop.f32.mrb[0].mxu0
        %v1270 = vadd.f32 0.0, %v1269
        %v1271 = vpop.f32.mrb[0].mxu0
        %v1272 = vadd.f32 0.0, %v1271
        %1273 = vmatprep.mubr.bf16.mxu0 %v668
        %1274 = vmatmul.mubr.bf16.gmra.mrb[0].mxu0 %v667
        %v1275 = vpop.f32.mrb[0].mxu0
        %v1276 = vadd.f32 0.0, %v1275
        %v1277 = vpop.f32.mrb[0].mxu0
        %v1278 = vadd.f32 0.0, %v1277
        %v1279 = vpop.f32.mrb[0].mxu0
        %v1280 = vadd.f32 0.0, %v1279
        %v1281 = vpop.f32.mrb[0].mxu0
        %v1282 = vadd.f32 0.0, %v1281
        %1283 = vmatprep.mubr.bf16.mxu0 %v670
        %1284 = vmatmul.mubr.bf16.gmra.mrb[0].mxu0 %v669
        %v1285 = vpop.f32.mrb[0].mxu0
        %v1286 = vadd.f32 0.0, %v1285
        %v1287 = vpop.f32.mrb[0].mxu0
        %v1288 = vadd.f32 0.0, %v1287
        %v1289 = vpop.f32.mrb[0].mxu0
        %v1290 = vadd.f32 0.0, %v1289
        %v1291 = vpop.f32.mrb[0].mxu0
        %v1292 = vadd.f32 0.0, %v1291
        %1293 = vmatprep.mubr.bf16.mxu0 %v672
        %1294 = vmatmul.mubr.bf16.gmra.mrb[0].mxu0 %v671
        %v1295 = vpop.f32.mrb[0].mxu0
        %v1296 = vadd.f32 0.0, %v1295
        %v1297 = vpop.f32.mrb[0].mxu0
        %v1298 = vadd.f32 0.0, %v1297
        %v1299 = vpop.f32.mrb[0].mxu0
        %v1300 = vadd.f32 0.0, %v1299
        %v1301 = vpop.f32.mrb[0].mxu0
        %v1302 = vadd.f32 0.0, %v1301
        %1303 = vmatprep.mubr.bf16.mxu0 %v674
        %1304 = vmatmul.mubr.bf16.gmra.mrb[0].mxu0 %v673
        %v1305 = vpop.f32.mrb[0].mxu0
        %v1306 = vadd.f32 0.0, %v1305
        %v1307 = vpop.f32.mrb[0].mxu0
        %v1308 = vadd.f32 0.0, %v1307
        %v1309 = vpop.f32.mrb[0].mxu0
        %v1310 = vadd.f32 0.0, %v1309
        %v1311 = vpop.f32.mrb[0].mxu0
        %v1312 = vadd.f32 0.0, %v1311
        %1313 = vmatprep.mubr.bf16.mxu0 %v676
        %1314 = vmatmul.mubr.bf16.gmra.mrb[0].mxu0 %v675
        %v1315 = vpop.f32.mrb[0].mxu0
        %v1316 = vadd.f32 0.0, %v1315
        %v1317 = vpop.f32.mrb[0].mxu0
        %v1318 = vadd.f32 0.0, %v1317
        %v1319 = vpop.f32.mrb[0].mxu0
        %v1320 = vadd.f32 0.0, %v1319
        %v1321 = vpop.f32.mrb[0].mxu0
        %v1322 = vadd.f32 0.0, %v1321
        %1323 = vmatprep.mubr.bf16.mxu0 %v678
        %1324 = vmatmul.mubr.bf16.gmra.mrb[0].mxu0 %v677
        %v1325 = vpop.f32.mrb[0].mxu0
        %v1326 = vadd.f32 0.0, %v1325
        %v1327 = vpop.f32.mrb[0].mxu0
        %v1328 = vadd.f32 0.0, %v1327
        %v1329 = vpop.f32.mrb[0].mxu0
        %v1330 = vadd.f32 0.0, %v1329
        %v1331 = vpop.f32.mrb[0].mxu0
        %v1332 = vadd.f32 0.0, %v1331
        %1333 = vmatprep.mubr.bf16.mxu0 %v680
        %1334 = vmatmul.mubr.bf16.gmra.mrb[0].mxu0 %v679
        %v1335 = vpop.f32.mrb[0].mxu0
        %v1336 = vadd.f32 0.0, %v1335
        %v1337 = vpop.f32.mrb[0].mxu0
        %v1338 = vadd.f32 0.0, %v1337
        %v1339 = vpop.f32.mrb[0].mxu0
        %v1340 = vadd.f32 0.0, %v1339
        %v1341 = vpop.f32.mrb[0].mxu0
        %v1342 = vadd.f32 0.0, %v1341
        %1343 = vmatprep.mubr.bf16.mxu0 %v682
        %1344 = vmatmul.mubr.bf16.gmra.mrb[0].mxu0 %v681
        %v1345 = vpop.f32.mrb[0].mxu0
        %v1346 = vadd.f32 0.0, %v1345
        %v1347 = vpop.f32.mrb[0].mxu0
        %v1348 = vadd.f32 0.0, %v1347
        %v1349 = vpop.f32.mrb[0].mxu0
        %v1350 = vadd.f32 0.0, %v1349
        %v1351 = vpop.f32.mrb[0].mxu0
        %v1352 = vadd.f32 0.0, %v1351
        %1353 = vmatprep.mubr.bf16.mxu0 %v684
        %1354 = vmatmul.mubr.bf16.gmra.mrb[0].mxu0 %v683
        %v1355 = vpop.f32.mrb[0].mxu0
        %v1356 = vadd.f32 0.0, %v1355
        %v1357 = vpop.f32.mrb[0].mxu0
        %v1358 = vadd.f32 0.0, %v1357
        %v1359 = vpop.f32.mrb[0].mxu0
        %v1360 = vadd.f32 0.0, %v1359
        %v1361 = vpop.f32.mrb[0].mxu0
        %v1362 = vadd.f32 0.0, %v1361
        %1363 = vmatprep.mubr.bf16.mxu0 %v686
        %1364 = vmatmul.mubr.bf16.gmra.mrb[0].mxu0 %v685
        %v1365 = vpop.f32.mrb[0].mxu0
        %v1366 = vadd.f32 0.0, %v1365
        %v1367 = vpop.f32.mrb[0].mxu0
        %v1368 = vadd.f32 0.0, %v1367
        %v1369 = vpop.f32.mrb[0].mxu0
        %v1370 = vadd.f32 0.0, %v1369
        %v1371 = vpop.f32.mrb[0].mxu0
        %v1372 = vadd.f32 0.0, %v1371
        %1373 = vmatprep.mubr.bf16.mxu0 %v688
        %1374 = vmatmul.mubr.bf16.gmra.mrb[0].mxu0 %v687
        %v1375 = vpop.f32.mrb[0].mxu0
        %v1376 = vadd.f32 0.0, %v1375
        %v1377 = vpop.f32.mrb[0].mxu0
        %v1378 = vadd.f32 0.0, %v1377
        %v1379 = vpop.f32.mrb[0].mxu0
        %v1380 = vadd.f32 0.0, %v1379
        %v1381 = vpop.f32.mrb[0].mxu0
        %v1382 = vadd.f32 0.0, %v1381
        %1383 = vmatprep.mubr.bf16.mxu0 %v690
        %1384 = vmatmul.mubr.bf16.gmra.mrb[0].mxu0 %v689
        %v1385 = vpop.f32.mrb[0].mxu0
        %v1386 = vadd.f32 0.0, %v1385
        %v1387 = vpop.f32.mrb[0].mxu0
        %v1388 = vadd.f32 0.0, %v1387
        %v1389 = vpop.f32.mrb[0].mxu0
        %v1390 = vadd.f32 0.0, %v1389
        %v1391 = vpop.f32.mrb[0].mxu0
        %v1392 = vadd.f32 0.0, %v1391
        %1393 = vmatprep.mubr.bf16.mxu0 %v692
        %1394 = vmatmul.mubr.bf16.gmra.mrb[0].mxu0 %v691
        %v1395 = vpop.f32.mrb[0].mxu0
        %v1396 = vadd.f32 0.0, %v1395
        %v1397 = vpop.f32.mrb[0].mxu0
        %v1398 = vadd.f32 0.0, %v1397
        %v1399 = vpop.f32.mrb[0].mxu0
        %v1400 = vadd.f32 0.0, %v1399
        %v1401 = vpop.f32.mrb[0].mxu0
        %v1402 = vadd.f32 0.0, %v1401
        %1403 = vmatprep.mubr.bf16.mxu0 %v694
        %1404 = vmatmul.mubr.bf16.gmra.mrb[0].mxu0 %v693
        %v1405 = vpop.f32.mrb[0].mxu0
        %v1406 = vadd.f32 0.0, %v1405
        %v1407 = vpop.f32.mrb[0].mxu0
        %v1408 = vadd.f32 0.0, %v1407
        %v1409 = vpop.f32.mrb[0].mxu0
        %v1410 = vadd.f32 0.0, %v1409
        %v1411 = vpop.f32.mrb[0].mxu0
        %v1412 = vadd.f32 0.0, %v1411
        %1413 = vmatprep.mubr.bf16.mxu0 %v696
        %1414 = vmatmul.mubr.bf16.gmra.mrb[0].mxu0 %v695
        %v1415 = vpop.f32.mrb[0].mxu0
        %v1416 = vpop.f32.mrb[0].mxu0
        %v1417 = vpop.f32.mrb[0].mxu0
        %v1418 = vpop.f32.mrb[0].mxu0
        %1419 = vdwg.mxu0
        %1420 = vmatprep.subr.bf16.mxu0 %v1024
        %1421 = vmatpush1.bf16.msra.mxu0 %v1023
        %1422 = vmatprep.subr.bf16.mxu0 %v1030
        %1423 = vmatpush1.bf16.msra.mxu0 %v1029
        %1424 = vmatprep.subr.bf16.mxu0 %v1036
        %1425 = vmatpush1.bf16.msra.mxu0 %v1035
        %1426 = vmatprep.subr.bf16.mxu0 %v1042
        %1427 = vmatpush1.bf16.msra.mxu0 %v1041
        %1428 = vmatprep.subr.bf16.mxu0 %v1048
        %1429 = vmatpush1.bf16.msra.mxu0 %v1047
        %1430 = vmatprep.subr.bf16.mxu0 %v1054
        %1431 = vmatpush1.bf16.msra.mxu0 %v1053
        %1432 = vmatprep.subr.bf16.mxu0 %v1060
        %1433 = vmatpush1.bf16.msra.mxu0 %v1059
        %1434 = vmatprep.subr.bf16.mxu0 %v1066
        %1435 = vmatpush1.bf16.msra.mxu0 %v1065
        %1436 = vmatprep.subr.bf16.mxu0 %v1072
        %1437 = vmatpush1.bf16.msra.mxu0 %v1071
        %1438 = vmatprep.subr.bf16.mxu0 %v1078
        %1439 = vmatpush1.bf16.msra.mxu0 %v1077
        %1440 = vmatprep.subr.bf16.mxu0 %v1084
        %1441 = vmatpush1.bf16.msra.mxu0 %v1083
        %1442 = vmatprep.subr.bf16.mxu0 %v1090
        %1443 = vmatpush1.bf16.msra.mxu0 %v1089
        %1444 = vmatprep.subr.bf16.mxu0 %v1096
        %1445 = vmatpush1.bf16.msra.mxu0 %v1095
        %1446 = vmatprep.subr.bf16.mxu0 %v1102
        %1447 = vmatpush1.bf16.msra.mxu0 %v1101
        %1448 = vmatprep.subr.bf16.mxu0 %v1108
        %1449 = vmatpush1.bf16.msra.mxu0 %v1107
        %1450 = vmatprep.subr.bf16.mxu0 %v1114
        %1451 = vmatpush1.bf16.msra.mxu0 %v1113
        %1452 = vmatprep.mubr.bf16.mxu0 %v662
        %1453 = vmatmul.mubr.bf16.gmra.mrb[0].mxu0 %v661
        %v1454 = vpop.f32.mrb[0].mxu0
        %v1455 = vpop.f32.mrb[0].mxu0
        %v1456 = vpop.f32.mrb[0].mxu0
        %v1457 = vpop.f32.mrb[0].mxu0
        %1458 = vmatprep.mubr.bf16.mxu0 %v664
        %1459 = vmatmul.mubr.bf16.gmra.mrb[0].mxu0 %v663
        %v1460 = vpop.f32.mrb[0].mxu0
        %v1461 = vadd.f32 0.0, %v1460
        %v1462 = vpop.f32.mrb[0].mxu0
        %v1463 = vadd.f32 0.0, %v1462
        %v1464 = vpop.f32.mrb[0].mxu0
        %v1465 = vadd.f32 0.0, %v1464
        %v1466 = vpop.f32.mrb[0].mxu0
        %v1467 = vadd.f32 0.0, %v1466
        %1468 = vmatprep.mubr.bf16.mxu0 %v666
        %1469 = vmatmul.mubr.bf16.gmra.mrb[0].mxu0 %v665
        %v1470 = vpop.f32.mrb[0].mxu0
        %v1471 = vadd.f32 0.0, %v1470
        %v1472 = vpop.f32.mrb[0].mxu0
        %v1473 = vadd.f32 0.0, %v1472
        %v1474 = vpop.f32.mrb[0].mxu0
        %v1475 = vadd.f32 0.0, %v1474
        %v1476 = vpop.f32.mrb[0].mxu0
        %v1477 = vadd.f32 0.0, %v1476
        %1478 = vmatprep.mubr.bf16.mxu0 %v668
        %1479 = vmatmul.mubr.bf16.gmra.mrb[0].mxu0 %v667
        %v1480 = vpop.f32.mrb[0].mxu0
        %v1481 = vadd.f32 0.0, %v1480
        %v1482 = vpop.f32.mrb[0].mxu0
        %v1483 = vadd.f32 0.0, %v1482
        %v1484 = vpop.f32.mrb[0].mxu0
        %v1485 = vadd.f32 0.0, %v1484
        %v1486 = vpop.f32.mrb[0].mxu0
        %v1487 = vadd.f32 0.0, %v1486
        %1488 = vmatprep.mubr.bf16.mxu0 %v670
        %1489 = vmatmul.mubr.bf16.gmra.mrb[0].mxu0 %v669
        %v1490 = vpop.f32.mrb[0].mxu0
        %v1491 = vadd.f32 0.0, %v1490
        %v1492 = vpop.f32.mrb[0].mxu0
        %v1493 = vadd.f32 0.0, %v1492
        %v1494 = vpop.f32.mrb[0].mxu0
        %v1495 = vadd.f32 0.0, %v1494
        %v1496 = vpop.f32.mrb[0].mxu0
        %v1497 = vadd.f32 0.0, %v1496
        %1498 = vmatprep.mubr.bf16.mxu0 %v672
        %1499 = vmatmul.mubr.bf16.gmra.mrb[0].mxu0 %v671
        %v1500 = vpop.f32.mrb[0].mxu0
        %v1501 = vadd.f32 0.0, %v1500
        %v1502 = vpop.f32.mrb[0].mxu0
        %v1503 = vadd.f32 0.0, %v1502
        %v1504 = vpop.f32.mrb[0].mxu0
        %v1505 = vadd.f32 0.0, %v1504
        %v1506 = vpop.f32.mrb[0].mxu0
        %v1507 = vadd.f32 0.0, %v1506
        %1508 = vmatprep.mubr.bf16.mxu0 %v674
        %1509 = vmatmul.mubr.bf16.gmra.mrb[0].mxu0 %v673
        %v1510 = vpop.f32.mrb[0].mxu0
        %v1511 = vadd.f32 0.0, %v1510
        %v1512 = vpop.f32.mrb[0].mxu0
        %v1513 = vadd.f32 0.0, %v1512
        %v1514 = vpop.f32.mrb[0].mxu0
        %v1515 = vadd.f32 0.0, %v1514
        %v1516 = vpop.f32.mrb[0].mxu0
        %v1517 = vadd.f32 0.0, %v1516
        %1518 = vmatprep.mubr.bf16.mxu0 %v676
        %1519 = vmatmul.mubr.bf16.gmra.mrb[0].mxu0 %v675
        %v1520 = vpop.f32.mrb[0].mxu0
        %v1521 = vadd.f32 0.0, %v1520
        %v1522 = vpop.f32.mrb[0].mxu0
        %v1523 = vadd.f32 0.0, %v1522
        %v1524 = vpop.f32.mrb[0].mxu0
        %v1525 = vadd.f32 0.0, %v1524
        %v1526 = vpop.f32.mrb[0].mxu0
        %v1527 = vadd.f32 0.0, %v1526
        %1528 = vmatprep.mubr.bf16.mxu0 %v678
        %1529 = vmatmul.mubr.bf16.gmra.mrb[0].mxu0 %v677
        %v1530 = vpop.f32.mrb[0].mxu0
        %v1531 = vadd.f32 0.0, %v1530
        %v1532 = vpop.f32.mrb[0].mxu0
        %v1533 = vadd.f32 0.0, %v1532
        %v1534 = vpop.f32.mrb[0].mxu0
        %v1535 = vadd.f32 0.0, %v1534
        %v1536 = vpop.f32.mrb[0].mxu0
        %v1537 = vadd.f32 0.0, %v1536
        %1538 = vmatprep.mubr.bf16.mxu0 %v680
        %1539 = vmatmul.mubr.bf16.gmra.mrb[0].mxu0 %v679
        %v1540 = vpop.f32.mrb[0].mxu0
        %v1541 = vadd.f32 0.0, %v1540
        %v1542 = vpop.f32.mrb[0].mxu0
        %v1543 = vadd.f32 0.0, %v1542
        %v1544 = vpop.f32.mrb[0].mxu0
        %v1545 = vadd.f32 0.0, %v1544
        %v1546 = vpop.f32.mrb[0].mxu0
        %v1547 = vadd.f32 0.0, %v1546
        %1548 = vmatprep.mubr.bf16.mxu0 %v682
        %1549 = vmatmul.mubr.bf16.gmra.mrb[0].mxu0 %v681
        %v1550 = vpop.f32.mrb[0].mxu0
        %v1551 = vadd.f32 0.0, %v1550
        %v1552 = vpop.f32.mrb[0].mxu0
        %v1553 = vadd.f32 0.0, %v1552
        %v1554 = vpop.f32.mrb[0].mxu0
        %v1555 = vadd.f32 0.0, %v1554
        %v1556 = vpop.f32.mrb[0].mxu0
        %v1557 = vadd.f32 0.0, %v1556
        %1558 = vmatprep.mubr.bf16.mxu0 %v684
        %1559 = vmatmul.mubr.bf16.gmra.mrb[0].mxu0 %v683
        %v1560 = vpop.f32.mrb[0].mxu0
        %v1561 = vadd.f32 0.0, %v1560
        %v1562 = vpop.f32.mrb[0].mxu0
        %v1563 = vadd.f32 0.0, %v1562
        %v1564 = vpop.f32.mrb[0].mxu0
        %v1565 = vadd.f32 0.0, %v1564
        %v1566 = vpop.f32.mrb[0].mxu0
        %v1567 = vadd.f32 0.0, %v1566
        %1568 = vmatprep.mubr.bf16.mxu0 %v686
        %1569 = vmatmul.mubr.bf16.gmra.mrb[0].mxu0 %v685
        %v1570 = vpop.f32.mrb[0].mxu0
        %v1571 = vadd.f32 0.0, %v1570
        %v1572 = vpop.f32.mrb[0].mxu0
        %v1573 = vadd.f32 0.0, %v1572
        %v1574 = vpop.f32.mrb[0].mxu0
        %v1575 = vadd.f32 0.0, %v1574
        %v1576 = vpop.f32.mrb[0].mxu0
        %v1577 = vadd.f32 0.0, %v1576
        %1578 = vmatprep.mubr.bf16.mxu0 %v688
        %1579 = vmatmul.mubr.bf16.gmra.mrb[0].mxu0 %v687
        %v1580 = vpop.f32.mrb[0].mxu0
        %v1581 = vadd.f32 0.0, %v1580
        %v1582 = vpop.f32.mrb[0].mxu0
        %v1583 = vadd.f32 0.0, %v1582
        %v1584 = vpop.f32.mrb[0].mxu0
        %v1585 = vadd.f32 0.0, %v1584
        %v1586 = vpop.f32.mrb[0].mxu0
        %v1587 = vadd.f32 0.0, %v1586
        %1588 = vmatprep.mubr.bf16.mxu0 %v690
        %1589 = vmatmul.mubr.bf16.gmra.mrb[0].mxu0 %v689
        %v1590 = vpop.f32.mrb[0].mxu0
        %v1591 = vadd.f32 0.0, %v1590
        %v1592 = vpop.f32.mrb[0].mxu0
        %v1593 = vadd.f32 0.0, %v1592
        %v1594 = vpop.f32.mrb[0].mxu0
        %v1595 = vadd.f32 0.0, %v1594
        %v1596 = vpop.f32.mrb[0].mxu0
        %v1597 = vadd.f32 0.0, %v1596
        %1598 = vmatprep.mubr.bf16.mxu0 %v692
        %1599 = vmatmul.mubr.bf16.gmra.mrb[0].mxu0 %v691
        %v1600 = vpop.f32.mrb[0].mxu0
        %v1601 = vadd.f32 0.0, %v1600
        %v1602 = vpop.f32.mrb[0].mxu0
        %v1603 = vadd.f32 0.0, %v1602
        %v1604 = vpop.f32.mrb[0].mxu0
        %v1605 = vadd.f32 0.0, %v1604
        %v1606 = vpop.f32.mrb[0].mxu0
        %v1607 = vadd.f32 0.0, %v1606
        %1608 = vmatprep.mubr.bf16.mxu0 %v694
        %1609 = vmatmul.mubr.bf16.gmra.mrb[0].mxu0 %v693
        %v1610 = vpop.f32.mrb[0].mxu0
        %v1611 = vadd.f32 0.0, %v1610
        %v1612 = vpop.f32.mrb[0].mxu0
        %v1613 = vadd.f32 0.0, %v1612
        %v1614 = vpop.f32.mrb[0].mxu0
        %v1615 = vadd.f32 0.0, %v1614
        %v1616 = vpop.f32.mrb[0].mxu0
        %v1617 = vadd.f32 0.0, %v1616
        %1618 = vmatprep.mubr.bf16.mxu0 %v696
        %1619 = vmatmul.mubr.bf16.gmra.mrb[0].mxu0 %v695
        %v1620 = vpop.f32.mrb[0].mxu0
        %v1621 = vpop.f32.mrb[0].mxu0
        %v1622 = vpop.f32.mrb[0].mxu0
        %v1623 = vpop.f32.mrb[0].mxu0
        %1624 = vdwg.mxu0
        %1625 = vmatprep.subr.bf16.mxu0 %v1026
        %1626 = vmatpush1.bf16.msra.mxu0 %v1025
        %1627 = vmatprep.subr.bf16.mxu0 %v1032
        %1628 = vmatpush1.bf16.msra.mxu0 %v1031
        %1629 = vmatprep.subr.bf16.mxu0 %v1038
        %1630 = vmatpush1.bf16.msra.mxu0 %v1037
        %1631 = vmatprep.subr.bf16.mxu0 %v1044
        %1632 = vmatpush1.bf16.msra.mxu0 %v1043
        %1633 = vmatprep.subr.bf16.mxu0 %v1050
        %1634 = vmatpush1.bf16.msra.mxu0 %v1049
        %1635 = vmatprep.subr.bf16.mxu0 %v1056
        %1636 = vmatpush1.bf16.msra.mxu0 %v1055
        %1637 = vmatprep.subr.bf16.mxu0 %v1062
        %1638 = vmatpush1.bf16.msra.mxu0 %v1061
        %1639 = vmatprep.subr.bf16.mxu0 %v1068
        %1640 = vmatpush1.bf16.msra.mxu0 %v1067
        %1641 = vmatprep.subr.bf16.mxu0 %v1074
        %1642 = vmatpush1.bf16.msra.mxu0 %v1073
        %1643 = vmatprep.subr.bf16.mxu0 %v1080
        %1644 = vmatpush1.bf16.msra.mxu0 %v1079
        %1645 = vmatprep.subr.bf16.mxu0 %v1086
        %1646 = vmatpush1.bf16.msra.mxu0 %v1085
        %1647 = vmatprep.subr.bf16.mxu0 %v1092
        %1648 = vmatpush1.bf16.msra.mxu0 %v1091
        %1649 = vmatprep.subr.bf16.mxu0 %v1098
        %1650 = vmatpush1.bf16.msra.mxu0 %v1097
        %1651 = vmatprep.subr.bf16.mxu0 %v1104
        %1652 = vmatpush1.bf16.msra.mxu0 %v1103
        %1653 = vmatprep.subr.bf16.mxu0 %v1110
        %1654 = vmatpush1.bf16.msra.mxu0 %v1109
        %1655 = vmatprep.subr.bf16.mxu0 %v1116
        %1656 = vmatpush1.bf16.msra.mxu0 %v1115
        %1657 = vmatprep.mubr.bf16.mxu0 %v662
        %1658 = vmatmul.mubr.bf16.gmra.mrb[0].mxu0 %v661
        %v1659 = vpop.f32.mrb[0].mxu0
        %v1660 = vpop.f32.mrb[0].mxu0
        %v1661 = vpop.f32.mrb[0].mxu0
        %v1662 = vpop.f32.mrb[0].mxu0
        %1663 = vmatprep.mubr.bf16.mxu0 %v664
        %1664 = vmatmul.mubr.bf16.gmra.mrb[0].mxu0 %v663
        %v1665 = vpop.f32.mrb[0].mxu0
        %v1666 = vadd.f32 0.0, %v1665
        %v1667 = vpop.f32.mrb[0].mxu0
        %v1668 = vadd.f32 0.0, %v1667
        %v1669 = vpop.f32.mrb[0].mxu0
        %v1670 = vadd.f32 0.0, %v1669
        %v1671 = vpop.f32.mrb[0].mxu0
        %v1672 = vadd.f32 0.0, %v1671
        %1673 = vmatprep.mubr.bf16.mxu0 %v666
        %1674 = vmatmul.mubr.bf16.gmra.mrb[0].mxu0 %v665
        %v1675 = vpop.f32.mrb[0].mxu0
        %v1676 = vadd.f32 0.0, %v1675
        %v1677 = vpop.f32.mrb[0].mxu0
        %v1678 = vadd.f32 0.0, %v1677
        %v1679 = vpop.f32.mrb[0].mxu0
        %v1680 = vadd.f32 0.0, %v1679
        %v1681 = vpop.f32.mrb[0].mxu0
        %v1682 = vadd.f32 0.0, %v1681
        %1683 = vmatprep.mubr.bf16.mxu0 %v668
        %1684 = vmatmul.mubr.bf16.gmra.mrb[0].mxu0 %v667
        %v1685 = vpop.f32.mrb[0].mxu0
        %v1686 = vadd.f32 0.0, %v1685
        %v1687 = vpop.f32.mrb[0].mxu0
        %v1688 = vadd.f32 0.0, %v1687
        %v1689 = vpop.f32.mrb[0].mxu0
        %v1690 = vadd.f32 0.0, %v1689
        %v1691 = vpop.f32.mrb[0].mxu0
        %v1692 = vadd.f32 0.0, %v1691
        %1693 = vmatprep.mubr.bf16.mxu0 %v670
        %1694 = vmatmul.mubr.bf16.gmra.mrb[0].mxu0 %v669
        %v1695 = vpop.f32.mrb[0].mxu0
        %v1696 = vadd.f32 0.0, %v1695
        %v1697 = vpop.f32.mrb[0].mxu0
        %v1698 = vadd.f32 0.0, %v1697
        %v1699 = vpop.f32.mrb[0].mxu0
        %v1700 = vadd.f32 0.0, %v1699
        %v1701 = vpop.f32.mrb[0].mxu0
        %v1702 = vadd.f32 0.0, %v1701
        %1703 = vmatprep.mubr.bf16.mxu0 %v672
        %1704 = vmatmul.mubr.bf16.gmra.mrb[0].mxu0 %v671
        %v1705 = vpop.f32.mrb[0].mxu0
        %v1706 = vadd.f32 0.0, %v1705
        %v1707 = vpop.f32.mrb[0].mxu0
        %v1708 = vadd.f32 0.0, %v1707
        %v1709 = vpop.f32.mrb[0].mxu0
        %v1710 = vadd.f32 0.0, %v1709
        %v1711 = vpop.f32.mrb[0].mxu0
        %v1712 = vadd.f32 0.0, %v1711
        %1713 = vmatprep.mubr.bf16.mxu0 %v674
        %1714 = vmatmul.mubr.bf16.gmra.mrb[0].mxu0 %v673
        %v1715 = vpop.f32.mrb[0].mxu0
        %v1716 = vadd.f32 0.0, %v1715
        %v1717 = vpop.f32.mrb[0].mxu0
        %v1718 = vadd.f32 0.0, %v1717
        %v1719 = vpop.f32.mrb[0].mxu0
        %v1720 = vadd.f32 0.0, %v1719
        %v1721 = vpop.f32.mrb[0].mxu0
        %v1722 = vadd.f32 0.0, %v1721
        %1723 = vmatprep.mubr.bf16.mxu0 %v676
        %1724 = vmatmul.mubr.bf16.gmra.mrb[0].mxu0 %v675
        %v1725 = vpop.f32.mrb[0].mxu0
        %v1726 = vadd.f32 0.0, %v1725
        %v1727 = vpop.f32.mrb[0].mxu0
        %v1728 = vadd.f32 0.0, %v1727
        %v1729 = vpop.f32.mrb[0].mxu0
        %v1730 = vadd.f32 0.0, %v1729
        %v1731 = vpop.f32.mrb[0].mxu0
        %v1732 = vadd.f32 0.0, %v1731
        %1733 = vmatprep.mubr.bf16.mxu0 %v678
        %1734 = vmatmul.mubr.bf16.gmra.mrb[0].mxu0 %v677
        %v1735 = vpop.f32.mrb[0].mxu0
        %v1736 = vadd.f32 0.0, %v1735
        %v1737 = vpop.f32.mrb[0].mxu0
        %v1738 = vadd.f32 0.0, %v1737
        %v1739 = vpop.f32.mrb[0].mxu0
        %v1740 = vadd.f32 0.0, %v1739
        %v1741 = vpop.f32.mrb[0].mxu0
        %v1742 = vadd.f32 0.0, %v1741
        %1743 = vmatprep.mubr.bf16.mxu0 %v680
        %1744 = vmatmul.mubr.bf16.gmra.mrb[0].mxu0 %v679
        %v1745 = vpop.f32.mrb[0].mxu0
        %v1746 = vadd.f32 0.0, %v1745
        %v1747 = vpop.f32.mrb[0].mxu0
        %v1748 = vadd.f32 0.0, %v1747
        %v1749 = vpop.f32.mrb[0].mxu0
        %v1750 = vadd.f32 0.0, %v1749
        %v1751 = vpop.f32.mrb[0].mxu0
        %v1752 = vadd.f32 0.0, %v1751
        %1753 = vmatprep.mubr.bf16.mxu0 %v682
        %1754 = vmatmul.mubr.bf16.gmra.mrb[0].mxu0 %v681
        %v1755 = vpop.f32.mrb[0].mxu0
        %v1756 = vadd.f32 0.0, %v1755
        %v1757 = vpop.f32.mrb[0].mxu0
        %v1758 = vadd.f32 0.0, %v1757
        %v1759 = vpop.f32.mrb[0].mxu0
        %v1760 = vadd.f32 0.0, %v1759
        %v1761 = vpop.f32.mrb[0].mxu0
        %v1762 = vadd.f32 0.0, %v1761
        %1763 = vmatprep.mubr.bf16.mxu0 %v684
        %1764 = vmatmul.mubr.bf16.gmra.mrb[0].mxu0 %v683
        %v1765 = vpop.f32.mrb[0].mxu0
        %v1766 = vadd.f32 0.0, %v1765
        %v1767 = vpop.f32.mrb[0].mxu0
        %v1768 = vadd.f32 0.0, %v1767
        %v1769 = vpop.f32.mrb[0].mxu0
        %v1770 = vadd.f32 0.0, %v1769
        %v1771 = vpop.f32.mrb[0].mxu0
        %v1772 = vadd.f32 0.0, %v1771
        %1773 = vmatprep.mubr.bf16.mxu0 %v686
        %1774 = vmatmul.mubr.bf16.gmra.mrb[0].mxu0 %v685
        %v1775 = vpop.f32.mrb[0].mxu0
        %v1776 = vadd.f32 0.0, %v1775
        %v1777 = vpop.f32.mrb[0].mxu0
        %v1778 = vadd.f32 0.0, %v1777
        %v1779 = vpop.f32.mrb[0].mxu0
        %v1780 = vadd.f32 0.0, %v1779
        %v1781 = vpop.f32.mrb[0].mxu0
        %v1782 = vadd.f32 0.0, %v1781
        %1783 = vmatprep.mubr.bf16.mxu0 %v688
        %1784 = vmatmul.mubr.bf16.gmra.mrb[0].mxu0 %v687
        %v1785 = vpop.f32.mrb[0].mxu0
        %v1786 = vadd.f32 0.0, %v1785
        %v1787 = vpop.f32.mrb[0].mxu0
        %v1788 = vadd.f32 0.0, %v1787
        %v1789 = vpop.f32.mrb[0].mxu0
        %v1790 = vadd.f32 0.0, %v1789
        %v1791 = vpop.f32.mrb[0].mxu0
        %v1792 = vadd.f32 0.0, %v1791
        %1793 = vmatprep.mubr.bf16.mxu0 %v690
        %1794 = vmatmul.mubr.bf16.gmra.mrb[0].mxu0 %v689
        %v1795 = vpop.f32.mrb[0].mxu0
        %v1796 = vadd.f32 0.0, %v1795
        %v1797 = vpop.f32.mrb[0].mxu0
        %v1798 = vadd.f32 0.0, %v1797
        %v1799 = vpop.f32.mrb[0].mxu0
        %v1800 = vadd.f32 0.0, %v1799
        %v1801 = vpop.f32.mrb[0].mxu0
        %v1802 = vadd.f32 0.0, %v1801
        %1803 = vmatprep.mubr.bf16.mxu0 %v692
        %1804 = vmatmul.mubr.bf16.gmra.mrb[0].mxu0 %v691
        %v1805 = vpop.f32.mrb[0].mxu0
        %v1806 = vadd.f32 0.0, %v1805
        %v1807 = vpop.f32.mrb[0].mxu0
        %v1808 = vadd.f32 0.0, %v1807
        %v1809 = vpop.f32.mrb[0].mxu0
        %v1810 = vadd.f32 0.0, %v1809
        %v1811 = vpop.f32.mrb[0].mxu0
        %v1812 = vadd.f32 0.0, %v1811
        %1813 = vmatprep.mubr.bf16.mxu0 %v694
        %1814 = vmatmul.mubr.bf16.gmra.mrb[0].mxu0 %v693
        %v1815 = vpop.f32.mrb[0].mxu0
        %v1816 = vadd.f32 0.0, %v1815
        %v1817 = vpop.f32.mrb[0].mxu0
        %v1818 = vadd.f32 0.0, %v1817
        %v1819 = vpop.f32.mrb[0].mxu0
        %v1820 = vadd.f32 0.0, %v1819
        %v1821 = vpop.f32.mrb[0].mxu0
        %v1822 = vadd.f32 0.0, %v1821
        %1823 = vmatprep.mubr.bf16.mxu0 %v696
        %1824 = vmatmul.mubr.bf16.gmra.mrb[0].mxu0 %v695
        %v1825 = vpop.f32.mrb[0].mxu0
        %v1826 = vadd.f32 0.0, %v1825
        %v1827 = vpop.f32.mrb[0].mxu0
        %v1828 = vadd.f32 0.0, %v1827
        %v1829 = vpop.f32.mrb[0].mxu0
        %v1830 = vpop.f32.mrb[0].mxu0
        %1831 = vdwg.mxu0
        %v1834 = vunpack.c.l.b16 %v326
        %v1835 = vunpack.c.h.b16 %v326
        %v1836 = vunpack.c.l.b16 %v327
        %v1837 = vunpack.c.h.b16 %v327
        %v1838 = vpack.c.b16 %v1836, %v1834
        %v1839 = vpack.c.b16 %v1837, %v1835
        %v1840 = vpack.c.b16 %v655, %v655
        %v1841 = vpack.c.b16 %v656, %v656
        %v1942 = vunpack.c.l.b16 %v361
        %v1943 = vunpack.c.h.b16 %v361
        %v1944 = vunpack.c.l.b16 %v362
        %v1945 = vunpack.c.h.b16 %v362
        %v1946 = vunpack.c.l.b16 %v363
        %v1947 = vunpack.c.h.b16 %v363
        %v1948 = vunpack.c.l.b16 %v364
        %v1949 = vunpack.c.h.b16 %v364
        %v1950 = vunpack.c.l.b16 %v365
        %v1951 = vunpack.c.h.b16 %v365
        %v1952 = vunpack.c.l.b16 %v366
        %v1953 = vunpack.c.h.b16 %v366
        %v1954 = vunpack.c.l.b16 %v367
        %v1955 = vunpack.c.h.b16 %v367
        %v1956 = vunpack.c.l.b16 %v368
        %v1957 = vunpack.c.h.b16 %v368
        %v1958 = vunpack.c.l.b16 %v369
        %v1959 = vunpack.c.h.b16 %v369
        %v1960 = vunpack.c.l.b16 %v370
        %v1961 = vunpack.c.h.b16 %v370
        %v1962 = vunpack.c.l.b16 %v371
        %v1963 = vunpack.c.h.b16 %v371
        %v1964 = vunpack.c.l.b16 %v372
        %v1965 = vunpack.c.h.b16 %v372
        %v1966 = vunpack.c.l.b16 %v373
        %v1967 = vunpack.c.h.b16 %v373
        %v1968 = vunpack.c.l.b16 %v374
        %v1969 = vunpack.c.h.b16 %v374
        %v1970 = vunpack.c.l.b16 %v375
        %v1971 = vunpack.c.h.b16 %v375
        %v1972 = vunpack.c.l.b16 %v376
        %v1973 = vunpack.c.h.b16 %v376
        %v1974 = vunpack.c.l.b16 %v377
        %v1975 = vunpack.c.h.b16 %v377
        %v1976 = vunpack.c.l.b16 %v378
        %v1977 = vunpack.c.h.b16 %v378
        %v1978 = vunpack.c.l.b16 %v379
        %v1979 = vunpack.c.h.b16 %v379
        %v1980 = vunpack.c.l.b16 %v380
        %v1981 = vunpack.c.h.b16 %v380
        %v1982 = vunpack.c.l.b16 %v381
        %v1983 = vunpack.c.h.b16 %v381
        %v1984 = vunpack.c.l.b16 %v382
        %v1985 = vunpack.c.h.b16 %v382
        %v1986 = vunpack.c.l.b16 %v383
        %v1987 = vunpack.c.h.b16 %v383
        %v1988 = vunpack.c.l.b16 %v384
        %v1989 = vunpack.c.h.b16 %v384
        %v1990 = vunpack.c.l.b16 %v385
        %v1991 = vunpack.c.h.b16 %v385
        %v1992 = vunpack.c.l.b16 %v386
        %v1993 = vunpack.c.h.b16 %v386
        %v1994 = vunpack.c.l.b16 %v387
        %v1995 = vunpack.c.h.b16 %v387
        %v1996 = vunpack.c.l.b16 %v388
        %v1997 = vunpack.c.h.b16 %v388
        %v1998 = vunpack.c.l.b16 %v389
        %v1999 = vunpack.c.h.b16 %v389
        %v2000 = vunpack.c.l.b16 %v390
        %v2001 = vunpack.c.h.b16 %v390
        %v2002 = vunpack.c.l.b16 %v391
        %v2003 = vunpack.c.h.b16 %v391
        %v2004 = vunpack.c.l.b16 %v392
        %v2005 = vunpack.c.h.b16 %v392
        %v2006 = vunpack.c.l.b16 %v393
        %v2007 = vunpack.c.h.b16 %v393
        %v2008 = vunpack.c.l.b16 %v394
        %v2009 = vunpack.c.h.b16 %v394
        %v2010 = vunpack.c.l.b16 %v395
        %v2011 = vunpack.c.h.b16 %v395
        %v2012 = vunpack.c.l.b16 %v396
        %v2013 = vunpack.c.h.b16 %v396
        %v2014 = vunpack.c.l.b16 %v397
        %v2015 = vunpack.c.h.b16 %v397
        %v2016 = vunpack.c.l.b16 %v398
        %v2017 = vunpack.c.h.b16 %v398
        %v2018 = vunpack.c.l.b16 %v399
        %v2019 = vunpack.c.h.b16 %v399
        %v2020 = vunpack.c.l.b16 %v400
        %v2021 = vunpack.c.h.b16 %v400
        %v2022 = vunpack.c.l.b16 %v401
        %v2023 = vunpack.c.h.b16 %v401
        %v2024 = vunpack.c.l.b16 %v402
        %v2025 = vunpack.c.h.b16 %v402
        %v2026 = vunpack.c.l.b16 %v403
        %v2027 = vunpack.c.h.b16 %v403
        %v2028 = vunpack.c.l.b16 %v404
        %v2029 = vunpack.c.h.b16 %v404
        %v2030 = vunpack.c.l.b16 %v405
        %v2031 = vunpack.c.h.b16 %v405
        %v2032 = vunpack.c.l.b16 %v406
        %v2033 = vunpack.c.h.b16 %v406
        %v2034 = vunpack.c.l.b16 %v407
        %v2035 = vunpack.c.h.b16 %v407
        %v2036 = vunpack.c.l.b16 %v408
        %v2037 = vunpack.c.h.b16 %v408
        %v2038 = vunpack.c.l.b16 %v409
        %v2039 = vunpack.c.h.b16 %v409
        %v2040 = vunpack.c.l.b16 %v410
        %v2041 = vunpack.c.h.b16 %v410
        %v2042 = vunpack.c.l.b16 %v411
        %v2043 = vunpack.c.h.b16 %v411
        %v2044 = vunpack.c.l.b16 %v412
        %v2045 = vunpack.c.h.b16 %v412
        %v2046 = vunpack.c.l.b16 %v413
        %v2047 = vunpack.c.h.b16 %v413
        %v2048 = vunpack.c.l.b16 %v414
        %v2049 = vunpack.c.h.b16 %v414
        %v2050 = vunpack.c.l.b16 %v415
        %v2051 = vunpack.c.h.b16 %v415
        %v2052 = vunpack.c.l.b16 %v416
        %v2053 = vunpack.c.h.b16 %v416
        %v2054 = vunpack.c.l.b16 %v417
        %v2055 = vunpack.c.h.b16 %v417
        %v2056 = vunpack.c.l.b16 %v418
        %v2057 = vunpack.c.h.b16 %v418
        %v2058 = vunpack.c.l.b16 %v419
        %v2059 = vunpack.c.h.b16 %v419
        %v2060 = vunpack.c.l.b16 %v420
        %v2061 = vunpack.c.h.b16 %v420
        %v2062 = vunpack.c.l.b16 %v421
        %v2063 = vunpack.c.h.b16 %v421
        %v2064 = vunpack.c.l.b16 %v422
        %v2065 = vunpack.c.h.b16 %v422
        %v2066 = vunpack.c.l.b16 %v423
        %v2067 = vunpack.c.h.b16 %v423
        %v2068 = vunpack.c.l.b16 %v424
        %v2069 = vunpack.c.h.b16 %v424
        %v2070 = vunpack.c.l.b16 %v425
        %v2071 = vunpack.c.h.b16 %v425
        %v2072 = vunpack.c.l.b16 %v426
        %v2073 = vunpack.c.h.b16 %v426
        %v2074 = vunpack.c.l.b16 %v427
        %v2075 = vunpack.c.h.b16 %v427
        %v2076 = vunpack.c.l.b16 %v428
        %v2077 = vunpack.c.h.b16 %v428
        %v2078 = vunpack.c.l.b16 %v429
        %v2079 = vunpack.c.h.b16 %v429
        %v2080 = vunpack.c.l.b16 %v430
        %v2081 = vunpack.c.h.b16 %v430
        %v2082 = vunpack.c.l.b16 %v431
        %v2083 = vunpack.c.h.b16 %v431
        %v2084 = vunpack.c.l.b16 %v432
        %v2085 = vunpack.c.h.b16 %v432
        %v2086 = vunpack.c.l.b16 %v433
        %v2087 = vunpack.c.h.b16 %v433
        %v2088 = vunpack.c.l.b16 %v434
        %v2089 = vunpack.c.h.b16 %v434
        %v2090 = vunpack.c.l.b16 %v435
        %v2091 = vunpack.c.h.b16 %v435
        %v2092 = vunpack.c.l.b16 %v436
        %v2093 = vunpack.c.h.b16 %v436
        %v2094 = vunpack.c.l.b16 %v437
        %v2095 = vunpack.c.h.b16 %v437
        %v2096 = vunpack.c.l.b16 %v438
        %v2097 = vunpack.c.h.b16 %v438
        %v2098 = vunpack.c.l.b16 %v439
        %v2099 = vunpack.c.h.b16 %v439
        %v2100 = vunpack.c.l.b16 %v440
        %v2101 = vunpack.c.h.b16 %v440
        %v2102 = vunpack.c.l.b16 %v441
        %v2103 = vunpack.c.h.b16 %v441
        %v2104 = vunpack.c.l.b16 %v442
        %v2105 = vunpack.c.h.b16 %v442
        %v2106 = vunpack.c.l.b16 %v443
        %v2107 = vunpack.c.h.b16 %v443
        %v2108 = vunpack.c.l.b16 %v444
        %v2109 = vunpack.c.h.b16 %v444
        %v2110 = vunpack.c.l.b16 %v445
        %v2111 = vunpack.c.h.b16 %v445
        %v2112 = vunpack.c.l.b16 %v446
        %v2113 = vunpack.c.h.b16 %v446
        %v2114 = vunpack.c.l.b16 %v447
        %v2115 = vunpack.c.h.b16 %v447
        %v2116 = vunpack.c.l.b16 %v448
        %v2117 = vunpack.c.h.b16 %v448
        %v2118 = vunpack.c.l.b16 %v449
        %v2119 = vunpack.c.h.b16 %v449
        %v2120 = vunpack.c.l.b16 %v450
        %v2121 = vunpack.c.h.b16 %v450
        %v2122 = vunpack.c.l.b16 %v451
        %v2123 = vunpack.c.h.b16 %v451
        %v2124 = vunpack.c.l.b16 %v452
        %v2125 = vunpack.c.h.b16 %v452
        %v2126 = vunpack.c.l.b16 %v453
        %v2127 = vunpack.c.h.b16 %v453
        %v2128 = vunpack.c.l.b16 %v454
        %v2129 = vunpack.c.h.b16 %v454
        %v2130 = vunpack.c.l.b16 %v455
        %v2131 = vunpack.c.h.b16 %v455
        %v2132 = vunpack.c.l.b16 %v456
        %v2133 = vunpack.c.h.b16 %v456
        %v2134 = vpack.c.b16 %v1948, %v1942
        %v2135 = vpack.c.b16 %v1949, %v1943
        %v2136 = vpack.c.b16 %v1950, %v1944
        %v2137 = vpack.c.b16 %v1951, %v1945
        %v2138 = vpack.c.b16 %v1952, %v1946
        %v2139 = vpack.c.b16 %v1953, %v1947
        %v2140 = vpack.c.b16 %v1960, %v1954
        %v2141 = vpack.c.b16 %v1961, %v1955
        %v2142 = vpack.c.b16 %v1962, %v1956
        %v2143 = vpack.c.b16 %v1963, %v1957
        %v2144 = vpack.c.b16 %v1964, %v1958
        %v2145 = vpack.c.b16 %v1965, %v1959
        %v2146 = vpack.c.b16 %v1972, %v1966
        %v2147 = vpack.c.b16 %v1973, %v1967
        %v2148 = vpack.c.b16 %v1974, %v1968
        %v2149 = vpack.c.b16 %v1975, %v1969
        %v2150 = vpack.c.b16 %v1976, %v1970
        %v2151 = vpack.c.b16 %v1977, %v1971
        %v2152 = vpack.c.b16 %v1984, %v1978
        %v2153 = vpack.c.b16 %v1985, %v1979
        %v2154 = vpack.c.b16 %v1986, %v1980
        %v2155 = vpack.c.b16 %v1987, %v1981
        %v2156 = vpack.c.b16 %v1988, %v1982
        %v2157 = vpack.c.b16 %v1989, %v1983
        %v2158 = vpack.c.b16 %v1996, %v1990
        %v2159 = vpack.c.b16 %v1997, %v1991
        %v2160 = vpack.c.b16 %v1998, %v1992
        %v2161 = vpack.c.b16 %v1999, %v1993
        %v2162 = vpack.c.b16 %v2000, %v1994
        %v2163 = vpack.c.b16 %v2001, %v1995
        %v2164 = vpack.c.b16 %v2008, %v2002
        %v2165 = vpack.c.b16 %v2009, %v2003
        %v2166 = vpack.c.b16 %v2010, %v2004
        %v2167 = vpack.c.b16 %v2011, %v2005
        %v2168 = vpack.c.b16 %v2012, %v2006
        %v2169 = vpack.c.b16 %v2013, %v2007
        %v2170 = vpack.c.b16 %v2020, %v2014
        %v2171 = vpack.c.b16 %v2021, %v2015
        %v2172 = vpack.c.b16 %v2022, %v2016
        %v2173 = vpack.c.b16 %v2023, %v2017
        %v2174 = vpack.c.b16 %v2024, %v2018
        %v2175 = vpack.c.b16 %v2025, %v2019
        %v2176 = vpack.c.b16 %v2032, %v2026
        %v2177 = vpack.c.b16 %v2033, %v2027
        %v2178 = vpack.c.b16 %v2034, %v2028
        %v2179 = vpack.c.b16 %v2035, %v2029
        %v2180 = vpack.c.b16 %v2036, %v2030
        %v2181 = vpack.c.b16 %v2037, %v2031
        %v2182 = vpack.c.b16 %v2044, %v2038
        %v2183 = vpack.c.b16 %v2045, %v2039
        %v2184 = vpack.c.b16 %v2046, %v2040
        %v2185 = vpack.c.b16 %v2047, %v2041
        %v2186 = vpack.c.b16 %v2048, %v2042
        %v2187 = vpack.c.b16 %v2049, %v2043
        %v2188 = vpack.c.b16 %v2056, %v2050
        %v2189 = vpack.c.b16 %v2057, %v2051
        %v2190 = vpack.c.b16 %v2058, %v2052
        %v2191 = vpack.c.b16 %v2059, %v2053
        %v2192 = vpack.c.b16 %v2060, %v2054
        %v2193 = vpack.c.b16 %v2061, %v2055
        %v2194 = vpack.c.b16 %v2068, %v2062
        %v2195 = vpack.c.b16 %v2069, %v2063
        %v2196 = vpack.c.b16 %v2070, %v2064
        %v2197 = vpack.c.b16 %v2071, %v2065
        %v2198 = vpack.c.b16 %v2072, %v2066
        %v2199 = vpack.c.b16 %v2073, %v2067
        %v2200 = vpack.c.b16 %v2080, %v2074
        %v2201 = vpack.c.b16 %v2081, %v2075
        %v2202 = vpack.c.b16 %v2082, %v2076
        %v2203 = vpack.c.b16 %v2083, %v2077
        %v2204 = vpack.c.b16 %v2084, %v2078
        %v2205 = vpack.c.b16 %v2085, %v2079
        %v2206 = vpack.c.b16 %v2092, %v2086
        %v2207 = vpack.c.b16 %v2093, %v2087
        %v2208 = vpack.c.b16 %v2094, %v2088
        %v2209 = vpack.c.b16 %v2095, %v2089
        %v2210 = vpack.c.b16 %v2096, %v2090
        %v2211 = vpack.c.b16 %v2097, %v2091
        %v2212 = vpack.c.b16 %v2104, %v2098
        %v2213 = vpack.c.b16 %v2105, %v2099
        %v2214 = vpack.c.b16 %v2106, %v2100
        %v2215 = vpack.c.b16 %v2107, %v2101
        %v2216 = vpack.c.b16 %v2108, %v2102
        %v2217 = vpack.c.b16 %v2109, %v2103
        %v2218 = vpack.c.b16 %v2116, %v2110
        %v2219 = vpack.c.b16 %v2117, %v2111
        %v2220 = vpack.c.b16 %v2118, %v2112
        %v2221 = vpack.c.b16 %v2119, %v2113
        %v2222 = vpack.c.b16 %v2120, %v2114
        %v2223 = vpack.c.b16 %v2121, %v2115
        %v2224 = vpack.c.b16 %v2128, %v2122
        %v2225 = vpack.c.b16 %v2129, %v2123
        %v2226 = vpack.c.b16 %v2130, %v2124
        %v2227 = vpack.c.b16 %v2131, %v2125
        %v2228 = vpack.c.b16 %v2132, %v2126
        %v2229 = vpack.c.b16 %v2133, %v2127
        %2326 = vmatprep.subr.bf16.mxu0 %v2135
        %2327 = vmatpush1.bf16.msra.mxu0 %v2134
        %2328 = vmatprep.subr.bf16.mxu0 %v2141
        %2329 = vmatpush1.bf16.msra.mxu0 %v2140
        %2330 = vmatprep.subr.bf16.mxu0 %v2147
        %2331 = vmatpush1.bf16.msra.mxu0 %v2146
        %2332 = vmatprep.subr.bf16.mxu0 %v2153
        %2333 = vmatpush1.bf16.msra.mxu0 %v2152
        %2334 = vmatprep.subr.bf16.mxu0 %v2159
        %2335 = vmatpush1.bf16.msra.mxu0 %v2158
        %2336 = vmatprep.subr.bf16.mxu0 %v2165
        %2337 = vmatpush1.bf16.msra.mxu0 %v2164
        %2338 = vmatprep.subr.bf16.mxu0 %v2171
        %2339 = vmatpush1.bf16.msra.mxu0 %v2170
        %2340 = vmatprep.subr.bf16.mxu0 %v2177
        %2341 = vmatpush1.bf16.msra.mxu0 %v2176
        %2342 = vmatprep.subr.bf16.mxu0 %v2183
        %2343 = vmatpush1.bf16.msra.mxu0 %v2182
        %2344 = vmatprep.subr.bf16.mxu0 %v2189
        %2345 = vmatpush1.bf16.msra.mxu0 %v2188
        %2346 = vmatprep.subr.bf16.mxu0 %v2195
        %2347 = vmatpush1.bf16.msra.mxu0 %v2194
        %2348 = vmatprep.subr.bf16.mxu0 %v2201
        %2349 = vmatpush1.bf16.msra.mxu0 %v2200
        %2350 = vmatprep.subr.bf16.mxu0 %v2207
        %2351 = vmatpush1.bf16.msra.mxu0 %v2206
        %2352 = vmatprep.subr.bf16.mxu0 %v2213
        %2353 = vmatpush1.bf16.msra.mxu0 %v2212
        %2354 = vmatprep.subr.bf16.mxu0 %v2219
        %2355 = vmatpush1.bf16.msra.mxu0 %v2218
        %2356 = vmatprep.subr.bf16.mxu0 %v2225
        %2357 = vmatpush1.bf16.msra.mxu0 %v2224
        %2358 = vmatprep.mubr.bf16.mxu0 %v1839
        %2359 = vmatmul.mubr.bf16.gmra.mrb[0].mxu0 %v1838
        %v2360 = vpop.f32.mrb[0].mxu0
        %v2361 = vpop.f32.mrb[0].mxu0
        %v2362 = vpop.f32.mrb[0].mxu0
        %v2363 = vadd.f32 %v1250, %v2362
        %v2364 = vpop.f32.mrb[0].mxu0
        %v2365 = vadd.f32 %v1252, %v2364
        %2366 = vmatprep.mubr.bf16.mxu0 %v662
        %2367 = vmatmul.mubr.bf16.gmra.mrb[0].mxu0 %v661
        %v2368 = vpop.f32.mrb[0].mxu0
        %v2369 = vadd.f32 %v1256, %v2368
        %v2370 = vpop.f32.mrb[0].mxu0
        %v2371 = vadd.f32 %v1258, %v2370
        %v2372 = vpop.f32.mrb[0].mxu0
        %v2373 = vadd.f32 %v1260, %v2372
        %v2374 = vpop.f32.mrb[0].mxu0
        %v2375 = vadd.f32 %v1262, %v2374
        %2376 = vmatprep.mubr.bf16.mxu0 %v664
        %2377 = vmatmul.mubr.bf16.gmra.mrb[0].mxu0 %v663
        %v2378 = vpop.f32.mrb[0].mxu0
        %v2379 = vadd.f32 %v1266, %v2378
        %v2380 = vpop.f32.mrb[0].mxu0
        %v2381 = vadd.f32 %v1268, %v2380
        %v2382 = vpop.f32.mrb[0].mxu0
        %v2383 = vadd.f32 %v1270, %v2382
        %v2384 = vpop.f32.mrb[0].mxu0
        %v2385 = vadd.f32 %v1272, %v2384
        %2386 = vmatprep.mubr.bf16.mxu0 %v666
        %2387 = vmatmul.mubr.bf16.gmra.mrb[0].mxu0 %v665
        %v2388 = vpop.f32.mrb[0].mxu0
        %v2389 = vadd.f32 %v1276, %v2388
        %v2390 = vpop.f32.mrb[0].mxu0
        %v2391 = vadd.f32 %v1278, %v2390
        %v2392 = vpop.f32.mrb[0].mxu0
        %v2393 = vadd.f32 %v1280, %v2392
        %v2394 = vpop.f32.mrb[0].mxu0
        %v2395 = vadd.f32 %v1282, %v2394
        %2396 = vmatprep.mubr.bf16.mxu0 %v668
        %2397 = vmatmul.mubr.bf16.gmra.mrb[0].mxu0 %v667
        %v2398 = vpop.f32.mrb[0].mxu0
        %v2399 = vadd.f32 %v1286, %v2398
        %v2400 = vpop.f32.mrb[0].mxu0
        %v2401 = vadd.f32 %v1288, %v2400
        %v2402 = vpop.f32.mrb[0].mxu0
        %v2403 = vadd.f32 %v1290, %v2402
        %v2404 = vpop.f32.mrb[0].mxu0
        %v2405 = vadd.f32 %v1292, %v2404
        %2406 = vmatprep.mubr.bf16.mxu0 %v670
        %2407 = vmatmul.mubr.bf16.gmra.mrb[0].mxu0 %v669
        %v2408 = vpop.f32.mrb[0].mxu0
        %v2409 = vadd.f32 %v1296, %v2408
        %v2410 = vpop.f32.mrb[0].mxu0
        %v2411 = vadd.f32 %v1298, %v2410
        %v2412 = vpop.f32.mrb[0].mxu0
        %v2413 = vadd.f32 %v1300, %v2412
        %v2414 = vpop.f32.mrb[0].mxu0
        %v2415 = vadd.f32 %v1302, %v2414
        %2416 = vmatprep.mubr.bf16.mxu0 %v672
        %2417 = vmatmul.mubr.bf16.gmra.mrb[0].mxu0 %v671
        %v2418 = vpop.f32.mrb[0].mxu0
        %v2419 = vadd.f32 %v1306, %v2418
        %v2420 = vpop.f32.mrb[0].mxu0
        %v2421 = vadd.f32 %v1308, %v2420
        %v2422 = vpop.f32.mrb[0].mxu0
        %v2423 = vadd.f32 %v1310, %v2422
        %v2424 = vpop.f32.mrb[0].mxu0
        %v2425 = vadd.f32 %v1312, %v2424
        %2426 = vmatprep.mubr.bf16.mxu0 %v674
        %2427 = vmatmul.mubr.bf16.gmra.mrb[0].mxu0 %v673
        %v2428 = vpop.f32.mrb[0].mxu0
        %v2429 = vadd.f32 %v1316, %v2428
        %v2430 = vpop.f32.mrb[0].mxu0
        %v2431 = vadd.f32 %v1318, %v2430
        %v2432 = vpop.f32.mrb[0].mxu0
        %v2433 = vadd.f32 %v1320, %v2432
        %v2434 = vpop.f32.mrb[0].mxu0
        %v2435 = vadd.f32 %v1322, %v2434
        %2436 = vmatprep.mubr.bf16.mxu0 %v676
        %2437 = vmatmul.mubr.bf16.gmra.mrb[0].mxu0 %v675
        %v2438 = vpop.f32.mrb[0].mxu0
        %v2439 = vadd.f32 %v1326, %v2438
        %v2440 = vpop.f32.mrb[0].mxu0
        %v2441 = vadd.f32 %v1328, %v2440
        %v2442 = vpop.f32.mrb[0].mxu0
        %v2443 = vadd.f32 %v1330, %v2442
        %v2444 = vpop.f32.mrb[0].mxu0
        %v2445 = vadd.f32 %v1332, %v2444
        %2446 = vmatprep.mubr.bf16.mxu0 %v678
        %2447 = vmatmul.mubr.bf16.gmra.mrb[0].mxu0 %v677
        %v2448 = vpop.f32.mrb[0].mxu0
        %v2449 = vadd.f32 %v1336, %v2448
        %v2450 = vpop.f32.mrb[0].mxu0
        %v2451 = vadd.f32 %v1338, %v2450
        %v2452 = vpop.f32.mrb[0].mxu0
        %v2453 = vadd.f32 %v1340, %v2452
        %v2454 = vpop.f32.mrb[0].mxu0
        %v2455 = vadd.f32 %v1342, %v2454
        %2456 = vmatprep.mubr.bf16.mxu0 %v680
        %2457 = vmatmul.mubr.bf16.gmra.mrb[0].mxu0 %v679
        %v2458 = vpop.f32.mrb[0].mxu0
        %v2459 = vadd.f32 %v1346, %v2458
        %v2460 = vpop.f32.mrb[0].mxu0
        %v2461 = vadd.f32 %v1348, %v2460
        %v2462 = vpop.f32.mrb[0].mxu0
        %v2463 = vadd.f32 %v1350, %v2462
        %v2464 = vpop.f32.mrb[0].mxu0
        %v2465 = vadd.f32 %v1352, %v2464
        %2466 = vmatprep.mubr.bf16.mxu0 %v682
        %2467 = vmatmul.mubr.bf16.gmra.mrb[0].mxu0 %v681
        %v2468 = vpop.f32.mrb[0].mxu0
        %v2469 = vadd.f32 %v1356, %v2468
        %v2470 = vpop.f32.mrb[0].mxu0
        %v2471 = vadd.f32 %v1358, %v2470
        %v2472 = vpop.f32.mrb[0].mxu0
        %v2473 = vadd.f32 %v1360, %v2472
        %v2474 = vpop.f32.mrb[0].mxu0
        %v2475 = vadd.f32 %v1362, %v2474
        %2476 = vmatprep.mubr.bf16.mxu0 %v684
        %2477 = vmatmul.mubr.bf16.gmra.mrb[0].mxu0 %v683
        %v2478 = vpop.f32.mrb[0].mxu0
        %v2479 = vadd.f32 %v1366, %v2478
        %v2480 = vpop.f32.mrb[0].mxu0
        %v2481 = vadd.f32 %v1368, %v2480
        %v2482 = vpop.f32.mrb[0].mxu0
        %v2483 = vadd.f32 %v1370, %v2482
        %v2484 = vpop.f32.mrb[0].mxu0
        %v2485 = vadd.f32 %v1372, %v2484
        %2486 = vmatprep.mubr.bf16.mxu0 %v686
        %2487 = vmatmul.mubr.bf16.gmra.mrb[0].mxu0 %v685
        %v2488 = vpop.f32.mrb[0].mxu0
        %v2489 = vadd.f32 %v1376, %v2488
        %v2490 = vpop.f32.mrb[0].mxu0
        %v2491 = vadd.f32 %v1378, %v2490
        %v2492 = vpop.f32.mrb[0].mxu0
        %v2493 = vadd.f32 %v1380, %v2492
        %v2494 = vpop.f32.mrb[0].mxu0
        %v2495 = vadd.f32 %v1382, %v2494
        %2496 = vmatprep.mubr.bf16.mxu0 %v688
        %2497 = vmatmul.mubr.bf16.gmra.mrb[0].mxu0 %v687
        %v2498 = vpop.f32.mrb[0].mxu0
        %v2499 = vadd.f32 %v1386, %v2498
        %v2500 = vpop.f32.mrb[0].mxu0
        %v2501 = vadd.f32 %v1388, %v2500
        %v2502 = vpop.f32.mrb[0].mxu0
        %v2503 = vadd.f32 %v1390, %v2502
        %v2504 = vpop.f32.mrb[0].mxu0
        %v2505 = vadd.f32 %v1392, %v2504
        %2506 = vmatprep.mubr.bf16.mxu0 %v690
        %2507 = vmatmul.mubr.bf16.gmra.mrb[0].mxu0 %v689
        %v2508 = vpop.f32.mrb[0].mxu0
        %v2509 = vadd.f32 %v1396, %v2508
        %v2510 = vpop.f32.mrb[0].mxu0
        %v2511 = vadd.f32 %v1398, %v2510
        %v2512 = vpop.f32.mrb[0].mxu0
        %v2513 = vadd.f32 %v1400, %v2512
        %v2514 = vpop.f32.mrb[0].mxu0
        %v2515 = vadd.f32 %v1402, %v2514
        %2516 = vmatprep.mubr.bf16.mxu0 %v692
        %2517 = vmatmul.mubr.bf16.gmra.mrb[0].mxu0 %v691
        %v2518 = vpop.f32.mrb[0].mxu0
        %v2519 = vadd.f32 %v1406, %v2518
        %v2520 = vpop.f32.mrb[0].mxu0
        %v2521 = vadd.f32 %v1408, %v2520
        %v2522 = vpop.f32.mrb[0].mxu0
        %v2523 = vadd.f32 %v1410, %v2522
        %v2524 = vpop.f32.mrb[0].mxu0
        %v2525 = vadd.f32 %v1412, %v2524
        %2526 = vmatprep.mubr.bf16.mxu0 %v1841
        %2527 = vmatmul.mubr.bf16.gmra.mrb[0].mxu0 %v1840
        %v2528 = vpop.f32.mrb[0].mxu0
        %v2529 = vpop.f32.mrb[0].mxu0
        %v2530 = vpop.f32.mrb[0].mxu0
        %v2531 = vpop.f32.mrb[0].mxu0
        %2532 = vdwg.mxu0
        %2533 = vmatprep.subr.bf16.mxu0 %v2137
        %2534 = vmatpush1.bf16.msra.mxu0 %v2136
        %2535 = vmatprep.subr.bf16.mxu0 %v2143
        %2536 = vmatpush1.bf16.msra.mxu0 %v2142
        %2537 = vmatprep.subr.bf16.mxu0 %v2149
        %2538 = vmatpush1.bf16.msra.mxu0 %v2148
        %2539 = vmatprep.subr.bf16.mxu0 %v2155
        %2540 = vmatpush1.bf16.msra.mxu0 %v2154
        %2541 = vmatprep.subr.bf16.mxu0 %v2161
        %2542 = vmatpush1.bf16.msra.mxu0 %v2160
        %2543 = vmatprep.subr.bf16.mxu0 %v2167
        %2544 = vmatpush1.bf16.msra.mxu0 %v2166
        %2545 = vmatprep.subr.bf16.mxu0 %v2173
        %2546 = vmatpush1.bf16.msra.mxu0 %v2172
        %2547 = vmatprep.subr.bf16.mxu0 %v2179
        %2548 = vmatpush1.bf16.msra.mxu0 %v2178
        %2549 = vmatprep.subr.bf16.mxu0 %v2185
        %2550 = vmatpush1.bf16.msra.mxu0 %v2184
        %2551 = vmatprep.subr.bf16.mxu0 %v2191
        %2552 = vmatpush1.bf16.msra.mxu0 %v2190
        %2553 = vmatprep.subr.bf16.mxu0 %v2197
        %2554 = vmatpush1.bf16.msra.mxu0 %v2196
        %2555 = vmatprep.subr.bf16.mxu0 %v2203
        %2556 = vmatpush1.bf16.msra.mxu0 %v2202
        %2557 = vmatprep.subr.bf16.mxu0 %v2209
        %2558 = vmatpush1.bf16.msra.mxu0 %v2208
        %2559 = vmatprep.subr.bf16.mxu0 %v2215
        %2560 = vmatpush1.bf16.msra.mxu0 %v2214
        %2561 = vmatprep.subr.bf16.mxu0 %v2221
        %2562 = vmatpush1.bf16.msra.mxu0 %v2220
        %2563 = vmatprep.subr.bf16.mxu0 %v2227
        %2564 = vmatpush1.bf16.msra.mxu0 %v2226
        %2565 = vmatprep.mubr.bf16.mxu0 %v1839
        %2566 = vmatmul.mubr.bf16.gmra.mrb[0].mxu0 %v1838
        %v2567 = vpop.f32.mrb[0].mxu0
        %v2568 = vpop.f32.mrb[0].mxu0
        %v2569 = vpop.f32.mrb[0].mxu0
        %v2570 = vpop.f32.mrb[0].mxu0
        %2571 = vmatprep.mubr.bf16.mxu0 %v662
        %2572 = vmatmul.mubr.bf16.gmra.mrb[0].mxu0 %v661
        %v2573 = vpop.f32.mrb[0].mxu0
        %v2574 = vadd.f32 %v1461, %v2573
        %v2575 = vpop.f32.mrb[0].mxu0
        %v2576 = vadd.f32 %v1463, %v2575
        %v2577 = vpop.f32.mrb[0].mxu0
        %v2578 = vadd.f32 %v1465, %v2577
        %v2579 = vpop.f32.mrb[0].mxu0
        %v2580 = vadd.f32 %v1467, %v2579
        %2581 = vmatprep.mubr.bf16.mxu0 %v664
        %2582 = vmatmul.mubr.bf16.gmra.mrb[0].mxu0 %v663
        %v2583 = vpop.f32.mrb[0].mxu0
        %v2584 = vadd.f32 %v1471, %v2583
        %v2585 = vpop.f32.mrb[0].mxu0
        %v2586 = vadd.f32 %v1473, %v2585
        %v2587 = vpop.f32.mrb[0].mxu0
        %v2588 = vadd.f32 %v1475, %v2587
        %v2589 = vpop.f32.mrb[0].mxu0
        %v2590 = vadd.f32 %v1477, %v2589
        %2591 = vmatprep.mubr.bf16.mxu0 %v666
        %2592 = vmatmul.mubr.bf16.gmra.mrb[0].mxu0 %v665
        %v2593 = vpop.f32.mrb[0].mxu0
        %v2594 = vadd.f32 %v1481, %v2593
        %v2595 = vpop.f32.mrb[0].mxu0
        %v2596 = vadd.f32 %v1483, %v2595
        %v2597 = vpop.f32.mrb[0].mxu0
        %v2598 = vadd.f32 %v1485, %v2597
        %v2599 = vpop.f32.mrb[0].mxu0
        %v2600 = vadd.f32 %v1487, %v2599
        %2601 = vmatprep.mubr.bf16.mxu0 %v668
        %2602 = vmatmul.mubr.bf16.gmra.mrb[0].mxu0 %v667
        %v2603 = vpop.f32.mrb[0].mxu0
        %v2604 = vadd.f32 %v1491, %v2603
        %v2605 = vpop.f32.mrb[0].mxu0
        %v2606 = vadd.f32 %v1493, %v2605
        %v2607 = vpop.f32.mrb[0].mxu0
        %v2608 = vadd.f32 %v1495, %v2607
        %v2609 = vpop.f32.mrb[0].mxu0
        %v2610 = vadd.f32 %v1497, %v2609
        %2611 = vmatprep.mubr.bf16.mxu0 %v670
        %2612 = vmatmul.mubr.bf16.gmra.mrb[0].mxu0 %v669
        %v2613 = vpop.f32.mrb[0].mxu0
        %v2614 = vadd.f32 %v1501, %v2613
        %v2615 = vpop.f32.mrb[0].mxu0
        %v2616 = vadd.f32 %v1503, %v2615
        %v2617 = vpop.f32.mrb[0].mxu0
        %v2618 = vadd.f32 %v1505, %v2617
        %v2619 = vpop.f32.mrb[0].mxu0
        %v2620 = vadd.f32 %v1507, %v2619
        %2621 = vmatprep.mubr.bf16.mxu0 %v672
        %2622 = vmatmul.mubr.bf16.gmra.mrb[0].mxu0 %v671
        %v2623 = vpop.f32.mrb[0].mxu0
        %v2624 = vadd.f32 %v1511, %v2623
        %v2625 = vpop.f32.mrb[0].mxu0
        %v2626 = vadd.f32 %v1513, %v2625
        %v2627 = vpop.f32.mrb[0].mxu0
        %v2628 = vadd.f32 %v1515, %v2627
        %v2629 = vpop.f32.mrb[0].mxu0
        %v2630 = vadd.f32 %v1517, %v2629
        %2631 = vmatprep.mubr.bf16.mxu0 %v674
        %2632 = vmatmul.mubr.bf16.gmra.mrb[0].mxu0 %v673
        %v2633 = vpop.f32.mrb[0].mxu0
        %v2634 = vadd.f32 %v1521, %v2633
        %v2635 = vpop.f32.mrb[0].mxu0
        %v2636 = vadd.f32 %v1523, %v2635
        %v2637 = vpop.f32.mrb[0].mxu0
        %v2638 = vadd.f32 %v1525, %v2637
        %v2639 = vpop.f32.mrb[0].mxu0
        %v2640 = vadd.f32 %v1527, %v2639
        %2641 = vmatprep.mubr.bf16.mxu0 %v676
        %2642 = vmatmul.mubr.bf16.gmra.mrb[0].mxu0 %v675
        %v2643 = vpop.f32.mrb[0].mxu0
        %v2644 = vadd.f32 %v1531, %v2643
        %v2645 = vpop.f32.mrb[0].mxu0
        %v2646 = vadd.f32 %v1533, %v2645
        %v2647 = vpop.f32.mrb[0].mxu0
        %v2648 = vadd.f32 %v1535, %v2647
        %v2649 = vpop.f32.mrb[0].mxu0
        %v2650 = vadd.f32 %v1537, %v2649
        %2651 = vmatprep.mubr.bf16.mxu0 %v678
        %2652 = vmatmul.mubr.bf16.gmra.mrb[0].mxu0 %v677
        %v2653 = vpop.f32.mrb[0].mxu0
        %v2654 = vadd.f32 %v1541, %v2653
        %v2655 = vpop.f32.mrb[0].mxu0
        %v2656 = vadd.f32 %v1543, %v2655
        %v2657 = vpop.f32.mrb[0].mxu0
        %v2658 = vadd.f32 %v1545, %v2657
        %v2659 = vpop.f32.mrb[0].mxu0
        %v2660 = vadd.f32 %v1547, %v2659
        %2661 = vmatprep.mubr.bf16.mxu0 %v680
        %2662 = vmatmul.mubr.bf16.gmra.mrb[0].mxu0 %v679
        %v2663 = vpop.f32.mrb[0].mxu0
        %v2664 = vadd.f32 %v1551, %v2663
        %v2665 = vpop.f32.mrb[0].mxu0
        %v2666 = vadd.f32 %v1553, %v2665
        %v2667 = vpop.f32.mrb[0].mxu0
        %v2668 = vadd.f32 %v1555, %v2667
        %v2669 = vpop.f32.mrb[0].mxu0
        %v2670 = vadd.f32 %v1557, %v2669
        %2671 = vmatprep.mubr.bf16.mxu0 %v682
        %2672 = vmatmul.mubr.bf16.gmra.mrb[0].mxu0 %v681
        %v2673 = vpop.f32.mrb[0].mxu0
        %v2674 = vadd.f32 %v1561, %v2673
        %v2675 = vpop.f32.mrb[0].mxu0
        %v2676 = vadd.f32 %v1563, %v2675
        %v2677 = vpop.f32.mrb[0].mxu0
        %v2678 = vadd.f32 %v1565, %v2677
        %v2679 = vpop.f32.mrb[0].mxu0
        %v2680 = vadd.f32 %v1567, %v2679
        %2681 = vmatprep.mubr.bf16.mxu0 %v684
        %2682 = vmatmul.mubr.bf16.gmra.mrb[0].mxu0 %v683
        %v2683 = vpop.f32.mrb[0].mxu0
        %v2684 = vadd.f32 %v1571, %v2683
        %v2685 = vpop.f32.mrb[0].mxu0
        %v2686 = vadd.f32 %v1573, %v2685
        %v2687 = vpop.f32.mrb[0].mxu0
        %v2688 = vadd.f32 %v1575, %v2687
        %v2689 = vpop.f32.mrb[0].mxu0
        %v2690 = vadd.f32 %v1577, %v2689
        %2691 = vmatprep.mubr.bf16.mxu0 %v686
        %2692 = vmatmul.mubr.bf16.gmra.mrb[0].mxu0 %v685
        %v2693 = vpop.f32.mrb[0].mxu0
        %v2694 = vadd.f32 %v1581, %v2693
        %v2695 = vpop.f32.mrb[0].mxu0
        %v2696 = vadd.f32 %v1583, %v2695
        %v2697 = vpop.f32.mrb[0].mxu0
        %v2698 = vadd.f32 %v1585, %v2697
        %v2699 = vpop.f32.mrb[0].mxu0
        %v2700 = vadd.f32 %v1587, %v2699
        %2701 = vmatprep.mubr.bf16.mxu0 %v688
        %2702 = vmatmul.mubr.bf16.gmra.mrb[0].mxu0 %v687
        %v2703 = vpop.f32.mrb[0].mxu0
        %v2704 = vadd.f32 %v1591, %v2703
        %v2705 = vpop.f32.mrb[0].mxu0
        %v2706 = vadd.f32 %v1593, %v2705
        %v2707 = vpop.f32.mrb[0].mxu0
        %v2708 = vadd.f32 %v1595, %v2707
        %v2709 = vpop.f32.mrb[0].mxu0
        %v2710 = vadd.f32 %v1597, %v2709
        %2711 = vmatprep.mubr.bf16.mxu0 %v690
        %2712 = vmatmul.mubr.bf16.gmra.mrb[0].mxu0 %v689
        %v2713 = vpop.f32.mrb[0].mxu0
        %v2714 = vadd.f32 %v1601, %v2713
        %v2715 = vpop.f32.mrb[0].mxu0
        %v2716 = vadd.f32 %v1603, %v2715
        %v2717 = vpop.f32.mrb[0].mxu0
        %v2718 = vadd.f32 %v1605, %v2717
        %v2719 = vpop.f32.mrb[0].mxu0
        %v2720 = vadd.f32 %v1607, %v2719
        %2721 = vmatprep.mubr.bf16.mxu0 %v692
        %2722 = vmatmul.mubr.bf16.gmra.mrb[0].mxu0 %v691
        %v2723 = vpop.f32.mrb[0].mxu0
        %v2724 = vadd.f32 %v1611, %v2723
        %v2725 = vpop.f32.mrb[0].mxu0
        %v2726 = vadd.f32 %v1613, %v2725
        %v2727 = vpop.f32.mrb[0].mxu0
        %v2728 = vadd.f32 %v1615, %v2727
        %v2729 = vpop.f32.mrb[0].mxu0
        %v2730 = vadd.f32 %v1617, %v2729
        %2731 = vmatprep.mubr.bf16.mxu0 %v1841
        %2732 = vmatmul.mubr.bf16.gmra.mrb[0].mxu0 %v1840
        %v2733 = vpop.f32.mrb[0].mxu0
        %v2734 = vpop.f32.mrb[0].mxu0
        %v2735 = vpop.f32.mrb[0].mxu0
        %v2736 = vpop.f32.mrb[0].mxu0
        %2737 = vdwg.mxu0
        %2738 = vmatprep.subr.bf16.mxu0 %v2139
        %2739 = vmatpush1.bf16.msra.mxu0 %v2138
        %2740 = vmatprep.subr.bf16.mxu0 %v2145
        %2741 = vmatpush1.bf16.msra.mxu0 %v2144
        %2742 = vmatprep.subr.bf16.mxu0 %v2151
        %2743 = vmatpush1.bf16.msra.mxu0 %v2150
        %2744 = vmatprep.subr.bf16.mxu0 %v2157
        %2745 = vmatpush1.bf16.msra.mxu0 %v2156
        %2746 = vmatprep.subr.bf16.mxu0 %v2163
        %2747 = vmatpush1.bf16.msra.mxu0 %v2162
        %2748 = vmatprep.subr.bf16.mxu0 %v2169
        %2749 = vmatpush1.bf16.msra.mxu0 %v2168
        %2750 = vmatprep.subr.bf16.mxu0 %v2175
        %2751 = vmatpush1.bf16.msra.mxu0 %v2174
        %2752 = vmatprep.subr.bf16.mxu0 %v2181
        %2753 = vmatpush1.bf16.msra.mxu0 %v2180
        %2754 = vmatprep.subr.bf16.mxu0 %v2187
        %2755 = vmatpush1.bf16.msra.mxu0 %v2186
        %2756 = vmatprep.subr.bf16.mxu0 %v2193
        %2757 = vmatpush1.bf16.msra.mxu0 %v2192
        %2758 = vmatprep.subr.bf16.mxu0 %v2199
        %2759 = vmatpush1.bf16.msra.mxu0 %v2198
        %2760 = vmatprep.subr.bf16.mxu0 %v2205
        %2761 = vmatpush1.bf16.msra.mxu0 %v2204
        %2762 = vmatprep.subr.bf16.mxu0 %v2211
        %2763 = vmatpush1.bf16.msra.mxu0 %v2210
        %2764 = vmatprep.subr.bf16.mxu0 %v2217
        %2765 = vmatpush1.bf16.msra.mxu0 %v2216
        %2766 = vmatprep.subr.bf16.mxu0 %v2223
        %2767 = vmatpush1.bf16.msra.mxu0 %v2222
        %2768 = vmatprep.subr.bf16.mxu0 %v2229
        %2769 = vmatpush1.bf16.msra.mxu0 %v2228
        %2770 = vmatprep.mubr.bf16.mxu0 %v1839
        %2771 = vmatmul.mubr.bf16.gmra.mrb[0].mxu0 %v1838
        %v2772 = vpop.f32.mrb[0].mxu0
        %v2773 = vpop.f32.mrb[0].mxu0
        %v2774 = vpop.f32.mrb[0].mxu0
        %v2775 = vpop.f32.mrb[0].mxu0
        %2776 = vmatprep.mubr.bf16.mxu0 %v662
        %2777 = vmatmul.mubr.bf16.gmra.mrb[0].mxu0 %v661
        %v2778 = vpop.f32.mrb[0].mxu0
        %v2779 = vadd.f32 %v1666, %v2778
        %v2780 = vpop.f32.mrb[0].mxu0
        %v2781 = vadd.f32 %v1668, %v2780
        %v2782 = vpop.f32.mrb[0].mxu0
        %v2783 = vadd.f32 %v1670, %v2782
        %v2784 = vpop.f32.mrb[0].mxu0
        %v2785 = vadd.f32 %v1672, %v2784
        %2786 = vmatprep.mubr.bf16.mxu0 %v664
        %2787 = vmatmul.mubr.bf16.gmra.mrb[0].mxu0 %v663
        %v2788 = vpop.f32.mrb[0].mxu0
        %v2789 = vadd.f32 %v1676, %v2788
        %v2790 = vpop.f32.mrb[0].mxu0
        %v2791 = vadd.f32 %v1678, %v2790
        %v2792 = vpop.f32.mrb[0].mxu0
        %v2793 = vadd.f32 %v1680, %v2792
        %v2794 = vpop.f32.mrb[0].mxu0
        %v2795 = vadd.f32 %v1682, %v2794
        %2796 = vmatprep.mubr.bf16.mxu0 %v666
        %2797 = vmatmul.mubr.bf16.gmra.mrb[0].mxu0 %v665
        %v2798 = vpop.f32.mrb[0].mxu0
        %v2799 = vadd.f32 %v1686, %v2798
        %v2800 = vpop.f32.mrb[0].mxu0
        %v2801 = vadd.f32 %v1688, %v2800
        %v2802 = vpop.f32.mrb[0].mxu0
        %v2803 = vadd.f32 %v1690, %v2802
        %v2804 = vpop.f32.mrb[0].mxu0
        %v2805 = vadd.f32 %v1692, %v2804
        %2806 = vmatprep.mubr.bf16.mxu0 %v668
        %2807 = vmatmul.mubr.bf16.gmra.mrb[0].mxu0 %v667
        %v2808 = vpop.f32.mrb[0].mxu0
        %v2809 = vadd.f32 %v1696, %v2808
        %v2810 = vpop.f32.mrb[0].mxu0
        %v2811 = vadd.f32 %v1698, %v2810
        %v2812 = vpop.f32.mrb[0].mxu0
        %v2813 = vadd.f32 %v1700, %v2812
        %v2814 = vpop.f32.mrb[0].mxu0
        %v2815 = vadd.f32 %v1702, %v2814
        %2816 = vmatprep.mubr.bf16.mxu0 %v670
        %2817 = vmatmul.mubr.bf16.gmra.mrb[0].mxu0 %v669
        %v2818 = vpop.f32.mrb[0].mxu0
        %v2819 = vadd.f32 %v1706, %v2818
        %v2820 = vpop.f32.mrb[0].mxu0
        %v2821 = vadd.f32 %v1708, %v2820
        %v2822 = vpop.f32.mrb[0].mxu0
        %v2823 = vadd.f32 %v1710, %v2822
        %v2824 = vpop.f32.mrb[0].mxu0
        %v2825 = vadd.f32 %v1712, %v2824
        %2826 = vmatprep.mubr.bf16.mxu0 %v672
        %2827 = vmatmul.mubr.bf16.gmra.mrb[0].mxu0 %v671
        %v2828 = vpop.f32.mrb[0].mxu0
        %v2829 = vadd.f32 %v1716, %v2828
        %v2830 = vpop.f32.mrb[0].mxu0
        %v2831 = vadd.f32 %v1718, %v2830
        %v2832 = vpop.f32.mrb[0].mxu0
        %v2833 = vadd.f32 %v1720, %v2832
        %v2834 = vpop.f32.mrb[0].mxu0
        %v2835 = vadd.f32 %v1722, %v2834
        %2836 = vmatprep.mubr.bf16.mxu0 %v674
        %2837 = vmatmul.mubr.bf16.gmra.mrb[0].mxu0 %v673
        %v2838 = vpop.f32.mrb[0].mxu0
        %v2839 = vadd.f32 %v1726, %v2838
        %v2840 = vpop.f32.mrb[0].mxu0
        %v2841 = vadd.f32 %v1728, %v2840
        %v2842 = vpop.f32.mrb[0].mxu0
        %v2843 = vadd.f32 %v1730, %v2842
        %v2844 = vpop.f32.mrb[0].mxu0
        %v2845 = vadd.f32 %v1732, %v2844
        %2846 = vmatprep.mubr.bf16.mxu0 %v676
        %2847 = vmatmul.mubr.bf16.gmra.mrb[0].mxu0 %v675
        %v2848 = vpop.f32.mrb[0].mxu0
        %v2849 = vadd.f32 %v1736, %v2848
        %v2850 = vpop.f32.mrb[0].mxu0
        %v2851 = vadd.f32 %v1738, %v2850
        %v2852 = vpop.f32.mrb[0].mxu0
        %v2853 = vadd.f32 %v1740, %v2852
        %v2854 = vpop.f32.mrb[0].mxu0
        %v2855 = vadd.f32 %v1742, %v2854
        %2856 = vmatprep.mubr.bf16.mxu0 %v678
        %2857 = vmatmul.mubr.bf16.gmra.mrb[0].mxu0 %v677
        %v2858 = vpop.f32.mrb[0].mxu0
        %v2859 = vadd.f32 %v1746, %v2858
        %v2860 = vpop.f32.mrb[0].mxu0
        %v2861 = vadd.f32 %v1748, %v2860
        %v2862 = vpop.f32.mrb[0].mxu0
        %v2863 = vadd.f32 %v1750, %v2862
        %v2864 = vpop.f32.mrb[0].mxu0
        %v2865 = vadd.f32 %v1752, %v2864
        %2866 = vmatprep.mubr.bf16.mxu0 %v680
        %2867 = vmatmul.mubr.bf16.gmra.mrb[0].mxu0 %v679
        %v2868 = vpop.f32.mrb[0].mxu0
        %v2869 = vadd.f32 %v1756, %v2868
        %v2870 = vpop.f32.mrb[0].mxu0
        %v2871 = vadd.f32 %v1758, %v2870
        %v2872 = vpop.f32.mrb[0].mxu0
        %v2873 = vadd.f32 %v1760, %v2872
        %v2874 = vpop.f32.mrb[0].mxu0
        %v2875 = vadd.f32 %v1762, %v2874
        %2876 = vmatprep.mubr.bf16.mxu0 %v682
        %2877 = vmatmul.mubr.bf16.gmra.mrb[0].mxu0 %v681
        %v2878 = vpop.f32.mrb[0].mxu0
        %v2879 = vadd.f32 %v1766, %v2878
        %v2880 = vpop.f32.mrb[0].mxu0
        %v2881 = vadd.f32 %v1768, %v2880
        %v2882 = vpop.f32.mrb[0].mxu0
        %v2883 = vadd.f32 %v1770, %v2882
        %v2884 = vpop.f32.mrb[0].mxu0
        %v2885 = vadd.f32 %v1772, %v2884
        %2886 = vmatprep.mubr.bf16.mxu0 %v684
        %2887 = vmatmul.mubr.bf16.gmra.mrb[0].mxu0 %v683
        %v2888 = vpop.f32.mrb[0].mxu0
        %v2889 = vadd.f32 %v1776, %v2888
        %v2890 = vpop.f32.mrb[0].mxu0
        %v2891 = vadd.f32 %v1778, %v2890
        %v2892 = vpop.f32.mrb[0].mxu0
        %v2893 = vadd.f32 %v1780, %v2892
        %v2894 = vpop.f32.mrb[0].mxu0
        %v2895 = vadd.f32 %v1782, %v2894
        %2896 = vmatprep.mubr.bf16.mxu0 %v686
        %2897 = vmatmul.mubr.bf16.gmra.mrb[0].mxu0 %v685
        %v2898 = vpop.f32.mrb[0].mxu0
        %v2899 = vadd.f32 %v1786, %v2898
        %v2900 = vpop.f32.mrb[0].mxu0
        %v2901 = vadd.f32 %v1788, %v2900
        %v2902 = vpop.f32.mrb[0].mxu0
        %v2903 = vadd.f32 %v1790, %v2902
        %v2904 = vpop.f32.mrb[0].mxu0
        %v2905 = vadd.f32 %v1792, %v2904
        %2906 = vmatprep.mubr.bf16.mxu0 %v688
        %2907 = vmatmul.mubr.bf16.gmra.mrb[0].mxu0 %v687
        %v2908 = vpop.f32.mrb[0].mxu0
        %v2909 = vadd.f32 %v1796, %v2908
        %v2910 = vpop.f32.mrb[0].mxu0
        %v2911 = vadd.f32 %v1798, %v2910
        %v2912 = vpop.f32.mrb[0].mxu0
        %v2913 = vadd.f32 %v1800, %v2912
        %v2914 = vpop.f32.mrb[0].mxu0
        %v2915 = vadd.f32 %v1802, %v2914
        %2916 = vmatprep.mubr.bf16.mxu0 %v690
        %2917 = vmatmul.mubr.bf16.gmra.mrb[0].mxu0 %v689
        %v2918 = vpop.f32.mrb[0].mxu0
        %v2919 = vadd.f32 %v1806, %v2918
        %v2920 = vpop.f32.mrb[0].mxu0
        %v2921 = vadd.f32 %v1808, %v2920
        %v2922 = vpop.f32.mrb[0].mxu0
        %v2923 = vadd.f32 %v1810, %v2922
        %v2924 = vpop.f32.mrb[0].mxu0
        %v2925 = vadd.f32 %v1812, %v2924
        %2926 = vmatprep.mubr.bf16.mxu0 %v692
        %2927 = vmatmul.mubr.bf16.gmra.mrb[0].mxu0 %v691
        %v2928 = vpop.f32.mrb[0].mxu0
        %v2929 = vadd.f32 %v1816, %v2928
        %v2930 = vpop.f32.mrb[0].mxu0
        %v2931 = vadd.f32 %v1818, %v2930
        %v2932 = vpop.f32.mrb[0].mxu0
        %v2933 = vadd.f32 %v1820, %v2932
        %v2934 = vpop.f32.mrb[0].mxu0
        %v2935 = vadd.f32 %v1822, %v2934
        %2936 = vmatprep.mubr.bf16.mxu0 %v1841
        %2937 = vmatmul.mubr.bf16.gmra.mrb[0].mxu0 %v1840
        %v2938 = vpop.f32.mrb[0].mxu0
        %v2939 = vadd.f32 %v1826, %v2938
        %v2940 = vpop.f32.mrb[0].mxu0
        %v2941 = vadd.f32 %v1828, %v2940
        %v2942 = vpop.f32.mrb[0].mxu0
        %v2943 = vpop.f32.mrb[0].mxu0
        %2944 = vdwg.mxu0
        %v2945 = vld [vmem:[%s248 + $0x20] sm:$0xff]
        %v2946 = vld [vmem:[%s248 + $0x28] sm:$0xff]
        %v2947 = vld [vmem:[%s248 + $0x30] sm:$0xff]
        %v2948 = vld [vmem:[%s248 + $0x38] sm:$0xff]
        %v2949 = vld [vmem:[%s248 + $0x40] sm:$0xff]
        %v2950 = vld [vmem:[%s248 + $0x48] sm:$0xff]
        %v2951 = vld [vmem:[%s248 + $0x50] sm:$0xff]
        %v2952 = vld [vmem:[%s248 + $0x58] sm:$0xff]
        %v2953 = vld [vmem:[%s248 + $0x60] sm:$0xff]
        %v2954 = vld [vmem:[%s248 + $0x68] sm:$0xff]
        %v2955 = vld [vmem:[%s248 + $0x70] sm:$0xff]
        %v2956 = vld [vmem:[%s248 + $0x78] sm:$0xff]
        %v2957 = vld [vmem:[%s248 + $0x80] sm:$0xff]
        %v2958 = vld [vmem:[%s248 + $0x88] sm:$0xff]
        %v2959 = vld [vmem:[%s248 + $0x90] sm:$0xff]
        %v2960 = vld [vmem:[%s248 + $0x98] sm:$0xff]
        %v2961 = vld [vmem:[%s248 + $0xa0] sm:$0xff]
        %v2962 = vld [vmem:[%s248 + $0xa8] sm:$0xff]
        %v2963 = vld [vmem:[%s248 + $0xb0] sm:$0xff]
        %v2964 = vld [vmem:[%s248 + $0xb8] sm:$0xff]
        %v2965 = vld [vmem:[%s248 + $0xc0] sm:$0xff]
        %v2966 = vld [vmem:[%s248 + $0xc8] sm:$0xff]
        %v2967 = vld [vmem:[%s248 + $0xd0] sm:$0xff]
        %v2968 = vld [vmem:[%s248 + $0xd8] sm:$0xff]
        %v2969 = vld [vmem:[%s248 + $0xe0] sm:$0xff]
        %v2970 = vld [vmem:[%s248 + $0xe8] sm:$0xff]
        %v2971 = vld [vmem:[%s248 + $0xf0] sm:$0xff]
        %v2972 = vld [vmem:[%s248 + $0xf8] sm:$0xff]
        %v2973 = vld [vmem:[%s248 + $0x100] sm:$0xff]
        %v2974 = vld [vmem:[%s248 + $0x108] sm:$0xff]
        %v2975 = vld [vmem:[%s248 + $0x110] sm:$0xff]
        %v2976 = vld [vmem:[%s248 + $0x118] sm:$0xff]
        %v2977 = vld [vmem:[%s248 + $0x120] sm:$0xff]
        %v2978 = vld [vmem:[%s248 + $0x128] sm:$0xff]
        %v2979 = vld [vmem:[%s248 + $0x130] sm:$0xff]
        %s2980 = scalar_lea.vmem %s1, 1536
        %v2981 = vld [vmem:[%s2980] sm:$0xff]
        %v2982 = vld [vmem:[%s2980 + $0x8] sm:$0xff]
        %v2983 = vld [vmem:[%s2980 + $0x10] sm:$0xff]
        %v2984 = vld [vmem:[%s2980 + $0x18] sm:$0xff]
        %v2985 = vld [vmem:[%s2980 + $0x20] sm:$0xff]
        %v2986 = vld [vmem:[%s2980 + $0x28] sm:$0xff]
        %v2987 = vld [vmem:[%s2980 + $0x30] sm:$0xff]
        %v2988 = vld [vmem:[%s2980 + $0x38] sm:$0xff]
        %v2989 = vld [vmem:[%s2980 + $0x40] sm:$0xff]
        %v2990 = vld [vmem:[%s2980 + $0x48] sm:$0xff]
        %v2991 = vld [vmem:[%s2980 + $0x50] sm:$0xff]
        %v2992 = vld [vmem:[%s2980 + $0x58] sm:$0xff]
        %v2993 = vld [vmem:[%s2980 + $0x60] sm:$0xff]
        %v2994 = vld [vmem:[%s2980 + $0x68] sm:$0xff]
        %v2995 = vld [vmem:[%s2980 + $0x70] sm:$0xff]
        %v2996 = vld [vmem:[%s2980 + $0x78] sm:$0xff]
        %v2997 = vld [vmem:[%s2980 + $0x80] sm:$0xff]
        %v2998 = vld [vmem:[%s2980 + $0x88] sm:$0xff]
        %v2999 = vld [vmem:[%s2980 + $0x90] sm:$0xff]
        %v3000 = vld [vmem:[%s2980 + $0x98] sm:$0xff]
        %v3001 = vld [vmem:[%s2980 + $0xa0] sm:$0xff]
        %v3002 = vld [vmem:[%s2980 + $0xa8] sm:$0xff]
        %v3003 = vld [vmem:[%s2980 + $0xb0] sm:$0xff]
        %v3004 = vld [vmem:[%s2980 + $0xb8] sm:$0xff]
        %v3005 = vld [vmem:[%s2980 + $0xc0] sm:$0xff]
        %v3006 = vld [vmem:[%s2980 + $0xc8] sm:$0xff]
        %v3007 = vld [vmem:[%s2980 + $0xd0] sm:$0xff]
        %v3008 = vld [vmem:[%s2980 + $0xd8] sm:$0xff]
        %v3009 = vld [vmem:[%s2980 + $0xe0] sm:$0xff]
        %v3010 = vld [vmem:[%s2980 + $0xe8] sm:$0xff]
        %v3011 = vld [vmem:[%s2980 + $0xf0] sm:$0xff]
        %v3012 = vld [vmem:[%s2980 + $0xf8] sm:$0xff]
        %v3013 = vld [vmem:[%s2980 + $0x100] sm:$0xff]
        %v3014 = vld [vmem:[%s2980 + $0x108] sm:$0xff]
        %v3015 = vld [vmem:[%s2980 + $0x110] sm:$0xff]
        %v3016 = vld [vmem:[%s2980 + $0x118] sm:$0xff]
        %v3017 = vld [vmem:[%s2980 + $0x120] sm:$0xff]
        %v3018 = vld [vmem:[%s2980 + $0x128] sm:$0xff]
        %v3019 = vld [vmem:[%s2980 + $0x130] sm:$0xff]
        %v3020 = vld [vmem:[%s2980 + $0x138] sm:$0xff]
        %v3021 = vld [vmem:[%s2980 + $0x140] sm:$0xff]
        %v3022 = vld [vmem:[%s2980 + $0x148] sm:$0xff]
        %v3023 = vld [vmem:[%s2980 + $0x150] sm:$0xff]
        %v3024 = vld [vmem:[%s2980 + $0x158] sm:$0xff]
        %v3025 = vld [vmem:[%s2980 + $0x160] sm:$0xff]
        %v3026 = vld [vmem:[%s2980 + $0x168] sm:$0xff]
        %v3027 = vld [vmem:[%s2980 + $0x170] sm:$0xff]
        %v3028 = vld [vmem:[%s2980 + $0x178] sm:$0xff]
        %v3029 = vld [vmem:[%s2980 + $0x180] sm:$0xff]
        %v3030 = vld [vmem:[%s2980 + $0x188] sm:$0xff]
        %v3031 = vld [vmem:[%s2980 + $0x190] sm:$0xff]
        %v3032 = vld [vmem:[%s2980 + $0x198] sm:$0xff]
        %v3033 = vld [vmem:[%s2980 + $0x1a0] sm:$0xff]
        %v3034 = vld [vmem:[%s2980 + $0x1a8] sm:$0xff]
        %v3035 = vld [vmem:[%s2980 + $0x1b0] sm:$0xff]
        %v3036 = vld [vmem:[%s2980 + $0x1b8] sm:$0xff]
        %v3037 = vld [vmem:[%s2980 + $0x1c0] sm:$0xff]
        %v3038 = vld [vmem:[%s2980 + $0x1c8] sm:$0xff]
        %v3039 = vld [vmem:[%s2980 + $0x1d0] sm:$0xff]
        %v3040 = vld [vmem:[%s2980 + $0x1d8] sm:$0xff]
        %v3041 = vld [vmem:[%s2980 + $0x1e0] sm:$0xff]
        %v3042 = vld [vmem:[%s2980 + $0x1e8] sm:$0xff]
        %v3043 = vld [vmem:[%s2980 + $0x1f0] sm:$0xff]
        %v3044 = vld [vmem:[%s2980 + $0x1f8] sm:$0xff]
        %v3045 = vld [vmem:[%s2980 + $0x200] sm:$0xff]
        %v3046 = vld [vmem:[%s2980 + $0x208] sm:$0xff]
        %v3047 = vld [vmem:[%s2980 + $0x210] sm:$0xff]
        %v3048 = vld [vmem:[%s2980 + $0x218] sm:$0xff]
        %v3049 = vld [vmem:[%s2980 + $0x220] sm:$0xff]
        %v3050 = vld [vmem:[%s2980 + $0x228] sm:$0xff]
        %v3051 = vld [vmem:[%s2980 + $0x230] sm:$0xff]
        %v3052 = vld [vmem:[%s2980 + $0x238] sm:$0xff]
        %v3053 = vld [vmem:[%s2980 + $0x240] sm:$0xff]
        %v3054 = vld [vmem:[%s2980 + $0x248] sm:$0xff]
        %v3055 = vld [vmem:[%s2980 + $0x250] sm:$0xff]
        %v3056 = vld [vmem:[%s2980 + $0x258] sm:$0xff]
        %v3057 = vld [vmem:[%s2980 + $0x260] sm:$0xff]
        %v3058 = vld [vmem:[%s2980 + $0x268] sm:$0xff]
        %v3059 = vld [vmem:[%s2980 + $0x270] sm:$0xff]
        %v3060 = vld [vmem:[%s2980 + $0x278] sm:$0xff]
        %v3061 = vld [vmem:[%s2980 + $0x280] sm:$0xff]
        %v3062 = vld [vmem:[%s2980 + $0x288] sm:$0xff]
        %v3063 = vld [vmem:[%s2980 + $0x290] sm:$0xff]
        %v3064 = vld [vmem:[%s2980 + $0x298] sm:$0xff]
        %v3065 = vld [vmem:[%s2980 + $0x2a0] sm:$0xff]
        %v3066 = vld [vmem:[%s2980 + $0x2a8] sm:$0xff]
        %v3067 = vld [vmem:[%s2980 + $0x2b0] sm:$0xff]
        %v3068 = vld [vmem:[%s2980 + $0x2b8] sm:$0xff]
        %v3069 = vld [vmem:[%s2980 + $0x2c0] sm:$0xff]
        %v3070 = vld [vmem:[%s2980 + $0x2c8] sm:$0xff]
        %v3071 = vld [vmem:[%s2980 + $0x2d0] sm:$0xff]
        %v3072 = vld [vmem:[%s2980 + $0x2d8] sm:$0xff]
        %v3073 = vld [vmem:[%s2980 + $0x2e0] sm:$0xff]
        %v3074 = vld [vmem:[%s2980 + $0x2e8] sm:$0xff]
        %v3075 = vld [vmem:[%s2980 + $0x2f0] sm:$0xff]
        %v3076 = vld [vmem:[%s2980 + $0x2f8] sm:$0xff]
        %v3112 = vunpack.c.l.b16 %v2945
        %v3113 = vunpack.c.h.b16 %v2945
        %v3114 = vunpack.c.l.b16 %v2946
        %v3115 = vunpack.c.h.b16 %v2946
        %v3116 = vunpack.c.l.b16 %v2947
        %v3117 = vunpack.c.h.b16 %v2947
        %v3118 = vunpack.c.l.b16 %v2948
        %v3119 = vunpack.c.h.b16 %v2948
        %v3120 = vunpack.c.l.b16 %v2949
        %v3121 = vunpack.c.h.b16 %v2949
        %v3122 = vunpack.c.l.b16 %v2950
        %v3123 = vunpack.c.h.b16 %v2950
        %v3124 = vunpack.c.l.b16 %v2951
        %v3125 = vunpack.c.h.b16 %v2951
        %v3126 = vunpack.c.l.b16 %v2952
        %v3127 = vunpack.c.h.b16 %v2952
        %v3128 = vunpack.c.l.b16 %v2953
        %v3129 = vunpack.c.h.b16 %v2953
        %v3130 = vunpack.c.l.b16 %v2954
        %v3131 = vunpack.c.h.b16 %v2954
        %v3132 = vunpack.c.l.b16 %v2955
        %v3133 = vunpack.c.h.b16 %v2955
        %v3134 = vunpack.c.l.b16 %v2956
        %v3135 = vunpack.c.h.b16 %v2956
        %v3136 = vunpack.c.l.b16 %v2957
        %v3137 = vunpack.c.h.b16 %v2957
        %v3138 = vunpack.c.l.b16 %v2958
        %v3139 = vunpack.c.h.b16 %v2958
        %v3140 = vunpack.c.l.b16 %v2959
        %v3141 = vunpack.c.h.b16 %v2959
        %v3142 = vunpack.c.l.b16 %v2960
        %v3143 = vunpack.c.h.b16 %v2960
        %v3144 = vunpack.c.l.b16 %v2961
        %v3145 = vunpack.c.h.b16 %v2961
        %v3146 = vunpack.c.l.b16 %v2962
        %v3147 = vunpack.c.h.b16 %v2962
        %v3148 = vunpack.c.l.b16 %v2963
        %v3149 = vunpack.c.h.b16 %v2963
        %v3150 = vunpack.c.l.b16 %v2964
        %v3151 = vunpack.c.h.b16 %v2964
        %v3152 = vunpack.c.l.b16 %v2965
        %v3153 = vunpack.c.h.b16 %v2965
        %v3154 = vunpack.c.l.b16 %v2966
        %v3155 = vunpack.c.h.b16 %v2966
        %v3156 = vunpack.c.l.b16 %v2967
        %v3157 = vunpack.c.h.b16 %v2967
        %v3158 = vunpack.c.l.b16 %v2968
        %v3159 = vunpack.c.h.b16 %v2968
        %v3160 = vunpack.c.l.b16 %v2969
        %v3161 = vunpack.c.h.b16 %v2969
        %v3162 = vunpack.c.l.b16 %v2970
        %v3163 = vunpack.c.h.b16 %v2970
        %v3164 = vunpack.c.l.b16 %v2971
        %v3165 = vunpack.c.h.b16 %v2971
        %v3166 = vunpack.c.l.b16 %v2972
        %v3167 = vunpack.c.h.b16 %v2972
        %v3168 = vunpack.c.l.b16 %v2973
        %v3169 = vunpack.c.h.b16 %v2973
        %v3170 = vunpack.c.l.b16 %v2974
        %v3171 = vunpack.c.h.b16 %v2974
        %v3172 = vunpack.c.l.b16 %v2975
        %v3173 = vunpack.c.h.b16 %v2975
        %v3174 = vunpack.c.l.b16 %v2976
        %v3175 = vunpack.c.h.b16 %v2976
        %v3176 = vunpack.c.l.b16 %v2977
        %v3177 = vunpack.c.h.b16 %v2977
        %v3178 = vunpack.c.l.b16 %v2978
        %v3179 = vunpack.c.h.b16 %v2978
        %v3180 = vunpack.c.l.b16 %v2979
        %v3181 = vunpack.c.h.b16 %v2979
        %v3182 = vpack.c.b16 %v3114, %v3112
        %v3183 = vpack.c.b16 %v3115, %v3113
        %v3184 = vpack.c.b16 %v3118, %v3116
        %v3185 = vpack.c.b16 %v3119, %v3117
        %v3186 = vpack.c.b16 %v3122, %v3120
        %v3187 = vpack.c.b16 %v3123, %v3121
        %v3188 = vpack.c.b16 %v3126, %v3124
        %v3189 = vpack.c.b16 %v3127, %v3125
        %v3190 = vpack.c.b16 %v3130, %v3128
        %v3191 = vpack.c.b16 %v3131, %v3129
        %v3192 = vpack.c.b16 %v3134, %v3132
        %v3193 = vpack.c.b16 %v3135, %v3133
        %v3194 = vpack.c.b16 %v3138, %v3136
        %v3195 = vpack.c.b16 %v3139, %v3137
        %v3196 = vpack.c.b16 %v3142, %v3140
        %v3197 = vpack.c.b16 %v3143, %v3141
        %v3198 = vpack.c.b16 %v3146, %v3144
        %v3199 = vpack.c.b16 %v3147, %v3145
        %v3200 = vpack.c.b16 %v3150, %v3148
        %v3201 = vpack.c.b16 %v3151, %v3149
        %v3202 = vpack.c.b16 %v3154, %v3152
        %v3203 = vpack.c.b16 %v3155, %v3153
        %v3204 = vpack.c.b16 %v3158, %v3156
        %v3205 = vpack.c.b16 %v3159, %v3157
        %v3206 = vpack.c.b16 %v3162, %v3160
        %v3207 = vpack.c.b16 %v3163, %v3161
        %v3208 = vpack.c.b16 %v3166, %v3164
        %v3209 = vpack.c.b16 %v3167, %v3165
        %v3210 = vpack.c.b16 %v3170, %v3168
        %v3211 = vpack.c.b16 %v3171, %v3169
        %v3212 = vpack.c.b16 %v3174, %v3172
        %v3213 = vpack.c.b16 %v3175, %v3173
        %v3214 = vpack.c.b16 %v3178, %v3176
        %v3215 = vpack.c.b16 %v3179, %v3177
        %v3216 = vpack.c.b16 %v3180, %v3180
        %v3217 = vpack.c.b16 %v3181, %v3181
        %v3350 = vunpack.c.l.b16 %v2981
        %v3351 = vunpack.c.h.b16 %v2981
        %v3352 = vunpack.c.l.b16 %v2982
        %v3353 = vunpack.c.h.b16 %v2982
        %v3354 = vunpack.c.l.b16 %v2983
        %v3355 = vunpack.c.h.b16 %v2983
        %v3356 = vunpack.c.l.b16 %v2984
        %v3357 = vunpack.c.h.b16 %v2984
        %v3358 = vunpack.c.l.b16 %v2985
        %v3359 = vunpack.c.h.b16 %v2985
        %v3360 = vunpack.c.l.b16 %v2986
        %v3361 = vunpack.c.h.b16 %v2986
        %v3362 = vunpack.c.l.b16 %v2987
        %v3363 = vunpack.c.h.b16 %v2987
        %v3364 = vunpack.c.l.b16 %v2988
        %v3365 = vunpack.c.h.b16 %v2988
        %v3366 = vunpack.c.l.b16 %v2989
        %v3367 = vunpack.c.h.b16 %v2989
        %v3368 = vunpack.c.l.b16 %v2990
        %v3369 = vunpack.c.h.b16 %v2990
        %v3370 = vunpack.c.l.b16 %v2991
        %v3371 = vunpack.c.h.b16 %v2991
        %v3372 = vunpack.c.l.b16 %v2992
        %v3373 = vunpack.c.h.b16 %v2992
        %v3374 = vunpack.c.l.b16 %v2993
        %v3375 = vunpack.c.h.b16 %v2993
        %v3376 = vunpack.c.l.b16 %v2994
        %v3377 = vunpack.c.h.b16 %v2994
        %v3378 = vunpack.c.l.b16 %v2995
        %v3379 = vunpack.c.h.b16 %v2995
        %v3380 = vunpack.c.l.b16 %v2996
        %v3381 = vunpack.c.h.b16 %v2996
        %v3382 = vunpack.c.l.b16 %v2997
        %v3383 = vunpack.c.h.b16 %v2997
        %v3384 = vunpack.c.l.b16 %v2998
        %v3385 = vunpack.c.h.b16 %v2998
        %v3386 = vunpack.c.l.b16 %v2999
        %v3387 = vunpack.c.h.b16 %v2999
        %v3388 = vunpack.c.l.b16 %v3000
        %v3389 = vunpack.c.h.b16 %v3000
        %v3390 = vunpack.c.l.b16 %v3001
        %v3391 = vunpack.c.h.b16 %v3001
        %v3392 = vunpack.c.l.b16 %v3002
        %v3393 = vunpack.c.h.b16 %v3002
        %v3394 = vunpack.c.l.b16 %v3003
        %v3395 = vunpack.c.h.b16 %v3003
        %v3396 = vunpack.c.l.b16 %v3004
        %v3397 = vunpack.c.h.b16 %v3004
        %v3398 = vunpack.c.l.b16 %v3005
        %v3399 = vunpack.c.h.b16 %v3005
        %v3400 = vunpack.c.l.b16 %v3006
        %v3401 = vunpack.c.h.b16 %v3006
        %v3402 = vunpack.c.l.b16 %v3007
        %v3403 = vunpack.c.h.b16 %v3007
        %v3404 = vunpack.c.l.b16 %v3008
        %v3405 = vunpack.c.h.b16 %v3008
        %v3406 = vunpack.c.l.b16 %v3009
        %v3407 = vunpack.c.h.b16 %v3009
        %v3408 = vunpack.c.l.b16 %v3010
        %v3409 = vunpack.c.h.b16 %v3010
        %v3410 = vunpack.c.l.b16 %v3011
        %v3411 = vunpack.c.h.b16 %v3011
        %v3412 = vunpack.c.l.b16 %v3012
        %v3413 = vunpack.c.h.b16 %v3012
        %v3414 = vunpack.c.l.b16 %v3013
        %v3415 = vunpack.c.h.b16 %v3013
        %v3416 = vunpack.c.l.b16 %v3014
        %v3417 = vunpack.c.h.b16 %v3014
        %v3418 = vunpack.c.l.b16 %v3015
        %v3419 = vunpack.c.h.b16 %v3015
        %v3420 = vunpack.c.l.b16 %v3016
        %v3421 = vunpack.c.h.b16 %v3016
        %v3422 = vunpack.c.l.b16 %v3017
        %v3423 = vunpack.c.h.b16 %v3017
        %v3424 = vunpack.c.l.b16 %v3018
        %v3425 = vunpack.c.h.b16 %v3018
        %v3426 = vunpack.c.l.b16 %v3019
        %v3427 = vunpack.c.h.b16 %v3019
        %v3428 = vunpack.c.l.b16 %v3020
        %v3429 = vunpack.c.h.b16 %v3020
        %v3430 = vunpack.c.l.b16 %v3021
        %v3431 = vunpack.c.h.b16 %v3021
        %v3432 = vunpack.c.l.b16 %v3022
        %v3433 = vunpack.c.h.b16 %v3022
        %v3434 = vunpack.c.l.b16 %v3023
        %v3435 = vunpack.c.h.b16 %v3023
        %v3436 = vunpack.c.l.b16 %v3024
        %v3437 = vunpack.c.h.b16 %v3024
        %v3438 = vunpack.c.l.b16 %v3025
        %v3439 = vunpack.c.h.b16 %v3025
        %v3440 = vunpack.c.l.b16 %v3026
        %v3441 = vunpack.c.h.b16 %v3026
        %v3442 = vunpack.c.l.b16 %v3027
        %v3443 = vunpack.c.h.b16 %v3027
        %v3444 = vunpack.c.l.b16 %v3028
        %v3445 = vunpack.c.h.b16 %v3028
        %v3446 = vunpack.c.l.b16 %v3029
        %v3447 = vunpack.c.h.b16 %v3029
        %v3448 = vunpack.c.l.b16 %v3030
        %v3449 = vunpack.c.h.b16 %v3030
        %v3450 = vunpack.c.l.b16 %v3031
        %v3451 = vunpack.c.h.b16 %v3031
        %v3452 = vunpack.c.l.b16 %v3032
        %v3453 = vunpack.c.h.b16 %v3032
        %v3454 = vunpack.c.l.b16 %v3033
        %v3455 = vunpack.c.h.b16 %v3033
        %v3456 = vunpack.c.l.b16 %v3034
        %v3457 = vunpack.c.h.b16 %v3034
        %v3458 = vunpack.c.l.b16 %v3035
        %v3459 = vunpack.c.h.b16 %v3035
        %v3460 = vunpack.c.l.b16 %v3036
        %v3461 = vunpack.c.h.b16 %v3036
        %v3462 = vunpack.c.l.b16 %v3037
        %v3463 = vunpack.c.h.b16 %v3037
        %v3464 = vunpack.c.l.b16 %v3038
        %v3465 = vunpack.c.h.b16 %v3038
        %v3466 = vunpack.c.l.b16 %v3039
        %v3467 = vunpack.c.h.b16 %v3039
        %v3468 = vunpack.c.l.b16 %v3040
        %v3469 = vunpack.c.h.b16 %v3040
        %v3470 = vunpack.c.l.b16 %v3041
        %v3471 = vunpack.c.h.b16 %v3041
        %v3472 = vunpack.c.l.b16 %v3042
        %v3473 = vunpack.c.h.b16 %v3042
        %v3474 = vunpack.c.l.b16 %v3043
        %v3475 = vunpack.c.h.b16 %v3043
        %v3476 = vunpack.c.l.b16 %v3044
        %v3477 = vunpack.c.h.b16 %v3044
        %v3478 = vunpack.c.l.b16 %v3045
        %v3479 = vunpack.c.h.b16 %v3045
        %v3480 = vunpack.c.l.b16 %v3046
        %v3481 = vunpack.c.h.b16 %v3046
        %v3482 = vunpack.c.l.b16 %v3047
        %v3483 = vunpack.c.h.b16 %v3047
        %v3484 = vunpack.c.l.b16 %v3048
        %v3485 = vunpack.c.h.b16 %v3048
        %v3486 = vunpack.c.l.b16 %v3049
        %v3487 = vunpack.c.h.b16 %v3049
        %v3488 = vunpack.c.l.b16 %v3050
        %v3489 = vunpack.c.h.b16 %v3050
        %v3490 = vunpack.c.l.b16 %v3051
        %v3491 = vunpack.c.h.b16 %v3051
        %v3492 = vunpack.c.l.b16 %v3052
        %v3493 = vunpack.c.h.b16 %v3052
        %v3494 = vunpack.c.l.b16 %v3053
        %v3495 = vunpack.c.h.b16 %v3053
        %v3496 = vunpack.c.l.b16 %v3054
        %v3497 = vunpack.c.h.b16 %v3054
        %v3498 = vunpack.c.l.b16 %v3055
        %v3499 = vunpack.c.h.b16 %v3055
        %v3500 = vunpack.c.l.b16 %v3056
        %v3501 = vunpack.c.h.b16 %v3056
        %v3502 = vunpack.c.l.b16 %v3057
        %v3503 = vunpack.c.h.b16 %v3057
        %v3504 = vunpack.c.l.b16 %v3058
        %v3505 = vunpack.c.h.b16 %v3058
        %v3506 = vunpack.c.l.b16 %v3059
        %v3507 = vunpack.c.h.b16 %v3059
        %v3508 = vunpack.c.l.b16 %v3060
        %v3509 = vunpack.c.h.b16 %v3060
        %v3510 = vunpack.c.l.b16 %v3061
        %v3511 = vunpack.c.h.b16 %v3061
        %v3512 = vunpack.c.l.b16 %v3062
        %v3513 = vunpack.c.h.b16 %v3062
        %v3514 = vunpack.c.l.b16 %v3063
        %v3515 = vunpack.c.h.b16 %v3063
        %v3516 = vunpack.c.l.b16 %v3064
        %v3517 = vunpack.c.h.b16 %v3064
        %v3518 = vunpack.c.l.b16 %v3065
        %v3519 = vunpack.c.h.b16 %v3065
        %v3520 = vunpack.c.l.b16 %v3066
        %v3521 = vunpack.c.h.b16 %v3066
        %v3522 = vunpack.c.l.b16 %v3067
        %v3523 = vunpack.c.h.b16 %v3067
        %v3524 = vunpack.c.l.b16 %v3068
        %v3525 = vunpack.c.h.b16 %v3068
        %v3526 = vunpack.c.l.b16 %v3069
        %v3527 = vunpack.c.h.b16 %v3069
        %v3528 = vunpack.c.l.b16 %v3070
        %v3529 = vunpack.c.h.b16 %v3070
        %v3530 = vunpack.c.l.b16 %v3071
        %v3531 = vunpack.c.h.b16 %v3071
        %v3532 = vunpack.c.l.b16 %v3072
        %v3533 = vunpack.c.h.b16 %v3072
        %v3534 = vunpack.c.l.b16 %v3073
        %v3535 = vunpack.c.h.b16 %v3073
        %v3536 = vunpack.c.l.b16 %v3074
        %v3537 = vunpack.c.h.b16 %v3074
        %v3538 = vunpack.c.l.b16 %v3075
        %v3539 = vunpack.c.h.b16 %v3075
        %v3540 = vunpack.c.l.b16 %v3076
        %v3541 = vunpack.c.h.b16 %v3076
        %v3542 = vpack.c.b16 %v3356, %v3350
        %v3543 = vpack.c.b16 %v3357, %v3351
        %v3544 = vpack.c.b16 %v3358, %v3352
        %v3545 = vpack.c.b16 %v3359, %v3353
        %v3546 = vpack.c.b16 %v3360, %v3354
        %v3547 = vpack.c.b16 %v3361, %v3355
        %v3548 = vpack.c.b16 %v3368, %v3362
        %v3549 = vpack.c.b16 %v3369, %v3363
        %v3550 = vpack.c.b16 %v3370, %v3364
        %v3551 = vpack.c.b16 %v3371, %v3365
        %v3552 = vpack.c.b16 %v3372, %v3366
        %v3553 = vpack.c.b16 %v3373, %v3367
        %v3554 = vpack.c.b16 %v3380, %v3374
        %v3555 = vpack.c.b16 %v3381, %v3375
        %v3556 = vpack.c.b16 %v3382, %v3376
        %v3557 = vpack.c.b16 %v3383, %v3377
        %v3558 = vpack.c.b16 %v3384, %v3378
        %v3559 = vpack.c.b16 %v3385, %v3379
        %v3560 = vpack.c.b16 %v3392, %v3386
        %v3561 = vpack.c.b16 %v3393, %v3387
        %v3562 = vpack.c.b16 %v3394, %v3388
        %v3563 = vpack.c.b16 %v3395, %v3389
        %v3564 = vpack.c.b16 %v3396, %v3390
        %v3565 = vpack.c.b16 %v3397, %v3391
        %v3566 = vpack.c.b16 %v3404, %v3398
        %v3567 = vpack.c.b16 %v3405, %v3399
        %v3568 = vpack.c.b16 %v3406, %v3400
        %v3569 = vpack.c.b16 %v3407, %v3401
        %v3570 = vpack.c.b16 %v3408, %v3402
        %v3571 = vpack.c.b16 %v3409, %v3403
        %v3572 = vpack.c.b16 %v3416, %v3410
        %v3573 = vpack.c.b16 %v3417, %v3411
        %v3574 = vpack.c.b16 %v3418, %v3412
        %v3575 = vpack.c.b16 %v3419, %v3413
        %v3576 = vpack.c.b16 %v3420, %v3414
        %v3577 = vpack.c.b16 %v3421, %v3415
        %v3578 = vpack.c.b16 %v3428, %v3422
        %v3579 = vpack.c.b16 %v3429, %v3423
        %v3580 = vpack.c.b16 %v3430, %v3424
        %v3581 = vpack.c.b16 %v3431, %v3425
        %v3582 = vpack.c.b16 %v3432, %v3426
        %v3583 = vpack.c.b16 %v3433, %v3427
        %v3584 = vpack.c.b16 %v3440, %v3434
        %v3585 = vpack.c.b16 %v3441, %v3435
        %v3586 = vpack.c.b16 %v3442, %v3436
        %v3587 = vpack.c.b16 %v3443, %v3437
        %v3588 = vpack.c.b16 %v3444, %v3438
        %v3589 = vpack.c.b16 %v3445, %v3439
        %v3590 = vpack.c.b16 %v3452, %v3446
        %v3591 = vpack.c.b16 %v3453, %v3447
        %v3592 = vpack.c.b16 %v3454, %v3448
        %v3593 = vpack.c.b16 %v3455, %v3449
        %v3594 = vpack.c.b16 %v3456, %v3450
        %v3595 = vpack.c.b16 %v3457, %v3451
        %v3596 = vpack.c.b16 %v3464, %v3458
        %v3597 = vpack.c.b16 %v3465, %v3459
        %v3598 = vpack.c.b16 %v3466, %v3460
        %v3599 = vpack.c.b16 %v3467, %v3461
        %v3600 = vpack.c.b16 %v3468, %v3462
        %v3601 = vpack.c.b16 %v3469, %v3463
        %v3602 = vpack.c.b16 %v3476, %v3470
        %v3603 = vpack.c.b16 %v3477, %v3471
        %v3604 = vpack.c.b16 %v3478, %v3472
        %v3605 = vpack.c.b16 %v3479, %v3473
        %v3606 = vpack.c.b16 %v3480, %v3474
        %v3607 = vpack.c.b16 %v3481, %v3475
        %v3608 = vpack.c.b16 %v3488, %v3482
        %v3609 = vpack.c.b16 %v3489, %v3483
        %v3610 = vpack.c.b16 %v3490, %v3484
        %v3611 = vpack.c.b16 %v3491, %v3485
        %v3612 = vpack.c.b16 %v3492, %v3486
        %v3613 = vpack.c.b16 %v3493, %v3487
        %v3614 = vpack.c.b16 %v3500, %v3494
        %v3615 = vpack.c.b16 %v3501, %v3495
        %v3616 = vpack.c.b16 %v3502, %v3496
        %v3617 = vpack.c.b16 %v3503, %v3497
        %v3618 = vpack.c.b16 %v3504, %v3498
        %v3619 = vpack.c.b16 %v3505, %v3499
        %v3620 = vpack.c.b16 %v3512, %v3506
        %v3621 = vpack.c.b16 %v3513, %v3507
        %v3622 = vpack.c.b16 %v3514, %v3508
        %v3623 = vpack.c.b16 %v3515, %v3509
        %v3624 = vpack.c.b16 %v3516, %v3510
        %v3625 = vpack.c.b16 %v3517, %v3511
        %v3626 = vpack.c.b16 %v3524, %v3518
        %v3627 = vpack.c.b16 %v3525, %v3519
        %v3628 = vpack.c.b16 %v3526, %v3520
        %v3629 = vpack.c.b16 %v3527, %v3521
        %v3630 = vpack.c.b16 %v3528, %v3522
        %v3631 = vpack.c.b16 %v3529, %v3523
        %v3632 = vpack.c.b16 %v3536, %v3530
        %v3633 = vpack.c.b16 %v3537, %v3531
        %v3634 = vpack.c.b16 %v3538, %v3532
        %v3635 = vpack.c.b16 %v3539, %v3533
        %v3636 = vpack.c.b16 %v3540, %v3534
        %v3637 = vpack.c.b16 %v3541, %v3535
        %3734 = vmatprep.subr.bf16.mxu0 %v3543
        %3735 = vmatpush1.bf16.msra.mxu0 %v3542
        %3736 = vmatprep.subr.bf16.mxu0 %v3549
        %3737 = vmatpush1.bf16.msra.mxu0 %v3548
        %3738 = vmatprep.subr.bf16.mxu0 %v3555
        %3739 = vmatpush1.bf16.msra.mxu0 %v3554
        %3740 = vmatprep.subr.bf16.mxu0 %v3561
        %3741 = vmatpush1.bf16.msra.mxu0 %v3560
        %3742 = vmatprep.subr.bf16.mxu0 %v3567
        %3743 = vmatpush1.bf16.msra.mxu0 %v3566
        %3744 = vmatprep.subr.bf16.mxu0 %v3573
        %3745 = vmatpush1.bf16.msra.mxu0 %v3572
        %3746 = vmatprep.subr.bf16.mxu0 %v3579
        %3747 = vmatpush1.bf16.msra.mxu0 %v3578
        %3748 = vmatprep.subr.bf16.mxu0 %v3585
        %3749 = vmatpush1.bf16.msra.mxu0 %v3584
        %3750 = vmatprep.subr.bf16.mxu0 %v3591
        %3751 = vmatpush1.bf16.msra.mxu0 %v3590
        %3752 = vmatprep.subr.bf16.mxu0 %v3597
        %3753 = vmatpush1.bf16.msra.mxu0 %v3596
        %3754 = vmatprep.subr.bf16.mxu0 %v3603
        %3755 = vmatpush1.bf16.msra.mxu0 %v3602
        %3756 = vmatprep.subr.bf16.mxu0 %v3609
        %3757 = vmatpush1.bf16.msra.mxu0 %v3608
        %3758 = vmatprep.subr.bf16.mxu0 %v3615
        %3759 = vmatpush1.bf16.msra.mxu0 %v3614
        %3760 = vmatprep.subr.bf16.mxu0 %v3621
        %3761 = vmatpush1.bf16.msra.mxu0 %v3620
        %3762 = vmatprep.subr.bf16.mxu0 %v3627
        %3763 = vmatpush1.bf16.msra.mxu0 %v3626
        %3764 = vmatprep.subr.bf16.mxu0 %v3633
        %3765 = vmatpush1.bf16.msra.mxu0 %v3632
        %3766 = vmatprep.mubr.bf16.mxu0 %v3183
        %3767 = vmatmul.mubr.bf16.gmra.mrb[0].mxu0 %v3182
        %v3768 = vpop.f32.mrb[0].mxu0
        %v3769 = vpop.f32.mrb[0].mxu0
        %v3770 = vpop.f32.mrb[0].mxu0
        %v3771 = vadd.f32 0.0, %v3770
        %v3772 = vpop.f32.mrb[0].mxu0
        %v3773 = vadd.f32 0.0, %v3772
        %3774 = vmatprep.mubr.bf16.mxu0 %v3185
        %3775 = vmatmul.mubr.bf16.gmra.mrb[0].mxu0 %v3184
        %v3776 = vpop.f32.mrb[0].mxu0
        %v3777 = vadd.f32 0.0, %v3776
        %v3778 = vpop.f32.mrb[0].mxu0
        %v3779 = vadd.f32 0.0, %v3778
        %v3780 = vpop.f32.mrb[0].mxu0
        %v3781 = vadd.f32 0.0, %v3780
        %v3782 = vpop.f32.mrb[0].mxu0
        %v3783 = vadd.f32 0.0, %v3782
        %3784 = vmatprep.mubr.bf16.mxu0 %v3187
        %3785 = vmatmul.mubr.bf16.gmra.mrb[0].mxu0 %v3186
        %v3786 = vpop.f32.mrb[0].mxu0
        %v3787 = vadd.f32 0.0, %v3786
        %v3788 = vpop.f32.mrb[0].mxu0
        %v3789 = vadd.f32 0.0, %v3788
        %v3790 = vpop.f32.mrb[0].mxu0
        %v3791 = vadd.f32 0.0, %v3790
        %v3792 = vpop.f32.mrb[0].mxu0
        %v3793 = vadd.f32 0.0, %v3792
        %3794 = vmatprep.mubr.bf16.mxu0 %v3189
        %3795 = vmatmul.mubr.bf16.gmra.mrb[0].mxu0 %v3188
        %v3796 = vpop.f32.mrb[0].mxu0
        %v3797 = vadd.f32 0.0, %v3796
        %v3798 = vpop.f32.mrb[0].mxu0
        %v3799 = vadd.f32 0.0, %v3798
        %v3800 = vpop.f32.mrb[0].mxu0
        %v3801 = vadd.f32 0.0, %v3800
        %v3802 = vpop.f32.mrb[0].mxu0
        %v3803 = vadd.f32 0.0, %v3802
        %3804 = vmatprep.mubr.bf16.mxu0 %v3191
        %3805 = vmatmul.mubr.bf16.gmra.mrb[0].mxu0 %v3190
        %v3806 = vpop.f32.mrb[0].mxu0
        %v3807 = vadd.f32 0.0, %v3806
        %v3808 = vpop.f32.mrb[0].mxu0
        %v3809 = vadd.f32 0.0, %v3808
        %v3810 = vpop.f32.mrb[0].mxu0
        %v3811 = vadd.f32 0.0, %v3810
        %v3812 = vpop.f32.mrb[0].mxu0
        %v3813 = vadd.f32 0.0, %v3812
        %3814 = vmatprep.mubr.bf16.mxu0 %v3193
        %3815 = vmatmul.mubr.bf16.gmra.mrb[0].mxu0 %v3192
        %v3816 = vpop.f32.mrb[0].mxu0
        %v3817 = vadd.f32 0.0, %v3816
        %v3818 = vpop.f32.mrb[0].mxu0
        %v3819 = vadd.f32 0.0, %v3818
        %v3820 = vpop.f32.mrb[0].mxu0
        %v3821 = vadd.f32 0.0, %v3820
        %v3822 = vpop.f32.mrb[0].mxu0
        %v3823 = vadd.f32 0.0, %v3822
        %3824 = vmatprep.mubr.bf16.mxu0 %v3195
        %3825 = vmatmul.mubr.bf16.gmra.mrb[0].mxu0 %v3194
        %v3826 = vpop.f32.mrb[0].mxu0
        %v3827 = vadd.f32 0.0, %v3826
        %v3828 = vpop.f32.mrb[0].mxu0
        %v3829 = vadd.f32 0.0, %v3828
        %v3830 = vpop.f32.mrb[0].mxu0
        %v3831 = vadd.f32 0.0, %v3830
        %v3832 = vpop.f32.mrb[0].mxu0
        %v3833 = vadd.f32 0.0, %v3832
        %3834 = vmatprep.mubr.bf16.mxu0 %v3197
        %3835 = vmatmul.mubr.bf16.gmra.mrb[0].mxu0 %v3196
        %v3836 = vpop.f32.mrb[0].mxu0
        %v3837 = vadd.f32 0.0, %v3836
        %v3838 = vpop.f32.mrb[0].mxu0
        %v3839 = vadd.f32 0.0, %v3838
        %v3840 = vpop.f32.mrb[0].mxu0
        %v3841 = vadd.f32 0.0, %v3840
        %v3842 = vpop.f32.mrb[0].mxu0
        %v3843 = vadd.f32 0.0, %v3842
        %3844 = vmatprep.mubr.bf16.mxu0 %v3199
        %3845 = vmatmul.mubr.bf16.gmra.mrb[0].mxu0 %v3198
        %v3846 = vpop.f32.mrb[0].mxu0
        %v3847 = vadd.f32 0.0, %v3846
        %v3848 = vpop.f32.mrb[0].mxu0
        %v3849 = vadd.f32 0.0, %v3848
        %v3850 = vpop.f32.mrb[0].mxu0
        %v3851 = vadd.f32 0.0, %v3850
        %v3852 = vpop.f32.mrb[0].mxu0
        %v3853 = vadd.f32 0.0, %v3852
        %3854 = vmatprep.mubr.bf16.mxu0 %v3201
        %3855 = vmatmul.mubr.bf16.gmra.mrb[0].mxu0 %v3200
        %v3856 = vpop.f32.mrb[0].mxu0
        %v3857 = vadd.f32 0.0, %v3856
        %v3858 = vpop.f32.mrb[0].mxu0
        %v3859 = vadd.f32 0.0, %v3858
        %v3860 = vpop.f32.mrb[0].mxu0
        %v3861 = vadd.f32 0.0, %v3860
        %v3862 = vpop.f32.mrb[0].mxu0
        %v3863 = vadd.f32 0.0, %v3862
        %3864 = vmatprep.mubr.bf16.mxu0 %v3203
        %3865 = vmatmul.mubr.bf16.gmra.mrb[0].mxu0 %v3202
        %v3866 = vpop.f32.mrb[0].mxu0
        %v3867 = vadd.f32 0.0, %v3866
        %v3868 = vpop.f32.mrb[0].mxu0
        %v3869 = vadd.f32 0.0, %v3868
        %v3870 = vpop.f32.mrb[0].mxu0
        %v3871 = vadd.f32 0.0, %v3870
        %v3872 = vpop.f32.mrb[0].mxu0
        %v3873 = vadd.f32 0.0, %v3872
        %3874 = vmatprep.mubr.bf16.mxu0 %v3205
        %3875 = vmatmul.mubr.bf16.gmra.mrb[0].mxu0 %v3204
        %v3876 = vpop.f32.mrb[0].mxu0
        %v3877 = vadd.f32 0.0, %v3876
        %v3878 = vpop.f32.mrb[0].mxu0
        %v3879 = vadd.f32 0.0, %v3878
        %v3880 = vpop.f32.mrb[0].mxu0
        %v3881 = vadd.f32 0.0, %v3880
        %v3882 = vpop.f32.mrb[0].mxu0
        %v3883 = vadd.f32 0.0, %v3882
        %3884 = vmatprep.mubr.bf16.mxu0 %v3207
        %3885 = vmatmul.mubr.bf16.gmra.mrb[0].mxu0 %v3206
        %v3886 = vpop.f32.mrb[0].mxu0
        %v3887 = vadd.f32 0.0, %v3886
        %v3888 = vpop.f32.mrb[0].mxu0
        %v3889 = vadd.f32 0.0, %v3888
        %v3890 = vpop.f32.mrb[0].mxu0
        %v3891 = vadd.f32 0.0, %v3890
        %v3892 = vpop.f32.mrb[0].mxu0
        %v3893 = vadd.f32 0.0, %v3892
        %3894 = vmatprep.mubr.bf16.mxu0 %v3209
        %3895 = vmatmul.mubr.bf16.gmra.mrb[0].mxu0 %v3208
        %v3896 = vpop.f32.mrb[0].mxu0
        %v3897 = vadd.f32 0.0, %v3896
        %v3898 = vpop.f32.mrb[0].mxu0
        %v3899 = vadd.f32 0.0, %v3898
        %v3900 = vpop.f32.mrb[0].mxu0
        %v3901 = vadd.f32 0.0, %v3900
        %v3902 = vpop.f32.mrb[0].mxu0
        %v3903 = vadd.f32 0.0, %v3902
        %3904 = vmatprep.mubr.bf16.mxu0 %v3211
        %3905 = vmatmul.mubr.bf16.gmra.mrb[0].mxu0 %v3210
        %v3906 = vpop.f32.mrb[0].mxu0
        %v3907 = vadd.f32 0.0, %v3906
        %v3908 = vpop.f32.mrb[0].mxu0
        %v3909 = vadd.f32 0.0, %v3908
        %v3910 = vpop.f32.mrb[0].mxu0
        %v3911 = vadd.f32 0.0, %v3910
        %v3912 = vpop.f32.mrb[0].mxu0
        %v3913 = vadd.f32 0.0, %v3912
        %3914 = vmatprep.mubr.bf16.mxu0 %v3213
        %3915 = vmatmul.mubr.bf16.gmra.mrb[0].mxu0 %v3212
        %v3916 = vpop.f32.mrb[0].mxu0
        %v3917 = vadd.f32 0.0, %v3916
        %v3918 = vpop.f32.mrb[0].mxu0
        %v3919 = vadd.f32 0.0, %v3918
        %v3920 = vpop.f32.mrb[0].mxu0
        %v3921 = vadd.f32 0.0, %v3920
        %v3922 = vpop.f32.mrb[0].mxu0
        %v3923 = vadd.f32 0.0, %v3922
        %3924 = vmatprep.mubr.bf16.mxu0 %v3215
        %3925 = vmatmul.mubr.bf16.gmra.mrb[0].mxu0 %v3214
        %v3926 = vpop.f32.mrb[0].mxu0
        %v3927 = vadd.f32 0.0, %v3926
        %v3928 = vpop.f32.mrb[0].mxu0
        %v3929 = vadd.f32 0.0, %v3928
        %v3930 = vpop.f32.mrb[0].mxu0
        %v3931 = vadd.f32 0.0, %v3930
        %v3932 = vpop.f32.mrb[0].mxu0
        %v3933 = vadd.f32 0.0, %v3932
        %3934 = vmatprep.mubr.bf16.mxu0 %v3217
        %3935 = vmatmul.mubr.bf16.gmra.mrb[0].mxu0 %v3216
        %v3936 = vpop.f32.mrb[0].mxu0
        %v3937 = vpop.f32.mrb[0].mxu0
        %v3938 = vpop.f32.mrb[0].mxu0
        %v3939 = vpop.f32.mrb[0].mxu0
        %3940 = vdwg.mxu0
        %3941 = vmatprep.subr.bf16.mxu0 %v3545
        %3942 = vmatpush1.bf16.msra.mxu0 %v3544
        %3943 = vmatprep.subr.bf16.mxu0 %v3551
        %3944 = vmatpush1.bf16.msra.mxu0 %v3550
        %3945 = vmatprep.subr.bf16.mxu0 %v3557
        %3946 = vmatpush1.bf16.msra.mxu0 %v3556
        %3947 = vmatprep.subr.bf16.mxu0 %v3563
        %3948 = vmatpush1.bf16.msra.mxu0 %v3562
        %3949 = vmatprep.subr.bf16.mxu0 %v3569
        %3950 = vmatpush1.bf16.msra.mxu0 %v3568
        %3951 = vmatprep.subr.bf16.mxu0 %v3575
        %3952 = vmatpush1.bf16.msra.mxu0 %v3574
        %3953 = vmatprep.subr.bf16.mxu0 %v3581
        %3954 = vmatpush1.bf16.msra.mxu0 %v3580
        %3955 = vmatprep.subr.bf16.mxu0 %v3587
        %3956 = vmatpush1.bf16.msra.mxu0 %v3586
        %3957 = vmatprep.subr.bf16.mxu0 %v3593
        %3958 = vmatpush1.bf16.msra.mxu0 %v3592
        %3959 = vmatprep.subr.bf16.mxu0 %v3599
        %3960 = vmatpush1.bf16.msra.mxu0 %v3598
        %3961 = vmatprep.subr.bf16.mxu0 %v3605
        %3962 = vmatpush1.bf16.msra.mxu0 %v3604
        %3963 = vmatprep.subr.bf16.mxu0 %v3611
        %3964 = vmatpush1.bf16.msra.mxu0 %v3610
        %3965 = vmatprep.subr.bf16.mxu0 %v3617
        %3966 = vmatpush1.bf16.msra.mxu0 %v3616
        %3967 = vmatprep.subr.bf16.mxu0 %v3623
        %3968 = vmatpush1.bf16.msra.mxu0 %v3622
        %3969 = vmatprep.subr.bf16.mxu0 %v3629
        %3970 = vmatpush1.bf16.msra.mxu0 %v3628
        %3971 = vmatprep.subr.bf16.mxu0 %v3635
        %3972 = vmatpush1.bf16.msra.mxu0 %v3634
        %3973 = vmatprep.mubr.bf16.mxu0 %v3183
        %3974 = vmatmul.mubr.bf16.gmra.mrb[0].mxu0 %v3182
        %v3975 = vpop.f32.mrb[0].mxu0
        %v3976 = vpop.f32.mrb[0].mxu0
        %v3977 = vpop.f32.mrb[0].mxu0
        %v3978 = vpop.f32.mrb[0].mxu0
        %3979 = vmatprep.mubr.bf16.mxu0 %v3185
        %3980 = vmatmul.mubr.bf16.gmra.mrb[0].mxu0 %v3184
        %v3981 = vpop.f32.mrb[0].mxu0
        %v3982 = vadd.f32 0.0, %v3981
        %v3983 = vpop.f32.mrb[0].mxu0
        %v3984 = vadd.f32 0.0, %v3983
        %v3985 = vpop.f32.mrb[0].mxu0
        %v3986 = vadd.f32 0.0, %v3985
        %v3987 = vpop.f32.mrb[0].mxu0
        %v3988 = vadd.f32 0.0, %v3987
        %3989 = vmatprep.mubr.bf16.mxu0 %v3187
        %3990 = vmatmul.mubr.bf16.gmra.mrb[0].mxu0 %v3186
        %v3991 = vpop.f32.mrb[0].mxu0
        %v3992 = vadd.f32 0.0, %v3991
        %v3993 = vpop.f32.mrb[0].mxu0
        %v3994 = vadd.f32 0.0, %v3993
        %v3995 = vpop.f32.mrb[0].mxu0
        %v3996 = vadd.f32 0.0, %v3995
        %v3997 = vpop.f32.mrb[0].mxu0
        %v3998 = vadd.f32 0.0, %v3997
        %3999 = vmatprep.mubr.bf16.mxu0 %v3189
        %4000 = vmatmul.mubr.bf16.gmra.mrb[0].mxu0 %v3188
        %v4001 = vpop.f32.mrb[0].mxu0
        %v4002 = vadd.f32 0.0, %v4001
        %v4003 = vpop.f32.mrb[0].mxu0
        %v4004 = vadd.f32 0.0, %v4003
        %v4005 = vpop.f32.mrb[0].mxu0
        %v4006 = vadd.f32 0.0, %v4005
        %v4007 = vpop.f32.mrb[0].mxu0
        %v4008 = vadd.f32 0.0, %v4007
        %4009 = vmatprep.mubr.bf16.mxu0 %v3191
        %4010 = vmatmul.mubr.bf16.gmra.mrb[0].mxu0 %v3190
        %v4011 = vpop.f32.mrb[0].mxu0
        %v4012 = vadd.f32 0.0, %v4011
        %v4013 = vpop.f32.mrb[0].mxu0
        %v4014 = vadd.f32 0.0, %v4013
        %v4015 = vpop.f32.mrb[0].mxu0
        %v4016 = vadd.f32 0.0, %v4015
        %v4017 = vpop.f32.mrb[0].mxu0
        %v4018 = vadd.f32 0.0, %v4017
        %4019 = vmatprep.mubr.bf16.mxu0 %v3193
        %4020 = vmatmul.mubr.bf16.gmra.mrb[0].mxu0 %v3192
        %v4021 = vpop.f32.mrb[0].mxu0
        %v4022 = vadd.f32 0.0, %v4021
        %v4023 = vpop.f32.mrb[0].mxu0
        %v4024 = vadd.f32 0.0, %v4023
        %v4025 = vpop.f32.mrb[0].mxu0
        %v4026 = vadd.f32 0.0, %v4025
        %v4027 = vpop.f32.mrb[0].mxu0
        %v4028 = vadd.f32 0.0, %v4027
        %4029 = vmatprep.mubr.bf16.mxu0 %v3195
        %4030 = vmatmul.mubr.bf16.gmra.mrb[0].mxu0 %v3194
        %v4031 = vpop.f32.mrb[0].mxu0
        %v4032 = vadd.f32 0.0, %v4031
        %v4033 = vpop.f32.mrb[0].mxu0
        %v4034 = vadd.f32 0.0, %v4033
        %v4035 = vpop.f32.mrb[0].mxu0
        %v4036 = vadd.f32 0.0, %v4035
        %v4037 = vpop.f32.mrb[0].mxu0
        %v4038 = vadd.f32 0.0, %v4037
        %4039 = vmatprep.mubr.bf16.mxu0 %v3197
        %4040 = vmatmul.mubr.bf16.gmra.mrb[0].mxu0 %v3196
        %v4041 = vpop.f32.mrb[0].mxu0
        %v4042 = vadd.f32 0.0, %v4041
        %v4043 = vpop.f32.mrb[0].mxu0
        %v4044 = vadd.f32 0.0, %v4043
        %v4045 = vpop.f32.mrb[0].mxu0
        %v4046 = vadd.f32 0.0, %v4045
        %v4047 = vpop.f32.mrb[0].mxu0
        %v4048 = vadd.f32 0.0, %v4047
        %4049 = vmatprep.mubr.bf16.mxu0 %v3199
        %4050 = vmatmul.mubr.bf16.gmra.mrb[0].mxu0 %v3198
        %v4051 = vpop.f32.mrb[0].mxu0
        %v4052 = vadd.f32 0.0, %v4051
        %v4053 = vpop.f32.mrb[0].mxu0
        %v4054 = vadd.f32 0.0, %v4053
        %v4055 = vpop.f32.mrb[0].mxu0
        %v4056 = vadd.f32 0.0, %v4055
        %v4057 = vpop.f32.mrb[0].mxu0
        %v4058 = vadd.f32 0.0, %v4057
        %4059 = vmatprep.mubr.bf16.mxu0 %v3201
        %4060 = vmatmul.mubr.bf16.gmra.mrb[0].mxu0 %v3200
        %v4061 = vpop.f32.mrb[0].mxu0
        %v4062 = vadd.f32 0.0, %v4061
        %v4063 = vpop.f32.mrb[0].mxu0
        %v4064 = vadd.f32 0.0, %v4063
        %v4065 = vpop.f32.mrb[0].mxu0
        %v4066 = vadd.f32 0.0, %v4065
        %v4067 = vpop.f32.mrb[0].mxu0
        %v4068 = vadd.f32 0.0, %v4067
        %4069 = vmatprep.mubr.bf16.mxu0 %v3203
        %4070 = vmatmul.mubr.bf16.gmra.mrb[0].mxu0 %v3202
        %v4071 = vpop.f32.mrb[0].mxu0
        %v4072 = vadd.f32 0.0, %v4071
        %v4073 = vpop.f32.mrb[0].mxu0
        %v4074 = vadd.f32 0.0, %v4073
        %v4075 = vpop.f32.mrb[0].mxu0
        %v4076 = vadd.f32 0.0, %v4075
        %v4077 = vpop.f32.mrb[0].mxu0
        %v4078 = vadd.f32 0.0, %v4077
        %4079 = vmatprep.mubr.bf16.mxu0 %v3205
        %4080 = vmatmul.mubr.bf16.gmra.mrb[0].mxu0 %v3204
        %v4081 = vpop.f32.mrb[0].mxu0
        %v4082 = vadd.f32 0.0, %v4081
        %v4083 = vpop.f32.mrb[0].mxu0
        %v4084 = vadd.f32 0.0, %v4083
        %v4085 = vpop.f32.mrb[0].mxu0
        %v4086 = vadd.f32 0.0, %v4085
        %v4087 = vpop.f32.mrb[0].mxu0
        %v4088 = vadd.f32 0.0, %v4087
        %4089 = vmatprep.mubr.bf16.mxu0 %v3207
        %4090 = vmatmul.mubr.bf16.gmra.mrb[0].mxu0 %v3206
        %v4091 = vpop.f32.mrb[0].mxu0
        %v4092 = vadd.f32 0.0, %v4091
        %v4093 = vpop.f32.mrb[0].mxu0
        %v4094 = vadd.f32 0.0, %v4093
        %v4095 = vpop.f32.mrb[0].mxu0
        %v4096 = vadd.f32 0.0, %v4095
        %v4097 = vpop.f32.mrb[0].mxu0
        %v4098 = vadd.f32 0.0, %v4097
        %4099 = vmatprep.mubr.bf16.mxu0 %v3209
        %4100 = vmatmul.mubr.bf16.gmra.mrb[0].mxu0 %v3208
        %v4101 = vpop.f32.mrb[0].mxu0
        %v4102 = vadd.f32 0.0, %v4101
        %v4103 = vpop.f32.mrb[0].mxu0
        %v4104 = vadd.f32 0.0, %v4103
        %v4105 = vpop.f32.mrb[0].mxu0
        %v4106 = vadd.f32 0.0, %v4105
        %v4107 = vpop.f32.mrb[0].mxu0
        %v4108 = vadd.f32 0.0, %v4107
        %4109 = vmatprep.mubr.bf16.mxu0 %v3211
        %4110 = vmatmul.mubr.bf16.gmra.mrb[0].mxu0 %v3210
        %v4111 = vpop.f32.mrb[0].mxu0
        %v4112 = vadd.f32 0.0, %v4111
        %v4113 = vpop.f32.mrb[0].mxu0
        %v4114 = vadd.f32 0.0, %v4113
        %v4115 = vpop.f32.mrb[0].mxu0
        %v4116 = vadd.f32 0.0, %v4115
        %v4117 = vpop.f32.mrb[0].mxu0
        %v4118 = vadd.f32 0.0, %v4117
        %4119 = vmatprep.mubr.bf16.mxu0 %v3213
        %4120 = vmatmul.mubr.bf16.gmra.mrb[0].mxu0 %v3212
        %v4121 = vpop.f32.mrb[0].mxu0
        %v4122 = vadd.f32 0.0, %v4121
        %v4123 = vpop.f32.mrb[0].mxu0
        %v4124 = vadd.f32 0.0, %v4123
        %v4125 = vpop.f32.mrb[0].mxu0
        %v4126 = vadd.f32 0.0, %v4125
        %v4127 = vpop.f32.mrb[0].mxu0
        %v4128 = vadd.f32 0.0, %v4127
        %4129 = vmatprep.mubr.bf16.mxu0 %v3215
        %4130 = vmatmul.mubr.bf16.gmra.mrb[0].mxu0 %v3214
        %v4131 = vpop.f32.mrb[0].mxu0
        %v4132 = vadd.f32 0.0, %v4131
        %v4133 = vpop.f32.mrb[0].mxu0
        %v4134 = vadd.f32 0.0, %v4133
        %v4135 = vpop.f32.mrb[0].mxu0
        %v4136 = vadd.f32 0.0, %v4135
        %v4137 = vpop.f32.mrb[0].mxu0
        %v4138 = vadd.f32 0.0, %v4137
        %4139 = vmatprep.mubr.bf16.mxu0 %v3217
        %4140 = vmatmul.mubr.bf16.gmra.mrb[0].mxu0 %v3216
        %v4141 = vpop.f32.mrb[0].mxu0
        %v4142 = vpop.f32.mrb[0].mxu0
        %v4143 = vpop.f32.mrb[0].mxu0
        %v4144 = vpop.f32.mrb[0].mxu0
        %4145 = vdwg.mxu0
        %4146 = vmatprep.subr.bf16.mxu0 %v3547
        %4147 = vmatpush1.bf16.msra.mxu0 %v3546
        %4148 = vmatprep.subr.bf16.mxu0 %v3553
        %4149 = vmatpush1.bf16.msra.mxu0 %v3552
        %4150 = vmatprep.subr.bf16.mxu0 %v3559
        %4151 = vmatpush1.bf16.msra.mxu0 %v3558
        %4152 = vmatprep.subr.bf16.mxu0 %v3565
        %4153 = vmatpush1.bf16.msra.mxu0 %v3564
        %4154 = vmatprep.subr.bf16.mxu0 %v3571
        %4155 = vmatpush1.bf16.msra.mxu0 %v3570
        %4156 = vmatprep.subr.bf16.mxu0 %v3577
        %4157 = vmatpush1.bf16.msra.mxu0 %v3576
        %4158 = vmatprep.subr.bf16.mxu0 %v3583
        %4159 = vmatpush1.bf16.msra.mxu0 %v3582
        %4160 = vmatprep.subr.bf16.mxu0 %v3589
        %4161 = vmatpush1.bf16.msra.mxu0 %v3588
        %4162 = vmatprep.subr.bf16.mxu0 %v3595
        %4163 = vmatpush1.bf16.msra.mxu0 %v3594
        %4164 = vmatprep.subr.bf16.mxu0 %v3601
        %4165 = vmatpush1.bf16.msra.mxu0 %v3600
        %4166 = vmatprep.subr.bf16.mxu0 %v3607
        %4167 = vmatpush1.bf16.msra.mxu0 %v3606
        %4168 = vmatprep.subr.bf16.mxu0 %v3613
        %4169 = vmatpush1.bf16.msra.mxu0 %v3612
        %4170 = vmatprep.subr.bf16.mxu0 %v3619
        %4171 = vmatpush1.bf16.msra.mxu0 %v3618
        %4172 = vmatprep.subr.bf16.mxu0 %v3625
        %4173 = vmatpush1.bf16.msra.mxu0 %v3624
        %4174 = vmatprep.subr.bf16.mxu0 %v3631
        %4175 = vmatpush1.bf16.msra.mxu0 %v3630
        %4176 = vmatprep.subr.bf16.mxu0 %v3637
        %4177 = vmatpush1.bf16.msra.mxu0 %v3636
        %4178 = vmatprep.mubr.bf16.mxu0 %v3183
        %4179 = vmatmul.mubr.bf16.gmra.mrb[0].mxu0 %v3182
        %v4180 = vpop.f32.mrb[0].mxu0
        %v4181 = vpop.f32.mrb[0].mxu0
        %v4182 = vpop.f32.mrb[0].mxu0
        %v4183 = vpop.f32.mrb[0].mxu0
        %4184 = vmatprep.mubr.bf16.mxu0 %v3185
        %4185 = vmatmul.mubr.bf16.gmra.mrb[0].mxu0 %v3184
        %v4186 = vpop.f32.mrb[0].mxu0
        %v4187 = vadd.f32 0.0, %v4186
        %v4188 = vpop.f32.mrb[0].mxu0
        %v4189 = vadd.f32 0.0, %v4188
        %v4190 = vpop.f32.mrb[0].mxu0
        %v4191 = vadd.f32 0.0, %v4190
        %v4192 = vpop.f32.mrb[0].mxu0
        %v4193 = vadd.f32 0.0, %v4192
        %4194 = vmatprep.mubr.bf16.mxu0 %v3187
        %4195 = vmatmul.mubr.bf16.gmra.mrb[0].mxu0 %v3186
        %v4196 = vpop.f32.mrb[0].mxu0
        %v4197 = vadd.f32 0.0, %v4196
        %v4198 = vpop.f32.mrb[0].mxu0
        %v4199 = vadd.f32 0.0, %v4198
        %v4200 = vpop.f32.mrb[0].mxu0
        %v4201 = vadd.f32 0.0, %v4200
        %v4202 = vpop.f32.mrb[0].mxu0
        %v4203 = vadd.f32 0.0, %v4202
        %4204 = vmatprep.mubr.bf16.mxu0 %v3189
        %4205 = vmatmul.mubr.bf16.gmra.mrb[0].mxu0 %v3188
        %v4206 = vpop.f32.mrb[0].mxu0
        %v4207 = vadd.f32 0.0, %v4206
        %v4208 = vpop.f32.mrb[0].mxu0
        %v4209 = vadd.f32 0.0, %v4208
        %v4210 = vpop.f32.mrb[0].mxu0
        %v4211 = vadd.f32 0.0, %v4210
        %v4212 = vpop.f32.mrb[0].mxu0
        %v4213 = vadd.f32 0.0, %v4212
        %4214 = vmatprep.mubr.bf16.mxu0 %v3191
        %4215 = vmatmul.mubr.bf16.gmra.mrb[0].mxu0 %v3190
        %v4216 = vpop.f32.mrb[0].mxu0
        %v4217 = vadd.f32 0.0, %v4216
        %v4218 = vpop.f32.mrb[0].mxu0
        %v4219 = vadd.f32 0.0, %v4218
        %v4220 = vpop.f32.mrb[0].mxu0
        %v4221 = vadd.f32 0.0, %v4220
        %v4222 = vpop.f32.mrb[0].mxu0
        %v4223 = vadd.f32 0.0, %v4222
        %4224 = vmatprep.mubr.bf16.mxu0 %v3193
        %4225 = vmatmul.mubr.bf16.gmra.mrb[0].mxu0 %v3192
        %v4226 = vpop.f32.mrb[0].mxu0
        %v4227 = vadd.f32 0.0, %v4226
        %v4228 = vpop.f32.mrb[0].mxu0
        %v4229 = vadd.f32 0.0, %v4228
        %v4230 = vpop.f32.mrb[0].mxu0
        %v4231 = vadd.f32 0.0, %v4230
        %v4232 = vpop.f32.mrb[0].mxu0
        %v4233 = vadd.f32 0.0, %v4232
        %4234 = vmatprep.mubr.bf16.mxu0 %v3195
        %4235 = vmatmul.mubr.bf16.gmra.mrb[0].mxu0 %v3194
        %v4236 = vpop.f32.mrb[0].mxu0
        %v4237 = vadd.f32 0.0, %v4236
        %v4238 = vpop.f32.mrb[0].mxu0
        %v4239 = vadd.f32 0.0, %v4238
        %v4240 = vpop.f32.mrb[0].mxu0
        %v4241 = vadd.f32 0.0, %v4240
        %v4242 = vpop.f32.mrb[0].mxu0
        %v4243 = vadd.f32 0.0, %v4242
        %4244 = vmatprep.mubr.bf16.mxu0 %v3197
        %4245 = vmatmul.mubr.bf16.gmra.mrb[0].mxu0 %v3196
        %v4246 = vpop.f32.mrb[0].mxu0
        %v4247 = vadd.f32 0.0, %v4246
        %v4248 = vpop.f32.mrb[0].mxu0
        %v4249 = vadd.f32 0.0, %v4248
        %v4250 = vpop.f32.mrb[0].mxu0
        %v4251 = vadd.f32 0.0, %v4250
        %v4252 = vpop.f32.mrb[0].mxu0
        %v4253 = vadd.f32 0.0, %v4252
        %4254 = vmatprep.mubr.bf16.mxu0 %v3199
        %4255 = vmatmul.mubr.bf16.gmra.mrb[0].mxu0 %v3198
        %v4256 = vpop.f32.mrb[0].mxu0
        %v4257 = vadd.f32 0.0, %v4256
        %v4258 = vpop.f32.mrb[0].mxu0
        %v4259 = vadd.f32 0.0, %v4258
        %v4260 = vpop.f32.mrb[0].mxu0
        %v4261 = vadd.f32 0.0, %v4260
        %v4262 = vpop.f32.mrb[0].mxu0
        %v4263 = vadd.f32 0.0, %v4262
        %4264 = vmatprep.mubr.bf16.mxu0 %v3201
        %4265 = vmatmul.mubr.bf16.gmra.mrb[0].mxu0 %v3200
        %v4266 = vpop.f32.mrb[0].mxu0
        %v4267 = vadd.f32 0.0, %v4266
        %v4268 = vpop.f32.mrb[0].mxu0
        %v4269 = vadd.f32 0.0, %v4268
        %v4270 = vpop.f32.mrb[0].mxu0
        %v4271 = vadd.f32 0.0, %v4270
        %v4272 = vpop.f32.mrb[0].mxu0
        %v4273 = vadd.f32 0.0, %v4272
        %4274 = vmatprep.mubr.bf16.mxu0 %v3203
        %4275 = vmatmul.mubr.bf16.gmra.mrb[0].mxu0 %v3202
        %v4276 = vpop.f32.mrb[0].mxu0
        %v4277 = vadd.f32 0.0, %v4276
        %v4278 = vpop.f32.mrb[0].mxu0
        %v4279 = vadd.f32 0.0, %v4278
        %v4280 = vpop.f32.mrb[0].mxu0
        %v4281 = vadd.f32 0.0, %v4280
        %v4282 = vpop.f32.mrb[0].mxu0
        %v4283 = vadd.f32 0.0, %v4282
        %4284 = vmatprep.mubr.bf16.mxu0 %v3205
        %4285 = vmatmul.mubr.bf16.gmra.mrb[0].mxu0 %v3204
        %v4286 = vpop.f32.mrb[0].mxu0
        %v4287 = vadd.f32 0.0, %v4286
        %v4288 = vpop.f32.mrb[0].mxu0
        %v4289 = vadd.f32 0.0, %v4288
        %v4290 = vpop.f32.mrb[0].mxu0
        %v4291 = vadd.f32 0.0, %v4290
        %v4292 = vpop.f32.mrb[0].mxu0
        %v4293 = vadd.f32 0.0, %v4292
        %4294 = vmatprep.mubr.bf16.mxu0 %v3207
        %4295 = vmatmul.mubr.bf16.gmra.mrb[0].mxu0 %v3206
        %v4296 = vpop.f32.mrb[0].mxu0
        %v4297 = vadd.f32 0.0, %v4296
        %v4298 = vpop.f32.mrb[0].mxu0
        %v4299 = vadd.f32 0.0, %v4298
        %v4300 = vpop.f32.mrb[0].mxu0
        %v4301 = vadd.f32 0.0, %v4300
        %v4302 = vpop.f32.mrb[0].mxu0
        %v4303 = vadd.f32 0.0, %v4302
        %4304 = vmatprep.mubr.bf16.mxu0 %v3209
        %4305 = vmatmul.mubr.bf16.gmra.mrb[0].mxu0 %v3208
        %v4306 = vpop.f32.mrb[0].mxu0
        %v4307 = vadd.f32 0.0, %v4306
        %v4308 = vpop.f32.mrb[0].mxu0
        %v4309 = vadd.f32 0.0, %v4308
        %v4310 = vpop.f32.mrb[0].mxu0
        %v4311 = vadd.f32 0.0, %v4310
        %v4312 = vpop.f32.mrb[0].mxu0
        %v4313 = vadd.f32 0.0, %v4312
        %4314 = vmatprep.mubr.bf16.mxu0 %v3211
        %4315 = vmatmul.mubr.bf16.gmra.mrb[0].mxu0 %v3210
        %v4316 = vpop.f32.mrb[0].mxu0
        %v4317 = vadd.f32 0.0, %v4316
        %v4318 = vpop.f32.mrb[0].mxu0
        %v4319 = vadd.f32 0.0, %v4318
        %v4320 = vpop.f32.mrb[0].mxu0
        %v4321 = vadd.f32 0.0, %v4320
        %v4322 = vpop.f32.mrb[0].mxu0
        %v4323 = vadd.f32 0.0, %v4322
        %4324 = vmatprep.mubr.bf16.mxu0 %v3213
        %4325 = vmatmul.mubr.bf16.gmra.mrb[0].mxu0 %v3212
        %v4326 = vpop.f32.mrb[0].mxu0
        %v4327 = vadd.f32 0.0, %v4326
        %v4328 = vpop.f32.mrb[0].mxu0
        %v4329 = vadd.f32 0.0, %v4328
        %v4330 = vpop.f32.mrb[0].mxu0
        %v4331 = vadd.f32 0.0, %v4330
        %v4332 = vpop.f32.mrb[0].mxu0
        %v4333 = vadd.f32 0.0, %v4332
        %4334 = vmatprep.mubr.bf16.mxu0 %v3215
        %4335 = vmatmul.mubr.bf16.gmra.mrb[0].mxu0 %v3214
        %v4336 = vpop.f32.mrb[0].mxu0
        %v4337 = vadd.f32 0.0, %v4336
        %v4338 = vpop.f32.mrb[0].mxu0
        %v4339 = vadd.f32 0.0, %v4338
        %v4340 = vpop.f32.mrb[0].mxu0
        %v4341 = vadd.f32 0.0, %v4340
        %v4342 = vpop.f32.mrb[0].mxu0
        %v4343 = vadd.f32 0.0, %v4342
        %4344 = vmatprep.mubr.bf16.mxu0 %v3217
        %4345 = vmatmul.mubr.bf16.gmra.mrb[0].mxu0 %v3216
        %v4346 = vpop.f32.mrb[0].mxu0
        %v4347 = vadd.f32 0.0, %v4346
        %v4348 = vpop.f32.mrb[0].mxu0
        %v4349 = vadd.f32 0.0, %v4348
        %v4350 = vpop.f32.mrb[0].mxu0
        %v4351 = vpop.f32.mrb[0].mxu0
        %4352 = vdwg.mxu0
        %v4353 = vadd.f32 %v2363, %v3771
        %v4354 = vadd.f32 %v2365, %v3773
        %v4355 = vadd.f32 %v2369, %v3777
        %v4356 = vadd.f32 %v2371, %v3779
        %v4357 = vadd.f32 %v2574, %v3982
        %v4358 = vadd.f32 %v2576, %v3984
        %v4359 = vadd.f32 %v2779, %v4187
        %v4360 = vadd.f32 %v2781, %v4189
        %v4361 = vadd.f32 %v2373, %v3781
        %v4362 = vadd.f32 %v2375, %v3783
        %v4363 = vadd.f32 %v2578, %v3986
        %v4364 = vadd.f32 %v2580, %v3988
        %v4365 = vadd.f32 %v2783, %v4191
        %v4366 = vadd.f32 %v2785, %v4193
        %v4367 = vadd.f32 %v2379, %v3787
        %v4368 = vadd.f32 %v2381, %v3789
        %v4369 = vadd.f32 %v2584, %v3992
        %v4370 = vadd.f32 %v2586, %v3994
        %v4371 = vadd.f32 %v2789, %v4197
        %v4372 = vadd.f32 %v2791, %v4199
        %v4373 = vadd.f32 %v2383, %v3791
        %v4374 = vadd.f32 %v2385, %v3793
        %v4375 = vadd.f32 %v2588, %v3996
        %v4376 = vadd.f32 %v2590, %v3998
        %v4377 = vadd.f32 %v2793, %v4201
        %v4378 = vadd.f32 %v2795, %v4203
        %v4379 = vadd.f32 %v2389, %v3797
        %v4380 = vadd.f32 %v2391, %v3799
        %v4381 = vadd.f32 %v2594, %v4002
        %v4382 = vadd.f32 %v2596, %v4004
        %v4383 = vadd.f32 %v2799, %v4207
        %v4384 = vadd.f32 %v2801, %v4209
        %v4385 = vadd.f32 %v2393, %v3801
        %v4386 = vadd.f32 %v2395, %v3803
        %v4387 = vadd.f32 %v2598, %v4006
        %v4388 = vadd.f32 %v2600, %v4008
        %v4389 = vadd.f32 %v2803, %v4211
        %v4390 = vadd.f32 %v2805, %v4213
        %v4391 = vadd.f32 %v2399, %v3807
        %v4392 = vadd.f32 %v2401, %v3809
        %v4393 = vadd.f32 %v2604, %v4012
        %v4394 = vadd.f32 %v2606, %v4014
        %v4395 = vadd.f32 %v2809, %v4217
        %v4396 = vadd.f32 %v2811, %v4219
        %v4397 = vadd.f32 %v2403, %v3811
        %v4398 = vadd.f32 %v2405, %v3813
        %v4399 = vadd.f32 %v2608, %v4016
        %v4400 = vadd.f32 %v2610, %v4018
        %v4401 = vadd.f32 %v2813, %v4221
        %v4402 = vadd.f32 %v2815, %v4223
        %v4403 = vadd.f32 %v2409, %v3817
        %v4404 = vadd.f32 %v2411, %v3819
        %v4405 = vadd.f32 %v2614, %v4022
        %v4406 = vadd.f32 %v2616, %v4024
        %v4407 = vadd.f32 %v2819, %v4227
        %v4408 = vadd.f32 %v2821, %v4229
        %v4409 = vadd.f32 %v2413, %v3821
        %v4410 = vadd.f32 %v2415, %v3823
        %v4411 = vadd.f32 %v2618, %v4026
        %v4412 = vadd.f32 %v2620, %v4028
        %v4413 = vadd.f32 %v2823, %v4231
        %v4414 = vadd.f32 %v2825, %v4233
        %v4415 = vadd.f32 %v2419, %v3827
        %v4416 = vadd.f32 %v2421, %v3829
        %v4417 = vadd.f32 %v2624, %v4032
        %v4418 = vadd.f32 %v2626, %v4034
        %v4419 = vadd.f32 %v2829, %v4237
        %v4420 = vadd.f32 %v2831, %v4239
        %v4421 = vadd.f32 %v2423, %v3831
        %v4422 = vadd.f32 %v2425, %v3833
        %v4423 = vadd.f32 %v2628, %v4036
        %v4424 = vadd.f32 %v2630, %v4038
        %v4425 = vadd.f32 %v2833, %v4241
        %v4426 = vadd.f32 %v2835, %v4243
        %v4427 = vadd.f32 %v2429, %v3837
        %v4428 = vadd.f32 %v2431, %v3839
        %v4429 = vadd.f32 %v2634, %v4042
        %v4430 = vadd.f32 %v2636, %v4044
        %v4431 = vadd.f32 %v2839, %v4247
        %v4432 = vadd.f32 %v2841, %v4249
        %v4433 = vadd.f32 %v2433, %v3841
        %v4434 = vadd.f32 %v2435, %v3843
        %v4435 = vadd.f32 %v2638, %v4046
        %v4436 = vadd.f32 %v2640, %v4048
        %v4437 = vadd.f32 %v2843, %v4251
        %v4438 = vadd.f32 %v2845, %v4253
        %v4439 = vadd.f32 %v2439, %v3847
        %v4440 = vadd.f32 %v2441, %v3849
        %v4441 = vadd.f32 %v2644, %v4052
        %v4442 = vadd.f32 %v2646, %v4054
        %v4443 = vadd.f32 %v2849, %v4257
        %v4444 = vadd.f32 %v2851, %v4259
        %v4445 = vadd.f32 %v2443, %v3851
        %v4446 = vadd.f32 %v2445, %v3853
        %v4447 = vadd.f32 %v2648, %v4056
        %v4448 = vadd.f32 %v2650, %v4058
        %v4449 = vadd.f32 %v2853, %v4261
        %v4450 = vadd.f32 %v2855, %v4263
        %v4451 = vadd.f32 %v2449, %v3857
        %v4452 = vadd.f32 %v2451, %v3859
        %v4453 = vadd.f32 %v2654, %v4062
        %v4454 = vadd.f32 %v2656, %v4064
        %v4455 = vadd.f32 %v2859, %v4267
        %v4456 = vadd.f32 %v2861, %v4269
        %v4457 = vadd.f32 %v2453, %v3861
        %v4458 = vadd.f32 %v2455, %v3863
        %v4459 = vadd.f32 %v2658, %v4066
        %v4460 = vadd.f32 %v2660, %v4068
        %v4461 = vadd.f32 %v2863, %v4271
        %v4462 = vadd.f32 %v2865, %v4273
        %v4463 = vadd.f32 %v2459, %v3867
        %v4464 = vadd.f32 %v2461, %v3869
        %v4465 = vadd.f32 %v2664, %v4072
        %v4466 = vadd.f32 %v2666, %v4074
        %v4467 = vadd.f32 %v2869, %v4277
        %v4468 = vadd.f32 %v2871, %v4279
        %v4469 = vadd.f32 %v2463, %v3871
        %v4470 = vadd.f32 %v2465, %v3873
        %v4471 = vadd.f32 %v2668, %v4076
        %v4472 = vadd.f32 %v2670, %v4078
        %v4473 = vadd.f32 %v2873, %v4281
        %v4474 = vadd.f32 %v2875, %v4283
        %v4475 = vadd.f32 %v2469, %v3877
        %v4476 = vadd.f32 %v2471, %v3879
        %v4477 = vadd.f32 %v2674, %v4082
        %v4478 = vadd.f32 %v2676, %v4084
        %v4479 = vadd.f32 %v2879, %v4287
        %v4480 = vadd.f32 %v2881, %v4289
        %v4481 = vadd.f32 %v2473, %v3881
        %v4482 = vadd.f32 %v2475, %v3883
        %v4483 = vadd.f32 %v2678, %v4086
        %v4484 = vadd.f32 %v2680, %v4088
        %v4485 = vadd.f32 %v2883, %v4291
        %v4486 = vadd.f32 %v2885, %v4293
        %v4487 = vadd.f32 %v2479, %v3887
        %v4488 = vadd.f32 %v2481, %v3889
        %v4489 = vadd.f32 %v2684, %v4092
        %v4490 = vadd.f32 %v2686, %v4094
        %v4491 = vadd.f32 %v2889, %v4297
        %v4492 = vadd.f32 %v2891, %v4299
        %v4493 = vadd.f32 %v2483, %v3891
        %v4494 = vadd.f32 %v2485, %v3893
        %v4495 = vadd.f32 %v2688, %v4096
        %v4496 = vadd.f32 %v2690, %v4098
        %v4497 = vadd.f32 %v2893, %v4301
        %v4498 = vadd.f32 %v2895, %v4303
        %v4499 = vadd.f32 %v2489, %v3897
        %v4500 = vadd.f32 %v2491, %v3899
        %v4501 = vadd.f32 %v2694, %v4102
        %v4502 = vadd.f32 %v2696, %v4104
        %v4503 = vadd.f32 %v2899, %v4307
        %v4504 = vadd.f32 %v2901, %v4309
        %v4505 = vadd.f32 %v2493, %v3901
        %v4506 = vadd.f32 %v2495, %v3903
        %v4507 = vadd.f32 %v2698, %v4106
        %v4508 = vadd.f32 %v2700, %v4108
        %v4509 = vadd.f32 %v2903, %v4311
        %v4510 = vadd.f32 %v2905, %v4313
        %v4511 = vadd.f32 %v2499, %v3907
        %v4512 = vadd.f32 %v2501, %v3909
        %v4513 = vadd.f32 %v2704, %v4112
        %v4514 = vadd.f32 %v2706, %v4114
        %v4515 = vadd.f32 %v2909, %v4317
        %v4516 = vadd.f32 %v2911, %v4319
        %v4517 = vadd.f32 %v2503, %v3911
        %v4518 = vadd.f32 %v2505, %v3913
        %v4519 = vadd.f32 %v2708, %v4116
        %v4520 = vadd.f32 %v2710, %v4118
        %v4521 = vadd.f32 %v2913, %v4321
        %v4522 = vadd.f32 %v2915, %v4323
        %v4523 = vadd.f32 %v2509, %v3917
        %v4524 = vadd.f32 %v2511, %v3919
        %v4525 = vadd.f32 %v2714, %v4122
        %v4526 = vadd.f32 %v2716, %v4124
        %v4527 = vadd.f32 %v2919, %v4327
        %v4528 = vadd.f32 %v2921, %v4329
        %v4529 = vadd.f32 %v2513, %v3921
        %v4530 = vadd.f32 %v2515, %v3923
        %v4531 = vadd.f32 %v2718, %v4126
        %v4532 = vadd.f32 %v2720, %v4128
        %v4533 = vadd.f32 %v2923, %v4331
        %v4534 = vadd.f32 %v2925, %v4333
        %v4535 = vadd.f32 %v2519, %v3927
        %v4536 = vadd.f32 %v2521, %v3929
        %v4537 = vadd.f32 %v2724, %v4132
        %v4538 = vadd.f32 %v2726, %v4134
        %v4539 = vadd.f32 %v2929, %v4337
        %v4540 = vadd.f32 %v2931, %v4339
        %v4541 = vadd.f32 %v2523, %v3931
        %v4542 = vadd.f32 %v2525, %v3933
        %v4543 = vadd.f32 %v2728, %v4136
        %v4544 = vadd.f32 %v2730, %v4138
        %v4545 = vadd.f32 %v2933, %v4341
        %v4546 = vadd.f32 %v2935, %v4343
        %v4547 = vadd.f32 %v2939, %v4347
        %v4548 = vadd.f32 %v2941, %v4349
        %4550 = vset.pattern.permute.xlu0 0
        %4551 = vperm.xlu0 %4550, %v250
        %v4552 = vpop.permute.xlu0 %4551
        %4554 = vset.pattern.permute.xlu0 0
        %4555 = vperm.xlu0 %4554, %v251
        %v4556 = vpop.permute.xlu0 %4555
        %4558 = vset.pattern.permute.xlu0 0
        %4559 = vperm.xlu0 %4558, %v252
        %v4560 = vpop.permute.xlu0 %4559
        %4562 = vset.pattern.permute.xlu0 0
        %4563 = vperm.xlu0 %4562, %v253
        %v4564 = vpop.permute.xlu0 %4563
        %4566 = vset.pattern.permute.xlu0 0
        %4567 = vperm.xlu0 %4566, %v254
        %v4568 = vpop.permute.xlu0 %4567
        %4570 = vset.pattern.permute.xlu0 0
        %4571 = vperm.xlu0 %4570, %v255
        %v4572 = vpop.permute.xlu0 %4571
        %4574 = vset.pattern.permute.xlu0 0
        %4575 = vperm.xlu0 %4574, %v256
        %v4576 = vpop.permute.xlu0 %4575
        %4578 = vset.pattern.permute.xlu0 0
        %4579 = vperm.xlu0 %4578, %v257
        %v4580 = vpop.permute.xlu0 %4579
        %4582 = vset.pattern.permute.xlu0 0
        %4583 = vperm.xlu0 %4582, %v258
        %v4584 = vpop.permute.xlu0 %4583
        %4586 = vset.pattern.permute.xlu0 0
        %4587 = vperm.xlu0 %4586, %v259
        %v4588 = vpop.permute.xlu0 %4587
        %4590 = vset.pattern.permute.xlu0 0
        %4591 = vperm.xlu0 %4590, %v260
        %v4592 = vpop.permute.xlu0 %4591
        %4594 = vset.pattern.permute.xlu0 0
        %4595 = vperm.xlu0 %4594, %v261
        %v4596 = vpop.permute.xlu0 %4595
        %4598 = vset.pattern.permute.xlu0 0
        %4599 = vperm.xlu0 %4598, %v262
        %v4600 = vpop.permute.xlu0 %4599
        %4602 = vset.pattern.permute.xlu0 0
        %4603 = vperm.xlu0 %4602, %v263
        %v4604 = vpop.permute.xlu0 %4603
        %4606 = vset.pattern.permute.xlu0 0
        %4607 = vperm.xlu0 %4606, %v264
        %v4608 = vpop.permute.xlu0 %4607
        %4610 = vset.pattern.permute.xlu0 0
        %4611 = vperm.xlu0 %4610, %v265
        %v4612 = vpop.permute.xlu0 %4611
        %4614 = vset.pattern.permute.xlu0 0
        %4615 = vperm.xlu0 %4614, %v266
        %v4616 = vpop.permute.xlu0 %4615
        %4618 = vset.pattern.permute.xlu0 0
        %4619 = vperm.xlu0 %4618, %v267
        %v4620 = vpop.permute.xlu0 %4619
        %4622 = vset.pattern.permute.xlu0 0
        %4623 = vperm.xlu0 %4622, %v268
        %v4624 = vpop.permute.xlu0 %4623
        %4626 = vset.pattern.permute.xlu0 0
        %4627 = vperm.xlu0 %4626, %v269
        %v4628 = vpop.permute.xlu0 %4627
        %4630 = vset.pattern.permute.xlu0 0
        %4631 = vperm.xlu0 %4630, %v270
        %v4632 = vpop.permute.xlu0 %4631
        %4634 = vset.pattern.permute.xlu0 0
        %4635 = vperm.xlu0 %4634, %v271
        %v4636 = vpop.permute.xlu0 %4635
        %4638 = vset.pattern.permute.xlu0 0
        %4639 = vperm.xlu0 %4638, %v272
        %v4640 = vpop.permute.xlu0 %4639
        %4642 = vset.pattern.permute.xlu0 0
        %4643 = vperm.xlu0 %4642, %v273
        %v4644 = vpop.permute.xlu0 %4643
        %4646 = vset.pattern.permute.xlu0 0
        %4647 = vperm.xlu0 %4646, %v274
        %v4648 = vpop.permute.xlu0 %4647
        %4650 = vset.pattern.permute.xlu0 0
        %4651 = vperm.xlu0 %4650, %v275
        %v4652 = vpop.permute.xlu0 %4651
        %4654 = vset.pattern.permute.xlu0 0
        %4655 = vperm.xlu0 %4654, %v276
        %v4656 = vpop.permute.xlu0 %4655
        %4658 = vset.pattern.permute.xlu0 0
        %4659 = vperm.xlu0 %4658, %v277
        %v4660 = vpop.permute.xlu0 %4659
        %4662 = vset.pattern.permute.xlu0 0
        %4663 = vperm.xlu0 %4662, %v278
        %v4664 = vpop.permute.xlu0 %4663
        %4666 = vset.pattern.permute.xlu0 0
        %4667 = vperm.xlu0 %4666, %v279
        %v4668 = vpop.permute.xlu0 %4667
        %4670 = vset.pattern.permute.xlu0 0
        %4671 = vperm.xlu0 %4670, %v280
        %v4672 = vpop.permute.xlu0 %4671
        %4674 = vset.pattern.permute.xlu0 0
        %4675 = vperm.xlu0 %4674, %v281
        %v4676 = vpop.permute.xlu0 %4675
        %vm4677 = vcmask 1046528
        %v4678 = vrot.slane %v4552, 1
        %v4679 = vrot.slane %v4556, 1
        %v4680 = vsel %vm4677, %v4678, %v4679
        %v4681 = vrot.slane %v4560, 1
        %v4682 = vsel %vm4677, %v4679, %v4681
        %v4683 = vrot.slane %v4564, 1
        %v4684 = vsel %vm4677, %v4681, %v4683
        %v4685 = vrot.slane %v4568, 1
        %v4686 = vsel %vm4677, %v4683, %v4685
        %v4687 = vrot.slane %v4572, 1
        %v4688 = vsel %vm4677, %v4685, %v4687
        %v4689 = vrot.slane %v4576, 1
        %v4690 = vsel %vm4677, %v4687, %v4689
        %v4691 = vrot.slane %v4580, 1
        %v4692 = vsel %vm4677, %v4689, %v4691
        %v4693 = vrot.slane %v4584, 1
        %v4694 = vsel %vm4677, %v4691, %v4693
        %v4695 = vrot.slane %v4588, 1
        %v4696 = vsel %vm4677, %v4693, %v4695
        %v4697 = vrot.slane %v4592, 1
        %v4698 = vsel %vm4677, %v4695, %v4697
        %v4699 = vrot.slane %v4596, 1
        %v4700 = vsel %vm4677, %v4697, %v4699
        %v4701 = vrot.slane %v4600, 1
        %v4702 = vsel %vm4677, %v4699, %v4701
        %v4703 = vrot.slane %v4604, 1
        %v4704 = vsel %vm4677, %v4701, %v4703
        %v4705 = vrot.slane %v4608, 1
        %v4706 = vsel %vm4677, %v4703, %v4705
        %v4707 = vrot.slane %v4612, 1
        %v4708 = vsel %vm4677, %v4705, %v4707
        %v4709 = vrot.slane %v4616, 1
        %v4710 = vsel %vm4677, %v4707, %v4709
        %v4711 = vrot.slane %v4620, 1
        %v4712 = vsel %vm4677, %v4709, %v4711
        %v4713 = vrot.slane %v4624, 1
        %v4714 = vsel %vm4677, %v4711, %v4713
        %v4715 = vrot.slane %v4628, 1
        %v4716 = vsel %vm4677, %v4713, %v4715
        %v4717 = vrot.slane %v4632, 1
        %v4718 = vsel %vm4677, %v4715, %v4717
        %v4719 = vrot.slane %v4636, 1
        %v4720 = vsel %vm4677, %v4717, %v4719
        %v4721 = vrot.slane %v4640, 1
        %v4722 = vsel %vm4677, %v4719, %v4721
        %v4723 = vrot.slane %v4644, 1
        %v4724 = vsel %vm4677, %v4721, %v4723
        %v4725 = vrot.slane %v4648, 1
        %v4726 = vsel %vm4677, %v4723, %v4725
        %v4727 = vrot.slane %v4652, 1
        %v4728 = vsel %vm4677, %v4725, %v4727
        %v4729 = vrot.slane %v4656, 1
        %v4730 = vsel %vm4677, %v4727, %v4729
        %v4731 = vrot.slane %v4660, 1
        %v4732 = vsel %vm4677, %v4729, %v4731
        %v4733 = vrot.slane %v4664, 1
        %v4734 = vsel %vm4677, %v4731, %v4733
        %v4735 = vrot.slane %v4668, 1
        %v4736 = vsel %vm4677, %v4733, %v4735
        %v4737 = vrot.slane %v4672, 1
        %v4738 = vsel %vm4677, %v4735, %v4737
        %v4739 = vrot.slane %v4676, 1
        %v4740 = vsel %vm4677, %v4737, %v4739
        %v4774 = vmul.f32 %v4353, %v4678
        %v4775 = vmul.f32 %v4354, %v4678
        %v4776 = vmul.f32 %v4355, %v4680
        %v4777 = vmul.f32 %v4356, %v4680
        %v4778 = vmul.f32 %v4361, %v4682
        %v4779 = vmul.f32 %v4362, %v4682
        %v4780 = vmul.f32 %v4367, %v4684
        %v4781 = vmul.f32 %v4368, %v4684
        %v4782 = vmul.f32 %v4373, %v4686
        %v4783 = vmul.f32 %v4374, %v4686
        %v4784 = vmul.f32 %v4379, %v4688
        %v4785 = vmul.f32 %v4380, %v4688
        %v4786 = vmul.f32 %v4385, %v4690
        %v4787 = vmul.f32 %v4386, %v4690
        %v4788 = vmul.f32 %v4391, %v4692
        %v4789 = vmul.f32 %v4392, %v4692
        %v4790 = vmul.f32 %v4397, %v4694
        %v4791 = vmul.f32 %v4398, %v4694
        %v4792 = vmul.f32 %v4403, %v4696
        %v4793 = vmul.f32 %v4404, %v4696
        %v4794 = vmul.f32 %v4409, %v4698
        %v4795 = vmul.f32 %v4410, %v4698
        %v4796 = vmul.f32 %v4415, %v4700
        %v4797 = vmul.f32 %v4416, %v4700
        %v4798 = vmul.f32 %v4421, %v4702
        %v4799 = vmul.f32 %v4422, %v4702
        %v4800 = vmul.f32 %v4427, %v4704
        %v4801 = vmul.f32 %v4428, %v4704
        %v4802 = vmul.f32 %v4433, %v4706
        %v4803 = vmul.f32 %v4434, %v4706
        %v4804 = vmul.f32 %v4439, %v4708
        %v4805 = vmul.f32 %v4440, %v4708
        %v4806 = vmul.f32 %v4445, %v4710
        %v4807 = vmul.f32 %v4446, %v4710
        %v4808 = vmul.f32 %v4451, %v4712
        %v4809 = vmul.f32 %v4452, %v4712
        %v4810 = vmul.f32 %v4457, %v4714
        %v4811 = vmul.f32 %v4458, %v4714
        %v4812 = vmul.f32 %v4463, %v4716
        %v4813 = vmul.f32 %v4464, %v4716
        %v4814 = vmul.f32 %v4469, %v4718
        %v4815 = vmul.f32 %v4470, %v4718
        %v4816 = vmul.f32 %v4475, %v4720
        %v4817 = vmul.f32 %v4476, %v4720
        %v4818 = vmul.f32 %v4481, %v4722
        %v4819 = vmul.f32 %v4482, %v4722
        %v4820 = vmul.f32 %v4487, %v4724
        %v4821 = vmul.f32 %v4488, %v4724
        %v4822 = vmul.f32 %v4493, %v4726
        %v4823 = vmul.f32 %v4494, %v4726
        %v4824 = vmul.f32 %v4499, %v4728
        %v4825 = vmul.f32 %v4500, %v4728
        %v4826 = vmul.f32 %v4505, %v4730
        %v4827 = vmul.f32 %v4506, %v4730
        %v4828 = vmul.f32 %v4511, %v4732
        %v4829 = vmul.f32 %v4512, %v4732
        %v4830 = vmul.f32 %v4517, %v4734
        %v4831 = vmul.f32 %v4518, %v4734
        %v4832 = vmul.f32 %v4523, %v4736
        %v4833 = vmul.f32 %v4524, %v4736
        %v4834 = vmul.f32 %v4529, %v4738
        %v4835 = vmul.f32 %v4530, %v4738
        %v4836 = vmul.f32 %v4535, %v4740
        %v4837 = vmul.f32 %v4536, %v4740
        %v4838 = vmul.f32 %v4541, %v4739
        %v4839 = vmul.f32 %v4542, %v4739
        %vm4906 = vcmask 1040384
        %v4907 = vrot.slane %v4774, 7
        %v4908 = vrot.slane %v4776, 7
        %v4909 = vsel %vm4906, %v4907, %v4908
        %v4910 = vrot.slane %v4775, 7
        %v4911 = vrot.slane %v4777, 7
        %v4912 = vsel %vm4906, %v4910, %v4911
        %v4913 = vrot.slane %v4778, 7
        %v4914 = vsel %vm4906, %v4908, %v4913
        %v4915 = vrot.slane %v4779, 7
        %v4916 = vsel %vm4906, %v4911, %v4915
        %v4917 = vrot.slane %v4780, 7
        %v4918 = vsel %vm4906, %v4913, %v4917
        %v4919 = vrot.slane %v4781, 7
        %v4920 = vsel %vm4906, %v4915, %v4919
        %v4921 = vrot.slane %v4782, 7
        %v4922 = vsel %vm4906, %v4917, %v4921
        %v4923 = vrot.slane %v4783, 7
        %v4924 = vsel %vm4906, %v4919, %v4923
        %v4925 = vrot.slane %v4784, 7
        %v4926 = vsel %vm4906, %v4921, %v4925
        %v4927 = vrot.slane %v4785, 7
        %v4928 = vsel %vm4906, %v4923, %v4927
        %v4929 = vrot.slane %v4786, 7
        %v4930 = vsel %vm4906, %v4925, %v4929
        %v4931 = vrot.slane %v4787, 7
        %v4932 = vsel %vm4906, %v4927, %v4931
        %v4933 = vrot.slane %v4788, 7
        %v4934 = vsel %vm4906, %v4929, %v4933
        %v4935 = vrot.slane %v4789, 7
        %v4936 = vsel %vm4906, %v4931, %v4935
        %v4937 = vrot.slane %v4790, 7
        %v4938 = vsel %vm4906, %v4933, %v4937
        %v4939 = vrot.slane %v4791, 7
        %v4940 = vsel %vm4906, %v4935, %v4939
        %v4941 = vrot.slane %v4792, 7
        %v4942 = vsel %vm4906, %v4937, %v4941
        %v4943 = vrot.slane %v4793, 7
        %v4944 = vsel %vm4906, %v4939, %v4943
        %v4945 = vrot.slane %v4794, 7
        %v4946 = vsel %vm4906, %v4941, %v4945
        %v4947 = vrot.slane %v4795, 7
        %v4948 = vsel %vm4906, %v4943, %v4947
        %v4949 = vrot.slane %v4796, 7
        %v4950 = vsel %vm4906, %v4945, %v4949
        %v4951 = vrot.slane %v4797, 7
        %v4952 = vsel %vm4906, %v4947, %v4951
        %v4953 = vrot.slane %v4798, 7
        %v4954 = vsel %vm4906, %v4949, %v4953
        %v4955 = vrot.slane %v4799, 7
        %v4956 = vsel %vm4906, %v4951, %v4955
        %v4957 = vrot.slane %v4800, 7
        %v4958 = vsel %vm4906, %v4953, %v4957
        %v4959 = vrot.slane %v4801, 7
        %v4960 = vsel %vm4906, %v4955, %v4959
        %v4961 = vrot.slane %v4802, 7
        %v4962 = vsel %vm4906, %v4957, %v4961
        %v4963 = vrot.slane %v4803, 7
        %v4964 = vsel %vm4906, %v4959, %v4963
        %v4965 = vrot.slane %v4804, 7
        %v4966 = vsel %vm4906, %v4961, %v4965
        %v4967 = vrot.slane %v4805, 7
        %v4968 = vsel %vm4906, %v4963, %v4967
        %v4969 = vrot.slane %v4806, 7
        %v4970 = vsel %vm4906, %v4965, %v4969
        %v4971 = vrot.slane %v4807, 7
        %v4972 = vsel %vm4906, %v4967, %v4971
        %v4973 = vrot.slane %v4808, 7
        %v4974 = vsel %vm4906, %v4969, %v4973
        %v4975 = vrot.slane %v4809, 7
        %v4976 = vsel %vm4906, %v4971, %v4975
        %v4977 = vrot.slane %v4810, 7
        %v4978 = vsel %vm4906, %v4973, %v4977
        %v4979 = vrot.slane %v4811, 7
        %v4980 = vsel %vm4906, %v4975, %v4979
        %v4981 = vrot.slane %v4812, 7
        %v4982 = vsel %vm4906, %v4977, %v4981
        %v4983 = vrot.slane %v4813, 7
        %v4984 = vsel %vm4906, %v4979, %v4983
        %v4985 = vrot.slane %v4814, 7
        %v4986 = vsel %vm4906, %v4981, %v4985
        %v4987 = vrot.slane %v4815, 7
        %v4988 = vsel %vm4906, %v4983, %v4987
        %v4989 = vrot.slane %v4816, 7
        %v4990 = vsel %vm4906, %v4985, %v4989
        %v4991 = vrot.slane %v4817, 7
        %v4992 = vsel %vm4906, %v4987, %v4991
        %v4993 = vrot.slane %v4818, 7
        %v4994 = vsel %vm4906, %v4989, %v4993
        %v4995 = vrot.slane %v4819, 7
        %v4996 = vsel %vm4906, %v4991, %v4995
        %v4997 = vrot.slane %v4820, 7
        %v4998 = vsel %vm4906, %v4993, %v4997
        %v4999 = vrot.slane %v4821, 7
        %v5000 = vsel %vm4906, %v4995, %v4999
        %v5001 = vrot.slane %v4822, 7
        %v5002 = vsel %vm4906, %v4997, %v5001
        %v5003 = vrot.slane %v4823, 7
        %v5004 = vsel %vm4906, %v4999, %v5003
        %v5005 = vrot.slane %v4824, 7
        %v5006 = vsel %vm4906, %v5001, %v5005
        %v5007 = vrot.slane %v4825, 7
        %v5008 = vsel %vm4906, %v5003, %v5007
        %v5009 = vrot.slane %v4826, 7
        %v5010 = vsel %vm4906, %v5005, %v5009
        %v5011 = vrot.slane %v4827, 7
        %v5012 = vsel %vm4906, %v5007, %v5011
        %v5013 = vrot.slane %v4828, 7
        %v5014 = vsel %vm4906, %v5009, %v5013
        %v5015 = vrot.slane %v4829, 7
        %v5016 = vsel %vm4906, %v5011, %v5015
        %v5017 = vrot.slane %v4830, 7
        %v5018 = vsel %vm4906, %v5013, %v5017
        %v5019 = vrot.slane %v4831, 7
        %v5020 = vsel %vm4906, %v5015, %v5019
        %v5021 = vrot.slane %v4832, 7
        %v5022 = vsel %vm4906, %v5017, %v5021
        %v5023 = vrot.slane %v4833, 7
        %v5024 = vsel %vm4906, %v5019, %v5023
        %v5025 = vrot.slane %v4834, 7
        %v5026 = vsel %vm4906, %v5021, %v5025
        %v5027 = vrot.slane %v4835, 7
        %v5028 = vsel %vm4906, %v5023, %v5027
        %v5029 = vrot.slane %v4836, 7
        %v5030 = vsel %vm4906, %v5025, %v5029
        %v5031 = vrot.slane %v4837, 7
        %v5032 = vsel %vm4906, %v5027, %v5031
        %v5033 = vrot.slane %v4838, 7
        %v5034 = vsel %vm4906, %v5029, %v5033
        %v5035 = vrot.slane %v4839, 7
        %v5036 = vsel %vm4906, %v5031, %v5035
        %v5101 = vadd.f32 %v4357, %v4909
        %v5102 = vadd.f32 %v4358, %v4912
        %v5103 = vadd.f32 %v4363, %v4914
        %v5104 = vadd.f32 %v4364, %v4916
        %v5105 = vadd.f32 %v4369, %v4918
        %v5106 = vadd.f32 %v4370, %v4920
        %v5107 = vadd.f32 %v4375, %v4922
        %v5108 = vadd.f32 %v4376, %v4924
        %v5109 = vadd.f32 %v4381, %v4926
        %v5110 = vadd.f32 %v4382, %v4928
        %v5111 = vadd.f32 %v4387, %v4930
        %v5112 = vadd.f32 %v4388, %v4932
        %v5113 = vadd.f32 %v4393, %v4934
        %v5114 = vadd.f32 %v4394, %v4936
        %v5115 = vadd.f32 %v4399, %v4938
        %v5116 = vadd.f32 %v4400, %v4940
        %v5117 = vadd.f32 %v4405, %v4942
        %v5118 = vadd.f32 %v4406, %v4944
        %v5119 = vadd.f32 %v4411, %v4946
        %v5120 = vadd.f32 %v4412, %v4948
        %v5121 = vadd.f32 %v4417, %v4950
        %v5122 = vadd.f32 %v4418, %v4952
        %v5123 = vadd.f32 %v4423, %v4954
        %v5124 = vadd.f32 %v4424, %v4956
        %v5125 = vadd.f32 %v4429, %v4958
        %v5126 = vadd.f32 %v4430, %v4960
        %v5127 = vadd.f32 %v4435, %v4962
        %v5128 = vadd.f32 %v4436, %v4964
        %v5129 = vadd.f32 %v4441, %v4966
        %v5130 = vadd.f32 %v4442, %v4968
        %v5131 = vadd.f32 %v4447, %v4970
        %v5132 = vadd.f32 %v4448, %v4972
        %v5133 = vadd.f32 %v4453, %v4974
        %v5134 = vadd.f32 %v4454, %v4976
        %v5135 = vadd.f32 %v4459, %v4978
        %v5136 = vadd.f32 %v4460, %v4980
        %v5137 = vadd.f32 %v4465, %v4982
        %v5138 = vadd.f32 %v4466, %v4984
        %v5139 = vadd.f32 %v4471, %v4986
        %v5140 = vadd.f32 %v4472, %v4988
        %v5141 = vadd.f32 %v4477, %v4990
        %v5142 = vadd.f32 %v4478, %v4992
        %v5143 = vadd.f32 %v4483, %v4994
        %v5144 = vadd.f32 %v4484, %v4996
        %v5145 = vadd.f32 %v4489, %v4998
        %v5146 = vadd.f32 %v4490, %v5000
        %v5147 = vadd.f32 %v4495, %v5002
        %v5148 = vadd.f32 %v4496, %v5004
        %v5149 = vadd.f32 %v4501, %v5006
        %v5150 = vadd.f32 %v4502, %v5008
        %v5151 = vadd.f32 %v4507, %v5010
        %v5152 = vadd.f32 %v4508, %v5012
        %v5153 = vadd.f32 %v4513, %v5014
        %v5154 = vadd.f32 %v4514, %v5016
        %v5155 = vadd.f32 %v4519, %v5018
        %v5156 = vadd.f32 %v4520, %v5020
        %v5157 = vadd.f32 %v4525, %v5022
        %v5158 = vadd.f32 %v4526, %v5024
        %v5159 = vadd.f32 %v4531, %v5026
        %v5160 = vadd.f32 %v4532, %v5028
        %v5161 = vadd.f32 %v4537, %v5030
        %v5162 = vadd.f32 %v4538, %v5032
        %v5163 = vadd.f32 %v4543, %v5034
        %v5164 = vadd.f32 %v4544, %v5036
        %5166 = vset.pattern.permute.xlu0 0
        %5167 = vperm.xlu0 %5166, %v282
        %v5168 = vpop.permute.xlu0 %5167
        %5170 = vset.pattern.permute.xlu0 0
        %5171 = vperm.xlu0 %5170, %v283
        %v5172 = vpop.permute.xlu0 %5171
        %5174 = vset.pattern.permute.xlu0 0
        %5175 = vperm.xlu0 %5174, %v284
        %v5176 = vpop.permute.xlu0 %5175
        %5178 = vset.pattern.permute.xlu0 0
        %5179 = vperm.xlu0 %5178, %v285
        %v5180 = vpop.permute.xlu0 %5179
        %5182 = vset.pattern.permute.xlu0 0
        %5183 = vperm.xlu0 %5182, %v286
        %v5184 = vpop.permute.xlu0 %5183
        %5186 = vset.pattern.permute.xlu0 0
        %5187 = vperm.xlu0 %5186, %v287
        %v5188 = vpop.permute.xlu0 %5187
        %5190 = vset.pattern.permute.xlu0 0
        %5191 = vperm.xlu0 %5190, %v288
        %v5192 = vpop.permute.xlu0 %5191
        %5194 = vset.pattern.permute.xlu0 0
        %5195 = vperm.xlu0 %5194, %v289
        %v5196 = vpop.permute.xlu0 %5195
        %5198 = vset.pattern.permute.xlu0 0
        %5199 = vperm.xlu0 %5198, %v290
        %v5200 = vpop.permute.xlu0 %5199
        %5202 = vset.pattern.permute.xlu0 0
        %5203 = vperm.xlu0 %5202, %v291
        %v5204 = vpop.permute.xlu0 %5203
        %5206 = vset.pattern.permute.xlu0 0
        %5207 = vperm.xlu0 %5206, %v292
        %v5208 = vpop.permute.xlu0 %5207
        %5210 = vset.pattern.permute.xlu0 0
        %5211 = vperm.xlu0 %5210, %v293
        %v5212 = vpop.permute.xlu0 %5211
        %5214 = vset.pattern.permute.xlu0 0
        %5215 = vperm.xlu0 %5214, %v294
        %v5216 = vpop.permute.xlu0 %5215
        %5218 = vset.pattern.permute.xlu0 0
        %5219 = vperm.xlu0 %5218, %v295
        %v5220 = vpop.permute.xlu0 %5219
        %5222 = vset.pattern.permute.xlu0 0
        %5223 = vperm.xlu0 %5222, %v296
        %v5224 = vpop.permute.xlu0 %5223
        %5226 = vset.pattern.permute.xlu0 0
        %5227 = vperm.xlu0 %5226, %v297
        %v5228 = vpop.permute.xlu0 %5227
        %5230 = vset.pattern.permute.xlu0 0
        %5231 = vperm.xlu0 %5230, %v298
        %v5232 = vpop.permute.xlu0 %5231
        %5234 = vset.pattern.permute.xlu0 0
        %5235 = vperm.xlu0 %5234, %v299
        %v5236 = vpop.permute.xlu0 %5235
        %5238 = vset.pattern.permute.xlu0 0
        %5239 = vperm.xlu0 %5238, %v300
        %v5240 = vpop.permute.xlu0 %5239
        %5242 = vset.pattern.permute.xlu0 0
        %5243 = vperm.xlu0 %5242, %v301
        %v5244 = vpop.permute.xlu0 %5243
        %5246 = vset.pattern.permute.xlu0 0
        %5247 = vperm.xlu0 %5246, %v302
        %v5248 = vpop.permute.xlu0 %5247
        %5250 = vset.pattern.permute.xlu0 0
        %5251 = vperm.xlu0 %5250, %v303
        %v5252 = vpop.permute.xlu0 %5251
        %5254 = vset.pattern.permute.xlu0 0
        %5255 = vperm.xlu0 %5254, %v304
        %v5256 = vpop.permute.xlu0 %5255
        %5258 = vset.pattern.permute.xlu0 0
        %5259 = vperm.xlu0 %5258, %v305
        %v5260 = vpop.permute.xlu0 %5259
        %5262 = vset.pattern.permute.xlu0 0
        %5263 = vperm.xlu0 %5262, %v306
        %v5264 = vpop.permute.xlu0 %5263
        %5266 = vset.pattern.permute.xlu0 0
        %5267 = vperm.xlu0 %5266, %v307
        %v5268 = vpop.permute.xlu0 %5267
        %5270 = vset.pattern.permute.xlu0 0
        %5271 = vperm.xlu0 %5270, %v308
        %v5272 = vpop.permute.xlu0 %5271
        %5274 = vset.pattern.permute.xlu0 0
        %5275 = vperm.xlu0 %5274, %v309
        %v5276 = vpop.permute.xlu0 %5275
        %5278 = vset.pattern.permute.xlu0 0
        %5279 = vperm.xlu0 %5278, %v310
        %v5280 = vpop.permute.xlu0 %5279
        %5282 = vset.pattern.permute.xlu0 0
        %5283 = vperm.xlu0 %5282, %v311
        %v5284 = vpop.permute.xlu0 %5283
        %5286 = vset.pattern.permute.xlu0 0
        %5287 = vperm.xlu0 %5286, %v312
        %v5288 = vpop.permute.xlu0 %5287
        %5290 = vset.pattern.permute.xlu0 0
        %5291 = vperm.xlu0 %5290, %v313
        %v5292 = vpop.permute.xlu0 %5291
        %v5293 = vrot.slane %v5168, 7
        %v5294 = vrot.slane %v5172, 7
        %v5295 = vsel %vm4906, %v5293, %v5294
        %v5296 = vrot.slane %v5176, 7
        %v5297 = vsel %vm4906, %v5294, %v5296
        %v5298 = vrot.slane %v5180, 7
        %v5299 = vsel %vm4906, %v5296, %v5298
        %v5300 = vrot.slane %v5184, 7
        %v5301 = vsel %vm4906, %v5298, %v5300
        %v5302 = vrot.slane %v5188, 7
        %v5303 = vsel %vm4906, %v5300, %v5302
        %v5304 = vrot.slane %v5192, 7
        %v5305 = vsel %vm4906, %v5302, %v5304
        %v5306 = vrot.slane %v5196, 7
        %v5307 = vsel %vm4906, %v5304, %v5306
        %v5308 = vrot.slane %v5200, 7
        %v5309 = vsel %vm4906, %v5306, %v5308
        %v5310 = vrot.slane %v5204, 7
        %v5311 = vsel %vm4906, %v5308, %v5310
        %v5312 = vrot.slane %v5208, 7
        %v5313 = vsel %vm4906, %v5310, %v5312
        %v5314 = vrot.slane %v5212, 7
        %v5315 = vsel %vm4906, %v5312, %v5314
        %v5316 = vrot.slane %v5216, 7
        %v5317 = vsel %vm4906, %v5314, %v5316
        %v5318 = vrot.slane %v5220, 7
        %v5319 = vsel %vm4906, %v5316, %v5318
        %v5320 = vrot.slane %v5224, 7
        %v5321 = vsel %vm4906, %v5318, %v5320
        %v5322 = vrot.slane %v5228, 7
        %v5323 = vsel %vm4906, %v5320, %v5322
        %v5324 = vrot.slane %v5232, 7
        %v5325 = vsel %vm4906, %v5322, %v5324
        %v5326 = vrot.slane %v5236, 7
        %v5327 = vsel %vm4906, %v5324, %v5326
        %v5328 = vrot.slane %v5240, 7
        %v5329 = vsel %vm4906, %v5326, %v5328
        %v5330 = vrot.slane %v5244, 7
        %v5331 = vsel %vm4906, %v5328, %v5330
        %v5332 = vrot.slane %v5248, 7
        %v5333 = vsel %vm4906, %v5330, %v5332
        %v5334 = vrot.slane %v5252, 7
        %v5335 = vsel %vm4906, %v5332, %v5334
        %v5336 = vrot.slane %v5256, 7
        %v5337 = vsel %vm4906, %v5334, %v5336
        %v5338 = vrot.slane %v5260, 7
        %v5339 = vsel %vm4906, %v5336, %v5338
        %v5340 = vrot.slane %v5264, 7
        %v5341 = vsel %vm4906, %v5338, %v5340
        %v5342 = vrot.slane %v5268, 7
        %v5343 = vsel %vm4906, %v5340, %v5342
        %v5344 = vrot.slane %v5272, 7
        %v5345 = vsel %vm4906, %v5342, %v5344
        %v5346 = vrot.slane %v5276, 7
        %v5347 = vsel %vm4906, %v5344, %v5346
        %v5348 = vrot.slane %v5280, 7
        %v5349 = vsel %vm4906, %v5346, %v5348
        %v5350 = vrot.slane %v5284, 7
        %v5351 = vsel %vm4906, %v5348, %v5350
        %v5352 = vrot.slane %v5288, 7
        %v5353 = vsel %vm4906, %v5350, %v5352
        %v5354 = vrot.slane %v5292, 7
        %v5355 = vsel %vm4906, %v5352, %v5354
        %v5389 = vmul.f32 %v4359, %v5293
        %v5390 = vmul.f32 %v4360, %v5293
        %v5391 = vmul.f32 %v4365, %v5295
        %v5392 = vmul.f32 %v4366, %v5295
        %v5393 = vmul.f32 %v4371, %v5297
        %v5394 = vmul.f32 %v4372, %v5297
        %v5395 = vmul.f32 %v4377, %v5299
        %v5396 = vmul.f32 %v4378, %v5299
        %v5397 = vmul.f32 %v4383, %v5301
        %v5398 = vmul.f32 %v4384, %v5301
        %v5399 = vmul.f32 %v4389, %v5303
        %v5400 = vmul.f32 %v4390, %v5303
        %v5401 = vmul.f32 %v4395, %v5305
        %v5402 = vmul.f32 %v4396, %v5305
        %v5403 = vmul.f32 %v4401, %v5307
        %v5404 = vmul.f32 %v4402, %v5307
        %v5405 = vmul.f32 %v4407, %v5309
        %v5406 = vmul.f32 %v4408, %v5309
        %v5407 = vmul.f32 %v4413, %v5311
        %v5408 = vmul.f32 %v4414, %v5311
        %v5409 = vmul.f32 %v4419, %v5313
        %v5410 = vmul.f32 %v4420, %v5313
        %v5411 = vmul.f32 %v4425, %v5315
        %v5412 = vmul.f32 %v4426, %v5315
        %v5413 = vmul.f32 %v4431, %v5317
        %v5414 = vmul.f32 %v4432, %v5317
        %v5415 = vmul.f32 %v4437, %v5319
        %v5416 = vmul.f32 %v4438, %v5319
        %v5417 = vmul.f32 %v4443, %v5321
        %v5418 = vmul.f32 %v4444, %v5321
        %v5419 = vmul.f32 %v4449, %v5323
        %v5420 = vmul.f32 %v4450, %v5323
        %v5421 = vmul.f32 %v4455, %v5325
        %v5422 = vmul.f32 %v4456, %v5325
        %v5423 = vmul.f32 %v4461, %v5327
        %v5424 = vmul.f32 %v4462, %v5327
        %v5425 = vmul.f32 %v4467, %v5329
        %v5426 = vmul.f32 %v4468, %v5329
        %v5427 = vmul.f32 %v4473, %v5331
        %v5428 = vmul.f32 %v4474, %v5331
        %v5429 = vmul.f32 %v4479, %v5333
        %v5430 = vmul.f32 %v4480, %v5333
        %v5431 = vmul.f32 %v4485, %v5335
        %v5432 = vmul.f32 %v4486, %v5335
        %v5433 = vmul.f32 %v4491, %v5337
        %v5434 = vmul.f32 %v4492, %v5337
        %v5435 = vmul.f32 %v4497, %v5339
        %v5436 = vmul.f32 %v4498, %v5339
        %v5437 = vmul.f32 %v4503, %v5341
        %v5438 = vmul.f32 %v4504, %v5341
        %v5439 = vmul.f32 %v4509, %v5343
        %v5440 = vmul.f32 %v4510, %v5343
        %v5441 = vmul.f32 %v4515, %v5345
        %v5442 = vmul.f32 %v4516, %v5345
        %v5443 = vmul.f32 %v4521, %v5347
        %v5444 = vmul.f32 %v4522, %v5347
        %v5445 = vmul.f32 %v4527, %v5349
        %v5446 = vmul.f32 %v4528, %v5349
        %v5447 = vmul.f32 %v4533, %v5351
        %v5448 = vmul.f32 %v4534, %v5351
        %v5449 = vmul.f32 %v4539, %v5353
        %v5450 = vmul.f32 %v4540, %v5353
        %v5451 = vmul.f32 %v4545, %v5355
        %v5452 = vmul.f32 %v4546, %v5355
        %v5453 = vmul.f32 %v4547, %v5354
        %v5454 = vmul.f32 %v4548, %v5354
        %v5521 = vrot.slane %v5389, 1
        %v5522 = vrot.slane %v5391, 1
        %v5523 = vsel %vm4677, %v5521, %v5522
        %v5524 = vrot.slane %v5390, 1
        %v5525 = vrot.slane %v5392, 1
        %v5526 = vsel %vm4677, %v5524, %v5525
        %v5527 = vrot.slane %v5393, 1
        %v5528 = vsel %vm4677, %v5522, %v5527
        %v5529 = vrot.slane %v5394, 1
        %v5530 = vsel %vm4677, %v5525, %v5529
        %v5531 = vrot.slane %v5395, 1
        %v5532 = vsel %vm4677, %v5527, %v5531
        %v5533 = vrot.slane %v5396, 1
        %v5534 = vsel %vm4677, %v5529, %v5533
        %v5535 = vrot.slane %v5397, 1
        %v5536 = vsel %vm4677, %v5531, %v5535
        %v5537 = vrot.slane %v5398, 1
        %v5538 = vsel %vm4677, %v5533, %v5537
        %v5539 = vrot.slane %v5399, 1
        %v5540 = vsel %vm4677, %v5535, %v5539
        %v5541 = vrot.slane %v5400, 1
        %v5542 = vsel %vm4677, %v5537, %v5541
        %v5543 = vrot.slane %v5401, 1
        %v5544 = vsel %vm4677, %v5539, %v5543
        %v5545 = vrot.slane %v5402, 1
        %v5546 = vsel %vm4677, %v5541, %v5545
        %v5547 = vrot.slane %v5403, 1
        %v5548 = vsel %vm4677, %v5543, %v5547
        %v5549 = vrot.slane %v5404, 1
        %v5550 = vsel %vm4677, %v5545, %v5549
        %v5551 = vrot.slane %v5405, 1
        %v5552 = vsel %vm4677, %v5547, %v5551
        %v5553 = vrot.slane %v5406, 1
        %v5554 = vsel %vm4677, %v5549, %v5553
        %v5555 = vrot.slane %v5407, 1
        %v5556 = vsel %vm4677, %v5551, %v5555
        %v5557 = vrot.slane %v5408, 1
        %v5558 = vsel %vm4677, %v5553, %v5557
        %v5559 = vrot.slane %v5409, 1
        %v5560 = vsel %vm4677, %v5555, %v5559
        %v5561 = vrot.slane %v5410, 1
        %v5562 = vsel %vm4677, %v5557, %v5561
        %v5563 = vrot.slane %v5411, 1
        %v5564 = vsel %vm4677, %v5559, %v5563
        %v5565 = vrot.slane %v5412, 1
        %v5566 = vsel %vm4677, %v5561, %v5565
        %v5567 = vrot.slane %v5413, 1
        %v5568 = vsel %vm4677, %v5563, %v5567
        %v5569 = vrot.slane %v5414, 1
        %v5570 = vsel %vm4677, %v5565, %v5569
        %v5571 = vrot.slane %v5415, 1
        %v5572 = vsel %vm4677, %v5567, %v5571
        %v5573 = vrot.slane %v5416, 1
        %v5574 = vsel %vm4677, %v5569, %v5573
        %v5575 = vrot.slane %v5417, 1
        %v5576 = vsel %vm4677, %v5571, %v5575
        %v5577 = vrot.slane %v5418, 1
        %v5578 = vsel %vm4677, %v5573, %v5577
        %v5579 = vrot.slane %v5419, 1
        %v5580 = vsel %vm4677, %v5575, %v5579
        %v5581 = vrot.slane %v5420, 1
        %v5582 = vsel %vm4677, %v5577, %v5581
        %v5583 = vrot.slane %v5421, 1
        %v5584 = vsel %vm4677, %v5579, %v5583
        %v5585 = vrot.slane %v5422, 1
        %v5586 = vsel %vm4677, %v5581, %v5585
        %v5587 = vrot.slane %v5423, 1
        %v5588 = vsel %vm4677, %v5583, %v5587
        %v5589 = vrot.slane %v5424, 1
        %v5590 = vsel %vm4677, %v5585, %v5589
        %v5591 = vrot.slane %v5425, 1
        %v5592 = vsel %vm4677, %v5587, %v5591
        %v5593 = vrot.slane %v5426, 1
        %v5594 = vsel %vm4677, %v5589, %v5593
        %v5595 = vrot.slane %v5427, 1
        %v5596 = vsel %vm4677, %v5591, %v5595
        %v5597 = vrot.slane %v5428, 1
        %v5598 = vsel %vm4677, %v5593, %v5597
        %v5599 = vrot.slane %v5429, 1
        %v5600 = vsel %vm4677, %v5595, %v5599
        %v5601 = vrot.slane %v5430, 1
        %v5602 = vsel %vm4677, %v5597, %v5601
        %v5603 = vrot.slane %v5431, 1
        %v5604 = vsel %vm4677, %v5599, %v5603
        %v5605 = vrot.slane %v5432, 1
        %v5606 = vsel %vm4677, %v5601, %v5605
        %v5607 = vrot.slane %v5433, 1
        %v5608 = vsel %vm4677, %v5603, %v5607
        %v5609 = vrot.slane %v5434, 1
        %v5610 = vsel %vm4677, %v5605, %v5609
        %v5611 = vrot.slane %v5435, 1
        %v5612 = vsel %vm4677, %v5607, %v5611
        %v5613 = vrot.slane %v5436, 1
        %v5614 = vsel %vm4677, %v5609, %v5613
        %v5615 = vrot.slane %v5437, 1
        %v5616 = vsel %vm4677, %v5611, %v5615
        %v5617 = vrot.slane %v5438, 1
        %v5618 = vsel %vm4677, %v5613, %v5617
        %v5619 = vrot.slane %v5439, 1
        %v5620 = vsel %vm4677, %v5615, %v5619
        %v5621 = vrot.slane %v5440, 1
        %v5622 = vsel %vm4677, %v5617, %v5621
        %v5623 = vrot.slane %v5441, 1
        %v5624 = vsel %vm4677, %v5619, %v5623
        %v5625 = vrot.slane %v5442, 1
        %v5626 = vsel %vm4677, %v5621, %v5625
        %v5627 = vrot.slane %v5443, 1
        %v5628 = vsel %vm4677, %v5623, %v5627
        %v5629 = vrot.slane %v5444, 1
        %v5630 = vsel %vm4677, %v5625, %v5629
        %v5631 = vrot.slane %v5445, 1
        %v5632 = vsel %vm4677, %v5627, %v5631
        %v5633 = vrot.slane %v5446, 1
        %v5634 = vsel %vm4677, %v5629, %v5633
        %v5635 = vrot.slane %v5447, 1
        %v5636 = vsel %vm4677, %v5631, %v5635
        %v5637 = vrot.slane %v5448, 1
        %v5638 = vsel %vm4677, %v5633, %v5637
        %v5639 = vrot.slane %v5449, 1
        %v5640 = vsel %vm4677, %v5635, %v5639
        %v5641 = vrot.slane %v5450, 1
        %v5642 = vsel %vm4677, %v5637, %v5641
        %v5643 = vrot.slane %v5451, 1
        %v5644 = vsel %vm4677, %v5639, %v5643
        %v5645 = vrot.slane %v5452, 1
        %v5646 = vsel %vm4677, %v5641, %v5645
        %v5647 = vrot.slane %v5453, 1
        %v5648 = vsel %vm4677, %v5643, %v5647
        %v5649 = vrot.slane %v5454, 1
        %v5650 = vsel %vm4677, %v5645, %v5649
        %v5715 = vadd.f32 %v5101, %v5523
        %v5716 = vadd.f32 %v5102, %v5526
        %v5717 = vadd.f32 %v5103, %v5528
        %v5718 = vadd.f32 %v5104, %v5530
        %v5719 = vadd.f32 %v5105, %v5532
        %v5720 = vadd.f32 %v5106, %v5534
        %v5721 = vadd.f32 %v5107, %v5536
        %v5722 = vadd.f32 %v5108, %v5538
        %v5723 = vadd.f32 %v5109, %v5540
        %v5724 = vadd.f32 %v5110, %v5542
        %v5725 = vadd.f32 %v5111, %v5544
        %v5726 = vadd.f32 %v5112, %v5546
        %v5727 = vadd.f32 %v5113, %v5548
        %v5728 = vadd.f32 %v5114, %v5550
        %v5729 = vadd.f32 %v5115, %v5552
        %v5730 = vadd.f32 %v5116, %v5554
        %v5731 = vadd.f32 %v5117, %v5556
        %v5732 = vadd.f32 %v5118, %v5558
        %v5733 = vadd.f32 %v5119, %v5560
        %v5734 = vadd.f32 %v5120, %v5562
        %v5735 = vadd.f32 %v5121, %v5564
        %v5736 = vadd.f32 %v5122, %v5566
        %v5737 = vadd.f32 %v5123, %v5568
        %v5738 = vadd.f32 %v5124, %v5570
        %v5739 = vadd.f32 %v5125, %v5572
        %v5740 = vadd.f32 %v5126, %v5574
        %v5741 = vadd.f32 %v5127, %v5576
        %v5742 = vadd.f32 %v5128, %v5578
        %v5743 = vadd.f32 %v5129, %v5580
        %v5744 = vadd.f32 %v5130, %v5582
        %v5745 = vadd.f32 %v5131, %v5584
        %v5746 = vadd.f32 %v5132, %v5586
        %v5747 = vadd.f32 %v5133, %v5588
        %v5748 = vadd.f32 %v5134, %v5590
        %v5749 = vadd.f32 %v5135, %v5592
        %v5750 = vadd.f32 %v5136, %v5594
        %v5751 = vadd.f32 %v5137, %v5596
        %v5752 = vadd.f32 %v5138, %v5598
        %v5753 = vadd.f32 %v5139, %v5600
        %v5754 = vadd.f32 %v5140, %v5602
        %v5755 = vadd.f32 %v5141, %v5604
        %v5756 = vadd.f32 %v5142, %v5606
        %v5757 = vadd.f32 %v5143, %v5608
        %v5758 = vadd.f32 %v5144, %v5610
        %v5759 = vadd.f32 %v5145, %v5612
        %v5760 = vadd.f32 %v5146, %v5614
        %v5761 = vadd.f32 %v5147, %v5616
        %v5762 = vadd.f32 %v5148, %v5618
        %v5763 = vadd.f32 %v5149, %v5620
        %v5764 = vadd.f32 %v5150, %v5622
        %v5765 = vadd.f32 %v5151, %v5624
        %v5766 = vadd.f32 %v5152, %v5626
        %v5767 = vadd.f32 %v5153, %v5628
        %v5768 = vadd.f32 %v5154, %v5630
        %v5769 = vadd.f32 %v5155, %v5632
        %v5770 = vadd.f32 %v5156, %v5634
        %v5771 = vadd.f32 %v5157, %v5636
        %v5772 = vadd.f32 %v5158, %v5638
        %v5773 = vadd.f32 %v5159, %v5640
        %v5774 = vadd.f32 %v5160, %v5642
        %v5775 = vadd.f32 %v5161, %v5644
        %v5776 = vadd.f32 %v5162, %v5646
        %v5777 = vadd.f32 %v5163, %v5648
        %v5778 = vadd.f32 %v5164, %v5650
        %v5779 = vmax.f32 %v5715, 0.0
        %v5780 = vmax.f32 %v5716, 0.0
        %v5781 = vmax.f32 %v5717, 0.0
        %v5782 = vmax.f32 %v5718, 0.0
        %v5783 = vmax.f32 %v5719, 0.0
        %v5784 = vmax.f32 %v5720, 0.0
        %v5785 = vmax.f32 %v5721, 0.0
        %v5786 = vmax.f32 %v5722, 0.0
        %v5787 = vmax.f32 %v5723, 0.0
        %v5788 = vmax.f32 %v5724, 0.0
        %v5789 = vmax.f32 %v5725, 0.0
        %v5790 = vmax.f32 %v5726, 0.0
        %v5791 = vmax.f32 %v5727, 0.0
        %v5792 = vmax.f32 %v5728, 0.0
        %v5793 = vmax.f32 %v5729, 0.0
        %v5794 = vmax.f32 %v5730, 0.0
        %v5795 = vmax.f32 %v5731, 0.0
        %v5796 = vmax.f32 %v5732, 0.0
        %v5797 = vmax.f32 %v5733, 0.0
        %v5798 = vmax.f32 %v5734, 0.0
        %v5799 = vmax.f32 %v5735, 0.0
        %v5800 = vmax.f32 %v5736, 0.0
        %v5801 = vmax.f32 %v5737, 0.0
        %v5802 = vmax.f32 %v5738, 0.0
        %v5803 = vmax.f32 %v5739, 0.0
        %v5804 = vmax.f32 %v5740, 0.0
        %v5805 = vmax.f32 %v5741, 0.0
        %v5806 = vmax.f32 %v5742, 0.0
        %v5807 = vmax.f32 %v5743, 0.0
        %v5808 = vmax.f32 %v5744, 0.0
        %v5809 = vmax.f32 %v5745, 0.0
        %v5810 = vmax.f32 %v5746, 0.0
        %v5811 = vmax.f32 %v5747, 0.0
        %v5812 = vmax.f32 %v5748, 0.0
        %v5813 = vmax.f32 %v5749, 0.0
        %v5814 = vmax.f32 %v5750, 0.0
        %v5815 = vmax.f32 %v5751, 0.0
        %v5816 = vmax.f32 %v5752, 0.0
        %v5817 = vmax.f32 %v5753, 0.0
        %v5818 = vmax.f32 %v5754, 0.0
        %v5819 = vmax.f32 %v5755, 0.0
        %v5820 = vmax.f32 %v5756, 0.0
        %v5821 = vmax.f32 %v5757, 0.0
        %v5822 = vmax.f32 %v5758, 0.0
        %v5823 = vmax.f32 %v5759, 0.0
        %v5824 = vmax.f32 %v5760, 0.0
        %v5825 = vmax.f32 %v5761, 0.0
        %v5826 = vmax.f32 %v5762, 0.0
        %v5827 = vmax.f32 %v5763, 0.0
        %v5828 = vmax.f32 %v5764, 0.0
        %v5829 = vmax.f32 %v5765, 0.0
        %v5830 = vmax.f32 %v5766, 0.0
        %v5831 = vmax.f32 %v5767, 0.0
        %v5832 = vmax.f32 %v5768, 0.0
        %v5833 = vmax.f32 %v5769, 0.0
        %v5834 = vmax.f32 %v5770, 0.0
        %v5835 = vmax.f32 %v5771, 0.0
        %v5836 = vmax.f32 %v5772, 0.0
        %v5837 = vmax.f32 %v5773, 0.0
        %v5838 = vmax.f32 %v5774, 0.0
        %v5839 = vmax.f32 %v5775, 0.0
        %v5840 = vmax.f32 %v5776, 0.0
        %v5841 = vmax.f32 %v5777, 0.0
        %v5842 = vmax.f32 %v5778, 0.0
        %v5843 = vpack.c.bf16 %v5781, %v5779
        %v5844 = vpack.c.bf16 %v5782, %v5780
        %v5845 = vpack.c.bf16 %v5785, %v5783
        %v5846 = vpack.c.bf16 %v5786, %v5784
        %v5847 = vpack.c.bf16 %v5789, %v5787
        %v5848 = vpack.c.bf16 %v5790, %v5788
        %v5849 = vpack.c.bf16 %v5793, %v5791
        %v5850 = vpack.c.bf16 %v5794, %v5792
        %v5851 = vpack.c.bf16 %v5797, %v5795
        %v5852 = vpack.c.bf16 %v5798, %v5796
        %v5853 = vpack.c.bf16 %v5801, %v5799
        %v5854 = vpack.c.bf16 %v5802, %v5800
        %v5855 = vpack.c.bf16 %v5805, %v5803
        %v5856 = vpack.c.bf16 %v5806, %v5804
        %v5857 = vpack.c.bf16 %v5809, %v5807
        %v5858 = vpack.c.bf16 %v5810, %v5808
        %v5859 = vpack.c.bf16 %v5813, %v5811
        %v5860 = vpack.c.bf16 %v5814, %v5812
        %v5861 = vpack.c.bf16 %v5817, %v5815
        %v5862 = vpack.c.bf16 %v5818, %v5816
        %v5863 = vpack.c.bf16 %v5821, %v5819
        %v5864 = vpack.c.bf16 %v5822, %v5820
        %v5865 = vpack.c.bf16 %v5825, %v5823
        %v5866 = vpack.c.bf16 %v5826, %v5824
        %v5867 = vpack.c.bf16 %v5829, %v5827
        %v5868 = vpack.c.bf16 %v5830, %v5828
        %v5869 = vpack.c.bf16 %v5833, %v5831
        %v5870 = vpack.c.bf16 %v5834, %v5832
        %v5871 = vpack.c.bf16 %v5837, %v5835
        %v5872 = vpack.c.bf16 %v5838, %v5836
        %v5873 = vpack.c.bf16 %v5841, %v5839
        %v5874 = vpack.c.bf16 %v5842, %v5840
        %5875 = vst [vmem:[#allocation2 + $0x20] sm:$0xff] %v5843
        %5876 = vst [vmem:[#allocation2 + $0x28] sm:$0xff] %v5844
        %5877 = vst [vmem:[#allocation2 + $0x30] sm:$0xff] %v5845
        %5878 = vst [vmem:[#allocation2 + $0x38] sm:$0xff] %v5846
        %5879 = vst [vmem:[#allocation2 + $0x40] sm:$0xff] %v5847
        %5880 = vst [vmem:[#allocation2 + $0x48] sm:$0xff] %v5848
        %5881 = vst [vmem:[#allocation2 + $0x50] sm:$0xff] %v5849
        %5882 = vst [vmem:[#allocation2 + $0x58] sm:$0xff] %v5850
        %5883 = vst [vmem:[#allocation2 + $0x60] sm:$0xff] %v5851
        %5884 = vst [vmem:[#allocation2 + $0x68] sm:$0xff] %v5852
        %5885 = vst [vmem:[#allocation2 + $0x70] sm:$0xff] %v5853
        %5886 = vst [vmem:[#allocation2 + $0x78] sm:$0xff] %v5854
        %5887 = vst [vmem:[#allocation2 + $0x80] sm:$0xff] %v5855
        %5888 = vst [vmem:[#allocation2 + $0x88] sm:$0xff] %v5856
        %5889 = vst [vmem:[#allocation2 + $0x90] sm:$0xff] %v5857
        %5890 = vst [vmem:[#allocation2 + $0x98] sm:$0xff] %v5858
        %5891 = vst [vmem:[#allocation2 + $0xa0] sm:$0xff] %v5859
        %5892 = vst [vmem:[#allocation2 + $0xa8] sm:$0xff] %v5860
        %5893 = vst [vmem:[#allocation2 + $0xb0] sm:$0xff] %v5861
        %5894 = vst [vmem:[#allocation2 + $0xb8] sm:$0xff] %v5862
        %5895 = vst [vmem:[#allocation2 + $0xc0] sm:$0xff] %v5863
        %5896 = vst [vmem:[#allocation2 + $0xc8] sm:$0xff] %v5864
        %5897 = vst [vmem:[#allocation2 + $0xd0] sm:$0xff] %v5865
        %5898 = vst [vmem:[#allocation2 + $0xd8] sm:$0xff] %v5866
        %5899 = vst [vmem:[#allocation2 + $0xe0] sm:$0xff] %v5867
        %5900 = vst [vmem:[#allocation2 + $0xe8] sm:$0xff] %v5868
        %5901 = vst [vmem:[#allocation2 + $0xf0] sm:$0xff] %v5869
        %5902 = vst [vmem:[#allocation2 + $0xf8] sm:$0xff] %v5870
        %5903 = vst [vmem:[#allocation2 + $0x100] sm:$0xff] %v5871
        %5904 = vst [vmem:[#allocation2 + $0x108] sm:$0xff] %v5872
        %5905 = vst [vmem:[#allocation2 + $0x110] sm:$0xff] %v5873
        %5906 = vst [vmem:[#allocation2 + $0x118] sm:$0xff] %v5874
        %v5907 = vld [vmem:[#allocation2] sm:$0xff]
        %v5908 = vld [vmem:[#allocation2 + $0x8] sm:$0xff]
        %v5909 = vld [vmem:[#allocation2 + $0x10] sm:$0xff]
        %v5910 = vld [vmem:[#allocation2 + $0x18] sm:$0xff]
        %v5911 = vld [vmem:[#allocation2 + $0x20] sm:$0xff]
        %v5912 = vld [vmem:[#allocation2 + $0x28] sm:$0xff]
        %v5913 = vld [vmem:[#allocation2 + $0x30] sm:$0xff]
        %v5914 = vld [vmem:[#allocation2 + $0x38] sm:$0xff]
        %v5915 = vld [vmem:[#allocation2 + $0x40] sm:$0xff]
        %v5916 = vld [vmem:[#allocation2 + $0x48] sm:$0xff]
        %v5917 = vld [vmem:[#allocation2 + $0x50] sm:$0xff]
        %v5918 = vld [vmem:[#allocation2 + $0x58] sm:$0xff]
        %v5919 = vld [vmem:[#allocation2 + $0x60] sm:$0xff]
        %v5920 = vld [vmem:[#allocation2 + $0x68] sm:$0xff]
        %v5921 = vld [vmem:[#allocation2 + $0x70] sm:$0xff]
        %v5922 = vld [vmem:[#allocation2 + $0x78] sm:$0xff]
        %v5923 = vld [vmem:[#allocation2 + $0x80] sm:$0xff]
        %v5924 = vld [vmem:[#allocation2 + $0x88] sm:$0xff]
        %v5925 = vld [vmem:[#allocation2 + $0x90] sm:$0xff]
        %v5926 = vld [vmem:[#allocation2 + $0x98] sm:$0xff]
        %v5927 = vld [vmem:[#allocation2 + $0xa0] sm:$0xff]
        %v5928 = vld [vmem:[#allocation2 + $0xa8] sm:$0xff]
        %v5929 = vld [vmem:[#allocation2 + $0xb0] sm:$0xff]
        %v5930 = vld [vmem:[#allocation2 + $0xb8] sm:$0xff]
        %v5931 = vld [vmem:[#allocation2 + $0xc0] sm:$0xff]
        %v5932 = vld [vmem:[#allocation2 + $0xc8] sm:$0xff]
        %v5933 = vld [vmem:[#allocation2 + $0xd0] sm:$0xff]
        %v5934 = vld [vmem:[#allocation2 + $0xd8] sm:$0xff]
        %v5935 = vld [vmem:[#allocation2 + $0xe0] sm:$0xff]
        %v5936 = vld [vmem:[#allocation2 + $0xe8] sm:$0xff]
        %v5937 = vld [vmem:[#allocation2 + $0xf0] sm:$0xff]
        %v5938 = vld [vmem:[#allocation2 + $0xf8] sm:$0xff]
        %v5939 = vld [vmem:[#allocation2 + $0x100] sm:$0xff]
        %v5940 = vld [vmem:[#allocation2 + $0x108] sm:$0xff]
        %v5941 = vld [vmem:[#allocation2 + $0x110] sm:$0xf]
        %v5942 = vld [vmem:[#allocation2 + $0x118] sm:$0xf]
        %v5943 = vld [vmem:[%s2] sm:$0xff]
        %v5944 = vld [vmem:[%s2 + $0x8] sm:$0xf]
        %v5945 = vld [vmem:[%s2 + $0xc] sm:$0xff]
        %v5946 = vld [vmem:[%s2 + $0x14] sm:$0xf]
        %v5947 = vld [vmem:[%s2 + $0x18] sm:$0xff]
        %v5948 = vld [vmem:[%s2 + $0x20] sm:$0xf]
        %v5949 = vld [vmem:[%s2 + $0x24] sm:$0xff]
        %v5950 = vld [vmem:[%s2 + $0x2c] sm:$0xf]
        %v5951 = vld [vmem:[%s2 + $0x30] sm:$0xff]
        %v5952 = vld [vmem:[%s2 + $0x38] sm:$0xf]
        %v5953 = vld [vmem:[%s2 + $0x3c] sm:$0xff]
        %v5954 = vld [vmem:[%s2 + $0x44] sm:$0xf]
        %v5955 = vld [vmem:[%s2 + $0x48] sm:$0xff]
        %v5956 = vld [vmem:[%s2 + $0x50] sm:$0xf]
        %v5957 = vld [vmem:[%s2 + $0x54] sm:$0xff]
        %v5958 = vld [vmem:[%s2 + $0x5c] sm:$0xf]
        %v5959 = vld [vmem:[%s2 + $0x60] sm:$0xff]
        %v5960 = vld [vmem:[%s2 + $0x68] sm:$0xf]
        %v5961 = vld [vmem:[%s2 + $0x6c] sm:$0xff]
        %v5962 = vld [vmem:[%s2 + $0x74] sm:$0xf]
        %v5963 = vld [vmem:[%s2 + $0x78] sm:$0xff]
        %v5964 = vld [vmem:[%s2 + $0x80] sm:$0xf]
        %v5965 = vld [vmem:[%s2 + $0x84] sm:$0xff]
        %v5966 = vld [vmem:[%s2 + $0x8c] sm:$0xf]
        %v5967 = vld [vmem:[%s2 + $0x90] sm:$0xff]
        %v5968 = vld [vmem:[%s2 + $0x98] sm:$0xf]
        %v5969 = vld [vmem:[%s2 + $0x9c] sm:$0xff]
        %v5970 = vld [vmem:[%s2 + $0xa4] sm:$0xf]
        %v5971 = vld [vmem:[%s2 + $0xa8] sm:$0xff]
        %v5972 = vld [vmem:[%s2 + $0xb0] sm:$0xf]
        %v5973 = vld [vmem:[%s2 + $0xb4] sm:$0xff]
        %v5974 = vld [vmem:[%s2 + $0xbc] sm:$0xf]
        %v5975 = vld [vmem:[%s2 + $0xc0] sm:$0xff]
        %v5976 = vld [vmem:[%s2 + $0xc8] sm:$0xf]
        %v5977 = vld [vmem:[%s2 + $0xcc] sm:$0xff]
        %v5978 = vld [vmem:[%s2 + $0xd4] sm:$0xf]
        %v5979 = vld [vmem:[%s2 + $0xd8] sm:$0xff]
        %v5980 = vld [vmem:[%s2 + $0xe0] sm:$0xf]
        %v5981 = vld [vmem:[%s2 + $0xe4] sm:$0xff]
        %v5982 = vld [vmem:[%s2 + $0xec] sm:$0xf]
        %v5983 = vld [vmem:[%s2 + $0xf0] sm:$0xff]
        %v5984 = vld [vmem:[%s2 + $0xf8] sm:$0xf]
        %v5985 = vld [vmem:[%s2 + $0xfc] sm:$0xff]
        %v5986 = vld [vmem:[%s2 + $0x104] sm:$0xf]
        %v5987 = vld [vmem:[%s2 + $0x108] sm:$0xff]
        %v5988 = vld [vmem:[%s2 + $0x110] sm:$0xf]
        %v5989 = vld [vmem:[%s2 + $0x114] sm:$0xff]
        %v5990 = vld [vmem:[%s2 + $0x11c] sm:$0xf]
        %v5991 = vld [vmem:[%s2 + $0x120] sm:$0xff]
        %v5992 = vld [vmem:[%s2 + $0x128] sm:$0xf]
        %v5993 = vld [vmem:[%s2 + $0x12c] sm:$0xff]
        %v5994 = vld [vmem:[%s2 + $0x134] sm:$0xf]
        %v5995 = vld [vmem:[%s2 + $0x138] sm:$0xff]
        %v5996 = vld [vmem:[%s2 + $0x140] sm:$0xf]
        %v5997 = vld [vmem:[%s2 + $0x144] sm:$0xff]
        %v5998 = vld [vmem:[%s2 + $0x14c] sm:$0xf]
        %v5999 = vld [vmem:[%s2 + $0x150] sm:$0xff]
        %v6000 = vld [vmem:[%s2 + $0x158] sm:$0xf]
        %v6001 = vld [vmem:[%s2 + $0x15c] sm:$0xff]
        %v6002 = vld [vmem:[%s2 + $0x164] sm:$0xf]
        %v6003 = vld [vmem:[%s2 + $0x168] sm:$0xff]
        %v6004 = vld [vmem:[%s2 + $0x170] sm:$0xf]
        %v6005 = vld [vmem:[%s2 + $0x174] sm:$0xff]
        %v6006 = vld [vmem:[%s2 + $0x17c] sm:$0xf]
        %v6007 = vld [vmem:[#allocation2 + $0x110] sm:$0xff]
        %v6008 = vld [vmem:[#allocation2 + $0x118] sm:$0xff]
        %v6009 = vld [vmem:[#allocation2 + $0x120] sm:$0xf]
        %v6010 = vld [vmem:[#allocation2 + $0x128] sm:$0xf]
        %s6011 = scalar_lea.vmem %s2, 384
        %v6012 = vld [vmem:[%s6011] sm:$0xff]
        %v6013 = vld [vmem:[%s6011 + $0x8] sm:$0xf]
        %v6014 = vld [vmem:[%s6011 + $0xc] sm:$0xff]
        %v6015 = vld [vmem:[%s6011 + $0x14] sm:$0xf]
        %v6016 = vld [vmem:[%s6011 + $0x18] sm:$0xff]
        %v6017 = vld [vmem:[%s6011 + $0x20] sm:$0xf]
        %v6018 = vld [vmem:[%s6011 + $0x24] sm:$0xff]
        %v6019 = vld [vmem:[%s6011 + $0x2c] sm:$0xf]
        %v6020 = vld [vmem:[%s6011 + $0x30] sm:$0xff]
        %v6021 = vld [vmem:[%s6011 + $0x38] sm:$0xf]
        %v6022 = vld [vmem:[%s6011 + $0x3c] sm:$0xff]
        %v6023 = vld [vmem:[%s6011 + $0x44] sm:$0xf]
        %v6024 = vld [vmem:[%s6011 + $0x48] sm:$0xff]
        %v6025 = vld [vmem:[%s6011 + $0x50] sm:$0xf]
        %v6026 = vld [vmem:[%s6011 + $0x54] sm:$0xff]
        %v6027 = vld [vmem:[%s6011 + $0x5c] sm:$0xf]
        %v6028 = vld [vmem:[%s6011 + $0x60] sm:$0xff]
        %v6029 = vld [vmem:[%s6011 + $0x68] sm:$0xf]
        %v6030 = vld [vmem:[%s6011 + $0x6c] sm:$0xff]
        %v6031 = vld [vmem:[%s6011 + $0x74] sm:$0xf]
        %v6032 = vld [vmem:[%s6011 + $0x78] sm:$0xff]
        %v6033 = vld [vmem:[%s6011 + $0x80] sm:$0xf]
        %v6034 = vld [vmem:[%s6011 + $0x84] sm:$0xff]
        %v6035 = vld [vmem:[%s6011 + $0x8c] sm:$0xf]
        %v6036 = vld [vmem:[%s6011 + $0x90] sm:$0xff]
        %v6037 = vld [vmem:[%s6011 + $0x98] sm:$0xf]
        %v6038 = vld [vmem:[%s6011 + $0x9c] sm:$0xff]
        %v6039 = vld [vmem:[%s6011 + $0xa4] sm:$0xf]
        %v6040 = vld [vmem:[%s6011 + $0xa8] sm:$0xff]
        %v6041 = vld [vmem:[%s6011 + $0xb0] sm:$0xf]
        %v6042 = vld [vmem:[%s6011 + $0xb4] sm:$0xff]
        %v6043 = vld [vmem:[%s6011 + $0xbc] sm:$0xf]
        %v6044 = vld [vmem:[%s6011 + $0xc0] sm:$0xff]
        %v6045 = vld [vmem:[%s6011 + $0xc8] sm:$0xf]
        %v6046 = vld [vmem:[%s6011 + $0xcc] sm:$0xff]
        %v6047 = vld [vmem:[%s6011 + $0xd4] sm:$0xf]
        %v6048 = vld [vmem:[%s6011 + $0xd8] sm:$0xff]
        %v6049 = vld [vmem:[%s6011 + $0xe0] sm:$0xf]
        %v6050 = vld [vmem:[%s6011 + $0xe4] sm:$0xff]
        %v6051 = vld [vmem:[%s6011 + $0xec] sm:$0xf]
        %v6052 = vld [vmem:[%s6011 + $0xf0] sm:$0xff]
        %v6053 = vld [vmem:[%s6011 + $0xf8] sm:$0xf]
        %v6054 = vld [vmem:[%s6011 + $0xfc] sm:$0xff]
        %v6055 = vld [vmem:[%s6011 + $0x104] sm:$0xf]
        %v6056 = vld [vmem:[%s6011 + $0x108] sm:$0xff]
        %v6057 = vld [vmem:[%s6011 + $0x110] sm:$0xf]
        %v6058 = vld [vmem:[%s6011 + $0x114] sm:$0xff]
        %v6059 = vld [vmem:[%s6011 + $0x11c] sm:$0xf]
        %v6060 = vld [vmem:[%s6011 + $0x120] sm:$0xff]
        %v6061 = vld [vmem:[%s6011 + $0x128] sm:$0xf]
        %v6062 = vld [vmem:[%s6011 + $0x12c] sm:$0xff]
        %v6063 = vld [vmem:[%s6011 + $0x134] sm:$0xf]
        %v6064 = vld [vmem:[%s6011 + $0x138] sm:$0xff]
        %v6065 = vld [vmem:[%s6011 + $0x140] sm:$0xf]
        %v6066 = vld [vmem:[%s6011 + $0x144] sm:$0xff]
        %v6067 = vld [vmem:[%s6011 + $0x14c] sm:$0xf]
        %v6068 = vld [vmem:[%s6011 + $0x150] sm:$0xff]
        %v6069 = vld [vmem:[%s6011 + $0x158] sm:$0xf]
        %v6070 = vld [vmem:[%s6011 + $0x15c] sm:$0xff]
        %v6071 = vld [vmem:[%s6011 + $0x164] sm:$0xf]
        %v6072 = vld [vmem:[%s6011 + $0x168] sm:$0xff]
        %v6073 = vld [vmem:[%s6011 + $0x170] sm:$0xf]
        %v6074 = vld [vmem:[%s6011 + $0x174] sm:$0xff]
        %v6075 = vld [vmem:[%s6011 + $0x17c] sm:$0xf]
        %v6140 = vunpack.c.l.b16 %v6012
        %v6141 = vunpack.c.h.b16 %v6012
        %v6142 = vunpack.c.l.b16 %v6013
        %v6143 = vunpack.c.l.b16 %v6014
        %v6144 = vunpack.c.h.b16 %v6014
        %v6145 = vunpack.c.l.b16 %v6015
        %v6146 = vunpack.c.l.b16 %v6016
        %v6147 = vunpack.c.h.b16 %v6016
        %v6148 = vunpack.c.l.b16 %v6017
        %v6149 = vunpack.c.l.b16 %v6018
        %v6150 = vunpack.c.h.b16 %v6018
        %v6151 = vunpack.c.l.b16 %v6019
        %v6152 = vunpack.c.l.b16 %v6020
        %v6153 = vunpack.c.h.b16 %v6020
        %v6154 = vunpack.c.l.b16 %v6021
        %v6155 = vunpack.c.l.b16 %v6022
        %v6156 = vunpack.c.h.b16 %v6022
        %v6157 = vunpack.c.l.b16 %v6023
        %v6158 = vunpack.c.l.b16 %v6024
        %v6159 = vunpack.c.h.b16 %v6024
        %v6160 = vunpack.c.l.b16 %v6025
        %v6161 = vunpack.c.l.b16 %v6026
        %v6162 = vunpack.c.h.b16 %v6026
        %v6163 = vunpack.c.l.b16 %v6027
        %v6164 = vunpack.c.l.b16 %v6028
        %v6165 = vunpack.c.h.b16 %v6028
        %v6166 = vunpack.c.l.b16 %v6029
        %v6167 = vunpack.c.l.b16 %v6030
        %v6168 = vunpack.c.h.b16 %v6030
        %v6169 = vunpack.c.l.b16 %v6031
        %v6170 = vunpack.c.l.b16 %v6032
        %v6171 = vunpack.c.h.b16 %v6032
        %v6172 = vunpack.c.l.b16 %v6033
        %v6173 = vunpack.c.l.b16 %v6034
        %v6174 = vunpack.c.h.b16 %v6034
        %v6175 = vunpack.c.l.b16 %v6035
        %v6176 = vunpack.c.l.b16 %v6036
        %v6177 = vunpack.c.h.b16 %v6036
        %v6178 = vunpack.c.l.b16 %v6037
        %v6179 = vunpack.c.l.b16 %v6038
        %v6180 = vunpack.c.h.b16 %v6038
        %v6181 = vunpack.c.l.b16 %v6039
        %v6182 = vunpack.c.l.b16 %v6040
        %v6183 = vunpack.c.h.b16 %v6040
        %v6184 = vunpack.c.l.b16 %v6041
        %v6185 = vunpack.c.l.b16 %v6042
        %v6186 = vunpack.c.h.b16 %v6042
        %v6187 = vunpack.c.l.b16 %v6043
        %v6188 = vunpack.c.l.b16 %v6044
        %v6189 = vunpack.c.h.b16 %v6044
        %v6190 = vunpack.c.l.b16 %v6045
        %v6191 = vunpack.c.l.b16 %v6046
        %v6192 = vunpack.c.h.b16 %v6046
        %v6193 = vunpack.c.l.b16 %v6047
        %v6194 = vunpack.c.l.b16 %v6048
        %v6195 = vunpack.c.h.b16 %v6048
        %v6196 = vunpack.c.l.b16 %v6049
        %v6197 = vunpack.c.l.b16 %v6050
        %v6198 = vunpack.c.h.b16 %v6050
        %v6199 = vunpack.c.l.b16 %v6051
        %v6200 = vunpack.c.l.b16 %v6052
        %v6201 = vunpack.c.h.b16 %v6052
        %v6202 = vunpack.c.l.b16 %v6053
        %v6203 = vunpack.c.l.b16 %v6054
        %v6204 = vunpack.c.h.b16 %v6054
        %v6205 = vunpack.c.l.b16 %v6055
        %v6206 = vunpack.c.l.b16 %v6056
        %v6207 = vunpack.c.h.b16 %v6056
        %v6208 = vunpack.c.l.b16 %v6057
        %v6209 = vunpack.c.l.b16 %v6058
        %v6210 = vunpack.c.h.b16 %v6058
        %v6211 = vunpack.c.l.b16 %v6059
        %v6212 = vunpack.c.l.b16 %v6060
        %v6213 = vunpack.c.h.b16 %v6060
        %v6214 = vunpack.c.l.b16 %v6061
        %v6215 = vunpack.c.l.b16 %v6062
        %v6216 = vunpack.c.h.b16 %v6062
        %v6217 = vunpack.c.l.b16 %v6063
        %v6218 = vunpack.c.l.b16 %v6064
        %v6219 = vunpack.c.h.b16 %v6064
        %v6220 = vunpack.c.l.b16 %v6065
        %v6221 = vunpack.c.l.b16 %v6066
        %v6222 = vunpack.c.h.b16 %v6066
        %v6223 = vunpack.c.l.b16 %v6067
        %v6224 = vunpack.c.l.b16 %v6068
        %v6225 = vunpack.c.h.b16 %v6068
        %v6226 = vunpack.c.l.b16 %v6069
        %v6227 = vunpack.c.l.b16 %v6070
        %v6228 = vunpack.c.h.b16 %v6070
        %v6229 = vunpack.c.l.b16 %v6071
        %v6230 = vunpack.c.l.b16 %v6072
        %v6231 = vunpack.c.h.b16 %v6072
        %v6232 = vunpack.c.l.b16 %v6073
        %v6233 = vunpack.c.l.b16 %v6074
        %v6234 = vunpack.c.h.b16 %v6074
        %v6235 = vunpack.c.l.b16 %v6075
        %v6236 = vpack.c.b16 %v6143, %v6140
        %v6237 = vpack.c.b16 %v6144, %v6141
        %v6238 = vpack.c.b16 %v6145, %v6142
        %v6239 = vpack.c.b16 %v6149, %v6146
        %v6240 = vpack.c.b16 %v6150, %v6147
        %v6241 = vpack.c.b16 %v6151, %v6148
        %v6242 = vpack.c.b16 %v6155, %v6152
        %v6243 = vpack.c.b16 %v6156, %v6153
        %v6244 = vpack.c.b16 %v6157, %v6154
        %v6245 = vpack.c.b16 %v6161, %v6158
        %v6246 = vpack.c.b16 %v6162, %v6159
        %v6247 = vpack.c.b16 %v6163, %v6160
        %v6248 = vpack.c.b16 %v6167, %v6164
        %v6249 = vpack.c.b16 %v6168, %v6165
        %v6250 = vpack.c.b16 %v6169, %v6166
        %v6251 = vpack.c.b16 %v6173, %v6170
        %v6252 = vpack.c.b16 %v6174, %v6171
        %v6253 = vpack.c.b16 %v6175, %v6172
        %v6254 = vpack.c.b16 %v6179, %v6176
        %v6255 = vpack.c.b16 %v6180, %v6177
        %v6256 = vpack.c.b16 %v6181, %v6178
        %v6257 = vpack.c.b16 %v6185, %v6182
        %v6258 = vpack.c.b16 %v6186, %v6183
        %v6259 = vpack.c.b16 %v6187, %v6184
        %v6260 = vpack.c.b16 %v6191, %v6188
        %v6261 = vpack.c.b16 %v6192, %v6189
        %v6262 = vpack.c.b16 %v6193, %v6190
        %v6263 = vpack.c.b16 %v6197, %v6194
        %v6264 = vpack.c.b16 %v6198, %v6195
        %v6265 = vpack.c.b16 %v6199, %v6196
        %v6266 = vpack.c.b16 %v6203, %v6200
        %v6267 = vpack.c.b16 %v6204, %v6201
        %v6268 = vpack.c.b16 %v6205, %v6202
        %v6269 = vpack.c.b16 %v6209, %v6206
        %v6270 = vpack.c.b16 %v6210, %v6207
        %v6271 = vpack.c.b16 %v6211, %v6208
        %v6272 = vpack.c.b16 %v6215, %v6212
        %v6273 = vpack.c.b16 %v6216, %v6213
        %v6274 = vpack.c.b16 %v6217, %v6214
        %v6275 = vpack.c.b16 %v6221, %v6218
        %v6276 = vpack.c.b16 %v6222, %v6219
        %v6277 = vpack.c.b16 %v6223, %v6220
        %v6278 = vpack.c.b16 %v6227, %v6224
        %v6279 = vpack.c.b16 %v6228, %v6225
        %v6280 = vpack.c.b16 %v6229, %v6226
        %v6281 = vpack.c.b16 %v6233, %v6230
        %v6282 = vpack.c.b16 %v6234, %v6231
        %v6283 = vpack.c.b16 %v6235, %v6232
        %6332 = vmatprep.subr.bf16.mxu0 %v6237
        %6333 = vmatpush1.bf16.msra.mxu0 %v6236
        %6334 = vmatprep.subr.bf16.mxu0 %v6240
        %6335 = vmatpush1.bf16.msra.mxu0 %v6239
        %6336 = vmatprep.subr.bf16.mxu0 %v6243
        %6337 = vmatpush1.bf16.msra.mxu0 %v6242
        %6338 = vmatprep.subr.bf16.mxu0 %v6246
        %6339 = vmatpush1.bf16.msra.mxu0 %v6245
        %6340 = vmatprep.subr.bf16.mxu0 %v6249
        %6341 = vmatpush1.bf16.msra.mxu0 %v6248
        %6342 = vmatprep.subr.bf16.mxu0 %v6252
        %6343 = vmatpush1.bf16.msra.mxu0 %v6251
        %6344 = vmatprep.subr.bf16.mxu0 %v6255
        %6345 = vmatpush1.bf16.msra.mxu0 %v6254
        %6346 = vmatprep.subr.bf16.mxu0 %v6258
        %6347 = vmatpush1.bf16.msra.mxu0 %v6257
        %6348 = vmatprep.subr.bf16.mxu0 %v6261
        %6349 = vmatpush1.bf16.msra.mxu0 %v6260
        %6350 = vmatprep.subr.bf16.mxu0 %v6264
        %6351 = vmatpush1.bf16.msra.mxu0 %v6263
        %6352 = vmatprep.subr.bf16.mxu0 %v6267
        %6353 = vmatpush1.bf16.msra.mxu0 %v6266
        %6354 = vmatprep.subr.bf16.mxu0 %v6270
        %6355 = vmatpush1.bf16.msra.mxu0 %v6269
        %6356 = vmatprep.subr.bf16.mxu0 %v6273
        %6357 = vmatpush1.bf16.msra.mxu0 %v6272
        %6358 = vmatprep.subr.bf16.mxu0 %v6276
        %6359 = vmatpush1.bf16.msra.mxu0 %v6275
        %6360 = vmatprep.subr.bf16.mxu0 %v6279
        %6361 = vmatpush1.bf16.msra.mxu0 %v6278
        %6362 = vmatprep.subr.bf16.mxu0 %v6282
        %6363 = vmatpush1.bf16.msra.mxu0 %v6281
        %6364 = vmatprep.mubr.bf16.mxu0 %v5910
        %6365 = vmatmul.mubr.bf16.gmra.mrb[0].mxu0 %v5909
        %v6366 = vpop.f32.mrb[0].mxu0
        %v6367 = vpop.f32.mrb[0].mxu0
        %v6368 = vpop.f32.mrb[0].mxu0
        %v6369 = vadd.f32 0.0, %v6368
        %v6370 = vpop.f32.mrb[0].mxu0
        %6371 = vmatprep.mubr.bf16.mxu0 %v5912
        %6372 = vmatmul.mubr.bf16.gmra.mrb[0].mxu0 %v5911
        %v6373 = vpop.f32.mrb[0].mxu0
        %v6374 = vadd.f32 0.0, %v6373
        %v6375 = vpop.f32.mrb[0].mxu0
        %v6376 = vadd.f32 0.0, %v6375
        %v6377 = vpop.f32.mrb[0].mxu0
        %v6378 = vadd.f32 0.0, %v6377
        %v6379 = vpop.f32.mrb[0].mxu0
        %v6380 = vadd.f32 0.0, %v6379
        %6381 = vmatprep.mubr.bf16.mxu0 %v5914
        %6382 = vmatmul.mubr.bf16.gmra.mrb[0].mxu0 %v5913
        %v6383 = vpop.f32.mrb[0].mxu0
        %v6384 = vadd.f32 0.0, %v6383
        %v6385 = vpop.f32.mrb[0].mxu0
        %v6386 = vadd.f32 0.0, %v6385
        %v6387 = vpop.f32.mrb[0].mxu0
        %v6388 = vadd.f32 0.0, %v6387
        %v6389 = vpop.f32.mrb[0].mxu0
        %v6390 = vadd.f32 0.0, %v6389
        %6391 = vmatprep.mubr.bf16.mxu0 %v5916
        %6392 = vmatmul.mubr.bf16.gmra.mrb[0].mxu0 %v5915
        %v6393 = vpop.f32.mrb[0].mxu0
        %v6394 = vadd.f32 0.0, %v6393
        %v6395 = vpop.f32.mrb[0].mxu0
        %v6396 = vadd.f32 0.0, %v6395
        %v6397 = vpop.f32.mrb[0].mxu0
        %v6398 = vadd.f32 0.0, %v6397
        %v6399 = vpop.f32.mrb[0].mxu0
        %v6400 = vadd.f32 0.0, %v6399
        %6401 = vmatprep.mubr.bf16.mxu0 %v5918
        %6402 = vmatmul.mubr.bf16.gmra.mrb[0].mxu0 %v5917
        %v6403 = vpop.f32.mrb[0].mxu0
        %v6404 = vadd.f32 0.0, %v6403
        %v6405 = vpop.f32.mrb[0].mxu0
        %v6406 = vadd.f32 0.0, %v6405
        %v6407 = vpop.f32.mrb[0].mxu0
        %v6408 = vadd.f32 0.0, %v6407
        %v6409 = vpop.f32.mrb[0].mxu0
        %v6410 = vadd.f32 0.0, %v6409
        %6411 = vmatprep.mubr.bf16.mxu0 %v5920
        %6412 = vmatmul.mubr.bf16.gmra.mrb[0].mxu0 %v5919
        %v6413 = vpop.f32.mrb[0].mxu0
        %v6414 = vadd.f32 0.0, %v6413
        %v6415 = vpop.f32.mrb[0].mxu0
        %v6416 = vadd.f32 0.0, %v6415
        %v6417 = vpop.f32.mrb[0].mxu0
        %v6418 = vadd.f32 0.0, %v6417
        %v6419 = vpop.f32.mrb[0].mxu0
        %v6420 = vadd.f32 0.0, %v6419
        %6421 = vmatprep.mubr.bf16.mxu0 %v5922
        %6422 = vmatmul.mubr.bf16.gmra.mrb[0].mxu0 %v5921
        %v6423 = vpop.f32.mrb[0].mxu0
        %v6424 = vadd.f32 0.0, %v6423
        %v6425 = vpop.f32.mrb[0].mxu0
        %v6426 = vadd.f32 0.0, %v6425
        %v6427 = vpop.f32.mrb[0].mxu0
        %v6428 = vadd.f32 0.0, %v6427
        %v6429 = vpop.f32.mrb[0].mxu0
        %v6430 = vadd.f32 0.0, %v6429
        %6431 = vmatprep.mubr.bf16.mxu0 %v5924
        %6432 = vmatmul.mubr.bf16.gmra.mrb[0].mxu0 %v5923
        %v6433 = vpop.f32.mrb[0].mxu0
        %v6434 = vadd.f32 0.0, %v6433
        %v6435 = vpop.f32.mrb[0].mxu0
        %v6436 = vadd.f32 0.0, %v6435
        %v6437 = vpop.f32.mrb[0].mxu0
        %v6438 = vadd.f32 0.0, %v6437
        %v6439 = vpop.f32.mrb[0].mxu0
        %v6440 = vadd.f32 0.0, %v6439
        %6441 = vmatprep.mubr.bf16.mxu0 %v5926
        %6442 = vmatmul.mubr.bf16.gmra.mrb[0].mxu0 %v5925
        %v6443 = vpop.f32.mrb[0].mxu0
        %v6444 = vadd.f32 0.0, %v6443
        %v6445 = vpop.f32.mrb[0].mxu0
        %v6446 = vadd.f32 0.0, %v6445
        %v6447 = vpop.f32.mrb[0].mxu0
        %v6448 = vadd.f32 0.0, %v6447
        %v6449 = vpop.f32.mrb[0].mxu0
        %v6450 = vadd.f32 0.0, %v6449
        %6451 = vmatprep.mubr.bf16.mxu0 %v5928
        %6452 = vmatmul.mubr.bf16.gmra.mrb[0].mxu0 %v5927
        %v6453 = vpop.f32.mrb[0].mxu0
        %v6454 = vadd.f32 0.0, %v6453
        %v6455 = vpop.f32.mrb[0].mxu0
        %v6456 = vadd.f32 0.0, %v6455
        %v6457 = vpop.f32.mrb[0].mxu0
        %v6458 = vadd.f32 0.0, %v6457
        %v6459 = vpop.f32.mrb[0].mxu0
        %v6460 = vadd.f32 0.0, %v6459
        %6461 = vmatprep.mubr.bf16.mxu0 %v5930
        %6462 = vmatmul.mubr.bf16.gmra.mrb[0].mxu0 %v5929
        %v6463 = vpop.f32.mrb[0].mxu0
        %v6464 = vadd.f32 0.0, %v6463
        %v6465 = vpop.f32.mrb[0].mxu0
        %v6466 = vadd.f32 0.0, %v6465
        %v6467 = vpop.f32.mrb[0].mxu0
        %v6468 = vadd.f32 0.0, %v6467
        %v6469 = vpop.f32.mrb[0].mxu0
        %v6470 = vadd.f32 0.0, %v6469
        %6471 = vmatprep.mubr.bf16.mxu0 %v5932
        %6472 = vmatmul.mubr.bf16.gmra.mrb[0].mxu0 %v5931
        %v6473 = vpop.f32.mrb[0].mxu0
        %v6474 = vadd.f32 0.0, %v6473
        %v6475 = vpop.f32.mrb[0].mxu0
        %v6476 = vadd.f32 0.0, %v6475
        %v6477 = vpop.f32.mrb[0].mxu0
        %v6478 = vadd.f32 0.0, %v6477
        %v6479 = vpop.f32.mrb[0].mxu0
        %v6480 = vadd.f32 0.0, %v6479
        %6481 = vmatprep.mubr.bf16.mxu0 %v5934
        %6482 = vmatmul.mubr.bf16.gmra.mrb[0].mxu0 %v5933
        %v6483 = vpop.f32.mrb[0].mxu0
        %v6484 = vadd.f32 0.0, %v6483
        %v6485 = vpop.f32.mrb[0].mxu0
        %v6486 = vadd.f32 0.0, %v6485
        %v6487 = vpop.f32.mrb[0].mxu0
        %v6488 = vadd.f32 0.0, %v6487
        %v6489 = vpop.f32.mrb[0].mxu0
        %v6490 = vadd.f32 0.0, %v6489
        %6491 = vmatprep.mubr.bf16.mxu0 %v5936
        %6492 = vmatmul.mubr.bf16.gmra.mrb[0].mxu0 %v5935
        %v6493 = vpop.f32.mrb[0].mxu0
        %v6494 = vadd.f32 0.0, %v6493
        %v6495 = vpop.f32.mrb[0].mxu0
        %v6496 = vadd.f32 0.0, %v6495
        %v6497 = vpop.f32.mrb[0].mxu0
        %v6498 = vadd.f32 0.0, %v6497
        %v6499 = vpop.f32.mrb[0].mxu0
        %v6500 = vadd.f32 0.0, %v6499
        %6501 = vmatprep.mubr.bf16.mxu0 %v5938
        %6502 = vmatmul.mubr.bf16.gmra.mrb[0].mxu0 %v5937
        %v6503 = vpop.f32.mrb[0].mxu0
        %v6504 = vadd.f32 0.0, %v6503
        %v6505 = vpop.f32.mrb[0].mxu0
        %v6506 = vadd.f32 0.0, %v6505
        %v6507 = vpop.f32.mrb[0].mxu0
        %v6508 = vadd.f32 0.0, %v6507
        %v6509 = vpop.f32.mrb[0].mxu0
        %v6510 = vadd.f32 0.0, %v6509
        %6511 = vmatprep.mubr.bf16.mxu0 %v5940
        %6512 = vmatmul.mubr.bf16.gmra.mrb[0].mxu0 %v5939
        %v6513 = vpop.f32.mrb[0].mxu0
        %v6514 = vadd.f32 0.0, %v6513
        %v6515 = vpop.f32.mrb[0].mxu0
        %v6516 = vadd.f32 0.0, %v6515
        %v6517 = vpop.f32.mrb[0].mxu0
        %v6518 = vadd.f32 0.0, %v6517
        %v6519 = vpop.f32.mrb[0].mxu0
        %v6520 = vadd.f32 0.0, %v6519
        %6521 = vmatprep.mubr.bf16.mxu0 %v6008
        %6522 = vmatmul.mubr.bf16.gmra.mrb[0].mxu0 %v6007
        %v6523 = vpop.f32.mrb[0].mxu0
        %v6524 = vadd.f32 0.0, %v6523
        %v6525 = vpop.f32.mrb[0].mxu0
        %v6526 = vadd.f32 0.0, %v6525
        %v6527 = vpop.f32.mrb[0].mxu0
        %v6528 = vadd.f32 0.0, %v6527
        %v6529 = vpop.f32.mrb[0].mxu0
        %v6530 = vadd.f32 0.0, %v6529
        %6531 = vmatprep.mubr.bf16.mxu0 %v6010
        %6532 = vmatmul.mubr.bf16.gmra.mrb[0].mxu0 %v6009
        %v6533 = vpop.f32.mrb[0].mxu0
        %v6534 = vpop.f32.mrb[0].mxu0
        %v6535 = vpop.f32.mrb[0].mxu0
        %v6536 = vpop.f32.mrb[0].mxu0
        %6537 = vdwg.mxu0
        %6538 = vmatprep.subr.bf16.mxu0 0
        %6539 = vmatpush1.bf16.msra.mxu0 %v6238
        %6540 = vmatprep.subr.bf16.mxu0 0
        %6541 = vmatpush1.bf16.msra.mxu0 %v6241
        %6542 = vmatprep.subr.bf16.mxu0 0
        %6543 = vmatpush1.bf16.msra.mxu0 %v6244
        %6544 = vmatprep.subr.bf16.mxu0 0
        %6545 = vmatpush1.bf16.msra.mxu0 %v6247
        %6546 = vmatprep.subr.bf16.mxu0 0
        %6547 = vmatpush1.bf16.msra.mxu0 %v6250
        %6548 = vmatprep.subr.bf16.mxu0 0
        %6549 = vmatpush1.bf16.msra.mxu0 %v6253
        %6550 = vmatprep.subr.bf16.mxu0 0
        %6551 = vmatpush1.bf16.msra.mxu0 %v6256
        %6552 = vmatprep.subr.bf16.mxu0 0
        %6553 = vmatpush1.bf16.msra.mxu0 %v6259
        %6554 = vmatprep.subr.bf16.mxu0 0
        %6555 = vmatpush1.bf16.msra.mxu0 %v6262
        %6556 = vmatprep.subr.bf16.mxu0 0
        %6557 = vmatpush1.bf16.msra.mxu0 %v6265
        %6558 = vmatprep.subr.bf16.mxu0 0
        %6559 = vmatpush1.bf16.msra.mxu0 %v6268
        %6560 = vmatprep.subr.bf16.mxu0 0
        %6561 = vmatpush1.bf16.msra.mxu0 %v6271
        %6562 = vmatprep.subr.bf16.mxu0 0
        %6563 = vmatpush1.bf16.msra.mxu0 %v6274
        %6564 = vmatprep.subr.bf16.mxu0 0
        %6565 = vmatpush1.bf16.msra.mxu0 %v6277
        %6566 = vmatprep.subr.bf16.mxu0 0
        %6567 = vmatpush1.bf16.msra.mxu0 %v6280
        %6568 = vmatprep.subr.bf16.mxu0 0
        %6569 = vmatpush1.bf16.msra.mxu0 %v6283
        %6570 = vmatprep.mubr.bf16.mxu0 %v5910
        %6571 = vmatmul.mubr.bf16.gmra.mrb[0].mxu0 %v5909
        %v6572 = vpop.f32.mrb[0].mxu0
        %v6573 = vpop.f32.mrb[0].mxu0
        %v6574 = vpop.f32.mrb[0].mxu0
        %v6575 = vpop.f32.mrb[0].mxu0
        %6576 = vmatprep.mubr.bf16.mxu0 %v5912
        %6577 = vmatmul.mubr.bf16.gmra.mrb[0].mxu0 %v5911
        %v6578 = vpop.f32.mrb[0].mxu0
        %v6579 = vadd.f32 0.0, %v6578
        %v6580 = vpop.f32.mrb[0].mxu0
        %v6581 = vpop.f32.mrb[0].mxu0
        %v6582 = vadd.f32 0.0, %v6581
        %v6583 = vpop.f32.mrb[0].mxu0
        %6584 = vmatprep.mubr.bf16.mxu0 %v5914
        %6585 = vmatmul.mubr.bf16.gmra.mrb[0].mxu0 %v5913
        %v6586 = vpop.f32.mrb[0].mxu0
        %v6587 = vadd.f32 0.0, %v6586
        %v6588 = vpop.f32.mrb[0].mxu0
        %v6589 = vpop.f32.mrb[0].mxu0
        %v6590 = vadd.f32 0.0, %v6589
        %v6591 = vpop.f32.mrb[0].mxu0
        %6592 = vmatprep.mubr.bf16.mxu0 %v5916
        %6593 = vmatmul.mubr.bf16.gmra.mrb[0].mxu0 %v5915
        %v6594 = vpop.f32.mrb[0].mxu0
        %v6595 = vadd.f32 0.0, %v6594
        %v6596 = vpop.f32.mrb[0].mxu0
        %v6597 = vpop.f32.mrb[0].mxu0
        %v6598 = vadd.f32 0.0, %v6597
        %v6599 = vpop.f32.mrb[0].mxu0
        %6600 = vmatprep.mubr.bf16.mxu0 %v5918
        %6601 = vmatmul.mubr.bf16.gmra.mrb[0].mxu0 %v5917
        %v6602 = vpop.f32.mrb[0].mxu0
        %v6603 = vadd.f32 0.0, %v6602
        %v6604 = vpop.f32.mrb[0].mxu0
        %v6605 = vpop.f32.mrb[0].mxu0
        %v6606 = vadd.f32 0.0, %v6605
        %v6607 = vpop.f32.mrb[0].mxu0
        %6608 = vmatprep.mubr.bf16.mxu0 %v5920
        %6609 = vmatmul.mubr.bf16.gmra.mrb[0].mxu0 %v5919
        %v6610 = vpop.f32.mrb[0].mxu0
        %v6611 = vadd.f32 0.0, %v6610
        %v6612 = vpop.f32.mrb[0].mxu0
        %v6613 = vpop.f32.mrb[0].mxu0
        %v6614 = vadd.f32 0.0, %v6613
        %v6615 = vpop.f32.mrb[0].mxu0
        %6616 = vmatprep.mubr.bf16.mxu0 %v5922
        %6617 = vmatmul.mubr.bf16.gmra.mrb[0].mxu0 %v5921
        %v6618 = vpop.f32.mrb[0].mxu0
        %v6619 = vadd.f32 0.0, %v6618
        %v6620 = vpop.f32.mrb[0].mxu0
        %v6621 = vpop.f32.mrb[0].mxu0
        %v6622 = vadd.f32 0.0, %v6621
        %v6623 = vpop.f32.mrb[0].mxu0
        %6624 = vmatprep.mubr.bf16.mxu0 %v5924
        %6625 = vmatmul.mubr.bf16.gmra.mrb[0].mxu0 %v5923
        %v6626 = vpop.f32.mrb[0].mxu0
        %v6627 = vadd.f32 0.0, %v6626
        %v6628 = vpop.f32.mrb[0].mxu0
        %v6629 = vpop.f32.mrb[0].mxu0
        %v6630 = vadd.f32 0.0, %v6629
        %v6631 = vpop.f32.mrb[0].mxu0
        %6632 = vmatprep.mubr.bf16.mxu0 %v5926
        %6633 = vmatmul.mubr.bf16.gmra.mrb[0].mxu0 %v5925
        %v6634 = vpop.f32.mrb[0].mxu0
        %v6635 = vadd.f32 0.0, %v6634
        %v6636 = vpop.f32.mrb[0].mxu0
        %v6637 = vpop.f32.mrb[0].mxu0
        %v6638 = vadd.f32 0.0, %v6637
        %v6639 = vpop.f32.mrb[0].mxu0
        %6640 = vmatprep.mubr.bf16.mxu0 %v5928
        %6641 = vmatmul.mubr.bf16.gmra.mrb[0].mxu0 %v5927
        %v6642 = vpop.f32.mrb[0].mxu0
        %v6643 = vadd.f32 0.0, %v6642
        %v6644 = vpop.f32.mrb[0].mxu0
        %v6645 = vpop.f32.mrb[0].mxu0
        %v6646 = vadd.f32 0.0, %v6645
        %v6647 = vpop.f32.mrb[0].mxu0
        %6648 = vmatprep.mubr.bf16.mxu0 %v5930
        %6649 = vmatmul.mubr.bf16.gmra.mrb[0].mxu0 %v5929
        %v6650 = vpop.f32.mrb[0].mxu0
        %v6651 = vadd.f32 0.0, %v6650
        %v6652 = vpop.f32.mrb[0].mxu0
        %v6653 = vpop.f32.mrb[0].mxu0
        %v6654 = vadd.f32 0.0, %v6653
        %v6655 = vpop.f32.mrb[0].mxu0
        %6656 = vmatprep.mubr.bf16.mxu0 %v5932
        %6657 = vmatmul.mubr.bf16.gmra.mrb[0].mxu0 %v5931
        %v6658 = vpop.f32.mrb[0].mxu0
        %v6659 = vadd.f32 0.0, %v6658
        %v6660 = vpop.f32.mrb[0].mxu0
        %v6661 = vpop.f32.mrb[0].mxu0
        %v6662 = vadd.f32 0.0, %v6661
        %v6663 = vpop.f32.mrb[0].mxu0
        %6664 = vmatprep.mubr.bf16.mxu0 %v5934
        %6665 = vmatmul.mubr.bf16.gmra.mrb[0].mxu0 %v5933
        %v6666 = vpop.f32.mrb[0].mxu0
        %v6667 = vadd.f32 0.0, %v6666
        %v6668 = vpop.f32.mrb[0].mxu0
        %v6669 = vpop.f32.mrb[0].mxu0
        %v6670 = vadd.f32 0.0, %v6669
        %v6671 = vpop.f32.mrb[0].mxu0
        %6672 = vmatprep.mubr.bf16.mxu0 %v5936
        %6673 = vmatmul.mubr.bf16.gmra.mrb[0].mxu0 %v5935
        %v6674 = vpop.f32.mrb[0].mxu0
        %v6675 = vadd.f32 0.0, %v6674
        %v6676 = vpop.f32.mrb[0].mxu0
        %v6677 = vpop.f32.mrb[0].mxu0
        %v6678 = vadd.f32 0.0, %v6677
        %v6679 = vpop.f32.mrb[0].mxu0
        %6680 = vmatprep.mubr.bf16.mxu0 %v5938
        %6681 = vmatmul.mubr.bf16.gmra.mrb[0].mxu0 %v5937
        %v6682 = vpop.f32.mrb[0].mxu0
        %v6683 = vadd.f32 0.0, %v6682
        %v6684 = vpop.f32.mrb[0].mxu0
        %v6685 = vpop.f32.mrb[0].mxu0
        %v6686 = vadd.f32 0.0, %v6685
        %v6687 = vpop.f32.mrb[0].mxu0
        %6688 = vmatprep.mubr.bf16.mxu0 %v5940
        %6689 = vmatmul.mubr.bf16.gmra.mrb[0].mxu0 %v5939
        %v6690 = vpop.f32.mrb[0].mxu0
        %v6691 = vadd.f32 0.0, %v6690
        %v6692 = vpop.f32.mrb[0].mxu0
        %v6693 = vpop.f32.mrb[0].mxu0
        %v6694 = vadd.f32 0.0, %v6693
        %v6695 = vpop.f32.mrb[0].mxu0
        %6696 = vmatprep.mubr.bf16.mxu0 %v6008
        %6697 = vmatmul.mubr.bf16.gmra.mrb[0].mxu0 %v6007
        %v6698 = vpop.f32.mrb[0].mxu0
        %v6699 = vadd.f32 0.0, %v6698
        %v6700 = vpop.f32.mrb[0].mxu0
        %v6701 = vpop.f32.mrb[0].mxu0
        %v6702 = vadd.f32 0.0, %v6701
        %v6703 = vpop.f32.mrb[0].mxu0
        %6704 = vmatprep.mubr.bf16.mxu0 %v6010
        %6705 = vmatmul.mubr.bf16.gmra.mrb[0].mxu0 %v6009
        %v6706 = vpop.f32.mrb[0].mxu0
        %v6707 = vadd.f32 0.0, %v6706
        %v6708 = vpop.f32.mrb[0].mxu0
        %v6709 = vpop.f32.mrb[0].mxu0
        %v6710 = vpop.f32.mrb[0].mxu0
        %6711 = vdwg.mxu0
        %v6776 = vunpack.c.l.b16 %v5943
        %v6777 = vunpack.c.h.b16 %v5943
        %v6778 = vunpack.c.l.b16 %v5944
        %v6779 = vunpack.c.l.b16 %v5945
        %v6780 = vunpack.c.h.b16 %v5945
        %v6781 = vunpack.c.l.b16 %v5946
        %v6782 = vunpack.c.l.b16 %v5947
        %v6783 = vunpack.c.h.b16 %v5947
        %v6784 = vunpack.c.l.b16 %v5948
        %v6785 = vunpack.c.l.b16 %v5949
        %v6786 = vunpack.c.h.b16 %v5949
        %v6787 = vunpack.c.l.b16 %v5950
        %v6788 = vunpack.c.l.b16 %v5951
        %v6789 = vunpack.c.h.b16 %v5951
        %v6790 = vunpack.c.l.b16 %v5952
        %v6791 = vunpack.c.l.b16 %v5953
        %v6792 = vunpack.c.h.b16 %v5953
        %v6793 = vunpack.c.l.b16 %v5954
        %v6794 = vunpack.c.l.b16 %v5955
        %v6795 = vunpack.c.h.b16 %v5955
        %v6796 = vunpack.c.l.b16 %v5956
        %v6797 = vunpack.c.l.b16 %v5957
        %v6798 = vunpack.c.h.b16 %v5957
        %v6799 = vunpack.c.l.b16 %v5958
        %v6800 = vunpack.c.l.b16 %v5959
        %v6801 = vunpack.c.h.b16 %v5959
        %v6802 = vunpack.c.l.b16 %v5960
        %v6803 = vunpack.c.l.b16 %v5961
        %v6804 = vunpack.c.h.b16 %v5961
        %v6805 = vunpack.c.l.b16 %v5962
        %v6806 = vunpack.c.l.b16 %v5963
        %v6807 = vunpack.c.h.b16 %v5963
        %v6808 = vunpack.c.l.b16 %v5964
        %v6809 = vunpack.c.l.b16 %v5965
        %v6810 = vunpack.c.h.b16 %v5965
        %v6811 = vunpack.c.l.b16 %v5966
        %v6812 = vunpack.c.l.b16 %v5967
        %v6813 = vunpack.c.h.b16 %v5967
        %v6814 = vunpack.c.l.b16 %v5968
        %v6815 = vunpack.c.l.b16 %v5969
        %v6816 = vunpack.c.h.b16 %v5969
        %v6817 = vunpack.c.l.b16 %v5970
        %v6818 = vunpack.c.l.b16 %v5971
        %v6819 = vunpack.c.h.b16 %v5971
        %v6820 = vunpack.c.l.b16 %v5972
        %v6821 = vunpack.c.l.b16 %v5973
        %v6822 = vunpack.c.h.b16 %v5973
        %v6823 = vunpack.c.l.b16 %v5974
        %v6824 = vunpack.c.l.b16 %v5975
        %v6825 = vunpack.c.h.b16 %v5975
        %v6826 = vunpack.c.l.b16 %v5976
        %v6827 = vunpack.c.l.b16 %v5977
        %v6828 = vunpack.c.h.b16 %v5977
        %v6829 = vunpack.c.l.b16 %v5978
        %v6830 = vunpack.c.l.b16 %v5979
        %v6831 = vunpack.c.h.b16 %v5979
        %v6832 = vunpack.c.l.b16 %v5980
        %v6833 = vunpack.c.l.b16 %v5981
        %v6834 = vunpack.c.h.b16 %v5981
        %v6835 = vunpack.c.l.b16 %v5982
        %v6836 = vunpack.c.l.b16 %v5983
        %v6837 = vunpack.c.h.b16 %v5983
        %v6838 = vunpack.c.l.b16 %v5984
        %v6839 = vunpack.c.l.b16 %v5985
        %v6840 = vunpack.c.h.b16 %v5985
        %v6841 = vunpack.c.l.b16 %v5986
        %v6842 = vunpack.c.l.b16 %v5987
        %v6843 = vunpack.c.h.b16 %v5987
        %v6844 = vunpack.c.l.b16 %v5988
        %v6845 = vunpack.c.l.b16 %v5989
        %v6846 = vunpack.c.h.b16 %v5989
        %v6847 = vunpack.c.l.b16 %v5990
        %v6848 = vunpack.c.l.b16 %v5991
        %v6849 = vunpack.c.h.b16 %v5991
        %v6850 = vunpack.c.l.b16 %v5992
        %v6851 = vunpack.c.l.b16 %v5993
        %v6852 = vunpack.c.h.b16 %v5993
        %v6853 = vunpack.c.l.b16 %v5994
        %v6854 = vunpack.c.l.b16 %v5995
        %v6855 = vunpack.c.h.b16 %v5995
        %v6856 = vunpack.c.l.b16 %v5996
        %v6857 = vunpack.c.l.b16 %v5997
        %v6858 = vunpack.c.h.b16 %v5997
        %v6859 = vunpack.c.l.b16 %v5998
        %v6860 = vunpack.c.l.b16 %v5999
        %v6861 = vunpack.c.h.b16 %v5999
        %v6862 = vunpack.c.l.b16 %v6000
        %v6863 = vunpack.c.l.b16 %v6001
        %v6864 = vunpack.c.h.b16 %v6001
        %v6865 = vunpack.c.l.b16 %v6002
        %v6866 = vunpack.c.l.b16 %v6003
        %v6867 = vunpack.c.h.b16 %v6003
        %v6868 = vunpack.c.l.b16 %v6004
        %v6869 = vunpack.c.l.b16 %v6005
        %v6870 = vunpack.c.h.b16 %v6005
        %v6871 = vunpack.c.l.b16 %v6006
        %v6872 = vpack.c.b16 %v6779, %v6776
        %v6873 = vpack.c.b16 %v6780, %v6777
        %v6874 = vpack.c.b16 %v6781, %v6778
        %v6875 = vpack.c.b16 %v6785, %v6782
        %v6876 = vpack.c.b16 %v6786, %v6783
        %v6877 = vpack.c.b16 %v6787, %v6784
        %v6878 = vpack.c.b16 %v6791, %v6788
        %v6879 = vpack.c.b16 %v6792, %v6789
        %v6880 = vpack.c.b16 %v6793, %v6790
        %v6881 = vpack.c.b16 %v6797, %v6794
        %v6882 = vpack.c.b16 %v6798, %v6795
        %v6883 = vpack.c.b16 %v6799, %v6796
        %v6884 = vpack.c.b16 %v6803, %v6800
        %v6885 = vpack.c.b16 %v6804, %v6801
        %v6886 = vpack.c.b16 %v6805, %v6802
        %v6887 = vpack.c.b16 %v6809, %v6806
        %v6888 = vpack.c.b16 %v6810, %v6807
        %v6889 = vpack.c.b16 %v6811, %v6808
        %v6890 = vpack.c.b16 %v6815, %v6812
        %v6891 = vpack.c.b16 %v6816, %v6813
        %v6892 = vpack.c.b16 %v6817, %v6814
        %v6893 = vpack.c.b16 %v6821, %v6818
        %v6894 = vpack.c.b16 %v6822, %v6819
        %v6895 = vpack.c.b16 %v6823, %v6820
        %v6896 = vpack.c.b16 %v6827, %v6824
        %v6897 = vpack.c.b16 %v6828, %v6825
        %v6898 = vpack.c.b16 %v6829, %v6826
        %v6899 = vpack.c.b16 %v6833, %v6830
        %v6900 = vpack.c.b16 %v6834, %v6831
        %v6901 = vpack.c.b16 %v6835, %v6832
        %v6902 = vpack.c.b16 %v6839, %v6836
        %v6903 = vpack.c.b16 %v6840, %v6837
        %v6904 = vpack.c.b16 %v6841, %v6838
        %v6905 = vpack.c.b16 %v6845, %v6842
        %v6906 = vpack.c.b16 %v6846, %v6843
        %v6907 = vpack.c.b16 %v6847, %v6844
        %v6908 = vpack.c.b16 %v6851, %v6848
        %v6909 = vpack.c.b16 %v6852, %v6849
        %v6910 = vpack.c.b16 %v6853, %v6850
        %v6911 = vpack.c.b16 %v6857, %v6854
        %v6912 = vpack.c.b16 %v6858, %v6855
        %v6913 = vpack.c.b16 %v6859, %v6856
        %v6914 = vpack.c.b16 %v6863, %v6860
        %v6915 = vpack.c.b16 %v6864, %v6861
        %v6916 = vpack.c.b16 %v6865, %v6862
        %v6917 = vpack.c.b16 %v6869, %v6866
        %v6918 = vpack.c.b16 %v6870, %v6867
        %v6919 = vpack.c.b16 %v6871, %v6868
        %6968 = vmatprep.subr.bf16.mxu0 %v6873
        %6969 = vmatpush1.bf16.msra.mxu0 %v6872
        %6970 = vmatprep.subr.bf16.mxu0 %v6876
        %6971 = vmatpush1.bf16.msra.mxu0 %v6875
        %6972 = vmatprep.subr.bf16.mxu0 %v6879
        %6973 = vmatpush1.bf16.msra.mxu0 %v6878
        %6974 = vmatprep.subr.bf16.mxu0 %v6882
        %6975 = vmatpush1.bf16.msra.mxu0 %v6881
        %6976 = vmatprep.subr.bf16.mxu0 %v6885
        %6977 = vmatpush1.bf16.msra.mxu0 %v6884
        %6978 = vmatprep.subr.bf16.mxu0 %v6888
        %6979 = vmatpush1.bf16.msra.mxu0 %v6887
        %6980 = vmatprep.subr.bf16.mxu0 %v6891
        %6981 = vmatpush1.bf16.msra.mxu0 %v6890
        %6982 = vmatprep.subr.bf16.mxu0 %v6894
        %6983 = vmatpush1.bf16.msra.mxu0 %v6893
        %6984 = vmatprep.subr.bf16.mxu0 %v6897
        %6985 = vmatpush1.bf16.msra.mxu0 %v6896
        %6986 = vmatprep.subr.bf16.mxu0 %v6900
        %6987 = vmatpush1.bf16.msra.mxu0 %v6899
        %6988 = vmatprep.subr.bf16.mxu0 %v6903
        %6989 = vmatpush1.bf16.msra.mxu0 %v6902
        %6990 = vmatprep.subr.bf16.mxu0 %v6906
        %6991 = vmatpush1.bf16.msra.mxu0 %v6905
        %6992 = vmatprep.subr.bf16.mxu0 %v6909
        %6993 = vmatpush1.bf16.msra.mxu0 %v6908
        %6994 = vmatprep.subr.bf16.mxu0 %v6912
        %6995 = vmatpush1.bf16.msra.mxu0 %v6911
        %6996 = vmatprep.subr.bf16.mxu0 %v6915
        %6997 = vmatpush1.bf16.msra.mxu0 %v6914
        %6998 = vmatprep.subr.bf16.mxu0 %v6918
        %6999 = vmatpush1.bf16.msra.mxu0 %v6917
        %7000 = vmatprep.mubr.bf16.mxu0 %v5908
        %7001 = vmatmul.mubr.bf16.gmra.mrb[0].mxu0 %v5907
        %v7002 = vpop.f32.mrb[0].mxu0
        %v7003 = vpop.f32.mrb[0].mxu0
        %v7004 = vpop.f32.mrb[0].mxu0
        %v7005 = vadd.f32 %v6369, %v7004
        %v7006 = vpop.f32.mrb[0].mxu0
        %7007 = vmatprep.mubr.bf16.mxu0 %v5910
        %7008 = vmatmul.mubr.bf16.gmra.mrb[0].mxu0 %v5909
        %v7009 = vpop.f32.mrb[0].mxu0
        %v7010 = vadd.f32 %v6374, %v7009
        %v7011 = vpop.f32.mrb[0].mxu0
        %v7012 = vadd.f32 %v6376, %v7011
        %v7013 = vpop.f32.mrb[0].mxu0
        %v7014 = vadd.f32 %v6378, %v7013
        %v7015 = vpop.f32.mrb[0].mxu0
        %v7016 = vadd.f32 %v6380, %v7015
        %7017 = vmatprep.mubr.bf16.mxu0 %v5912
        %7018 = vmatmul.mubr.bf16.gmra.mrb[0].mxu0 %v5911
        %v7019 = vpop.f32.mrb[0].mxu0
        %v7020 = vadd.f32 %v6384, %v7019
        %v7021 = vpop.f32.mrb[0].mxu0
        %v7022 = vadd.f32 %v6386, %v7021
        %v7023 = vpop.f32.mrb[0].mxu0
        %v7024 = vadd.f32 %v6388, %v7023
        %v7025 = vpop.f32.mrb[0].mxu0
        %v7026 = vadd.f32 %v6390, %v7025
        %7027 = vmatprep.mubr.bf16.mxu0 %v5914
        %7028 = vmatmul.mubr.bf16.gmra.mrb[0].mxu0 %v5913
        %v7029 = vpop.f32.mrb[0].mxu0
        %v7030 = vadd.f32 %v6394, %v7029
        %v7031 = vpop.f32.mrb[0].mxu0
        %v7032 = vadd.f32 %v6396, %v7031
        %v7033 = vpop.f32.mrb[0].mxu0
        %v7034 = vadd.f32 %v6398, %v7033
        %v7035 = vpop.f32.mrb[0].mxu0
        %v7036 = vadd.f32 %v6400, %v7035
        %7037 = vmatprep.mubr.bf16.mxu0 %v5916
        %7038 = vmatmul.mubr.bf16.gmra.mrb[0].mxu0 %v5915
        %v7039 = vpop.f32.mrb[0].mxu0
        %v7040 = vadd.f32 %v6404, %v7039
        %v7041 = vpop.f32.mrb[0].mxu0
        %v7042 = vadd.f32 %v6406, %v7041
        %v7043 = vpop.f32.mrb[0].mxu0
        %v7044 = vadd.f32 %v6408, %v7043
        %v7045 = vpop.f32.mrb[0].mxu0
        %v7046 = vadd.f32 %v6410, %v7045
        %7047 = vmatprep.mubr.bf16.mxu0 %v5918
        %7048 = vmatmul.mubr.bf16.gmra.mrb[0].mxu0 %v5917
        %v7049 = vpop.f32.mrb[0].mxu0
        %v7050 = vadd.f32 %v6414, %v7049
        %v7051 = vpop.f32.mrb[0].mxu0
        %v7052 = vadd.f32 %v6416, %v7051
        %v7053 = vpop.f32.mrb[0].mxu0
        %v7054 = vadd.f32 %v6418, %v7053
        %v7055 = vpop.f32.mrb[0].mxu0
        %v7056 = vadd.f32 %v6420, %v7055
        %7057 = vmatprep.mubr.bf16.mxu0 %v5920
        %7058 = vmatmul.mubr.bf16.gmra.mrb[0].mxu0 %v5919
        %v7059 = vpop.f32.mrb[0].mxu0
        %v7060 = vadd.f32 %v6424, %v7059
        %v7061 = vpop.f32.mrb[0].mxu0
        %v7062 = vadd.f32 %v6426, %v7061
        %v7063 = vpop.f32.mrb[0].mxu0
        %v7064 = vadd.f32 %v6428, %v7063
        %v7065 = vpop.f32.mrb[0].mxu0
        %v7066 = vadd.f32 %v6430, %v7065
        %7067 = vmatprep.mubr.bf16.mxu0 %v5922
        %7068 = vmatmul.mubr.bf16.gmra.mrb[0].mxu0 %v5921
        %v7069 = vpop.f32.mrb[0].mxu0
        %v7070 = vadd.f32 %v6434, %v7069
        %v7071 = vpop.f32.mrb[0].mxu0
        %v7072 = vadd.f32 %v6436, %v7071
        %v7073 = vpop.f32.mrb[0].mxu0
        %v7074 = vadd.f32 %v6438, %v7073
        %v7075 = vpop.f32.mrb[0].mxu0
        %v7076 = vadd.f32 %v6440, %v7075
        %7077 = vmatprep.mubr.bf16.mxu0 %v5924
        %7078 = vmatmul.mubr.bf16.gmra.mrb[0].mxu0 %v5923
        %v7079 = vpop.f32.mrb[0].mxu0
        %v7080 = vadd.f32 %v6444, %v7079
        %v7081 = vpop.f32.mrb[0].mxu0
        %v7082 = vadd.f32 %v6446, %v7081
        %v7083 = vpop.f32.mrb[0].mxu0
        %v7084 = vadd.f32 %v6448, %v7083
        %v7085 = vpop.f32.mrb[0].mxu0
        %v7086 = vadd.f32 %v6450, %v7085
        %7087 = vmatprep.mubr.bf16.mxu0 %v5926
        %7088 = vmatmul.mubr.bf16.gmra.mrb[0].mxu0 %v5925
        %v7089 = vpop.f32.mrb[0].mxu0
        %v7090 = vadd.f32 %v6454, %v7089
        %v7091 = vpop.f32.mrb[0].mxu0
        %v7092 = vadd.f32 %v6456, %v7091
        %v7093 = vpop.f32.mrb[0].mxu0
        %v7094 = vadd.f32 %v6458, %v7093
        %v7095 = vpop.f32.mrb[0].mxu0
        %v7096 = vadd.f32 %v6460, %v7095
        %7097 = vmatprep.mubr.bf16.mxu0 %v5928
        %7098 = vmatmul.mubr.bf16.gmra.mrb[0].mxu0 %v5927
        %v7099 = vpop.f32.mrb[0].mxu0
        %v7100 = vadd.f32 %v6464, %v7099
        %v7101 = vpop.f32.mrb[0].mxu0
        %v7102 = vadd.f32 %v6466, %v7101
        %v7103 = vpop.f32.mrb[0].mxu0
        %v7104 = vadd.f32 %v6468, %v7103
        %v7105 = vpop.f32.mrb[0].mxu0
        %v7106 = vadd.f32 %v6470, %v7105
        %7107 = vmatprep.mubr.bf16.mxu0 %v5930
        %7108 = vmatmul.mubr.bf16.gmra.mrb[0].mxu0 %v5929
        %v7109 = vpop.f32.mrb[0].mxu0
        %v7110 = vadd.f32 %v6474, %v7109
        %v7111 = vpop.f32.mrb[0].mxu0
        %v7112 = vadd.f32 %v6476, %v7111
        %v7113 = vpop.f32.mrb[0].mxu0
        %v7114 = vadd.f32 %v6478, %v7113
        %v7115 = vpop.f32.mrb[0].mxu0
        %v7116 = vadd.f32 %v6480, %v7115
        %7117 = vmatprep.mubr.bf16.mxu0 %v5932
        %7118 = vmatmul.mubr.bf16.gmra.mrb[0].mxu0 %v5931
        %v7119 = vpop.f32.mrb[0].mxu0
        %v7120 = vadd.f32 %v6484, %v7119
        %v7121 = vpop.f32.mrb[0].mxu0
        %v7122 = vadd.f32 %v6486, %v7121
        %v7123 = vpop.f32.mrb[0].mxu0
        %v7124 = vadd.f32 %v6488, %v7123
        %v7125 = vpop.f32.mrb[0].mxu0
        %v7126 = vadd.f32 %v6490, %v7125
        %7127 = vmatprep.mubr.bf16.mxu0 %v5934
        %7128 = vmatmul.mubr.bf16.gmra.mrb[0].mxu0 %v5933
        %v7129 = vpop.f32.mrb[0].mxu0
        %v7130 = vadd.f32 %v6494, %v7129
        %v7131 = vpop.f32.mrb[0].mxu0
        %v7132 = vadd.f32 %v6496, %v7131
        %v7133 = vpop.f32.mrb[0].mxu0
        %v7134 = vadd.f32 %v6498, %v7133
        %v7135 = vpop.f32.mrb[0].mxu0
        %v7136 = vadd.f32 %v6500, %v7135
        %7137 = vmatprep.mubr.bf16.mxu0 %v5936
        %7138 = vmatmul.mubr.bf16.gmra.mrb[0].mxu0 %v5935
        %v7139 = vpop.f32.mrb[0].mxu0
        %v7140 = vadd.f32 %v6504, %v7139
        %v7141 = vpop.f32.mrb[0].mxu0
        %v7142 = vadd.f32 %v6506, %v7141
        %v7143 = vpop.f32.mrb[0].mxu0
        %v7144 = vadd.f32 %v6508, %v7143
        %v7145 = vpop.f32.mrb[0].mxu0
        %v7146 = vadd.f32 %v6510, %v7145
        %7147 = vmatprep.mubr.bf16.mxu0 %v5938
        %7148 = vmatmul.mubr.bf16.gmra.mrb[0].mxu0 %v5937
        %v7149 = vpop.f32.mrb[0].mxu0
        %v7150 = vadd.f32 %v6514, %v7149
        %v7151 = vpop.f32.mrb[0].mxu0
        %v7152 = vadd.f32 %v6516, %v7151
        %v7153 = vpop.f32.mrb[0].mxu0
        %v7154 = vadd.f32 %v6518, %v7153
        %v7155 = vpop.f32.mrb[0].mxu0
        %v7156 = vadd.f32 %v6520, %v7155
        %7157 = vmatprep.mubr.bf16.mxu0 %v5940
        %7158 = vmatmul.mubr.bf16.gmra.mrb[0].mxu0 %v5939
        %v7159 = vpop.f32.mrb[0].mxu0
        %v7160 = vadd.f32 %v6524, %v7159
        %v7161 = vpop.f32.mrb[0].mxu0
        %v7162 = vadd.f32 %v6526, %v7161
        %v7163 = vpop.f32.mrb[0].mxu0
        %v7164 = vadd.f32 %v6528, %v7163
        %v7165 = vpop.f32.mrb[0].mxu0
        %v7166 = vadd.f32 %v6530, %v7165
        %7167 = vmatprep.mubr.bf16.mxu0 %v5942
        %7168 = vmatmul.mubr.bf16.gmra.mrb[0].mxu0 %v5941
        %v7169 = vpop.f32.mrb[0].mxu0
        %v7170 = vpop.f32.mrb[0].mxu0
        %v7171 = vpop.f32.mrb[0].mxu0
        %v7172 = vpop.f32.mrb[0].mxu0
        %7173 = vdwg.mxu0
        %7174 = vmatprep.subr.bf16.mxu0 0
        %7175 = vmatpush1.bf16.msra.mxu0 %v6874
        %7176 = vmatprep.subr.bf16.mxu0 0
        %7177 = vmatpush1.bf16.msra.mxu0 %v6877
        %7178 = vmatprep.subr.bf16.mxu0 0
        %7179 = vmatpush1.bf16.msra.mxu0 %v6880
        %7180 = vmatprep.subr.bf16.mxu0 0
        %7181 = vmatpush1.bf16.msra.mxu0 %v6883
        %7182 = vmatprep.subr.bf16.mxu0 0
        %7183 = vmatpush1.bf16.msra.mxu0 %v6886
        %7184 = vmatprep.subr.bf16.mxu0 0
        %7185 = vmatpush1.bf16.msra.mxu0 %v6889
        %7186 = vmatprep.subr.bf16.mxu0 0
        %7187 = vmatpush1.bf16.msra.mxu0 %v6892
        %7188 = vmatprep.subr.bf16.mxu0 0
        %7189 = vmatpush1.bf16.msra.mxu0 %v6895
        %7190 = vmatprep.subr.bf16.mxu0 0
        %7191 = vmatpush1.bf16.msra.mxu0 %v6898
        %7192 = vmatprep.subr.bf16.mxu0 0
        %7193 = vmatpush1.bf16.msra.mxu0 %v6901
        %7194 = vmatprep.subr.bf16.mxu0 0
        %7195 = vmatpush1.bf16.msra.mxu0 %v6904
        %7196 = vmatprep.subr.bf16.mxu0 0
        %7197 = vmatpush1.bf16.msra.mxu0 %v6907
        %7198 = vmatprep.subr.bf16.mxu0 0
        %7199 = vmatpush1.bf16.msra.mxu0 %v6910
        %7200 = vmatprep.subr.bf16.mxu0 0
        %7201 = vmatpush1.bf16.msra.mxu0 %v6913
        %7202 = vmatprep.subr.bf16.mxu0 0
        %7203 = vmatpush1.bf16.msra.mxu0 %v6916
        %7204 = vmatprep.subr.bf16.mxu0 0
        %7205 = vmatpush1.bf16.msra.mxu0 %v6919
        %7206 = vmatprep.mubr.bf16.mxu0 %v5908
        %7207 = vmatmul.mubr.bf16.gmra.mrb[0].mxu0 %v5907
        %v7208 = vpop.f32.mrb[0].mxu0
        %v7209 = vpop.f32.mrb[0].mxu0
        %v7210 = vpop.f32.mrb[0].mxu0
        %v7211 = vpop.f32.mrb[0].mxu0
        %7212 = vmatprep.mubr.bf16.mxu0 %v5910
        %7213 = vmatmul.mubr.bf16.gmra.mrb[0].mxu0 %v5909
        %v7214 = vpop.f32.mrb[0].mxu0
        %v7215 = vadd.f32 %v6579, %v7214
        %v7216 = vpop.f32.mrb[0].mxu0
        %v7217 = vpop.f32.mrb[0].mxu0
        %v7218 = vadd.f32 %v6582, %v7217
        %v7219 = vpop.f32.mrb[0].mxu0
        %7220 = vmatprep.mubr.bf16.mxu0 %v5912
        %7221 = vmatmul.mubr.bf16.gmra.mrb[0].mxu0 %v5911
        %v7222 = vpop.f32.mrb[0].mxu0
        %v7223 = vadd.f32 %v6587, %v7222
        %v7224 = vpop.f32.mrb[0].mxu0
        %v7225 = vpop.f32.mrb[0].mxu0
        %v7226 = vadd.f32 %v6590, %v7225
        %v7227 = vpop.f32.mrb[0].mxu0
        %7228 = vmatprep.mubr.bf16.mxu0 %v5914
        %7229 = vmatmul.mubr.bf16.gmra.mrb[0].mxu0 %v5913
        %v7230 = vpop.f32.mrb[0].mxu0
        %v7231 = vadd.f32 %v6595, %v7230
        %v7232 = vpop.f32.mrb[0].mxu0
        %v7233 = vpop.f32.mrb[0].mxu0
        %v7234 = vadd.f32 %v6598, %v7233
        %v7235 = vpop.f32.mrb[0].mxu0
        %7236 = vmatprep.mubr.bf16.mxu0 %v5916
        %7237 = vmatmul.mubr.bf16.gmra.mrb[0].mxu0 %v5915
        %v7238 = vpop.f32.mrb[0].mxu0
        %v7239 = vadd.f32 %v6603, %v7238
        %v7240 = vpop.f32.mrb[0].mxu0
        %v7241 = vpop.f32.mrb[0].mxu0
        %v7242 = vadd.f32 %v6606, %v7241
        %v7243 = vpop.f32.mrb[0].mxu0
        %7244 = vmatprep.mubr.bf16.mxu0 %v5918
        %7245 = vmatmul.mubr.bf16.gmra.mrb[0].mxu0 %v5917
        %v7246 = vpop.f32.mrb[0].mxu0
        %v7247 = vadd.f32 %v6611, %v7246
        %v7248 = vpop.f32.mrb[0].mxu0
        %v7249 = vpop.f32.mrb[0].mxu0
        %v7250 = vadd.f32 %v6614, %v7249
        %v7251 = vpop.f32.mrb[0].mxu0
        %7252 = vmatprep.mubr.bf16.mxu0 %v5920
        %7253 = vmatmul.mubr.bf16.gmra.mrb[0].mxu0 %v5919
        %v7254 = vpop.f32.mrb[0].mxu0
        %v7255 = vadd.f32 %v6619, %v7254
        %v7256 = vpop.f32.mrb[0].mxu0
        %v7257 = vpop.f32.mrb[0].mxu0
        %v7258 = vadd.f32 %v6622, %v7257
        %v7259 = vpop.f32.mrb[0].mxu0
        %7260 = vmatprep.mubr.bf16.mxu0 %v5922
        %7261 = vmatmul.mubr.bf16.gmra.mrb[0].mxu0 %v5921
        %v7262 = vpop.f32.mrb[0].mxu0
        %v7263 = vadd.f32 %v6627, %v7262
        %v7264 = vpop.f32.mrb[0].mxu0
        %v7265 = vpop.f32.mrb[0].mxu0
        %v7266 = vadd.f32 %v6630, %v7265
        %v7267 = vpop.f32.mrb[0].mxu0
        %7268 = vmatprep.mubr.bf16.mxu0 %v5924
        %7269 = vmatmul.mubr.bf16.gmra.mrb[0].mxu0 %v5923
        %v7270 = vpop.f32.mrb[0].mxu0
        %v7271 = vadd.f32 %v6635, %v7270
        %v7272 = vpop.f32.mrb[0].mxu0
        %v7273 = vpop.f32.mrb[0].mxu0
        %v7274 = vadd.f32 %v6638, %v7273
        %v7275 = vpop.f32.mrb[0].mxu0
        %7276 = vmatprep.mubr.bf16.mxu0 %v5926
        %7277 = vmatmul.mubr.bf16.gmra.mrb[0].mxu0 %v5925
        %v7278 = vpop.f32.mrb[0].mxu0
        %v7279 = vadd.f32 %v6643, %v7278
        %v7280 = vpop.f32.mrb[0].mxu0
        %v7281 = vpop.f32.mrb[0].mxu0
        %v7282 = vadd.f32 %v6646, %v7281
        %v7283 = vpop.f32.mrb[0].mxu0
        %7284 = vmatprep.mubr.bf16.mxu0 %v5928
        %7285 = vmatmul.mubr.bf16.gmra.mrb[0].mxu0 %v5927
        %v7286 = vpop.f32.mrb[0].mxu0
        %v7287 = vadd.f32 %v6651, %v7286
        %v7288 = vpop.f32.mrb[0].mxu0
        %v7289 = vpop.f32.mrb[0].mxu0
        %v7290 = vadd.f32 %v6654, %v7289
        %v7291 = vpop.f32.mrb[0].mxu0
        %7292 = vmatprep.mubr.bf16.mxu0 %v5930
        %7293 = vmatmul.mubr.bf16.gmra.mrb[0].mxu0 %v5929
        %v7294 = vpop.f32.mrb[0].mxu0
        %v7295 = vadd.f32 %v6659, %v7294
        %v7296 = vpop.f32.mrb[0].mxu0
        %v7297 = vpop.f32.mrb[0].mxu0
        %v7298 = vadd.f32 %v6662, %v7297
        %v7299 = vpop.f32.mrb[0].mxu0
        %7300 = vmatprep.mubr.bf16.mxu0 %v5932
        %7301 = vmatmul.mubr.bf16.gmra.mrb[0].mxu0 %v5931
        %v7302 = vpop.f32.mrb[0].mxu0
        %v7303 = vadd.f32 %v6667, %v7302
        %v7304 = vpop.f32.mrb[0].mxu0
        %v7305 = vpop.f32.mrb[0].mxu0
        %v7306 = vadd.f32 %v6670, %v7305
        %v7307 = vpop.f32.mrb[0].mxu0
        %7308 = vmatprep.mubr.bf16.mxu0 %v5934
        %7309 = vmatmul.mubr.bf16.gmra.mrb[0].mxu0 %v5933
        %v7310 = vpop.f32.mrb[0].mxu0
        %v7311 = vadd.f32 %v6675, %v7310
        %v7312 = vpop.f32.mrb[0].mxu0
        %v7313 = vpop.f32.mrb[0].mxu0
        %v7314 = vadd.f32 %v6678, %v7313
        %v7315 = vpop.f32.mrb[0].mxu0
        %7316 = vmatprep.mubr.bf16.mxu0 %v5936
        %7317 = vmatmul.mubr.bf16.gmra.mrb[0].mxu0 %v5935
        %v7318 = vpop.f32.mrb[0].mxu0
        %v7319 = vadd.f32 %v6683, %v7318
        %v7320 = vpop.f32.mrb[0].mxu0
        %v7321 = vpop.f32.mrb[0].mxu0
        %v7322 = vadd.f32 %v6686, %v7321
        %v7323 = vpop.f32.mrb[0].mxu0
        %7324 = vmatprep.mubr.bf16.mxu0 %v5938
        %7325 = vmatmul.mubr.bf16.gmra.mrb[0].mxu0 %v5937
        %v7326 = vpop.f32.mrb[0].mxu0
        %v7327 = vadd.f32 %v6691, %v7326
        %v7328 = vpop.f32.mrb[0].mxu0
        %v7329 = vpop.f32.mrb[0].mxu0
        %v7330 = vadd.f32 %v6694, %v7329
        %v7331 = vpop.f32.mrb[0].mxu0
        %7332 = vmatprep.mubr.bf16.mxu0 %v5940
        %7333 = vmatmul.mubr.bf16.gmra.mrb[0].mxu0 %v5939
        %v7334 = vpop.f32.mrb[0].mxu0
        %v7335 = vadd.f32 %v6699, %v7334
        %v7336 = vpop.f32.mrb[0].mxu0
        %v7337 = vpop.f32.mrb[0].mxu0
        %v7338 = vadd.f32 %v6702, %v7337
        %v7339 = vpop.f32.mrb[0].mxu0
        %7340 = vmatprep.mubr.bf16.mxu0 %v5942
        %7341 = vmatmul.mubr.bf16.gmra.mrb[0].mxu0 %v5941
        %v7342 = vpop.f32.mrb[0].mxu0
        %v7343 = vadd.f32 %v6707, %v7342
        %v7344 = vpop.f32.mrb[0].mxu0
        %v7345 = vpop.f32.mrb[0].mxu0
        %v7346 = vpop.f32.mrb[0].mxu0
        %7347 = vdwg.mxu0
        %v7348 = vld [vmem:[#allocation2 + $0x20] sm:$0xff]
        %v7349 = vld [vmem:[#allocation2 + $0x28] sm:$0xff]
        %v7350 = vld [vmem:[#allocation2 + $0x30] sm:$0xff]
        %v7351 = vld [vmem:[#allocation2 + $0x38] sm:$0xff]
        %v7352 = vld [vmem:[#allocation2 + $0x40] sm:$0xff]
        %v7353 = vld [vmem:[#allocation2 + $0x48] sm:$0xff]
        %v7354 = vld [vmem:[#allocation2 + $0x50] sm:$0xff]
        %v7355 = vld [vmem:[#allocation2 + $0x58] sm:$0xff]
        %v7356 = vld [vmem:[#allocation2 + $0x60] sm:$0xff]
        %v7357 = vld [vmem:[#allocation2 + $0x68] sm:$0xff]
        %v7358 = vld [vmem:[#allocation2 + $0x70] sm:$0xff]
        %v7359 = vld [vmem:[#allocation2 + $0x78] sm:$0xff]
        %v7360 = vld [vmem:[#allocation2 + $0x80] sm:$0xff]
        %v7361 = vld [vmem:[#allocation2 + $0x88] sm:$0xff]
        %v7362 = vld [vmem:[#allocation2 + $0x90] sm:$0xff]
        %v7363 = vld [vmem:[#allocation2 + $0x98] sm:$0xff]
        %v7364 = vld [vmem:[#allocation2 + $0xa0] sm:$0xff]
        %v7365 = vld [vmem:[#allocation2 + $0xa8] sm:$0xff]
        %v7366 = vld [vmem:[#allocation2 + $0xb0] sm:$0xff]
        %v7367 = vld [vmem:[#allocation2 + $0xb8] sm:$0xff]
        %v7368 = vld [vmem:[#allocation2 + $0xc0] sm:$0xff]
        %v7369 = vld [vmem:[#allocation2 + $0xc8] sm:$0xff]
        %v7370 = vld [vmem:[#allocation2 + $0xd0] sm:$0xff]
        %v7371 = vld [vmem:[#allocation2 + $0xd8] sm:$0xff]
        %v7372 = vld [vmem:[#allocation2 + $0xe0] sm:$0xff]
        %v7373 = vld [vmem:[#allocation2 + $0xe8] sm:$0xff]
        %v7374 = vld [vmem:[#allocation2 + $0xf0] sm:$0xff]
        %v7375 = vld [vmem:[#allocation2 + $0xf8] sm:$0xff]
        %v7376 = vld [vmem:[#allocation2 + $0x100] sm:$0xff]
        %v7377 = vld [vmem:[#allocation2 + $0x108] sm:$0xff]
        %v7378 = vld [vmem:[#allocation2 + $0x110] sm:$0xff]
        %v7379 = vld [vmem:[#allocation2 + $0x118] sm:$0xff]
        %v7380 = vld [vmem:[#allocation2 + $0x120] sm:$0xff]
        %v7381 = vld [vmem:[#allocation2 + $0x128] sm:$0xff]
        %v7382 = vld [vmem:[#allocation2 + $0x130] sm:$0xf]
        %v7383 = vld [vmem:[#allocation2 + $0x138] sm:$0xf]
        %s7384 = scalar_lea.vmem %s2, 768
        %v7385 = vld [vmem:[%s7384] sm:$0xff]
        %v7386 = vld [vmem:[%s7384 + $0x8] sm:$0xf]
        %v7387 = vld [vmem:[%s7384 + $0xc] sm:$0xff]
        %v7388 = vld [vmem:[%s7384 + $0x14] sm:$0xf]
        %v7389 = vld [vmem:[%s7384 + $0x18] sm:$0xff]
        %v7390 = vld [vmem:[%s7384 + $0x20] sm:$0xf]
        %v7391 = vld [vmem:[%s7384 + $0x24] sm:$0xff]
        %v7392 = vld [vmem:[%s7384 + $0x2c] sm:$0xf]
        %v7393 = vld [vmem:[%s7384 + $0x30] sm:$0xff]
        %v7394 = vld [vmem:[%s7384 + $0x38] sm:$0xf]
        %v7395 = vld [vmem:[%s7384 + $0x3c] sm:$0xff]
        %v7396 = vld [vmem:[%s7384 + $0x44] sm:$0xf]
        %v7397 = vld [vmem:[%s7384 + $0x48] sm:$0xff]
        %v7398 = vld [vmem:[%s7384 + $0x50] sm:$0xf]
        %v7399 = vld [vmem:[%s7384 + $0x54] sm:$0xff]
        %v7400 = vld [vmem:[%s7384 + $0x5c] sm:$0xf]
        %v7401 = vld [vmem:[%s7384 + $0x60] sm:$0xff]
        %v7402 = vld [vmem:[%s7384 + $0x68] sm:$0xf]
        %v7403 = vld [vmem:[%s7384 + $0x6c] sm:$0xff]
        %v7404 = vld [vmem:[%s7384 + $0x74] sm:$0xf]
        %v7405 = vld [vmem:[%s7384 + $0x78] sm:$0xff]
        %v7406 = vld [vmem:[%s7384 + $0x80] sm:$0xf]
        %v7407 = vld [vmem:[%s7384 + $0x84] sm:$0xff]
        %v7408 = vld [vmem:[%s7384 + $0x8c] sm:$0xf]
        %v7409 = vld [vmem:[%s7384 + $0x90] sm:$0xff]
        %v7410 = vld [vmem:[%s7384 + $0x98] sm:$0xf]
        %v7411 = vld [vmem:[%s7384 + $0x9c] sm:$0xff]
        %v7412 = vld [vmem:[%s7384 + $0xa4] sm:$0xf]
        %v7413 = vld [vmem:[%s7384 + $0xa8] sm:$0xff]
        %v7414 = vld [vmem:[%s7384 + $0xb0] sm:$0xf]
        %v7415 = vld [vmem:[%s7384 + $0xb4] sm:$0xff]
        %v7416 = vld [vmem:[%s7384 + $0xbc] sm:$0xf]
        %v7417 = vld [vmem:[%s7384 + $0xc0] sm:$0xff]
        %v7418 = vld [vmem:[%s7384 + $0xc8] sm:$0xf]
        %v7419 = vld [vmem:[%s7384 + $0xcc] sm:$0xff]
        %v7420 = vld [vmem:[%s7384 + $0xd4] sm:$0xf]
        %v7421 = vld [vmem:[%s7384 + $0xd8] sm:$0xff]
        %v7422 = vld [vmem:[%s7384 + $0xe0] sm:$0xf]
        %v7423 = vld [vmem:[%s7384 + $0xe4] sm:$0xff]
        %v7424 = vld [vmem:[%s7384 + $0xec] sm:$0xf]
        %v7425 = vld [vmem:[%s7384 + $0xf0] sm:$0xff]
        %v7426 = vld [vmem:[%s7384 + $0xf8] sm:$0xf]
        %v7427 = vld [vmem:[%s7384 + $0xfc] sm:$0xff]
        %v7428 = vld [vmem:[%s7384 + $0x104] sm:$0xf]
        %v7429 = vld [vmem:[%s7384 + $0x108] sm:$0xff]
        %v7430 = vld [vmem:[%s7384 + $0x110] sm:$0xf]
        %v7431 = vld [vmem:[%s7384 + $0x114] sm:$0xff]
        %v7432 = vld [vmem:[%s7384 + $0x11c] sm:$0xf]
        %v7433 = vld [vmem:[%s7384 + $0x120] sm:$0xff]
        %v7434 = vld [vmem:[%s7384 + $0x128] sm:$0xf]
        %v7435 = vld [vmem:[%s7384 + $0x12c] sm:$0xff]
        %v7436 = vld [vmem:[%s7384 + $0x134] sm:$0xf]
        %v7437 = vld [vmem:[%s7384 + $0x138] sm:$0xff]
        %v7438 = vld [vmem:[%s7384 + $0x140] sm:$0xf]
        %v7439 = vld [vmem:[%s7384 + $0x144] sm:$0xff]
        %v7440 = vld [vmem:[%s7384 + $0x14c] sm:$0xf]
        %v7441 = vld [vmem:[%s7384 + $0x150] sm:$0xff]
        %v7442 = vld [vmem:[%s7384 + $0x158] sm:$0xf]
        %v7443 = vld [vmem:[%s7384 + $0x15c] sm:$0xff]
        %v7444 = vld [vmem:[%s7384 + $0x164] sm:$0xf]
        %v7445 = vld [vmem:[%s7384 + $0x168] sm:$0xff]
        %v7446 = vld [vmem:[%s7384 + $0x170] sm:$0xf]
        %v7447 = vld [vmem:[%s7384 + $0x174] sm:$0xff]
        %v7448 = vld [vmem:[%s7384 + $0x17c] sm:$0xf]
        %v7513 = vunpack.c.l.b16 %v7385
        %v7514 = vunpack.c.h.b16 %v7385
        %v7515 = vunpack.c.l.b16 %v7386
        %v7516 = vunpack.c.l.b16 %v7387
        %v7517 = vunpack.c.h.b16 %v7387
        %v7518 = vunpack.c.l.b16 %v7388
        %v7519 = vunpack.c.l.b16 %v7389
        %v7520 = vunpack.c.h.b16 %v7389
        %v7521 = vunpack.c.l.b16 %v7390
        %v7522 = vunpack.c.l.b16 %v7391
        %v7523 = vunpack.c.h.b16 %v7391
        %v7524 = vunpack.c.l.b16 %v7392
        %v7525 = vunpack.c.l.b16 %v7393
        %v7526 = vunpack.c.h.b16 %v7393
        %v7527 = vunpack.c.l.b16 %v7394
        %v7528 = vunpack.c.l.b16 %v7395
        %v7529 = vunpack.c.h.b16 %v7395
        %v7530 = vunpack.c.l.b16 %v7396
        %v7531 = vunpack.c.l.b16 %v7397
        %v7532 = vunpack.c.h.b16 %v7397
        %v7533 = vunpack.c.l.b16 %v7398
        %v7534 = vunpack.c.l.b16 %v7399
        %v7535 = vunpack.c.h.b16 %v7399
        %v7536 = vunpack.c.l.b16 %v7400
        %v7537 = vunpack.c.l.b16 %v7401
        %v7538 = vunpack.c.h.b16 %v7401
        %v7539 = vunpack.c.l.b16 %v7402
        %v7540 = vunpack.c.l.b16 %v7403
        %v7541 = vunpack.c.h.b16 %v7403
        %v7542 = vunpack.c.l.b16 %v7404
        %v7543 = vunpack.c.l.b16 %v7405
        %v7544 = vunpack.c.h.b16 %v7405
        %v7545 = vunpack.c.l.b16 %v7406
        %v7546 = vunpack.c.l.b16 %v7407
        %v7547 = vunpack.c.h.b16 %v7407
        %v7548 = vunpack.c.l.b16 %v7408
        %v7549 = vunpack.c.l.b16 %v7409
        %v7550 = vunpack.c.h.b16 %v7409
        %v7551 = vunpack.c.l.b16 %v7410
        %v7552 = vunpack.c.l.b16 %v7411
        %v7553 = vunpack.c.h.b16 %v7411
        %v7554 = vunpack.c.l.b16 %v7412
        %v7555 = vunpack.c.l.b16 %v7413
        %v7556 = vunpack.c.h.b16 %v7413
        %v7557 = vunpack.c.l.b16 %v7414
        %v7558 = vunpack.c.l.b16 %v7415
        %v7559 = vunpack.c.h.b16 %v7415
        %v7560 = vunpack.c.l.b16 %v7416
        %v7561 = vunpack.c.l.b16 %v7417
        %v7562 = vunpack.c.h.b16 %v7417
        %v7563 = vunpack.c.l.b16 %v7418
        %v7564 = vunpack.c.l.b16 %v7419
        %v7565 = vunpack.c.h.b16 %v7419
        %v7566 = vunpack.c.l.b16 %v7420
        %v7567 = vunpack.c.l.b16 %v7421
        %v7568 = vunpack.c.h.b16 %v7421
        %v7569 = vunpack.c.l.b16 %v7422
        %v7570 = vunpack.c.l.b16 %v7423
        %v7571 = vunpack.c.h.b16 %v7423
        %v7572 = vunpack.c.l.b16 %v7424
        %v7573 = vunpack.c.l.b16 %v7425
        %v7574 = vunpack.c.h.b16 %v7425
        %v7575 = vunpack.c.l.b16 %v7426
        %v7576 = vunpack.c.l.b16 %v7427
        %v7577 = vunpack.c.h.b16 %v7427
        %v7578 = vunpack.c.l.b16 %v7428
        %v7579 = vunpack.c.l.b16 %v7429
        %v7580 = vunpack.c.h.b16 %v7429
        %v7581 = vunpack.c.l.b16 %v7430
        %v7582 = vunpack.c.l.b16 %v7431
        %v7583 = vunpack.c.h.b16 %v7431
        %v7584 = vunpack.c.l.b16 %v7432
        %v7585 = vunpack.c.l.b16 %v7433
        %v7586 = vunpack.c.h.b16 %v7433
        %v7587 = vunpack.c.l.b16 %v7434
        %v7588 = vunpack.c.l.b16 %v7435
        %v7589 = vunpack.c.h.b16 %v7435
        %v7590 = vunpack.c.l.b16 %v7436
        %v7591 = vunpack.c.l.b16 %v7437
        %v7592 = vunpack.c.h.b16 %v7437
        %v7593 = vunpack.c.l.b16 %v7438
        %v7594 = vunpack.c.l.b16 %v7439
        %v7595 = vunpack.c.h.b16 %v7439
        %v7596 = vunpack.c.l.b16 %v7440
        %v7597 = vunpack.c.l.b16 %v7441
        %v7598 = vunpack.c.h.b16 %v7441
        %v7599 = vunpack.c.l.b16 %v7442
        %v7600 = vunpack.c.l.b16 %v7443
        %v7601 = vunpack.c.h.b16 %v7443
        %v7602 = vunpack.c.l.b16 %v7444
        %v7603 = vunpack.c.l.b16 %v7445
        %v7604 = vunpack.c.h.b16 %v7445
        %v7605 = vunpack.c.l.b16 %v7446
        %v7606 = vunpack.c.l.b16 %v7447
        %v7607 = vunpack.c.h.b16 %v7447
        %v7608 = vunpack.c.l.b16 %v7448
        %v7609 = vpack.c.b16 %v7516, %v7513
        %v7610 = vpack.c.b16 %v7517, %v7514
        %v7611 = vpack.c.b16 %v7518, %v7515
        %v7612 = vpack.c.b16 %v7522, %v7519
        %v7613 = vpack.c.b16 %v7523, %v7520
        %v7614 = vpack.c.b16 %v7524, %v7521
        %v7615 = vpack.c.b16 %v7528, %v7525
        %v7616 = vpack.c.b16 %v7529, %v7526
        %v7617 = vpack.c.b16 %v7530, %v7527
        %v7618 = vpack.c.b16 %v7534, %v7531
        %v7619 = vpack.c.b16 %v7535, %v7532
        %v7620 = vpack.c.b16 %v7536, %v7533
        %v7621 = vpack.c.b16 %v7540, %v7537
        %v7622 = vpack.c.b16 %v7541, %v7538
        %v7623 = vpack.c.b16 %v7542, %v7539
        %v7624 = vpack.c.b16 %v7546, %v7543
        %v7625 = vpack.c.b16 %v7547, %v7544
        %v7626 = vpack.c.b16 %v7548, %v7545
        %v7627 = vpack.c.b16 %v7552, %v7549
        %v7628 = vpack.c.b16 %v7553, %v7550
        %v7629 = vpack.c.b16 %v7554, %v7551
        %v7630 = vpack.c.b16 %v7558, %v7555
        %v7631 = vpack.c.b16 %v7559, %v7556
        %v7632 = vpack.c.b16 %v7560, %v7557
        %v7633 = vpack.c.b16 %v7564, %v7561
        %v7634 = vpack.c.b16 %v7565, %v7562
        %v7635 = vpack.c.b16 %v7566, %v7563
        %v7636 = vpack.c.b16 %v7570, %v7567
        %v7637 = vpack.c.b16 %v7571, %v7568
        %v7638 = vpack.c.b16 %v7572, %v7569
        %v7639 = vpack.c.b16 %v7576, %v7573
        %v7640 = vpack.c.b16 %v7577, %v7574
        %v7641 = vpack.c.b16 %v7578, %v7575
        %v7642 = vpack.c.b16 %v7582, %v7579
        %v7643 = vpack.c.b16 %v7583, %v7580
        %v7644 = vpack.c.b16 %v7584, %v7581
        %v7645 = vpack.c.b16 %v7588, %v7585
        %v7646 = vpack.c.b16 %v7589, %v7586
        %v7647 = vpack.c.b16 %v7590, %v7587
        %v7648 = vpack.c.b16 %v7594, %v7591
        %v7649 = vpack.c.b16 %v7595, %v7592
        %v7650 = vpack.c.b16 %v7596, %v7593
        %v7651 = vpack.c.b16 %v7600, %v7597
        %v7652 = vpack.c.b16 %v7601, %v7598
        %v7653 = vpack.c.b16 %v7602, %v7599
        %v7654 = vpack.c.b16 %v7606, %v7603
        %v7655 = vpack.c.b16 %v7607, %v7604
        %v7656 = vpack.c.b16 %v7608, %v7605
        %7705 = vmatprep.subr.bf16.mxu0 %v7610
        %7706 = vmatpush1.bf16.msra.mxu0 %v7609
        %7707 = vmatprep.subr.bf16.mxu0 %v7613
        %7708 = vmatpush1.bf16.msra.mxu0 %v7612
        %7709 = vmatprep.subr.bf16.mxu0 %v7616
        %7710 = vmatpush1.bf16.msra.mxu0 %v7615
        %7711 = vmatprep.subr.bf16.mxu0 %v7619
        %7712 = vmatpush1.bf16.msra.mxu0 %v7618
        %7713 = vmatprep.subr.bf16.mxu0 %v7622
        %7714 = vmatpush1.bf16.msra.mxu0 %v7621
        %7715 = vmatprep.subr.bf16.mxu0 %v7625
        %7716 = vmatpush1.bf16.msra.mxu0 %v7624
        %7717 = vmatprep.subr.bf16.mxu0 %v7628
        %7718 = vmatpush1.bf16.msra.mxu0 %v7627
        %7719 = vmatprep.subr.bf16.mxu0 %v7631
        %7720 = vmatpush1.bf16.msra.mxu0 %v7630
        %7721 = vmatprep.subr.bf16.mxu0 %v7634
        %7722 = vmatpush1.bf16.msra.mxu0 %v7633
        %7723 = vmatprep.subr.bf16.mxu0 %v7637
        %7724 = vmatpush1.bf16.msra.mxu0 %v7636
        %7725 = vmatprep.subr.bf16.mxu0 %v7640
        %7726 = vmatpush1.bf16.msra.mxu0 %v7639
        %7727 = vmatprep.subr.bf16.mxu0 %v7643
        %7728 = vmatpush1.bf16.msra.mxu0 %v7642
        %7729 = vmatprep.subr.bf16.mxu0 %v7646
        %7730 = vmatpush1.bf16.msra.mxu0 %v7645
        %7731 = vmatprep.subr.bf16.mxu0 %v7649
        %7732 = vmatpush1.bf16.msra.mxu0 %v7648
        %7733 = vmatprep.subr.bf16.mxu0 %v7652
        %7734 = vmatpush1.bf16.msra.mxu0 %v7651
        %7735 = vmatprep.subr.bf16.mxu0 %v7655
        %7736 = vmatpush1.bf16.msra.mxu0 %v7654
        %7737 = vmatprep.mubr.bf16.mxu0 %v7349
        %7738 = vmatmul.mubr.bf16.gmra.mrb[0].mxu0 %v7348
        %v7739 = vpop.f32.mrb[0].mxu0
        %v7740 = vpop.f32.mrb[0].mxu0
        %v7741 = vpop.f32.mrb[0].mxu0
        %v7742 = vadd.f32 0.0, %v7741
        %v7743 = vpop.f32.mrb[0].mxu0
        %7744 = vmatprep.mubr.bf16.mxu0 %v7351
        %7745 = vmatmul.mubr.bf16.gmra.mrb[0].mxu0 %v7350
        %v7746 = vpop.f32.mrb[0].mxu0
        %v7747 = vadd.f32 0.0, %v7746
        %v7748 = vpop.f32.mrb[0].mxu0
        %v7749 = vadd.f32 0.0, %v7748
        %v7750 = vpop.f32.mrb[0].mxu0
        %v7751 = vadd.f32 0.0, %v7750
        %v7752 = vpop.f32.mrb[0].mxu0
        %v7753 = vadd.f32 0.0, %v7752
        %7754 = vmatprep.mubr.bf16.mxu0 %v7353
        %7755 = vmatmul.mubr.bf16.gmra.mrb[0].mxu0 %v7352
        %v7756 = vpop.f32.mrb[0].mxu0
        %v7757 = vadd.f32 0.0, %v7756
        %v7758 = vpop.f32.mrb[0].mxu0
        %v7759 = vadd.f32 0.0, %v7758
        %v7760 = vpop.f32.mrb[0].mxu0
        %v7761 = vadd.f32 0.0, %v7760
        %v7762 = vpop.f32.mrb[0].mxu0
        %v7763 = vadd.f32 0.0, %v7762
        %7764 = vmatprep.mubr.bf16.mxu0 %v7355
        %7765 = vmatmul.mubr.bf16.gmra.mrb[0].mxu0 %v7354
        %v7766 = vpop.f32.mrb[0].mxu0
        %v7767 = vadd.f32 0.0, %v7766
        %v7768 = vpop.f32.mrb[0].mxu0
        %v7769 = vadd.f32 0.0, %v7768
        %v7770 = vpop.f32.mrb[0].mxu0
        %v7771 = vadd.f32 0.0, %v7770
        %v7772 = vpop.f32.mrb[0].mxu0
        %v7773 = vadd.f32 0.0, %v7772
        %7774 = vmatprep.mubr.bf16.mxu0 %v7357
        %7775 = vmatmul.mubr.bf16.gmra.mrb[0].mxu0 %v7356
        %v7776 = vpop.f32.mrb[0].mxu0
        %v7777 = vadd.f32 0.0, %v7776
        %v7778 = vpop.f32.mrb[0].mxu0
        %v7779 = vadd.f32 0.0, %v7778
        %v7780 = vpop.f32.mrb[0].mxu0
        %v7781 = vadd.f32 0.0, %v7780
        %v7782 = vpop.f32.mrb[0].mxu0
        %v7783 = vadd.f32 0.0, %v7782
        %7784 = vmatprep.mubr.bf16.mxu0 %v7359
        %7785 = vmatmul.mubr.bf16.gmra.mrb[0].mxu0 %v7358
        %v7786 = vpop.f32.mrb[0].mxu0
        %v7787 = vadd.f32 0.0, %v7786
        %v7788 = vpop.f32.mrb[0].mxu0
        %v7789 = vadd.f32 0.0, %v7788
        %v7790 = vpop.f32.mrb[0].mxu0
        %v7791 = vadd.f32 0.0, %v7790
        %v7792 = vpop.f32.mrb[0].mxu0
        %v7793 = vadd.f32 0.0, %v7792
        %7794 = vmatprep.mubr.bf16.mxu0 %v7361
        %7795 = vmatmul.mubr.bf16.gmra.mrb[0].mxu0 %v7360
        %v7796 = vpop.f32.mrb[0].mxu0
        %v7797 = vadd.f32 0.0, %v7796
        %v7798 = vpop.f32.mrb[0].mxu0
        %v7799 = vadd.f32 0.0, %v7798
        %v7800 = vpop.f32.mrb[0].mxu0
        %v7801 = vadd.f32 0.0, %v7800
        %v7802 = vpop.f32.mrb[0].mxu0
        %v7803 = vadd.f32 0.0, %v7802
        %7804 = vmatprep.mubr.bf16.mxu0 %v7363
        %7805 = vmatmul.mubr.bf16.gmra.mrb[0].mxu0 %v7362
        %v7806 = vpop.f32.mrb[0].mxu0
        %v7807 = vadd.f32 0.0, %v7806
        %v7808 = vpop.f32.mrb[0].mxu0
        %v7809 = vadd.f32 0.0, %v7808
        %v7810 = vpop.f32.mrb[0].mxu0
        %v7811 = vadd.f32 0.0, %v7810
        %v7812 = vpop.f32.mrb[0].mxu0
        %v7813 = vadd.f32 0.0, %v7812
        %7814 = vmatprep.mubr.bf16.mxu0 %v7365
        %7815 = vmatmul.mubr.bf16.gmra.mrb[0].mxu0 %v7364
        %v7816 = vpop.f32.mrb[0].mxu0
        %v7817 = vadd.f32 0.0, %v7816
        %v7818 = vpop.f32.mrb[0].mxu0
        %v7819 = vadd.f32 0.0, %v7818
        %v7820 = vpop.f32.mrb[0].mxu0
        %v7821 = vadd.f32 0.0, %v7820
        %v7822 = vpop.f32.mrb[0].mxu0
        %v7823 = vadd.f32 0.0, %v7822
        %7824 = vmatprep.mubr.bf16.mxu0 %v7367
        %7825 = vmatmul.mubr.bf16.gmra.mrb[0].mxu0 %v7366
        %v7826 = vpop.f32.mrb[0].mxu0
        %v7827 = vadd.f32 0.0, %v7826
        %v7828 = vpop.f32.mrb[0].mxu0
        %v7829 = vadd.f32 0.0, %v7828
        %v7830 = vpop.f32.mrb[0].mxu0
        %v7831 = vadd.f32 0.0, %v7830
        %v7832 = vpop.f32.mrb[0].mxu0
        %v7833 = vadd.f32 0.0, %v7832
        %7834 = vmatprep.mubr.bf16.mxu0 %v7369
        %7835 = vmatmul.mubr.bf16.gmra.mrb[0].mxu0 %v7368
        %v7836 = vpop.f32.mrb[0].mxu0
        %v7837 = vadd.f32 0.0, %v7836
        %v7838 = vpop.f32.mrb[0].mxu0
        %v7839 = vadd.f32 0.0, %v7838
        %v7840 = vpop.f32.mrb[0].mxu0
        %v7841 = vadd.f32 0.0, %v7840
        %v7842 = vpop.f32.mrb[0].mxu0
        %v7843 = vadd.f32 0.0, %v7842
        %7844 = vmatprep.mubr.bf16.mxu0 %v7371
        %7845 = vmatmul.mubr.bf16.gmra.mrb[0].mxu0 %v7370
        %v7846 = vpop.f32.mrb[0].mxu0
        %v7847 = vadd.f32 0.0, %v7846
        %v7848 = vpop.f32.mrb[0].mxu0
        %v7849 = vadd.f32 0.0, %v7848
        %v7850 = vpop.f32.mrb[0].mxu0
        %v7851 = vadd.f32 0.0, %v7850
        %v7852 = vpop.f32.mrb[0].mxu0
        %v7853 = vadd.f32 0.0, %v7852
        %7854 = vmatprep.mubr.bf16.mxu0 %v7373
        %7855 = vmatmul.mubr.bf16.gmra.mrb[0].mxu0 %v7372
        %v7856 = vpop.f32.mrb[0].mxu0
        %v7857 = vadd.f32 0.0, %v7856
        %v7858 = vpop.f32.mrb[0].mxu0
        %v7859 = vadd.f32 0.0, %v7858
        %v7860 = vpop.f32.mrb[0].mxu0
        %v7861 = vadd.f32 0.0, %v7860
        %v7862 = vpop.f32.mrb[0].mxu0
        %v7863 = vadd.f32 0.0, %v7862
        %7864 = vmatprep.mubr.bf16.mxu0 %v7375
        %7865 = vmatmul.mubr.bf16.gmra.mrb[0].mxu0 %v7374
        %v7866 = vpop.f32.mrb[0].mxu0
        %v7867 = vadd.f32 0.0, %v7866
        %v7868 = vpop.f32.mrb[0].mxu0
        %v7869 = vadd.f32 0.0, %v7868
        %v7870 = vpop.f32.mrb[0].mxu0
        %v7871 = vadd.f32 0.0, %v7870
        %v7872 = vpop.f32.mrb[0].mxu0
        %v7873 = vadd.f32 0.0, %v7872
        %7874 = vmatprep.mubr.bf16.mxu0 %v7377
        %7875 = vmatmul.mubr.bf16.gmra.mrb[0].mxu0 %v7376
        %v7876 = vpop.f32.mrb[0].mxu0
        %v7877 = vadd.f32 0.0, %v7876
        %v7878 = vpop.f32.mrb[0].mxu0
        %v7879 = vadd.f32 0.0, %v7878
        %v7880 = vpop.f32.mrb[0].mxu0
        %v7881 = vadd.f32 0.0, %v7880
        %v7882 = vpop.f32.mrb[0].mxu0
        %v7883 = vadd.f32 0.0, %v7882
        %7884 = vmatprep.mubr.bf16.mxu0 %v7379
        %7885 = vmatmul.mubr.bf16.gmra.mrb[0].mxu0 %v7378
        %v7886 = vpop.f32.mrb[0].mxu0
        %v7887 = vadd.f32 0.0, %v7886
        %v7888 = vpop.f32.mrb[0].mxu0
        %v7889 = vadd.f32 0.0, %v7888
        %v7890 = vpop.f32.mrb[0].mxu0
        %v7891 = vadd.f32 0.0, %v7890
        %v7892 = vpop.f32.mrb[0].mxu0
        %v7893 = vadd.f32 0.0, %v7892
        %7894 = vmatprep.mubr.bf16.mxu0 %v7381
        %7895 = vmatmul.mubr.bf16.gmra.mrb[0].mxu0 %v7380
        %v7896 = vpop.f32.mrb[0].mxu0
        %v7897 = vadd.f32 0.0, %v7896
        %v7898 = vpop.f32.mrb[0].mxu0
        %v7899 = vadd.f32 0.0, %v7898
        %v7900 = vpop.f32.mrb[0].mxu0
        %v7901 = vadd.f32 0.0, %v7900
        %v7902 = vpop.f32.mrb[0].mxu0
        %v7903 = vadd.f32 0.0, %v7902
        %7904 = vmatprep.mubr.bf16.mxu0 %v7383
        %7905 = vmatmul.mubr.bf16.gmra.mrb[0].mxu0 %v7382
        %v7906 = vpop.f32.mrb[0].mxu0
        %v7907 = vpop.f32.mrb[0].mxu0
        %v7908 = vpop.f32.mrb[0].mxu0
        %v7909 = vpop.f32.mrb[0].mxu0
        %7910 = vdwg.mxu0
        %7911 = vmatprep.subr.bf16.mxu0 0
        %7912 = vmatpush1.bf16.msra.mxu0 %v7611
        %7913 = vmatprep.subr.bf16.mxu0 0
        %7914 = vmatpush1.bf16.msra.mxu0 %v7614
        %7915 = vmatprep.subr.bf16.mxu0 0
        %7916 = vmatpush1.bf16.msra.mxu0 %v7617
        %7917 = vmatprep.subr.bf16.mxu0 0
        %7918 = vmatpush1.bf16.msra.mxu0 %v7620
        %7919 = vmatprep.subr.bf16.mxu0 0
        %7920 = vmatpush1.bf16.msra.mxu0 %v7623
        %7921 = vmatprep.subr.bf16.mxu0 0
        %7922 = vmatpush1.bf16.msra.mxu0 %v7626
        %7923 = vmatprep.subr.bf16.mxu0 0
        %7924 = vmatpush1.bf16.msra.mxu0 %v7629
        %7925 = vmatprep.subr.bf16.mxu0 0
        %7926 = vmatpush1.bf16.msra.mxu0 %v7632
        %7927 = vmatprep.subr.bf16.mxu0 0
        %7928 = vmatpush1.bf16.msra.mxu0 %v7635
        %7929 = vmatprep.subr.bf16.mxu0 0
        %7930 = vmatpush1.bf16.msra.mxu0 %v7638
        %7931 = vmatprep.subr.bf16.mxu0 0
        %7932 = vmatpush1.bf16.msra.mxu0 %v7641
        %7933 = vmatprep.subr.bf16.mxu0 0
        %7934 = vmatpush1.bf16.msra.mxu0 %v7644
        %7935 = vmatprep.subr.bf16.mxu0 0
        %7936 = vmatpush1.bf16.msra.mxu0 %v7647
        %7937 = vmatprep.subr.bf16.mxu0 0
        %7938 = vmatpush1.bf16.msra.mxu0 %v7650
        %7939 = vmatprep.subr.bf16.mxu0 0
        %7940 = vmatpush1.bf16.msra.mxu0 %v7653
        %7941 = vmatprep.subr.bf16.mxu0 0
        %7942 = vmatpush1.bf16.msra.mxu0 %v7656
        %7943 = vmatprep.mubr.bf16.mxu0 %v7349
        %7944 = vmatmul.mubr.bf16.gmra.mrb[0].mxu0 %v7348
        %v7945 = vpop.f32.mrb[0].mxu0
        %v7946 = vpop.f32.mrb[0].mxu0
        %v7947 = vpop.f32.mrb[0].mxu0
        %v7948 = vpop.f32.mrb[0].mxu0
        %7949 = vmatprep.mubr.bf16.mxu0 %v7351
        %7950 = vmatmul.mubr.bf16.gmra.mrb[0].mxu0 %v7350
        %v7951 = vpop.f32.mrb[0].mxu0
        %v7952 = vadd.f32 0.0, %v7951
        %v7953 = vpop.f32.mrb[0].mxu0
        %v7954 = vpop.f32.mrb[0].mxu0
        %v7955 = vadd.f32 0.0, %v7954
        %v7956 = vpop.f32.mrb[0].mxu0
        %7957 = vmatprep.mubr.bf16.mxu0 %v7353
        %7958 = vmatmul.mubr.bf16.gmra.mrb[0].mxu0 %v7352
        %v7959 = vpop.f32.mrb[0].mxu0
        %v7960 = vadd.f32 0.0, %v7959
        %v7961 = vpop.f32.mrb[0].mxu0
        %v7962 = vpop.f32.mrb[0].mxu0
        %v7963 = vadd.f32 0.0, %v7962
        %v7964 = vpop.f32.mrb[0].mxu0
        %7965 = vmatprep.mubr.bf16.mxu0 %v7355
        %7966 = vmatmul.mubr.bf16.gmra.mrb[0].mxu0 %v7354
        %v7967 = vpop.f32.mrb[0].mxu0
        %v7968 = vadd.f32 0.0, %v7967
        %v7969 = vpop.f32.mrb[0].mxu0
        %v7970 = vpop.f32.mrb[0].mxu0
        %v7971 = vadd.f32 0.0, %v7970
        %v7972 = vpop.f32.mrb[0].mxu0
        %7973 = vmatprep.mubr.bf16.mxu0 %v7357
        %7974 = vmatmul.mubr.bf16.gmra.mrb[0].mxu0 %v7356
        %v7975 = vpop.f32.mrb[0].mxu0
        %v7976 = vadd.f32 0.0, %v7975
        %v7977 = vpop.f32.mrb[0].mxu0
        %v7978 = vpop.f32.mrb[0].mxu0
        %v7979 = vadd.f32 0.0, %v7978
        %v7980 = vpop.f32.mrb[0].mxu0
        %7981 = vmatprep.mubr.bf16.mxu0 %v7359
        %7982 = vmatmul.mubr.bf16.gmra.mrb[0].mxu0 %v7358
        %v7983 = vpop.f32.mrb[0].mxu0
        %v7984 = vadd.f32 0.0, %v7983
        %v7985 = vpop.f32.mrb[0].mxu0
        %v7986 = vpop.f32.mrb[0].mxu0
        %v7987 = vadd.f32 0.0, %v7986
        %v7988 = vpop.f32.mrb[0].mxu0
        %7989 = vmatprep.mubr.bf16.mxu0 %v7361
        %7990 = vmatmul.mubr.bf16.gmra.mrb[0].mxu0 %v7360
        %v7991 = vpop.f32.mrb[0].mxu0
        %v7992 = vadd.f32 0.0, %v7991
        %v7993 = vpop.f32.mrb[0].mxu0
        %v7994 = vpop.f32.mrb[0].mxu0
        %v7995 = vadd.f32 0.0, %v7994
        %v7996 = vpop.f32.mrb[0].mxu0
        %7997 = vmatprep.mubr.bf16.mxu0 %v7363
        %7998 = vmatmul.mubr.bf16.gmra.mrb[0].mxu0 %v7362
        %v7999 = vpop.f32.mrb[0].mxu0
        %v8000 = vadd.f32 0.0, %v7999
        %v8001 = vpop.f32.mrb[0].mxu0
        %v8002 = vpop.f32.mrb[0].mxu0
        %v8003 = vadd.f32 0.0, %v8002
        %v8004 = vpop.f32.mrb[0].mxu0
        %8005 = vmatprep.mubr.bf16.mxu0 %v7365
        %8006 = vmatmul.mubr.bf16.gmra.mrb[0].mxu0 %v7364
        %v8007 = vpop.f32.mrb[0].mxu0
        %v8008 = vadd.f32 0.0, %v8007
        %v8009 = vpop.f32.mrb[0].mxu0
        %v8010 = vpop.f32.mrb[0].mxu0
        %v8011 = vadd.f32 0.0, %v8010
        %v8012 = vpop.f32.mrb[0].mxu0
        %8013 = vmatprep.mubr.bf16.mxu0 %v7367
        %8014 = vmatmul.mubr.bf16.gmra.mrb[0].mxu0 %v7366
        %v8015 = vpop.f32.mrb[0].mxu0
        %v8016 = vadd.f32 0.0, %v8015
        %v8017 = vpop.f32.mrb[0].mxu0
        %v8018 = vpop.f32.mrb[0].mxu0
        %v8019 = vadd.f32 0.0, %v8018
        %v8020 = vpop.f32.mrb[0].mxu0
        %8021 = vmatprep.mubr.bf16.mxu0 %v7369
        %8022 = vmatmul.mubr.bf16.gmra.mrb[0].mxu0 %v7368
        %v8023 = vpop.f32.mrb[0].mxu0
        %v8024 = vadd.f32 0.0, %v8023
        %v8025 = vpop.f32.mrb[0].mxu0
        %v8026 = vpop.f32.mrb[0].mxu0
        %v8027 = vadd.f32 0.0, %v8026
        %v8028 = vpop.f32.mrb[0].mxu0
        %8029 = vmatprep.mubr.bf16.mxu0 %v7371
        %8030 = vmatmul.mubr.bf16.gmra.mrb[0].mxu0 %v7370
        %v8031 = vpop.f32.mrb[0].mxu0
        %v8032 = vadd.f32 0.0, %v8031
        %v8033 = vpop.f32.mrb[0].mxu0
        %v8034 = vpop.f32.mrb[0].mxu0
        %v8035 = vadd.f32 0.0, %v8034
        %v8036 = vpop.f32.mrb[0].mxu0
        %8037 = vmatprep.mubr.bf16.mxu0 %v7373
        %8038 = vmatmul.mubr.bf16.gmra.mrb[0].mxu0 %v7372
        %v8039 = vpop.f32.mrb[0].mxu0
        %v8040 = vadd.f32 0.0, %v8039
        %v8041 = vpop.f32.mrb[0].mxu0
        %v8042 = vpop.f32.mrb[0].mxu0
        %v8043 = vadd.f32 0.0, %v8042
        %v8044 = vpop.f32.mrb[0].mxu0
        %8045 = vmatprep.mubr.bf16.mxu0 %v7375
        %8046 = vmatmul.mubr.bf16.gmra.mrb[0].mxu0 %v7374
        %v8047 = vpop.f32.mrb[0].mxu0
        %v8048 = vadd.f32 0.0, %v8047
        %v8049 = vpop.f32.mrb[0].mxu0
        %v8050 = vpop.f32.mrb[0].mxu0
        %v8051 = vadd.f32 0.0, %v8050
        %v8052 = vpop.f32.mrb[0].mxu0
        %8053 = vmatprep.mubr.bf16.mxu0 %v7377
        %8054 = vmatmul.mubr.bf16.gmra.mrb[0].mxu0 %v7376
        %v8055 = vpop.f32.mrb[0].mxu0
        %v8056 = vadd.f32 0.0, %v8055
        %v8057 = vpop.f32.mrb[0].mxu0
        %v8058 = vpop.f32.mrb[0].mxu0
        %v8059 = vadd.f32 0.0, %v8058
        %v8060 = vpop.f32.mrb[0].mxu0
        %8061 = vmatprep.mubr.bf16.mxu0 %v7379
        %8062 = vmatmul.mubr.bf16.gmra.mrb[0].mxu0 %v7378
        %v8063 = vpop.f32.mrb[0].mxu0
        %v8064 = vadd.f32 0.0, %v8063
        %v8065 = vpop.f32.mrb[0].mxu0
        %v8066 = vpop.f32.mrb[0].mxu0
        %v8067 = vadd.f32 0.0, %v8066
        %v8068 = vpop.f32.mrb[0].mxu0
        %8069 = vmatprep.mubr.bf16.mxu0 %v7381
        %8070 = vmatmul.mubr.bf16.gmra.mrb[0].mxu0 %v7380
        %v8071 = vpop.f32.mrb[0].mxu0
        %v8072 = vadd.f32 0.0, %v8071
        %v8073 = vpop.f32.mrb[0].mxu0
        %v8074 = vpop.f32.mrb[0].mxu0
        %v8075 = vadd.f32 0.0, %v8074
        %v8076 = vpop.f32.mrb[0].mxu0
        %8077 = vmatprep.mubr.bf16.mxu0 %v7383
        %8078 = vmatmul.mubr.bf16.gmra.mrb[0].mxu0 %v7382
        %v8079 = vpop.f32.mrb[0].mxu0
        %v8080 = vadd.f32 0.0, %v8079
        %v8081 = vpop.f32.mrb[0].mxu0
        %v8082 = vpop.f32.mrb[0].mxu0
        %v8083 = vpop.f32.mrb[0].mxu0
        %8084 = vdwg.mxu0
        %v8085 = vadd.f32 %v7005, %v7742
        %v8086 = vadd.f32 %v7010, %v7747
        %v8087 = vadd.f32 %v7012, %v7749
        %v8088 = vadd.f32 %v7215, %v7952
        %v8089 = vadd.f32 %v7014, %v7751
        %v8090 = vadd.f32 %v7016, %v7753
        %v8091 = vadd.f32 %v7218, %v7955
        %v8092 = vadd.f32 %v7020, %v7757
        %v8093 = vadd.f32 %v7022, %v7759
        %v8094 = vadd.f32 %v7223, %v7960
        %v8095 = vadd.f32 %v7024, %v7761
        %v8096 = vadd.f32 %v7026, %v7763
        %v8097 = vadd.f32 %v7226, %v7963
        %v8098 = vadd.f32 %v7030, %v7767
        %v8099 = vadd.f32 %v7032, %v7769
        %v8100 = vadd.f32 %v7231, %v7968
        %v8101 = vadd.f32 %v7034, %v7771
        %v8102 = vadd.f32 %v7036, %v7773
        %v8103 = vadd.f32 %v7234, %v7971
        %v8104 = vadd.f32 %v7040, %v7777
        %v8105 = vadd.f32 %v7042, %v7779
        %v8106 = vadd.f32 %v7239, %v7976
        %v8107 = vadd.f32 %v7044, %v7781
        %v8108 = vadd.f32 %v7046, %v7783
        %v8109 = vadd.f32 %v7242, %v7979
        %v8110 = vadd.f32 %v7050, %v7787
        %v8111 = vadd.f32 %v7052, %v7789
        %v8112 = vadd.f32 %v7247, %v7984
        %v8113 = vadd.f32 %v7054, %v7791
        %v8114 = vadd.f32 %v7056, %v7793
        %v8115 = vadd.f32 %v7250, %v7987
        %v8116 = vadd.f32 %v7060, %v7797
        %v8117 = vadd.f32 %v7062, %v7799
        %v8118 = vadd.f32 %v7255, %v7992
        %v8119 = vadd.f32 %v7064, %v7801
        %v8120 = vadd.f32 %v7066, %v7803
        %v8121 = vadd.f32 %v7258, %v7995
        %v8122 = vadd.f32 %v7070, %v7807
        %v8123 = vadd.f32 %v7072, %v7809
        %v8124 = vadd.f32 %v7263, %v8000
        %v8125 = vadd.f32 %v7074, %v7811
        %v8126 = vadd.f32 %v7076, %v7813
        %v8127 = vadd.f32 %v7266, %v8003
        %v8128 = vadd.f32 %v7080, %v7817
        %v8129 = vadd.f32 %v7082, %v7819
        %v8130 = vadd.f32 %v7271, %v8008
        %v8131 = vadd.f32 %v7084, %v7821
        %v8132 = vadd.f32 %v7086, %v7823
        %v8133 = vadd.f32 %v7274, %v8011
        %v8134 = vadd.f32 %v7090, %v7827
        %v8135 = vadd.f32 %v7092, %v7829
        %v8136 = vadd.f32 %v7279, %v8016
        %v8137 = vadd.f32 %v7094, %v7831
        %v8138 = vadd.f32 %v7096, %v7833
        %v8139 = vadd.f32 %v7282, %v8019
        %v8140 = vadd.f32 %v7100, %v7837
        %v8141 = vadd.f32 %v7102, %v7839
        %v8142 = vadd.f32 %v7287, %v8024
        %v8143 = vadd.f32 %v7104, %v7841
        %v8144 = vadd.f32 %v7106, %v7843
        %v8145 = vadd.f32 %v7290, %v8027
        %v8146 = vadd.f32 %v7110, %v7847
        %v8147 = vadd.f32 %v7112, %v7849
        %v8148 = vadd.f32 %v7295, %v8032
        %v8149 = vadd.f32 %v7114, %v7851
        %v8150 = vadd.f32 %v7116, %v7853
        %v8151 = vadd.f32 %v7298, %v8035
        %v8152 = vadd.f32 %v7120, %v7857
        %v8153 = vadd.f32 %v7122, %v7859
        %v8154 = vadd.f32 %v7303, %v8040
        %v8155 = vadd.f32 %v7124, %v7861
        %v8156 = vadd.f32 %v7126, %v7863
        %v8157 = vadd.f32 %v7306, %v8043
        %v8158 = vadd.f32 %v7130, %v7867
        %v8159 = vadd.f32 %v7132, %v7869
        %v8160 = vadd.f32 %v7311, %v8048
        %v8161 = vadd.f32 %v7134, %v7871
        %v8162 = vadd.f32 %v7136, %v7873
        %v8163 = vadd.f32 %v7314, %v8051
        %v8164 = vadd.f32 %v7140, %v7877
        %v8165 = vadd.f32 %v7142, %v7879
        %v8166 = vadd.f32 %v7319, %v8056
        %v8167 = vadd.f32 %v7144, %v7881
        %v8168 = vadd.f32 %v7146, %v7883
        %v8169 = vadd.f32 %v7322, %v8059
        %v8170 = vadd.f32 %v7150, %v7887
        %v8171 = vadd.f32 %v7152, %v7889
        %v8172 = vadd.f32 %v7327, %v8064
        %v8173 = vadd.f32 %v7154, %v7891
        %v8174 = vadd.f32 %v7156, %v7893
        %v8175 = vadd.f32 %v7330, %v8067
        %v8176 = vadd.f32 %v7160, %v7897
        %v8177 = vadd.f32 %v7162, %v7899
        %v8178 = vadd.f32 %v7335, %v8072
        %v8179 = vadd.f32 %v7164, %v7901
        %v8180 = vadd.f32 %v7166, %v7903
        %v8181 = vadd.f32 %v7338, %v8075
        %v8182 = vadd.f32 %v7343, %v8080
        %v8183 = vmul.f32 %v8085, %v4678
        %v8184 = vmul.f32 %v8086, %v4680
        %v8185 = vmul.f32 %v8089, %v4682
        %v8186 = vmul.f32 %v8092, %v4684
        %v8187 = vmul.f32 %v8095, %v4686
        %v8188 = vmul.f32 %v8098, %v4688
        %v8189 = vmul.f32 %v8101, %v4690
        %v8190 = vmul.f32 %v8104, %v4692
        %v8191 = vmul.f32 %v8107, %v4694
        %v8192 = vmul.f32 %v8110, %v4696
        %v8193 = vmul.f32 %v8113, %v4698
        %v8194 = vmul.f32 %v8116, %v4700
        %v8195 = vmul.f32 %v8119, %v4702
        %v8196 = vmul.f32 %v8122, %v4704
        %v8197 = vmul.f32 %v8125, %v4706
        %v8198 = vmul.f32 %v8128, %v4708
        %v8199 = vmul.f32 %v8131, %v4710
        %v8200 = vmul.f32 %v8134, %v4712
        %v8201 = vmul.f32 %v8137, %v4714
        %v8202 = vmul.f32 %v8140, %v4716
        %v8203 = vmul.f32 %v8143, %v4718
        %v8204 = vmul.f32 %v8146, %v4720
        %v8205 = vmul.f32 %v8149, %v4722
        %v8206 = vmul.f32 %v8152, %v4724
        %v8207 = vmul.f32 %v8155, %v4726
        %v8208 = vmul.f32 %v8158, %v4728
        %v8209 = vmul.f32 %v8161, %v4730
        %v8210 = vmul.f32 %v8164, %v4732
        %v8211 = vmul.f32 %v8167, %v4734
        %v8212 = vmul.f32 %v8170, %v4736
        %v8213 = vmul.f32 %v8173, %v4738
        %v8214 = vmul.f32 %v8176, %v4740
        %v8215 = vmul.f32 %v8179, %v4739
        %v8249 = vrot.slane %v8183, 7
        %v8250 = vrot.slane %v8184, 7
        %v8251 = vsel %vm4906, %v8249, %v8250
        %v8252 = vrot.slane %v8185, 7
        %v8253 = vsel %vm4906, %v8250, %v8252
        %v8254 = vrot.slane %v8186, 7
        %v8255 = vsel %vm4906, %v8252, %v8254
        %v8256 = vrot.slane %v8187, 7
        %v8257 = vsel %vm4906, %v8254, %v8256
        %v8258 = vrot.slane %v8188, 7
        %v8259 = vsel %vm4906, %v8256, %v8258
        %v8260 = vrot.slane %v8189, 7
        %v8261 = vsel %vm4906, %v8258, %v8260
        %v8262 = vrot.slane %v8190, 7
        %v8263 = vsel %vm4906, %v8260, %v8262
        %v8264 = vrot.slane %v8191, 7
        %v8265 = vsel %vm4906, %v8262, %v8264
        %v8266 = vrot.slane %v8192, 7
        %v8267 = vsel %vm4906, %v8264, %v8266
        %v8268 = vrot.slane %v8193, 7
        %v8269 = vsel %vm4906, %v8266, %v8268
        %v8270 = vrot.slane %v8194, 7
        %v8271 = vsel %vm4906, %v8268, %v8270
        %v8272 = vrot.slane %v8195, 7
        %v8273 = vsel %vm4906, %v8270, %v8272
        %v8274 = vrot.slane %v8196, 7
        %v8275 = vsel %vm4906, %v8272, %v8274
        %v8276 = vrot.slane %v8197, 7
        %v8277 = vsel %vm4906, %v8274, %v8276
        %v8278 = vrot.slane %v8198, 7
        %v8279 = vsel %vm4906, %v8276, %v8278
        %v8280 = vrot.slane %v8199, 7
        %v8281 = vsel %vm4906, %v8278, %v8280
        %v8282 = vrot.slane %v8200, 7
        %v8283 = vsel %vm4906, %v8280, %v8282
        %v8284 = vrot.slane %v8201, 7
        %v8285 = vsel %vm4906, %v8282, %v8284
        %v8286 = vrot.slane %v8202, 7
        %v8287 = vsel %vm4906, %v8284, %v8286
        %v8288 = vrot.slane %v8203, 7
        %v8289 = vsel %vm4906, %v8286, %v8288
        %v8290 = vrot.slane %v8204, 7
        %v8291 = vsel %vm4906, %v8288, %v8290
        %v8292 = vrot.slane %v8205, 7
        %v8293 = vsel %vm4906, %v8290, %v8292
        %v8294 = vrot.slane %v8206, 7
        %v8295 = vsel %vm4906, %v8292, %v8294
        %v8296 = vrot.slane %v8207, 7
        %v8297 = vsel %vm4906, %v8294, %v8296
        %v8298 = vrot.slane %v8208, 7
        %v8299 = vsel %vm4906, %v8296, %v8298
        %v8300 = vrot.slane %v8209, 7
        %v8301 = vsel %vm4906, %v8298, %v8300
        %v8302 = vrot.slane %v8210, 7
        %v8303 = vsel %vm4906, %v8300, %v8302
        %v8304 = vrot.slane %v8211, 7
        %v8305 = vsel %vm4906, %v8302, %v8304
        %v8306 = vrot.slane %v8212, 7
        %v8307 = vsel %vm4906, %v8304, %v8306
        %v8308 = vrot.slane %v8213, 7
        %v8309 = vsel %vm4906, %v8306, %v8308
        %v8310 = vrot.slane %v8214, 7
        %v8311 = vsel %vm4906, %v8308, %v8310
        %v8312 = vrot.slane %v8215, 7
        %v8313 = vsel %vm4906, %v8310, %v8312
        %v8346 = vadd.f32 %v8087, %v8251
        %v8347 = vadd.f32 %v8090, %v8253
        %v8348 = vadd.f32 %v8093, %v8255
        %v8349 = vadd.f32 %v8096, %v8257
        %v8350 = vadd.f32 %v8099, %v8259
        %v8351 = vadd.f32 %v8102, %v8261
        %v8352 = vadd.f32 %v8105, %v8263
        %v8353 = vadd.f32 %v8108, %v8265
        %v8354 = vadd.f32 %v8111, %v8267
        %v8355 = vadd.f32 %v8114, %v8269
        %v8356 = vadd.f32 %v8117, %v8271
        %v8357 = vadd.f32 %v8120, %v8273
        %v8358 = vadd.f32 %v8123, %v8275
        %v8359 = vadd.f32 %v8126, %v8277
        %v8360 = vadd.f32 %v8129, %v8279
        %v8361 = vadd.f32 %v8132, %v8281
        %v8362 = vadd.f32 %v8135, %v8283
        %v8363 = vadd.f32 %v8138, %v8285
        %v8364 = vadd.f32 %v8141, %v8287
        %v8365 = vadd.f32 %v8144, %v8289
        %v8366 = vadd.f32 %v8147, %v8291
        %v8367 = vadd.f32 %v8150, %v8293
        %v8368 = vadd.f32 %v8153, %v8295
        %v8369 = vadd.f32 %v8156, %v8297
        %v8370 = vadd.f32 %v8159, %v8299
        %v8371 = vadd.f32 %v8162, %v8301
        %v8372 = vadd.f32 %v8165, %v8303
        %v8373 = vadd.f32 %v8168, %v8305
        %v8374 = vadd.f32 %v8171, %v8307
        %v8375 = vadd.f32 %v8174, %v8309
        %v8376 = vadd.f32 %v8177, %v8311
        %v8377 = vadd.f32 %v8180, %v8313
        %v8378 = vmul.f32 %v8088, %v5293
        %v8379 = vmul.f32 %v8091, %v5295
        %v8380 = vmul.f32 %v8094, %v5297
        %v8381 = vmul.f32 %v8097, %v5299
        %v8382 = vmul.f32 %v8100, %v5301
        %v8383 = vmul.f32 %v8103, %v5303
        %v8384 = vmul.f32 %v8106, %v5305
        %v8385 = vmul.f32 %v8109, %v5307
        %v8386 = vmul.f32 %v8112, %v5309
        %v8387 = vmul.f32 %v8115, %v5311
        %v8388 = vmul.f32 %v8118, %v5313
        %v8389 = vmul.f32 %v8121, %v5315
        %v8390 = vmul.f32 %v8124, %v5317
        %v8391 = vmul.f32 %v8127, %v5319
        %v8392 = vmul.f32 %v8130, %v5321
        %v8393 = vmul.f32 %v8133, %v5323
        %v8394 = vmul.f32 %v8136, %v5325
        %v8395 = vmul.f32 %v8139, %v5327
        %v8396 = vmul.f32 %v8142, %v5329
        %v8397 = vmul.f32 %v8145, %v5331
        %v8398 = vmul.f32 %v8148, %v5333
        %v8399 = vmul.f32 %v8151, %v5335
        %v8400 = vmul.f32 %v8154, %v5337
        %v8401 = vmul.f32 %v8157, %v5339
        %v8402 = vmul.f32 %v8160, %v5341
        %v8403 = vmul.f32 %v8163, %v5343
        %v8404 = vmul.f32 %v8166, %v5345
        %v8405 = vmul.f32 %v8169, %v5347
        %v8406 = vmul.f32 %v8172, %v5349
        %v8407 = vmul.f32 %v8175, %v5351
        %v8408 = vmul.f32 %v8178, %v5353
        %v8409 = vmul.f32 %v8181, %v5355
        %v8410 = vmul.f32 %v8182, %v5354
        %v8444 = vrot.slane %v8378, 1
        %v8445 = vrot.slane %v8379, 1
        %v8446 = vsel %vm4677, %v8444, %v8445
        %v8447 = vrot.slane %v8380, 1
        %v8448 = vsel %vm4677, %v8445, %v8447
        %v8449 = vrot.slane %v8381, 1
        %v8450 = vsel %vm4677, %v8447, %v8449
        %v8451 = vrot.slane %v8382, 1
        %v8452 = vsel %vm4677, %v8449, %v8451
        %v8453 = vrot.slane %v8383, 1
        %v8454 = vsel %vm4677, %v8451, %v8453
        %v8455 = vrot.slane %v8384, 1
        %v8456 = vsel %vm4677, %v8453, %v8455
        %v8457 = vrot.slane %v8385, 1
        %v8458 = vsel %vm4677, %v8455, %v8457
        %v8459 = vrot.slane %v8386, 1
        %v8460 = vsel %vm4677, %v8457, %v8459
        %v8461 = vrot.slane %v8387, 1
        %v8462 = vsel %vm4677, %v8459, %v8461
        %v8463 = vrot.slane %v8388, 1
        %v8464 = vsel %vm4677, %v8461, %v8463
        %v8465 = vrot.slane %v8389, 1
        %v8466 = vsel %vm4677, %v8463, %v8465
        %v8467 = vrot.slane %v8390, 1
        %v8468 = vsel %vm4677, %v8465, %v8467
        %v8469 = vrot.slane %v8391, 1
        %v8470 = vsel %vm4677, %v8467, %v8469
        %v8471 = vrot.slane %v8392, 1
        %v8472 = vsel %vm4677, %v8469, %v8471
        %v8473 = vrot.slane %v8393, 1
        %v8474 = vsel %vm4677, %v8471, %v8473
        %v8475 = vrot.slane %v8394, 1
        %v8476 = vsel %vm4677, %v8473, %v8475
        %v8477 = vrot.slane %v8395, 1
        %v8478 = vsel %vm4677, %v8475, %v8477
        %v8479 = vrot.slane %v8396, 1
        %v8480 = vsel %vm4677, %v8477, %v8479
        %v8481 = vrot.slane %v8397, 1
        %v8482 = vsel %vm4677, %v8479, %v8481
        %v8483 = vrot.slane %v8398, 1
        %v8484 = vsel %vm4677, %v8481, %v8483
        %v8485 = vrot.slane %v8399, 1
        %v8486 = vsel %vm4677, %v8483, %v8485
        %v8487 = vrot.slane %v8400, 1
        %v8488 = vsel %vm4677, %v8485, %v8487
        %v8489 = vrot.slane %v8401, 1
        %v8490 = vsel %vm4677, %v8487, %v8489
        %v8491 = vrot.slane %v8402, 1
        %v8492 = vsel %vm4677, %v8489, %v8491
        %v8493 = vrot.slane %v8403, 1
        %v8494 = vsel %vm4677, %v8491, %v8493
        %v8495 = vrot.slane %v8404, 1
        %v8496 = vsel %vm4677, %v8493, %v8495
        %v8497 = vrot.slane %v8405, 1
        %v8498 = vsel %vm4677, %v8495, %v8497
        %v8499 = vrot.slane %v8406, 1
        %v8500 = vsel %vm4677, %v8497, %v8499
        %v8501 = vrot.slane %v8407, 1
        %v8502 = vsel %vm4677, %v8499, %v8501
        %v8503 = vrot.slane %v8408, 1
        %v8504 = vsel %vm4677, %v8501, %v8503
        %v8505 = vrot.slane %v8409, 1
        %v8506 = vsel %vm4677, %v8503, %v8505
        %v8507 = vrot.slane %v8410, 1
        %v8508 = vsel %vm4677, %v8505, %v8507
        %v8541 = vadd.f32 %v8346, %v8446
        %v8542 = vadd.f32 %v8347, %v8448
        %v8543 = vadd.f32 %v8348, %v8450
        %v8544 = vadd.f32 %v8349, %v8452
        %v8545 = vadd.f32 %v8350, %v8454
        %v8546 = vadd.f32 %v8351, %v8456
        %v8547 = vadd.f32 %v8352, %v8458
        %v8548 = vadd.f32 %v8353, %v8460
        %v8549 = vadd.f32 %v8354, %v8462
        %v8550 = vadd.f32 %v8355, %v8464
        %v8551 = vadd.f32 %v8356, %v8466
        %v8552 = vadd.f32 %v8357, %v8468
        %v8553 = vadd.f32 %v8358, %v8470
        %v8554 = vadd.f32 %v8359, %v8472
        %v8555 = vadd.f32 %v8360, %v8474
        %v8556 = vadd.f32 %v8361, %v8476
        %v8557 = vadd.f32 %v8362, %v8478
        %v8558 = vadd.f32 %v8363, %v8480
        %v8559 = vadd.f32 %v8364, %v8482
        %v8560 = vadd.f32 %v8365, %v8484
        %v8561 = vadd.f32 %v8366, %v8486
        %v8562 = vadd.f32 %v8367, %v8488
        %v8563 = vadd.f32 %v8368, %v8490
        %v8564 = vadd.f32 %v8369, %v8492
        %v8565 = vadd.f32 %v8370, %v8494
        %v8566 = vadd.f32 %v8371, %v8496
        %v8567 = vadd.f32 %v8372, %v8498
        %v8568 = vadd.f32 %v8373, %v8500
        %v8569 = vadd.f32 %v8374, %v8502
        %v8570 = vadd.f32 %v8375, %v8504
        %v8571 = vadd.f32 %v8376, %v8506
        %v8572 = vadd.f32 %v8377, %v8508
        %v8573 = vmax.f32 %v8541, 0.0
        %v8574 = vmax.f32 %v8542, 0.0
        %v8575 = vmax.f32 %v8543, 0.0
        %v8576 = vmax.f32 %v8544, 0.0
        %v8577 = vmax.f32 %v8545, 0.0
        %v8578 = vmax.f32 %v8546, 0.0
        %v8579 = vmax.f32 %v8547, 0.0
        %v8580 = vmax.f32 %v8548, 0.0
        %v8581 = vmax.f32 %v8549, 0.0
        %v8582 = vmax.f32 %v8550, 0.0
        %v8583 = vmax.f32 %v8551, 0.0
        %v8584 = vmax.f32 %v8552, 0.0
        %v8585 = vmax.f32 %v8553, 0.0
        %v8586 = vmax.f32 %v8554, 0.0
        %v8587 = vmax.f32 %v8555, 0.0
        %v8588 = vmax.f32 %v8556, 0.0
        %v8589 = vmax.f32 %v8557, 0.0
        %v8590 = vmax.f32 %v8558, 0.0
        %v8591 = vmax.f32 %v8559, 0.0
        %v8592 = vmax.f32 %v8560, 0.0
        %v8593 = vmax.f32 %v8561, 0.0
        %v8594 = vmax.f32 %v8562, 0.0
        %v8595 = vmax.f32 %v8563, 0.0
        %v8596 = vmax.f32 %v8564, 0.0
        %v8597 = vmax.f32 %v8565, 0.0
        %v8598 = vmax.f32 %v8566, 0.0
        %v8599 = vmax.f32 %v8567, 0.0
        %v8600 = vmax.f32 %v8568, 0.0
        %v8601 = vmax.f32 %v8569, 0.0
        %v8602 = vmax.f32 %v8570, 0.0
        %v8603 = vmax.f32 %v8571, 0.0
        %v8604 = vmax.f32 %v8572, 0.0
        %v8605 = vpack.c.bf16 %v8574, %v8573
        %v8606 = vpack.c.bf16 %v8576, %v8575
        %v8607 = vpack.c.bf16 %v8578, %v8577
        %v8608 = vpack.c.bf16 %v8580, %v8579
        %v8609 = vpack.c.bf16 %v8582, %v8581
        %v8610 = vpack.c.bf16 %v8584, %v8583
        %v8611 = vpack.c.bf16 %v8586, %v8585
        %v8612 = vpack.c.bf16 %v8588, %v8587
        %v8613 = vpack.c.bf16 %v8590, %v8589
        %v8614 = vpack.c.bf16 %v8592, %v8591
        %v8615 = vpack.c.bf16 %v8594, %v8593
        %v8616 = vpack.c.bf16 %v8596, %v8595
        %v8617 = vpack.c.bf16 %v8598, %v8597
        %v8618 = vpack.c.bf16 %v8600, %v8599
        %v8619 = vpack.c.bf16 %v8602, %v8601
        %v8620 = vpack.c.bf16 %v8604, %v8603
        %8621 = vst [vmem:[#allocation3 + $0x10] sm:$0xff] %v8605
        %8622 = vst [vmem:[#allocation3 + $0x18] sm:$0xff] %v8606
        %8623 = vst [vmem:[#allocation3 + $0x20] sm:$0xff] %v8607
        %8624 = vst [vmem:[#allocation3 + $0x28] sm:$0xff] %v8608
        %8625 = vst [vmem:[#allocation3 + $0x30] sm:$0xff] %v8609
        %8626 = vst [vmem:[#allocation3 + $0x38] sm:$0xff] %v8610
        %8627 = vst [vmem:[#allocation3 + $0x40] sm:$0xff] %v8611
        %8628 = vst [vmem:[#allocation3 + $0x48] sm:$0xff] %v8612
        %8629 = vst [vmem:[#allocation3 + $0x50] sm:$0xff] %v8613
        %8630 = vst [vmem:[#allocation3 + $0x58] sm:$0xff] %v8614
        %8631 = vst [vmem:[#allocation3 + $0x60] sm:$0xff] %v8615
        %8632 = vst [vmem:[#allocation3 + $0x68] sm:$0xff] %v8616
        %8633 = vst [vmem:[#allocation3 + $0x70] sm:$0xff] %v8617
        %8634 = vst [vmem:[#allocation3 + $0x78] sm:$0xff] %v8618
        %8635 = vst [vmem:[#allocation3 + $0x80] sm:$0xff] %v8619
        %8636 = vst [vmem:[#allocation3 + $0x88] sm:$0xff] %v8620
        %v8637 = vld [vmem:[#allocation3] sm:$0xff]
        %v8638 = vld [vmem:[#allocation3 + $0x8] sm:$0xff]
        %v8639 = vld [vmem:[#allocation3 + $0x10] sm:$0xff]
        %v8640 = vld [vmem:[#allocation3 + $0x18] sm:$0xff]
        %v8641 = vld [vmem:[#allocation3 + $0x20] sm:$0xff]
        %v8642 = vld [vmem:[#allocation3 + $0x28] sm:$0xff]
        %v8643 = vld [vmem:[#allocation3 + $0x30] sm:$0xff]
        %v8644 = vld [vmem:[#allocation3 + $0x38] sm:$0xff]
        %v8645 = vld [vmem:[#allocation3 + $0x40] sm:$0xff]
        %v8646 = vld [vmem:[#allocation3 + $0x48] sm:$0xff]
        %v8647 = vld [vmem:[#allocation3 + $0x50] sm:$0xff]
        %v8648 = vld [vmem:[#allocation3 + $0x58] sm:$0xff]
        %v8649 = vld [vmem:[#allocation3 + $0x60] sm:$0xff]
        %v8650 = vld [vmem:[#allocation3 + $0x68] sm:$0xff]
        %v8651 = vld [vmem:[#allocation3 + $0x70] sm:$0xff]
        %v8652 = vld [vmem:[#allocation3 + $0x78] sm:$0xff]
        %v8653 = vld [vmem:[#allocation3 + $0x80] sm:$0xff]
        %v8654 = vld [vmem:[#allocation3 + $0x88] sm:$0xf]
        %v8655 = vld [vmem:[%s3] sm:$0xff]
        %v8656 = vld [vmem:[%s3 + $0x8] sm:$0xf]
        %v8657 = vld [vmem:[%s3 + $0xc] sm:$0xff]
        %v8658 = vld [vmem:[%s3 + $0x14] sm:$0xf]
        %v8659 = vld [vmem:[%s3 + $0x18] sm:$0xff]
        %v8660 = vld [vmem:[%s3 + $0x20] sm:$0xf]
        %v8661 = vld [vmem:[%s3 + $0x24] sm:$0xff]
        %v8662 = vld [vmem:[%s3 + $0x2c] sm:$0xf]
        %v8663 = vld [vmem:[%s3 + $0x30] sm:$0xff]
        %v8664 = vld [vmem:[%s3 + $0x38] sm:$0xf]
        %v8665 = vld [vmem:[%s3 + $0x3c] sm:$0xff]
        %v8666 = vld [vmem:[%s3 + $0x44] sm:$0xf]
        %v8667 = vld [vmem:[%s3 + $0x48] sm:$0xff]
        %v8668 = vld [vmem:[%s3 + $0x50] sm:$0xf]
        %v8669 = vld [vmem:[%s3 + $0x54] sm:$0xff]
        %v8670 = vld [vmem:[%s3 + $0x5c] sm:$0xf]
        %v8671 = vld [vmem:[%s3 + $0x60] sm:$0xff]
        %v8672 = vld [vmem:[%s3 + $0x68] sm:$0xf]
        %v8673 = vld [vmem:[%s3 + $0x6c] sm:$0xff]
        %v8674 = vld [vmem:[%s3 + $0x74] sm:$0xf]
        %v8675 = vld [vmem:[%s3 + $0x78] sm:$0xff]
        %v8676 = vld [vmem:[%s3 + $0x80] sm:$0xf]
        %v8677 = vld [vmem:[%s3 + $0x84] sm:$0xff]
        %v8678 = vld [vmem:[%s3 + $0x8c] sm:$0xf]
        %v8679 = vld [vmem:[%s3 + $0x90] sm:$0xff]
        %v8680 = vld [vmem:[%s3 + $0x98] sm:$0xf]
        %v8681 = vld [vmem:[%s3 + $0x9c] sm:$0xff]
        %v8682 = vld [vmem:[%s3 + $0xa4] sm:$0xf]
        %v8683 = vld [vmem:[%s3 + $0xa8] sm:$0xff]
        %v8684 = vld [vmem:[%s3 + $0xb0] sm:$0xf]
        %v8685 = vld [vmem:[%s3 + $0xb4] sm:$0xff]
        %v8686 = vld [vmem:[%s3 + $0xbc] sm:$0xf]
        %v8687 = vld [vmem:[#allocation3 + $0x88] sm:$0xff]
        %v8688 = vld [vmem:[#allocation3 + $0x90] sm:$0xf]
        %s8689 = scalar_lea.vmem %s3, 192
        %v8690 = vld [vmem:[%s8689] sm:$0xff]
        %v8691 = vld [vmem:[%s8689 + $0x8] sm:$0xf]
        %v8692 = vld [vmem:[%s8689 + $0xc] sm:$0xff]
        %v8693 = vld [vmem:[%s8689 + $0x14] sm:$0xf]
        %v8694 = vld [vmem:[%s8689 + $0x18] sm:$0xff]
        %v8695 = vld [vmem:[%s8689 + $0x20] sm:$0xf]
        %v8696 = vld [vmem:[%s8689 + $0x24] sm:$0xff]
        %v8697 = vld [vmem:[%s8689 + $0x2c] sm:$0xf]
        %v8698 = vld [vmem:[%s8689 + $0x30] sm:$0xff]
        %v8699 = vld [vmem:[%s8689 + $0x38] sm:$0xf]
        %v8700 = vld [vmem:[%s8689 + $0x3c] sm:$0xff]
        %v8701 = vld [vmem:[%s8689 + $0x44] sm:$0xf]
        %v8702 = vld [vmem:[%s8689 + $0x48] sm:$0xff]
        %v8703 = vld [vmem:[%s8689 + $0x50] sm:$0xf]
        %v8704 = vld [vmem:[%s8689 + $0x54] sm:$0xff]
        %v8705 = vld [vmem:[%s8689 + $0x5c] sm:$0xf]
        %v8706 = vld [vmem:[%s8689 + $0x60] sm:$0xff]
        %v8707 = vld [vmem:[%s8689 + $0x68] sm:$0xf]
        %v8708 = vld [vmem:[%s8689 + $0x6c] sm:$0xff]
        %v8709 = vld [vmem:[%s8689 + $0x74] sm:$0xf]
        %v8710 = vld [vmem:[%s8689 + $0x78] sm:$0xff]
        %v8711 = vld [vmem:[%s8689 + $0x80] sm:$0xf]
        %v8712 = vld [vmem:[%s8689 + $0x84] sm:$0xff]
        %v8713 = vld [vmem:[%s8689 + $0x8c] sm:$0xf]
        %v8714 = vld [vmem:[%s8689 + $0x90] sm:$0xff]
        %v8715 = vld [vmem:[%s8689 + $0x98] sm:$0xf]
        %v8716 = vld [vmem:[%s8689 + $0x9c] sm:$0xff]
        %v8717 = vld [vmem:[%s8689 + $0xa4] sm:$0xf]
        %v8718 = vld [vmem:[%s8689 + $0xa8] sm:$0xff]
        %v8719 = vld [vmem:[%s8689 + $0xb0] sm:$0xf]
        %v8720 = vld [vmem:[%s8689 + $0xb4] sm:$0xff]
        %v8721 = vld [vmem:[%s8689 + $0xbc] sm:$0xf]
        %v8754 = vunpack.c.l.b16 %v8690
        %v8755 = vunpack.c.h.b16 %v8690
        %v8756 = vunpack.c.l.b16 %v8691
        %v8757 = vunpack.c.l.b16 %v8692
        %v8758 = vunpack.c.h.b16 %v8692
        %v8759 = vunpack.c.l.b16 %v8693
        %v8760 = vunpack.c.l.b16 %v8694
        %v8761 = vunpack.c.h.b16 %v8694
        %v8762 = vunpack.c.l.b16 %v8695
        %v8763 = vunpack.c.l.b16 %v8696
        %v8764 = vunpack.c.h.b16 %v8696
        %v8765 = vunpack.c.l.b16 %v8697
        %v8766 = vunpack.c.l.b16 %v8698
        %v8767 = vunpack.c.h.b16 %v8698
        %v8768 = vunpack.c.l.b16 %v8699
        %v8769 = vunpack.c.l.b16 %v8700
        %v8770 = vunpack.c.h.b16 %v8700
        %v8771 = vunpack.c.l.b16 %v8701
        %v8772 = vunpack.c.l.b16 %v8702
        %v8773 = vunpack.c.h.b16 %v8702
        %v8774 = vunpack.c.l.b16 %v8703
        %v8775 = vunpack.c.l.b16 %v8704
        %v8776 = vunpack.c.h.b16 %v8704
        %v8777 = vunpack.c.l.b16 %v8705
        %v8778 = vunpack.c.l.b16 %v8706
        %v8779 = vunpack.c.h.b16 %v8706
        %v8780 = vunpack.c.l.b16 %v8707
        %v8781 = vunpack.c.l.b16 %v8708
        %v8782 = vunpack.c.h.b16 %v8708
        %v8783 = vunpack.c.l.b16 %v8709
        %v8784 = vunpack.c.l.b16 %v8710
        %v8785 = vunpack.c.h.b16 %v8710
        %v8786 = vunpack.c.l.b16 %v8711
        %v8787 = vunpack.c.l.b16 %v8712
        %v8788 = vunpack.c.h.b16 %v8712
        %v8789 = vunpack.c.l.b16 %v8713
        %v8790 = vunpack.c.l.b16 %v8714
        %v8791 = vunpack.c.h.b16 %v8714
        %v8792 = vunpack.c.l.b16 %v8715
        %v8793 = vunpack.c.l.b16 %v8716
        %v8794 = vunpack.c.h.b16 %v8716
        %v8795 = vunpack.c.l.b16 %v8717
        %v8796 = vunpack.c.l.b16 %v8718
        %v8797 = vunpack.c.h.b16 %v8718
        %v8798 = vunpack.c.l.b16 %v8719
        %v8799 = vunpack.c.l.b16 %v8720
        %v8800 = vunpack.c.h.b16 %v8720
        %v8801 = vunpack.c.l.b16 %v8721
        %v8802 = vpack.c.b16 %v8757, %v8754
        %v8803 = vpack.c.b16 %v8758, %v8755
        %v8804 = vpack.c.b16 %v8759, %v8756
        %v8805 = vpack.c.b16 %v8763, %v8760
        %v8806 = vpack.c.b16 %v8764, %v8761
        %v8807 = vpack.c.b16 %v8765, %v8762
        %v8808 = vpack.c.b16 %v8769, %v8766
        %v8809 = vpack.c.b16 %v8770, %v8767
        %v8810 = vpack.c.b16 %v8771, %v8768
        %v8811 = vpack.c.b16 %v8775, %v8772
        %v8812 = vpack.c.b16 %v8776, %v8773
        %v8813 = vpack.c.b16 %v8777, %v8774
        %v8814 = vpack.c.b16 %v8781, %v8778
        %v8815 = vpack.c.b16 %v8782, %v8779
        %v8816 = vpack.c.b16 %v8783, %v8780
        %v8817 = vpack.c.b16 %v8787, %v8784
        %v8818 = vpack.c.b16 %v8788, %v8785
        %v8819 = vpack.c.b16 %v8789, %v8786
        %v8820 = vpack.c.b16 %v8793, %v8790
        %v8821 = vpack.c.b16 %v8794, %v8791
        %v8822 = vpack.c.b16 %v8795, %v8792
        %v8823 = vpack.c.b16 %v8799, %v8796
        %v8824 = vpack.c.b16 %v8800, %v8797
        %v8825 = vpack.c.b16 %v8801, %v8798
        %8850 = vmatprep.subr.bf16.mxu0 %v8803
        %8851 = vmatpush1.bf16.msra.mxu0 %v8802
        %8852 = vmatprep.subr.bf16.mxu0 %v8806
        %8853 = vmatpush1.bf16.msra.mxu0 %v8805
        %8854 = vmatprep.subr.bf16.mxu0 %v8809
        %8855 = vmatpush1.bf16.msra.mxu0 %v8808
        %8856 = vmatprep.subr.bf16.mxu0 %v8812
        %8857 = vmatpush1.bf16.msra.mxu0 %v8811
        %8858 = vmatprep.subr.bf16.mxu0 %v8815
        %8859 = vmatpush1.bf16.msra.mxu0 %v8814
        %8860 = vmatprep.subr.bf16.mxu0 %v8818
        %8861 = vmatpush1.bf16.msra.mxu0 %v8817
        %8862 = vmatprep.subr.bf16.mxu0 %v8821
        %8863 = vmatpush1.bf16.msra.mxu0 %v8820
        %8864 = vmatprep.subr.bf16.mxu0 %v8824
        %8865 = vmatpush1.bf16.msra.mxu0 %v8823
        %8866 = vmatprep.subr.bf16.mxu0 0
        %8867 = vmatpush1.bf16.msra.mxu0 0
        %8868 = vmatprep.subr.bf16.mxu0 0
        %8869 = vmatpush1.bf16.msra.mxu0 0
        %8870 = vmatprep.subr.bf16.mxu0 0
        %8871 = vmatpush1.bf16.msra.mxu0 0
        %8872 = vmatprep.subr.bf16.mxu0 0
        %8873 = vmatpush1.bf16.msra.mxu0 0
        %8874 = vmatprep.subr.bf16.mxu0 0
        %8875 = vmatpush1.bf16.msra.mxu0 0
        %8876 = vmatprep.subr.bf16.mxu0 0
        %8877 = vmatpush1.bf16.msra.mxu0 0
        %8878 = vmatprep.subr.bf16.mxu0 0
        %8879 = vmatpush1.bf16.msra.mxu0 0
        %8880 = vmatprep.subr.bf16.mxu0 0
        %8881 = vmatpush1.bf16.msra.mxu0 0
        %8882 = vmatprep.mubr.bf16.mxu0 0
        %8883 = vmatmul.mubr.bf16.gmra.mrb[0].mxu0 %v8638
        %v8884 = vpop.f32.mrb[0].mxu0
        %v8885 = vpop.f32.mrb[0].mxu0
        %v8886 = vpop.f32.mrb[0].mxu0
        %v8887 = vadd.f32 0.0, %v8886
        %v8888 = vpop.f32.mrb[0].mxu0
        %8889 = vmatprep.mubr.bf16.mxu0 0
        %8890 = vmatmul.mubr.bf16.gmra.mrb[0].mxu0 %v8639
        %v8891 = vpop.f32.mrb[0].mxu0
        %v8892 = vadd.f32 0.0, %v8891
        %v8893 = vpop.f32.mrb[0].mxu0
        %v8894 = vadd.f32 0.0, %v8893
        %v8895 = vpop.f32.mrb[0].mxu0
        %v8896 = vadd.f32 0.0, %v8895
        %v8897 = vpop.f32.mrb[0].mxu0
        %v8898 = vadd.f32 0.0, %v8897
        %8899 = vmatprep.mubr.bf16.mxu0 0
        %8900 = vmatmul.mubr.bf16.gmra.mrb[0].mxu0 %v8640
        %v8901 = vpop.f32.mrb[0].mxu0
        %v8902 = vadd.f32 0.0, %v8901
        %v8903 = vpop.f32.mrb[0].mxu0
        %v8904 = vadd.f32 0.0, %v8903
        %v8905 = vpop.f32.mrb[0].mxu0
        %v8906 = vadd.f32 0.0, %v8905
        %v8907 = vpop.f32.mrb[0].mxu0
        %v8908 = vadd.f32 0.0, %v8907
        %8909 = vmatprep.mubr.bf16.mxu0 0
        %8910 = vmatmul.mubr.bf16.gmra.mrb[0].mxu0 %v8641
        %v8911 = vpop.f32.mrb[0].mxu0
        %v8912 = vadd.f32 0.0, %v8911
        %v8913 = vpop.f32.mrb[0].mxu0
        %v8914 = vadd.f32 0.0, %v8913
        %v8915 = vpop.f32.mrb[0].mxu0
        %v8916 = vadd.f32 0.0, %v8915
        %v8917 = vpop.f32.mrb[0].mxu0
        %v8918 = vadd.f32 0.0, %v8917
        %8919 = vmatprep.mubr.bf16.mxu0 0
        %8920 = vmatmul.mubr.bf16.gmra.mrb[0].mxu0 %v8642
        %v8921 = vpop.f32.mrb[0].mxu0
        %v8922 = vadd.f32 0.0, %v8921
        %v8923 = vpop.f32.mrb[0].mxu0
        %v8924 = vadd.f32 0.0, %v8923
        %v8925 = vpop.f32.mrb[0].mxu0
        %v8926 = vadd.f32 0.0, %v8925
        %v8927 = vpop.f32.mrb[0].mxu0
        %v8928 = vadd.f32 0.0, %v8927
        %8929 = vmatprep.mubr.bf16.mxu0 0
        %8930 = vmatmul.mubr.bf16.gmra.mrb[0].mxu0 %v8643
        %v8931 = vpop.f32.mrb[0].mxu0
        %v8932 = vadd.f32 0.0, %v8931
        %v8933 = vpop.f32.mrb[0].mxu0
        %v8934 = vadd.f32 0.0, %v8933
        %v8935 = vpop.f32.mrb[0].mxu0
        %v8936 = vadd.f32 0.0, %v8935
        %v8937 = vpop.f32.mrb[0].mxu0
        %v8938 = vadd.f32 0.0, %v8937
        %8939 = vmatprep.mubr.bf16.mxu0 0
        %8940 = vmatmul.mubr.bf16.gmra.mrb[0].mxu0 %v8644
        %v8941 = vpop.f32.mrb[0].mxu0
        %v8942 = vadd.f32 0.0, %v8941
        %v8943 = vpop.f32.mrb[0].mxu0
        %v8944 = vadd.f32 0.0, %v8943
        %v8945 = vpop.f32.mrb[0].mxu0
        %v8946 = vadd.f32 0.0, %v8945
        %v8947 = vpop.f32.mrb[0].mxu0
        %v8948 = vadd.f32 0.0, %v8947
        %8949 = vmatprep.mubr.bf16.mxu0 0
        %8950 = vmatmul.mubr.bf16.gmra.mrb[0].mxu0 %v8645
        %v8951 = vpop.f32.mrb[0].mxu0
        %v8952 = vadd.f32 0.0, %v8951
        %v8953 = vpop.f32.mrb[0].mxu0
        %v8954 = vadd.f32 0.0, %v8953
        %v8955 = vpop.f32.mrb[0].mxu0
        %v8956 = vadd.f32 0.0, %v8955
        %v8957 = vpop.f32.mrb[0].mxu0
        %v8958 = vadd.f32 0.0, %v8957
        %8959 = vmatprep.mubr.bf16.mxu0 0
        %8960 = vmatmul.mubr.bf16.gmra.mrb[0].mxu0 %v8646
        %v8961 = vpop.f32.mrb[0].mxu0
        %v8962 = vadd.f32 0.0, %v8961
        %v8963 = vpop.f32.mrb[0].mxu0
        %v8964 = vadd.f32 0.0, %v8963
        %v8965 = vpop.f32.mrb[0].mxu0
        %v8966 = vadd.f32 0.0, %v8965
        %v8967 = vpop.f32.mrb[0].mxu0
        %v8968 = vadd.f32 0.0, %v8967
        %8969 = vmatprep.mubr.bf16.mxu0 0
        %8970 = vmatmul.mubr.bf16.gmra.mrb[0].mxu0 %v8647
        %v8971 = vpop.f32.mrb[0].mxu0
        %v8972 = vadd.f32 0.0, %v8971
        %v8973 = vpop.f32.mrb[0].mxu0
        %v8974 = vadd.f32 0.0, %v8973
        %v8975 = vpop.f32.mrb[0].mxu0
        %v8976 = vadd.f32 0.0, %v8975
        %v8977 = vpop.f32.mrb[0].mxu0
        %v8978 = vadd.f32 0.0, %v8977
        %8979 = vmatprep.mubr.bf16.mxu0 0
        %8980 = vmatmul.mubr.bf16.gmra.mrb[0].mxu0 %v8648
        %v8981 = vpop.f32.mrb[0].mxu0
        %v8982 = vadd.f32 0.0, %v8981
        %v8983 = vpop.f32.mrb[0].mxu0
        %v8984 = vadd.f32 0.0, %v8983
        %v8985 = vpop.f32.mrb[0].mxu0
        %v8986 = vadd.f32 0.0, %v8985
        %v8987 = vpop.f32.mrb[0].mxu0
        %v8988 = vadd.f32 0.0, %v8987
        %8989 = vmatprep.mubr.bf16.mxu0 0
        %8990 = vmatmul.mubr.bf16.gmra.mrb[0].mxu0 %v8649
        %v8991 = vpop.f32.mrb[0].mxu0
        %v8992 = vadd.f32 0.0, %v8991
        %v8993 = vpop.f32.mrb[0].mxu0
        %v8994 = vadd.f32 0.0, %v8993
        %v8995 = vpop.f32.mrb[0].mxu0
        %v8996 = vadd.f32 0.0, %v8995
        %v8997 = vpop.f32.mrb[0].mxu0
        %v8998 = vadd.f32 0.0, %v8997
        %8999 = vmatprep.mubr.bf16.mxu0 0
        %9000 = vmatmul.mubr.bf16.gmra.mrb[0].mxu0 %v8650
        %v9001 = vpop.f32.mrb[0].mxu0
        %v9002 = vadd.f32 0.0, %v9001
        %v9003 = vpop.f32.mrb[0].mxu0
        %v9004 = vadd.f32 0.0, %v9003
        %v9005 = vpop.f32.mrb[0].mxu0
        %v9006 = vadd.f32 0.0, %v9005
        %v9007 = vpop.f32.mrb[0].mxu0
        %v9008 = vadd.f32 0.0, %v9007
        %9009 = vmatprep.mubr.bf16.mxu0 0
        %9010 = vmatmul.mubr.bf16.gmra.mrb[0].mxu0 %v8651
        %v9011 = vpop.f32.mrb[0].mxu0
        %v9012 = vadd.f32 0.0, %v9011
        %v9013 = vpop.f32.mrb[0].mxu0
        %v9014 = vadd.f32 0.0, %v9013
        %v9015 = vpop.f32.mrb[0].mxu0
        %v9016 = vadd.f32 0.0, %v9015
        %v9017 = vpop.f32.mrb[0].mxu0
        %v9018 = vadd.f32 0.0, %v9017
        %9019 = vmatprep.mubr.bf16.mxu0 0
        %9020 = vmatmul.mubr.bf16.gmra.mrb[0].mxu0 %v8652
        %v9021 = vpop.f32.mrb[0].mxu0
        %v9022 = vadd.f32 0.0, %v9021
        %v9023 = vpop.f32.mrb[0].mxu0
        %v9024 = vadd.f32 0.0, %v9023
        %v9025 = vpop.f32.mrb[0].mxu0
        %v9026 = vadd.f32 0.0, %v9025
        %v9027 = vpop.f32.mrb[0].mxu0
        %v9028 = vadd.f32 0.0, %v9027
        %9029 = vmatprep.mubr.bf16.mxu0 0
        %9030 = vmatmul.mubr.bf16.gmra.mrb[0].mxu0 %v8653
        %v9031 = vpop.f32.mrb[0].mxu0
        %v9032 = vadd.f32 0.0, %v9031
        %v9033 = vpop.f32.mrb[0].mxu0
        %v9034 = vadd.f32 0.0, %v9033
        %v9035 = vpop.f32.mrb[0].mxu0
        %v9036 = vadd.f32 0.0, %v9035
        %v9037 = vpop.f32.mrb[0].mxu0
        %v9038 = vadd.f32 0.0, %v9037
        %9039 = vmatprep.mubr.bf16.mxu0 0
        %9040 = vmatmul.mubr.bf16.gmra.mrb[0].mxu0 %v8687
        %v9041 = vpop.f32.mrb[0].mxu0
        %v9042 = vadd.f32 0.0, %v9041
        %v9043 = vpop.f32.mrb[0].mxu0
        %v9044 = vadd.f32 0.0, %v9043
        %v9045 = vpop.f32.mrb[0].mxu0
        %v9046 = vadd.f32 0.0, %v9045
        %v9047 = vpop.f32.mrb[0].mxu0
        %v9048 = vadd.f32 0.0, %v9047
        %9049 = vmatprep.mubr.bf16.mxu0 0
        %9050 = vmatmul.mubr.bf16.gmra.mrb[0].mxu0 %v8688
        %v9051 = vpop.f32.mrb[0].mxu0
        %v9052 = vpop.f32.mrb[0].mxu0
        %v9053 = vpop.f32.mrb[0].mxu0
        %v9054 = vpop.f32.mrb[0].mxu0
        %9055 = vdwg.mxu0
        %9056 = vmatprep.subr.bf16.mxu0 0
        %9057 = vmatpush1.bf16.msra.mxu0 %v8804
        %9058 = vmatprep.subr.bf16.mxu0 0
        %9059 = vmatpush1.bf16.msra.mxu0 %v8807
        %9060 = vmatprep.subr.bf16.mxu0 0
        %9061 = vmatpush1.bf16.msra.mxu0 %v8810
        %9062 = vmatprep.subr.bf16.mxu0 0
        %9063 = vmatpush1.bf16.msra.mxu0 %v8813
        %9064 = vmatprep.subr.bf16.mxu0 0
        %9065 = vmatpush1.bf16.msra.mxu0 %v8816
        %9066 = vmatprep.subr.bf16.mxu0 0
        %9067 = vmatpush1.bf16.msra.mxu0 %v8819
        %9068 = vmatprep.subr.bf16.mxu0 0
        %9069 = vmatpush1.bf16.msra.mxu0 %v8822
        %9070 = vmatprep.subr.bf16.mxu0 0
        %9071 = vmatpush1.bf16.msra.mxu0 %v8825
        %9072 = vmatprep.subr.bf16.mxu0 0
        %9073 = vmatpush1.bf16.msra.mxu0 0
        %9074 = vmatprep.subr.bf16.mxu0 0
        %9075 = vmatpush1.bf16.msra.mxu0 0
        %9076 = vmatprep.subr.bf16.mxu0 0
        %9077 = vmatpush1.bf16.msra.mxu0 0
        %9078 = vmatprep.subr.bf16.mxu0 0
        %9079 = vmatpush1.bf16.msra.mxu0 0
        %9080 = vmatprep.subr.bf16.mxu0 0
        %9081 = vmatpush1.bf16.msra.mxu0 0
        %9082 = vmatprep.subr.bf16.mxu0 0
        %9083 = vmatpush1.bf16.msra.mxu0 0
        %9084 = vmatprep.subr.bf16.mxu0 0
        %9085 = vmatpush1.bf16.msra.mxu0 0
        %9086 = vmatprep.subr.bf16.mxu0 0
        %9087 = vmatpush1.bf16.msra.mxu0 0
        %9088 = vmatprep.mubr.bf16.mxu0 0
        %9089 = vmatmul.mubr.bf16.gmra.mrb[0].mxu0 %v8638
        %v9090 = vpop.f32.mrb[0].mxu0
        %v9091 = vpop.f32.mrb[0].mxu0
        %v9092 = vpop.f32.mrb[0].mxu0
        %v9093 = vpop.f32.mrb[0].mxu0
        %9094 = vmatprep.mubr.bf16.mxu0 0
        %9095 = vmatmul.mubr.bf16.gmra.mrb[0].mxu0 %v8639
        %v9096 = vpop.f32.mrb[0].mxu0
        %v9097 = vadd.f32 0.0, %v9096
        %v9098 = vpop.f32.mrb[0].mxu0
        %v9099 = vpop.f32.mrb[0].mxu0
        %v9100 = vadd.f32 0.0, %v9099
        %v9101 = vpop.f32.mrb[0].mxu0
        %9102 = vmatprep.mubr.bf16.mxu0 0
        %9103 = vmatmul.mubr.bf16.gmra.mrb[0].mxu0 %v8640
        %v9104 = vpop.f32.mrb[0].mxu0
        %v9105 = vadd.f32 0.0, %v9104
        %v9106 = vpop.f32.mrb[0].mxu0
        %v9107 = vpop.f32.mrb[0].mxu0
        %v9108 = vadd.f32 0.0, %v9107
        %v9109 = vpop.f32.mrb[0].mxu0
        %9110 = vmatprep.mubr.bf16.mxu0 0
        %9111 = vmatmul.mubr.bf16.gmra.mrb[0].mxu0 %v8641
        %v9112 = vpop.f32.mrb[0].mxu0
        %v9113 = vadd.f32 0.0, %v9112
        %v9114 = vpop.f32.mrb[0].mxu0
        %v9115 = vpop.f32.mrb[0].mxu0
        %v9116 = vadd.f32 0.0, %v9115
        %v9117 = vpop.f32.mrb[0].mxu0
        %9118 = vmatprep.mubr.bf16.mxu0 0
        %9119 = vmatmul.mubr.bf16.gmra.mrb[0].mxu0 %v8642
        %v9120 = vpop.f32.mrb[0].mxu0
        %v9121 = vadd.f32 0.0, %v9120
        %v9122 = vpop.f32.mrb[0].mxu0
        %v9123 = vpop.f32.mrb[0].mxu0
        %v9124 = vadd.f32 0.0, %v9123
        %v9125 = vpop.f32.mrb[0].mxu0
        %9126 = vmatprep.mubr.bf16.mxu0 0
        %9127 = vmatmul.mubr.bf16.gmra.mrb[0].mxu0 %v8643
        %v9128 = vpop.f32.mrb[0].mxu0
        %v9129 = vadd.f32 0.0, %v9128
        %v9130 = vpop.f32.mrb[0].mxu0
        %v9131 = vpop.f32.mrb[0].mxu0
        %v9132 = vadd.f32 0.0, %v9131
        %v9133 = vpop.f32.mrb[0].mxu0
        %9134 = vmatprep.mubr.bf16.mxu0 0
        %9135 = vmatmul.mubr.bf16.gmra.mrb[0].mxu0 %v8644
        %v9136 = vpop.f32.mrb[0].mxu0
        %v9137 = vadd.f32 0.0, %v9136
        %v9138 = vpop.f32.mrb[0].mxu0
        %v9139 = vpop.f32.mrb[0].mxu0
        %v9140 = vadd.f32 0.0, %v9139
        %v9141 = vpop.f32.mrb[0].mxu0
        %9142 = vmatprep.mubr.bf16.mxu0 0
        %9143 = vmatmul.mubr.bf16.gmra.mrb[0].mxu0 %v8645
        %v9144 = vpop.f32.mrb[0].mxu0
        %v9145 = vadd.f32 0.0, %v9144
        %v9146 = vpop.f32.mrb[0].mxu0
        %v9147 = vpop.f32.mrb[0].mxu0
        %v9148 = vadd.f32 0.0, %v9147
        %v9149 = vpop.f32.mrb[0].mxu0
        %9150 = vmatprep.mubr.bf16.mxu0 0
        %9151 = vmatmul.mubr.bf16.gmra.mrb[0].mxu0 %v8646
        %v9152 = vpop.f32.mrb[0].mxu0
        %v9153 = vadd.f32 0.0, %v9152
        %v9154 = vpop.f32.mrb[0].mxu0
        %v9155 = vpop.f32.mrb[0].mxu0
        %v9156 = vadd.f32 0.0, %v9155
        %v9157 = vpop.f32.mrb[0].mxu0
        %9158 = vmatprep.mubr.bf16.mxu0 0
        %9159 = vmatmul.mubr.bf16.gmra.mrb[0].mxu0 %v8647
        %v9160 = vpop.f32.mrb[0].mxu0
        %v9161 = vadd.f32 0.0, %v9160
        %v9162 = vpop.f32.mrb[0].mxu0
        %v9163 = vpop.f32.mrb[0].mxu0
        %v9164 = vadd.f32 0.0, %v9163
        %v9165 = vpop.f32.mrb[0].mxu0
        %9166 = vmatprep.mubr.bf16.mxu0 0
        %9167 = vmatmul.mubr.bf16.gmra.mrb[0].mxu0 %v8648
        %v9168 = vpop.f32.mrb[0].mxu0
        %v9169 = vadd.f32 0.0, %v9168
        %v9170 = vpop.f32.mrb[0].mxu0
        %v9171 = vpop.f32.mrb[0].mxu0
        %v9172 = vadd.f32 0.0, %v9171
        %v9173 = vpop.f32.mrb[0].mxu0
        %9174 = vmatprep.mubr.bf16.mxu0 0
        %9175 = vmatmul.mubr.bf16.gmra.mrb[0].mxu0 %v8649
        %v9176 = vpop.f32.mrb[0].mxu0
        %v9177 = vadd.f32 0.0, %v9176
        %v9178 = vpop.f32.mrb[0].mxu0
        %v9179 = vpop.f32.mrb[0].mxu0
        %v9180 = vadd.f32 0.0, %v9179
        %v9181 = vpop.f32.mrb[0].mxu0
        %9182 = vmatprep.mubr.bf16.mxu0 0
        %9183 = vmatmul.mubr.bf16.gmra.mrb[0].mxu0 %v8650
        %v9184 = vpop.f32.mrb[0].mxu0
        %v9185 = vadd.f32 0.0, %v9184
        %v9186 = vpop.f32.mrb[0].mxu0
        %v9187 = vpop.f32.mrb[0].mxu0
        %v9188 = vadd.f32 0.0, %v9187
        %v9189 = vpop.f32.mrb[0].mxu0
        %9190 = vmatprep.mubr.bf16.mxu0 0
        %9191 = vmatmul.mubr.bf16.gmra.mrb[0].mxu0 %v8651
        %v9192 = vpop.f32.mrb[0].mxu0
        %v9193 = vadd.f32 0.0, %v9192
        %v9194 = vpop.f32.mrb[0].mxu0
        %v9195 = vpop.f32.mrb[0].mxu0
        %v9196 = vadd.f32 0.0, %v9195
        %v9197 = vpop.f32.mrb[0].mxu0
        %9198 = vmatprep.mubr.bf16.mxu0 0
        %9199 = vmatmul.mubr.bf16.gmra.mrb[0].mxu0 %v8652
        %v9200 = vpop.f32.mrb[0].mxu0
        %v9201 = vadd.f32 0.0, %v9200
        %v9202 = vpop.f32.mrb[0].mxu0
        %v9203 = vpop.f32.mrb[0].mxu0
        %v9204 = vadd.f32 0.0, %v9203
        %v9205 = vpop.f32.mrb[0].mxu0
        %9206 = vmatprep.mubr.bf16.mxu0 0
        %9207 = vmatmul.mubr.bf16.gmra.mrb[0].mxu0 %v8653
        %v9208 = vpop.f32.mrb[0].mxu0
        %v9209 = vadd.f32 0.0, %v9208
        %v9210 = vpop.f32.mrb[0].mxu0
        %v9211 = vpop.f32.mrb[0].mxu0
        %v9212 = vadd.f32 0.0, %v9211
        %v9213 = vpop.f32.mrb[0].mxu0
        %9214 = vmatprep.mubr.bf16.mxu0 0
        %9215 = vmatmul.mubr.bf16.gmra.mrb[0].mxu0 %v8687
        %v9216 = vpop.f32.mrb[0].mxu0
        %v9217 = vadd.f32 0.0, %v9216
        %v9218 = vpop.f32.mrb[0].mxu0
        %v9219 = vpop.f32.mrb[0].mxu0
        %v9220 = vadd.f32 0.0, %v9219
        %v9221 = vpop.f32.mrb[0].mxu0
        %9222 = vmatprep.mubr.bf16.mxu0 0
        %9223 = vmatmul.mubr.bf16.gmra.mrb[0].mxu0 %v8688
        %v9224 = vpop.f32.mrb[0].mxu0
        %v9225 = vadd.f32 0.0, %v9224
        %v9226 = vpop.f32.mrb[0].mxu0
        %v9227 = vpop.f32.mrb[0].mxu0
        %v9228 = vpop.f32.mrb[0].mxu0
        %9229 = vdwg.mxu0
        %v9262 = vunpack.c.l.b16 %v8655
        %v9263 = vunpack.c.h.b16 %v8655
        %v9264 = vunpack.c.l.b16 %v8656
        %v9265 = vunpack.c.l.b16 %v8657
        %v9266 = vunpack.c.h.b16 %v8657
        %v9267 = vunpack.c.l.b16 %v8658
        %v9268 = vunpack.c.l.b16 %v8659
        %v9269 = vunpack.c.h.b16 %v8659
        %v9270 = vunpack.c.l.b16 %v8660
        %v9271 = vunpack.c.l.b16 %v8661
        %v9272 = vunpack.c.h.b16 %v8661
        %v9273 = vunpack.c.l.b16 %v8662
        %v9274 = vunpack.c.l.b16 %v8663
        %v9275 = vunpack.c.h.b16 %v8663
        %v9276 = vunpack.c.l.b16 %v8664
        %v9277 = vunpack.c.l.b16 %v8665
        %v9278 = vunpack.c.h.b16 %v8665
        %v9279 = vunpack.c.l.b16 %v8666
        %v9280 = vunpack.c.l.b16 %v8667
        %v9281 = vunpack.c.h.b16 %v8667
        %v9282 = vunpack.c.l.b16 %v8668
        %v9283 = vunpack.c.l.b16 %v8669
        %v9284 = vunpack.c.h.b16 %v8669
        %v9285 = vunpack.c.l.b16 %v8670
        %v9286 = vunpack.c.l.b16 %v8671
        %v9287 = vunpack.c.h.b16 %v8671
        %v9288 = vunpack.c.l.b16 %v8672
        %v9289 = vunpack.c.l.b16 %v8673
        %v9290 = vunpack.c.h.b16 %v8673
        %v9291 = vunpack.c.l.b16 %v8674
        %v9292 = vunpack.c.l.b16 %v8675
        %v9293 = vunpack.c.h.b16 %v8675
        %v9294 = vunpack.c.l.b16 %v8676
        %v9295 = vunpack.c.l.b16 %v8677
        %v9296 = vunpack.c.h.b16 %v8677
        %v9297 = vunpack.c.l.b16 %v8678
        %v9298 = vunpack.c.l.b16 %v8679
        %v9299 = vunpack.c.h.b16 %v8679
        %v9300 = vunpack.c.l.b16 %v8680
        %v9301 = vunpack.c.l.b16 %v8681
        %v9302 = vunpack.c.h.b16 %v8681
        %v9303 = vunpack.c.l.b16 %v8682
        %v9304 = vunpack.c.l.b16 %v8683
        %v9305 = vunpack.c.h.b16 %v8683
        %v9306 = vunpack.c.l.b16 %v8684
        %v9307 = vunpack.c.l.b16 %v8685
        %v9308 = vunpack.c.h.b16 %v8685
        %v9309 = vunpack.c.l.b16 %v8686
        %v9310 = vpack.c.b16 %v9265, %v9262
        %v9311 = vpack.c.b16 %v9266, %v9263
        %v9312 = vpack.c.b16 %v9267, %v9264
        %v9313 = vpack.c.b16 %v9271, %v9268
        %v9314 = vpack.c.b16 %v9272, %v9269
        %v9315 = vpack.c.b16 %v9273, %v9270
        %v9316 = vpack.c.b16 %v9277, %v9274
        %v9317 = vpack.c.b16 %v9278, %v9275
        %v9318 = vpack.c.b16 %v9279, %v9276
        %v9319 = vpack.c.b16 %v9283, %v9280
        %v9320 = vpack.c.b16 %v9284, %v9281
        %v9321 = vpack.c.b16 %v9285, %v9282
        %v9322 = vpack.c.b16 %v9289, %v9286
        %v9323 = vpack.c.b16 %v9290, %v9287
        %v9324 = vpack.c.b16 %v9291, %v9288
        %v9325 = vpack.c.b16 %v9295, %v9292
        %v9326 = vpack.c.b16 %v9296, %v9293
        %v9327 = vpack.c.b16 %v9297, %v9294
        %v9328 = vpack.c.b16 %v9301, %v9298
        %v9329 = vpack.c.b16 %v9302, %v9299
        %v9330 = vpack.c.b16 %v9303, %v9300
        %v9331 = vpack.c.b16 %v9307, %v9304
        %v9332 = vpack.c.b16 %v9308, %v9305
        %v9333 = vpack.c.b16 %v9309, %v9306
        %9358 = vmatprep.subr.bf16.mxu0 %v9311
        %9359 = vmatpush1.bf16.msra.mxu0 %v9310
        %9360 = vmatprep.subr.bf16.mxu0 %v9314
        %9361 = vmatpush1.bf16.msra.mxu0 %v9313
        %9362 = vmatprep.subr.bf16.mxu0 %v9317
        %9363 = vmatpush1.bf16.msra.mxu0 %v9316
        %9364 = vmatprep.subr.bf16.mxu0 %v9320
        %9365 = vmatpush1.bf16.msra.mxu0 %v9319
        %9366 = vmatprep.subr.bf16.mxu0 %v9323
        %9367 = vmatpush1.bf16.msra.mxu0 %v9322
        %9368 = vmatprep.subr.bf16.mxu0 %v9326
        %9369 = vmatpush1.bf16.msra.mxu0 %v9325
        %9370 = vmatprep.subr.bf16.mxu0 %v9329
        %9371 = vmatpush1.bf16.msra.mxu0 %v9328
        %9372 = vmatprep.subr.bf16.mxu0 %v9332
        %9373 = vmatpush1.bf16.msra.mxu0 %v9331
        %9374 = vmatprep.subr.bf16.mxu0 0
        %9375 = vmatpush1.bf16.msra.mxu0 0
        %9376 = vmatprep.subr.bf16.mxu0 0
        %9377 = vmatpush1.bf16.msra.mxu0 0
        %9378 = vmatprep.subr.bf16.mxu0 0
        %9379 = vmatpush1.bf16.msra.mxu0 0
        %9380 = vmatprep.subr.bf16.mxu0 0
        %9381 = vmatpush1.bf16.msra.mxu0 0
        %9382 = vmatprep.subr.bf16.mxu0 0
        %9383 = vmatpush1.bf16.msra.mxu0 0
        %9384 = vmatprep.subr.bf16.mxu0 0
        %9385 = vmatpush1.bf16.msra.mxu0 0
        %9386 = vmatprep.subr.bf16.mxu0 0
        %9387 = vmatpush1.bf16.msra.mxu0 0
        %9388 = vmatprep.subr.bf16.mxu0 0
        %9389 = vmatpush1.bf16.msra.mxu0 0
        %9390 = vmatprep.mubr.bf16.mxu0 0
        %9391 = vmatmul.mubr.bf16.gmra.mrb[0].mxu0 %v8637
        %v9392 = vpop.f32.mrb[0].mxu0
        %v9393 = vpop.f32.mrb[0].mxu0
        %v9394 = vpop.f32.mrb[0].mxu0
        %v9395 = vadd.f32 %v8887, %v9394
        %v9396 = vpop.f32.mrb[0].mxu0
        %9397 = vmatprep.mubr.bf16.mxu0 0
        %9398 = vmatmul.mubr.bf16.gmra.mrb[0].mxu0 %v8638
        %v9399 = vpop.f32.mrb[0].mxu0
        %v9400 = vadd.f32 %v8892, %v9399
        %v9401 = vpop.f32.mrb[0].mxu0
        %v9402 = vadd.f32 %v8894, %v9401
        %v9403 = vpop.f32.mrb[0].mxu0
        %v9404 = vadd.f32 %v8896, %v9403
        %v9405 = vpop.f32.mrb[0].mxu0
        %v9406 = vadd.f32 %v8898, %v9405
        %9407 = vmatprep.mubr.bf16.mxu0 0
        %9408 = vmatmul.mubr.bf16.gmra.mrb[0].mxu0 %v8639
        %v9409 = vpop.f32.mrb[0].mxu0
        %v9410 = vadd.f32 %v8902, %v9409
        %v9411 = vpop.f32.mrb[0].mxu0
        %v9412 = vadd.f32 %v8904, %v9411
        %v9413 = vpop.f32.mrb[0].mxu0
        %v9414 = vadd.f32 %v8906, %v9413
        %v9415 = vpop.f32.mrb[0].mxu0
        %v9416 = vadd.f32 %v8908, %v9415
        %9417 = vmatprep.mubr.bf16.mxu0 0
        %9418 = vmatmul.mubr.bf16.gmra.mrb[0].mxu0 %v8640
        %v9419 = vpop.f32.mrb[0].mxu0
        %v9420 = vadd.f32 %v8912, %v9419
        %v9421 = vpop.f32.mrb[0].mxu0
        %v9422 = vadd.f32 %v8914, %v9421
        %v9423 = vpop.f32.mrb[0].mxu0
        %v9424 = vadd.f32 %v8916, %v9423
        %v9425 = vpop.f32.mrb[0].mxu0
        %v9426 = vadd.f32 %v8918, %v9425
        %9427 = vmatprep.mubr.bf16.mxu0 0
        %9428 = vmatmul.mubr.bf16.gmra.mrb[0].mxu0 %v8641
        %v9429 = vpop.f32.mrb[0].mxu0
        %v9430 = vadd.f32 %v8922, %v9429
        %v9431 = vpop.f32.mrb[0].mxu0
        %v9432 = vadd.f32 %v8924, %v9431
        %v9433 = vpop.f32.mrb[0].mxu0
        %v9434 = vadd.f32 %v8926, %v9433
        %v9435 = vpop.f32.mrb[0].mxu0
        %v9436 = vadd.f32 %v8928, %v9435
        %9437 = vmatprep.mubr.bf16.mxu0 0
        %9438 = vmatmul.mubr.bf16.gmra.mrb[0].mxu0 %v8642
        %v9439 = vpop.f32.mrb[0].mxu0
        %v9440 = vadd.f32 %v8932, %v9439
        %v9441 = vpop.f32.mrb[0].mxu0
        %v9442 = vadd.f32 %v8934, %v9441
        %v9443 = vpop.f32.mrb[0].mxu0
        %v9444 = vadd.f32 %v8936, %v9443
        %v9445 = vpop.f32.mrb[0].mxu0
        %v9446 = vadd.f32 %v8938, %v9445
        %9447 = vmatprep.mubr.bf16.mxu0 0
        %9448 = vmatmul.mubr.bf16.gmra.mrb[0].mxu0 %v8643
        %v9449 = vpop.f32.mrb[0].mxu0
        %v9450 = vadd.f32 %v8942, %v9449
        %v9451 = vpop.f32.mrb[0].mxu0
        %v9452 = vadd.f32 %v8944, %v9451
        %v9453 = vpop.f32.mrb[0].mxu0
        %v9454 = vadd.f32 %v8946, %v9453
        %v9455 = vpop.f32.mrb[0].mxu0
        %v9456 = vadd.f32 %v8948, %v9455
        %9457 = vmatprep.mubr.bf16.mxu0 0
        %9458 = vmatmul.mubr.bf16.gmra.mrb[0].mxu0 %v8644
        %v9459 = vpop.f32.mrb[0].mxu0
        %v9460 = vadd.f32 %v8952, %v9459
        %v9461 = vpop.f32.mrb[0].mxu0
        %v9462 = vadd.f32 %v8954, %v9461
        %v9463 = vpop.f32.mrb[0].mxu0
        %v9464 = vadd.f32 %v8956, %v9463
        %v9465 = vpop.f32.mrb[0].mxu0
        %v9466 = vadd.f32 %v8958, %v9465
        %9467 = vmatprep.mubr.bf16.mxu0 0
        %9468 = vmatmul.mubr.bf16.gmra.mrb[0].mxu0 %v8645
        %v9469 = vpop.f32.mrb[0].mxu0
        %v9470 = vadd.f32 %v8962, %v9469
        %v9471 = vpop.f32.mrb[0].mxu0
        %v9472 = vadd.f32 %v8964, %v9471
        %v9473 = vpop.f32.mrb[0].mxu0
        %v9474 = vadd.f32 %v8966, %v9473
        %v9475 = vpop.f32.mrb[0].mxu0
        %v9476 = vadd.f32 %v8968, %v9475
        %9477 = vmatprep.mubr.bf16.mxu0 0
        %9478 = vmatmul.mubr.bf16.gmra.mrb[0].mxu0 %v8646
        %v9479 = vpop.f32.mrb[0].mxu0
        %v9480 = vadd.f32 %v8972, %v9479
        %v9481 = vpop.f32.mrb[0].mxu0
        %v9482 = vadd.f32 %v8974, %v9481
        %v9483 = vpop.f32.mrb[0].mxu0
        %v9484 = vadd.f32 %v8976, %v9483
        %v9485 = vpop.f32.mrb[0].mxu0
        %v9486 = vadd.f32 %v8978, %v9485
        %9487 = vmatprep.mubr.bf16.mxu0 0
        %9488 = vmatmul.mubr.bf16.gmra.mrb[0].mxu0 %v8647
        %v9489 = vpop.f32.mrb[0].mxu0
        %v9490 = vadd.f32 %v8982, %v9489
        %v9491 = vpop.f32.mrb[0].mxu0
        %v9492 = vadd.f32 %v8984, %v9491
        %v9493 = vpop.f32.mrb[0].mxu0
        %v9494 = vadd.f32 %v8986, %v9493
        %v9495 = vpop.f32.mrb[0].mxu0
        %v9496 = vadd.f32 %v8988, %v9495
        %9497 = vmatprep.mubr.bf16.mxu0 0
        %9498 = vmatmul.mubr.bf16.gmra.mrb[0].mxu0 %v8648
        %v9499 = vpop.f32.mrb[0].mxu0
        %v9500 = vadd.f32 %v8992, %v9499
        %v9501 = vpop.f32.mrb[0].mxu0
        %v9502 = vadd.f32 %v8994, %v9501
        %v9503 = vpop.f32.mrb[0].mxu0
        %v9504 = vadd.f32 %v8996, %v9503
        %v9505 = vpop.f32.mrb[0].mxu0
        %v9506 = vadd.f32 %v8998, %v9505
        %9507 = vmatprep.mubr.bf16.mxu0 0
        %9508 = vmatmul.mubr.bf16.gmra.mrb[0].mxu0 %v8649
        %v9509 = vpop.f32.mrb[0].mxu0
        %v9510 = vadd.f32 %v9002, %v9509
        %v9511 = vpop.f32.mrb[0].mxu0
        %v9512 = vadd.f32 %v9004, %v9511
        %v9513 = vpop.f32.mrb[0].mxu0
        %v9514 = vadd.f32 %v9006, %v9513
        %v9515 = vpop.f32.mrb[0].mxu0
        %v9516 = vadd.f32 %v9008, %v9515
        %9517 = vmatprep.mubr.bf16.mxu0 0
        %9518 = vmatmul.mubr.bf16.gmra.mrb[0].mxu0 %v8650
        %v9519 = vpop.f32.mrb[0].mxu0
        %v9520 = vadd.f32 %v9012, %v9519
        %v9521 = vpop.f32.mrb[0].mxu0
        %v9522 = vadd.f32 %v9014, %v9521
        %v9523 = vpop.f32.mrb[0].mxu0
        %v9524 = vadd.f32 %v9016, %v9523
        %v9525 = vpop.f32.mrb[0].mxu0
        %v9526 = vadd.f32 %v9018, %v9525
        %9527 = vmatprep.mubr.bf16.mxu0 0
        %9528 = vmatmul.mubr.bf16.gmra.mrb[0].mxu0 %v8651
        %v9529 = vpop.f32.mrb[0].mxu0
        %v9530 = vadd.f32 %v9022, %v9529
        %v9531 = vpop.f32.mrb[0].mxu0
        %v9532 = vadd.f32 %v9024, %v9531
        %v9533 = vpop.f32.mrb[0].mxu0
        %v9534 = vadd.f32 %v9026, %v9533
        %v9535 = vpop.f32.mrb[0].mxu0
        %v9536 = vadd.f32 %v9028, %v9535
        %9537 = vmatprep.mubr.bf16.mxu0 0
        %9538 = vmatmul.mubr.bf16.gmra.mrb[0].mxu0 %v8652
        %v9539 = vpop.f32.mrb[0].mxu0
        %v9540 = vadd.f32 %v9032, %v9539
        %v9541 = vpop.f32.mrb[0].mxu0
        %v9542 = vadd.f32 %v9034, %v9541
        %v9543 = vpop.f32.mrb[0].mxu0
        %v9544 = vadd.f32 %v9036, %v9543
        %v9545 = vpop.f32.mrb[0].mxu0
        %v9546 = vadd.f32 %v9038, %v9545
        %9547 = vmatprep.mubr.bf16.mxu0 0
        %9548 = vmatmul.mubr.bf16.gmra.mrb[0].mxu0 %v8653
        %v9549 = vpop.f32.mrb[0].mxu0
        %v9550 = vadd.f32 %v9042, %v9549
        %v9551 = vpop.f32.mrb[0].mxu0
        %v9552 = vadd.f32 %v9044, %v9551
        %v9553 = vpop.f32.mrb[0].mxu0
        %v9554 = vadd.f32 %v9046, %v9553
        %v9555 = vpop.f32.mrb[0].mxu0
        %v9556 = vadd.f32 %v9048, %v9555
        %9557 = vmatprep.mubr.bf16.mxu0 0
        %9558 = vmatmul.mubr.bf16.gmra.mrb[0].mxu0 %v8654
        %v9559 = vpop.f32.mrb[0].mxu0
        %v9560 = vpop.f32.mrb[0].mxu0
        %v9561 = vpop.f32.mrb[0].mxu0
        %v9562 = vpop.f32.mrb[0].mxu0
        %9563 = vdwg.mxu0
        %9564 = vmatprep.subr.bf16.mxu0 0
        %9565 = vmatpush1.bf16.msra.mxu0 %v9312
        %9566 = vmatprep.subr.bf16.mxu0 0
        %9567 = vmatpush1.bf16.msra.mxu0 %v9315
        %9568 = vmatprep.subr.bf16.mxu0 0
        %9569 = vmatpush1.bf16.msra.mxu0 %v9318
        %9570 = vmatprep.subr.bf16.mxu0 0
        %9571 = vmatpush1.bf16.msra.mxu0 %v9321
        %9572 = vmatprep.subr.bf16.mxu0 0
        %9573 = vmatpush1.bf16.msra.mxu0 %v9324
        %9574 = vmatprep.subr.bf16.mxu0 0
        %9575 = vmatpush1.bf16.msra.mxu0 %v9327
        %9576 = vmatprep.subr.bf16.mxu0 0
        %9577 = vmatpush1.bf16.msra.mxu0 %v9330
        %9578 = vmatprep.subr.bf16.mxu0 0
        %9579 = vmatpush1.bf16.msra.mxu0 %v9333
        %9580 = vmatprep.subr.bf16.mxu0 0
        %9581 = vmatpush1.bf16.msra.mxu0 0
        %9582 = vmatprep.subr.bf16.mxu0 0
        %9583 = vmatpush1.bf16.msra.mxu0 0
        %9584 = vmatprep.subr.bf16.mxu0 0
        %9585 = vmatpush1.bf16.msra.mxu0 0
        %9586 = vmatprep.subr.bf16.mxu0 0
        %9587 = vmatpush1.bf16.msra.mxu0 0
        %9588 = vmatprep.subr.bf16.mxu0 0
        %9589 = vmatpush1.bf16.msra.mxu0 0
        %9590 = vmatprep.subr.bf16.mxu0 0
        %9591 = vmatpush1.bf16.msra.mxu0 0
        %9592 = vmatprep.subr.bf16.mxu0 0
        %9593 = vmatpush1.bf16.msra.mxu0 0
        %9594 = vmatprep.subr.bf16.mxu0 0
        %9595 = vmatpush1.bf16.msra.mxu0 0
        %9596 = vmatprep.mubr.bf16.mxu0 0
        %9597 = vmatmul.mubr.bf16.gmra.mrb[0].mxu0 %v8637
        %v9598 = vpop.f32.mrb[0].mxu0
        %v9599 = vpop.f32.mrb[0].mxu0
        %v9600 = vpop.f32.mrb[0].mxu0
        %v9601 = vpop.f32.mrb[0].mxu0
        %9602 = vmatprep.mubr.bf16.mxu0 0
        %9603 = vmatmul.mubr.bf16.gmra.mrb[0].mxu0 %v8638
        %v9604 = vpop.f32.mrb[0].mxu0
        %v9605 = vadd.f32 %v9097, %v9604
        %v9606 = vpop.f32.mrb[0].mxu0
        %v9607 = vpop.f32.mrb[0].mxu0
        %v9608 = vadd.f32 %v9100, %v9607
        %v9609 = vpop.f32.mrb[0].mxu0
        %9610 = vmatprep.mubr.bf16.mxu0 0
        %9611 = vmatmul.mubr.bf16.gmra.mrb[0].mxu0 %v8639
        %v9612 = vpop.f32.mrb[0].mxu0
        %v9613 = vadd.f32 %v9105, %v9612
        %v9614 = vpop.f32.mrb[0].mxu0
        %v9615 = vpop.f32.mrb[0].mxu0
        %v9616 = vadd.f32 %v9108, %v9615
        %v9617 = vpop.f32.mrb[0].mxu0
        %9618 = vmatprep.mubr.bf16.mxu0 0
        %9619 = vmatmul.mubr.bf16.gmra.mrb[0].mxu0 %v8640
        %v9620 = vpop.f32.mrb[0].mxu0
        %v9621 = vadd.f32 %v9113, %v9620
        %v9622 = vpop.f32.mrb[0].mxu0
        %v9623 = vpop.f32.mrb[0].mxu0
        %v9624 = vadd.f32 %v9116, %v9623
        %v9625 = vpop.f32.mrb[0].mxu0
        %9626 = vmatprep.mubr.bf16.mxu0 0
        %9627 = vmatmul.mubr.bf16.gmra.mrb[0].mxu0 %v8641
        %v9628 = vpop.f32.mrb[0].mxu0
        %v9629 = vadd.f32 %v9121, %v9628
        %v9630 = vpop.f32.mrb[0].mxu0
        %v9631 = vpop.f32.mrb[0].mxu0
        %v9632 = vadd.f32 %v9124, %v9631
        %v9633 = vpop.f32.mrb[0].mxu0
        %9634 = vmatprep.mubr.bf16.mxu0 0
        %9635 = vmatmul.mubr.bf16.gmra.mrb[0].mxu0 %v8642
        %v9636 = vpop.f32.mrb[0].mxu0
        %v9637 = vadd.f32 %v9129, %v9636
        %v9638 = vpop.f32.mrb[0].mxu0
        %v9639 = vpop.f32.mrb[0].mxu0
        %v9640 = vadd.f32 %v9132, %v9639
        %v9641 = vpop.f32.mrb[0].mxu0
        %9642 = vmatprep.mubr.bf16.mxu0 0
        %9643 = vmatmul.mubr.bf16.gmra.mrb[0].mxu0 %v8643
        %v9644 = vpop.f32.mrb[0].mxu0
        %v9645 = vadd.f32 %v9137, %v9644
        %v9646 = vpop.f32.mrb[0].mxu0
        %v9647 = vpop.f32.mrb[0].mxu0
        %v9648 = vadd.f32 %v9140, %v9647
        %v9649 = vpop.f32.mrb[0].mxu0
        %9650 = vmatprep.mubr.bf16.mxu0 0
        %9651 = vmatmul.mubr.bf16.gmra.mrb[0].mxu0 %v8644
        %v9652 = vpop.f32.mrb[0].mxu0
        %v9653 = vadd.f32 %v9145, %v9652
        %v9654 = vpop.f32.mrb[0].mxu0
        %v9655 = vpop.f32.mrb[0].mxu0
        %v9656 = vadd.f32 %v9148, %v9655
        %v9657 = vpop.f32.mrb[0].mxu0
        %9658 = vmatprep.mubr.bf16.mxu0 0
        %9659 = vmatmul.mubr.bf16.gmra.mrb[0].mxu0 %v8645
        %v9660 = vpop.f32.mrb[0].mxu0
        %v9661 = vadd.f32 %v9153, %v9660
        %v9662 = vpop.f32.mrb[0].mxu0
        %v9663 = vpop.f32.mrb[0].mxu0
        %v9664 = vadd.f32 %v9156, %v9663
        %v9665 = vpop.f32.mrb[0].mxu0
        %9666 = vmatprep.mubr.bf16.mxu0 0
        %9667 = vmatmul.mubr.bf16.gmra.mrb[0].mxu0 %v8646
        %v9668 = vpop.f32.mrb[0].mxu0
        %v9669 = vadd.f32 %v9161, %v9668
        %v9670 = vpop.f32.mrb[0].mxu0
        %v9671 = vpop.f32.mrb[0].mxu0
        %v9672 = vadd.f32 %v9164, %v9671
        %v9673 = vpop.f32.mrb[0].mxu0
        %9674 = vmatprep.mubr.bf16.mxu0 0
        %9675 = vmatmul.mubr.bf16.gmra.mrb[0].mxu0 %v8647
        %v9676 = vpop.f32.mrb[0].mxu0
        %v9677 = vadd.f32 %v9169, %v9676
        %v9678 = vpop.f32.mrb[0].mxu0
        %v9679 = vpop.f32.mrb[0].mxu0
        %v9680 = vadd.f32 %v9172, %v9679
        %v9681 = vpop.f32.mrb[0].mxu0
        %9682 = vmatprep.mubr.bf16.mxu0 0
        %9683 = vmatmul.mubr.bf16.gmra.mrb[0].mxu0 %v8648
        %v9684 = vpop.f32.mrb[0].mxu0
        %v9685 = vadd.f32 %v9177, %v9684
        %v9686 = vpop.f32.mrb[0].mxu0
        %v9687 = vpop.f32.mrb[0].mxu0
        %v9688 = vadd.f32 %v9180, %v9687
        %v9689 = vpop.f32.mrb[0].mxu0
        %9690 = vmatprep.mubr.bf16.mxu0 0
        %9691 = vmatmul.mubr.bf16.gmra.mrb[0].mxu0 %v8649
        %v9692 = vpop.f32.mrb[0].mxu0
        %v9693 = vadd.f32 %v9185, %v9692
        %v9694 = vpop.f32.mrb[0].mxu0
        %v9695 = vpop.f32.mrb[0].mxu0
        %v9696 = vadd.f32 %v9188, %v9695
        %v9697 = vpop.f32.mrb[0].mxu0
        %9698 = vmatprep.mubr.bf16.mxu0 0
        %9699 = vmatmul.mubr.bf16.gmra.mrb[0].mxu0 %v8650
        %v9700 = vpop.f32.mrb[0].mxu0
        %v9701 = vadd.f32 %v9193, %v9700
        %v9702 = vpop.f32.mrb[0].mxu0
        %v9703 = vpop.f32.mrb[0].mxu0
        %v9704 = vadd.f32 %v9196, %v9703
        %v9705 = vpop.f32.mrb[0].mxu0
        %9706 = vmatprep.mubr.bf16.mxu0 0
        %9707 = vmatmul.mubr.bf16.gmra.mrb[0].mxu0 %v8651
        %v9708 = vpop.f32.mrb[0].mxu0
        %v9709 = vadd.f32 %v9201, %v9708
        %v9710 = vpop.f32.mrb[0].mxu0
        %v9711 = vpop.f32.mrb[0].mxu0
        %v9712 = vadd.f32 %v9204, %v9711
        %v9713 = vpop.f32.mrb[0].mxu0
        %9714 = vmatprep.mubr.bf16.mxu0 0
        %9715 = vmatmul.mubr.bf16.gmra.mrb[0].mxu0 %v8652
        %v9716 = vpop.f32.mrb[0].mxu0
        %v9717 = vadd.f32 %v9209, %v9716
        %v9718 = vpop.f32.mrb[0].mxu0
        %v9719 = vpop.f32.mrb[0].mxu0
        %v9720 = vadd.f32 %v9212, %v9719
        %v9721 = vpop.f32.mrb[0].mxu0
        %9722 = vmatprep.mubr.bf16.mxu0 0
        %9723 = vmatmul.mubr.bf16.gmra.mrb[0].mxu0 %v8653
        %v9724 = vpop.f32.mrb[0].mxu0
        %v9725 = vadd.f32 %v9217, %v9724
        %v9726 = vpop.f32.mrb[0].mxu0
        %v9727 = vpop.f32.mrb[0].mxu0
        %v9728 = vadd.f32 %v9220, %v9727
        %v9729 = vpop.f32.mrb[0].mxu0
        %9730 = vmatprep.mubr.bf16.mxu0 0
        %9731 = vmatmul.mubr.bf16.gmra.mrb[0].mxu0 %v8654
        %v9732 = vpop.f32.mrb[0].mxu0
        %v9733 = vadd.f32 %v9225, %v9732
        %v9734 = vpop.f32.mrb[0].mxu0
        %v9735 = vpop.f32.mrb[0].mxu0
        %v9736 = vpop.f32.mrb[0].mxu0
        %9737 = vdwg.mxu0
        %v9738 = vld [vmem:[#allocation3 + $0x10] sm:$0xff]
        %v9739 = vld [vmem:[#allocation3 + $0x18] sm:$0xff]
        %v9740 = vld [vmem:[#allocation3 + $0x20] sm:$0xff]
        %v9741 = vld [vmem:[#allocation3 + $0x28] sm:$0xff]
        %v9742 = vld [vmem:[#allocation3 + $0x30] sm:$0xff]
        %v9743 = vld [vmem:[#allocation3 + $0x38] sm:$0xff]
        %v9744 = vld [vmem:[#allocation3 + $0x40] sm:$0xff]
        %v9745 = vld [vmem:[#allocation3 + $0x48] sm:$0xff]
        %v9746 = vld [vmem:[#allocation3 + $0x50] sm:$0xff]
        %v9747 = vld [vmem:[#allocation3 + $0x58] sm:$0xff]
        %v9748 = vld [vmem:[#allocation3 + $0x60] sm:$0xff]
        %v9749 = vld [vmem:[#allocation3 + $0x68] sm:$0xff]
        %v9750 = vld [vmem:[#allocation3 + $0x70] sm:$0xff]
        %v9751 = vld [vmem:[#allocation3 + $0x78] sm:$0xff]
        %v9752 = vld [vmem:[#allocation3 + $0x80] sm:$0xff]
        %v9753 = vld [vmem:[#allocation3 + $0x88] sm:$0xff]
        %v9754 = vld [vmem:[#allocation3 + $0x90] sm:$0xff]
        %v9755 = vld [vmem:[#allocation3 + $0x98] sm:$0xf]
        %s9756 = scalar_lea.vmem %s3, 384
        %v9757 = vld [vmem:[%s9756] sm:$0xff]
        %v9758 = vld [vmem:[%s9756 + $0x8] sm:$0xf]
        %v9759 = vld [vmem:[%s9756 + $0xc] sm:$0xff]
        %v9760 = vld [vmem:[%s9756 + $0x14] sm:$0xf]
        %v9761 = vld [vmem:[%s9756 + $0x18] sm:$0xff]
        %v9762 = vld [vmem:[%s9756 + $0x20] sm:$0xf]
        %v9763 = vld [vmem:[%s9756 + $0x24] sm:$0xff]
        %v9764 = vld [vmem:[%s9756 + $0x2c] sm:$0xf]
        %v9765 = vld [vmem:[%s9756 + $0x30] sm:$0xff]
        %v9766 = vld [vmem:[%s9756 + $0x38] sm:$0xf]
        %v9767 = vld [vmem:[%s9756 + $0x3c] sm:$0xff]
        %v9768 = vld [vmem:[%s9756 + $0x44] sm:$0xf]
        %v9769 = vld [vmem:[%s9756 + $0x48] sm:$0xff]
        %v9770 = vld [vmem:[%s9756 + $0x50] sm:$0xf]
        %v9771 = vld [vmem:[%s9756 + $0x54] sm:$0xff]
        %v9772 = vld [vmem:[%s9756 + $0x5c] sm:$0xf]
        %v9773 = vld [vmem:[%s9756 + $0x60] sm:$0xff]
        %v9774 = vld [vmem:[%s9756 + $0x68] sm:$0xf]
        %v9775 = vld [vmem:[%s9756 + $0x6c] sm:$0xff]
        %v9776 = vld [vmem:[%s9756 + $0x74] sm:$0xf]
        %v9777 = vld [vmem:[%s9756 + $0x78] sm:$0xff]
        %v9778 = vld [vmem:[%s9756 + $0x80] sm:$0xf]
        %v9779 = vld [vmem:[%s9756 + $0x84] sm:$0xff]
        %v9780 = vld [vmem:[%s9756 + $0x8c] sm:$0xf]
        %v9781 = vld [vmem:[%s9756 + $0x90] sm:$0xff]
        %v9782 = vld [vmem:[%s9756 + $0x98] sm:$0xf]
        %v9783 = vld [vmem:[%s9756 + $0x9c] sm:$0xff]
        %v9784 = vld [vmem:[%s9756 + $0xa4] sm:$0xf]
        %v9785 = vld [vmem:[%s9756 + $0xa8] sm:$0xff]
        %v9786 = vld [vmem:[%s9756 + $0xb0] sm:$0xf]
        %v9787 = vld [vmem:[%s9756 + $0xb4] sm:$0xff]
        %v9788 = vld [vmem:[%s9756 + $0xbc] sm:$0xf]
        %v9821 = vunpack.c.l.b16 %v9757
        %v9822 = vunpack.c.h.b16 %v9757
        %v9823 = vunpack.c.l.b16 %v9758
        %v9824 = vunpack.c.l.b16 %v9759
        %v9825 = vunpack.c.h.b16 %v9759
        %v9826 = vunpack.c.l.b16 %v9760
        %v9827 = vunpack.c.l.b16 %v9761
        %v9828 = vunpack.c.h.b16 %v9761
        %v9829 = vunpack.c.l.b16 %v9762
        %v9830 = vunpack.c.l.b16 %v9763
        %v9831 = vunpack.c.h.b16 %v9763
        %v9832 = vunpack.c.l.b16 %v9764
        %v9833 = vunpack.c.l.b16 %v9765
        %v9834 = vunpack.c.h.b16 %v9765
        %v9835 = vunpack.c.l.b16 %v9766
        %v9836 = vunpack.c.l.b16 %v9767
        %v9837 = vunpack.c.h.b16 %v9767
        %v9838 = vunpack.c.l.b16 %v9768
        %v9839 = vunpack.c.l.b16 %v9769
        %v9840 = vunpack.c.h.b16 %v9769
        %v9841 = vunpack.c.l.b16 %v9770
        %v9842 = vunpack.c.l.b16 %v9771
        %v9843 = vunpack.c.h.b16 %v9771
        %v9844 = vunpack.c.l.b16 %v9772
        %v9845 = vunpack.c.l.b16 %v9773
        %v9846 = vunpack.c.h.b16 %v9773
        %v9847 = vunpack.c.l.b16 %v9774
        %v9848 = vunpack.c.l.b16 %v9775
        %v9849 = vunpack.c.h.b16 %v9775
        %v9850 = vunpack.c.l.b16 %v9776
        %v9851 = vunpack.c.l.b16 %v9777
        %v9852 = vunpack.c.h.b16 %v9777
        %v9853 = vunpack.c.l.b16 %v9778
        %v9854 = vunpack.c.l.b16 %v9779
        %v9855 = vunpack.c.h.b16 %v9779
        %v9856 = vunpack.c.l.b16 %v9780
        %v9857 = vunpack.c.l.b16 %v9781
        %v9858 = vunpack.c.h.b16 %v9781
        %v9859 = vunpack.c.l.b16 %v9782
        %v9860 = vunpack.c.l.b16 %v9783
        %v9861 = vunpack.c.h.b16 %v9783
        %v9862 = vunpack.c.l.b16 %v9784
        %v9863 = vunpack.c.l.b16 %v9785
        %v9864 = vunpack.c.h.b16 %v9785
        %v9865 = vunpack.c.l.b16 %v9786
        %v9866 = vunpack.c.l.b16 %v9787
        %v9867 = vunpack.c.h.b16 %v9787
        %v9868 = vunpack.c.l.b16 %v9788
        %v9869 = vpack.c.b16 %v9824, %v9821
        %v9870 = vpack.c.b16 %v9825, %v9822
        %v9871 = vpack.c.b16 %v9826, %v9823
        %v9872 = vpack.c.b16 %v9830, %v9827
        %v9873 = vpack.c.b16 %v9831, %v9828
        %v9874 = vpack.c.b16 %v9832, %v9829
        %v9875 = vpack.c.b16 %v9836, %v9833
        %v9876 = vpack.c.b16 %v9837, %v9834
        %v9877 = vpack.c.b16 %v9838, %v9835
        %v9878 = vpack.c.b16 %v9842, %v9839
        %v9879 = vpack.c.b16 %v9843, %v9840
        %v9880 = vpack.c.b16 %v9844, %v9841
        %v9881 = vpack.c.b16 %v9848, %v9845
        %v9882 = vpack.c.b16 %v9849, %v9846
        %v9883 = vpack.c.b16 %v9850, %v9847
        %v9884 = vpack.c.b16 %v9854, %v9851
        %v9885 = vpack.c.b16 %v9855, %v9852
        %v9886 = vpack.c.b16 %v9856, %v9853
        %v9887 = vpack.c.b16 %v9860, %v9857
        %v9888 = vpack.c.b16 %v9861, %v9858
        %v9889 = vpack.c.b16 %v9862, %v9859
        %v9890 = vpack.c.b16 %v9866, %v9863
        %v9891 = vpack.c.b16 %v9867, %v9864
        %v9892 = vpack.c.b16 %v9868, %v9865
        %9917 = vmatprep.subr.bf16.mxu0 %v9870
        %9918 = vmatpush1.bf16.msra.mxu0 %v9869
        %9919 = vmatprep.subr.bf16.mxu0 %v9873
        %9920 = vmatpush1.bf16.msra.mxu0 %v9872
        %9921 = vmatprep.subr.bf16.mxu0 %v9876
        %9922 = vmatpush1.bf16.msra.mxu0 %v9875
        %9923 = vmatprep.subr.bf16.mxu0 %v9879
        %9924 = vmatpush1.bf16.msra.mxu0 %v9878
        %9925 = vmatprep.subr.bf16.mxu0 %v9882
        %9926 = vmatpush1.bf16.msra.mxu0 %v9881
        %9927 = vmatprep.subr.bf16.mxu0 %v9885
        %9928 = vmatpush1.bf16.msra.mxu0 %v9884
        %9929 = vmatprep.subr.bf16.mxu0 %v9888
        %9930 = vmatpush1.bf16.msra.mxu0 %v9887
        %9931 = vmatprep.subr.bf16.mxu0 %v9891
        %9932 = vmatpush1.bf16.msra.mxu0 %v9890
        %9933 = vmatprep.subr.bf16.mxu0 0
        %9934 = vmatpush1.bf16.msra.mxu0 0
        %9935 = vmatprep.subr.bf16.mxu0 0
        %9936 = vmatpush1.bf16.msra.mxu0 0
        %9937 = vmatprep.subr.bf16.mxu0 0
        %9938 = vmatpush1.bf16.msra.mxu0 0
        %9939 = vmatprep.subr.bf16.mxu0 0
        %9940 = vmatpush1.bf16.msra.mxu0 0
        %9941 = vmatprep.subr.bf16.mxu0 0
        %9942 = vmatpush1.bf16.msra.mxu0 0
        %9943 = vmatprep.subr.bf16.mxu0 0
        %9944 = vmatpush1.bf16.msra.mxu0 0
        %9945 = vmatprep.subr.bf16.mxu0 0
        %9946 = vmatpush1.bf16.msra.mxu0 0
        %9947 = vmatprep.subr.bf16.mxu0 0
        %9948 = vmatpush1.bf16.msra.mxu0 0
        %9949 = vmatprep.mubr.bf16.mxu0 0
        %9950 = vmatmul.mubr.bf16.gmra.mrb[0].mxu0 %v9738
        %v9951 = vpop.f32.mrb[0].mxu0
        %v9952 = vpop.f32.mrb[0].mxu0
        %v9953 = vpop.f32.mrb[0].mxu0
        %v9954 = vadd.f32 0.0, %v9953
        %v9955 = vpop.f32.mrb[0].mxu0
        %9956 = vmatprep.mubr.bf16.mxu0 0
        %9957 = vmatmul.mubr.bf16.gmra.mrb[0].mxu0 %v9739
        %v9958 = vpop.f32.mrb[0].mxu0
        %v9959 = vadd.f32 0.0, %v9958
        %v9960 = vpop.f32.mrb[0].mxu0
        %v9961 = vadd.f32 0.0, %v9960
        %v9962 = vpop.f32.mrb[0].mxu0
        %v9963 = vadd.f32 0.0, %v9962
        %v9964 = vpop.f32.mrb[0].mxu0
        %v9965 = vadd.f32 0.0, %v9964
        %9966 = vmatprep.mubr.bf16.mxu0 0
        %9967 = vmatmul.mubr.bf16.gmra.mrb[0].mxu0 %v9740
        %v9968 = vpop.f32.mrb[0].mxu0
        %v9969 = vadd.f32 0.0, %v9968
        %v9970 = vpop.f32.mrb[0].mxu0
        %v9971 = vadd.f32 0.0, %v9970
        %v9972 = vpop.f32.mrb[0].mxu0
        %v9973 = vadd.f32 0.0, %v9972
        %v9974 = vpop.f32.mrb[0].mxu0
        %v9975 = vadd.f32 0.0, %v9974
        %9976 = vmatprep.mubr.bf16.mxu0 0
        %9977 = vmatmul.mubr.bf16.gmra.mrb[0].mxu0 %v9741
        %v9978 = vpop.f32.mrb[0].mxu0
        %v9979 = vadd.f32 0.0, %v9978
        %v9980 = vpop.f32.mrb[0].mxu0
        %v9981 = vadd.f32 0.0, %v9980
        %v9982 = vpop.f32.mrb[0].mxu0
        %v9983 = vadd.f32 0.0, %v9982
        %v9984 = vpop.f32.mrb[0].mxu0
        %v9985 = vadd.f32 0.0, %v9984
        %9986 = vmatprep.mubr.bf16.mxu0 0
        %9987 = vmatmul.mubr.bf16.gmra.mrb[0].mxu0 %v9742
        %v9988 = vpop.f32.mrb[0].mxu0
        %v9989 = vadd.f32 0.0, %v9988
        %v9990 = vpop.f32.mrb[0].mxu0
        %v9991 = vadd.f32 0.0, %v9990
        %v9992 = vpop.f32.mrb[0].mxu0
        %v9993 = vadd.f32 0.0, %v9992
        %v9994 = vpop.f32.mrb[0].mxu0
        %v9995 = vadd.f32 0.0, %v9994
        %9996 = vmatprep.mubr.bf16.mxu0 0
        %9997 = vmatmul.mubr.bf16.gmra.mrb[0].mxu0 %v9743
        %v9998 = vpop.f32.mrb[0].mxu0
        %v9999 = vadd.f32 0.0, %v9998
        %v10000 = vpop.f32.mrb[0].mxu0
        %v10001 = vadd.f32 0.0, %v10000
        %v10002 = vpop.f32.mrb[0].mxu0
        %v10003 = vadd.f32 0.0, %v10002
        %v10004 = vpop.f32.mrb[0].mxu0
        %v10005 = vadd.f32 0.0, %v10004
        %10006 = vmatprep.mubr.bf16.mxu0 0
        %10007 = vmatmul.mubr.bf16.gmra.mrb[0].mxu0 %v9744
        %v10008 = vpop.f32.mrb[0].mxu0
        %v10009 = vadd.f32 0.0, %v10008
        %v10010 = vpop.f32.mrb[0].mxu0
        %v10011 = vadd.f32 0.0, %v10010
        %v10012 = vpop.f32.mrb[0].mxu0
        %v10013 = vadd.f32 0.0, %v10012
        %v10014 = vpop.f32.mrb[0].mxu0
        %v10015 = vadd.f32 0.0, %v10014
        %10016 = vmatprep.mubr.bf16.mxu0 0
        %10017 = vmatmul.mubr.bf16.gmra.mrb[0].mxu0 %v9745
        %v10018 = vpop.f32.mrb[0].mxu0
        %v10019 = vadd.f32 0.0, %v10018
        %v10020 = vpop.f32.mrb[0].mxu0
        %v10021 = vadd.f32 0.0, %v10020
        %v10022 = vpop.f32.mrb[0].mxu0
        %v10023 = vadd.f32 0.0, %v10022
        %v10024 = vpop.f32.mrb[0].mxu0
        %v10025 = vadd.f32 0.0, %v10024
        %10026 = vmatprep.mubr.bf16.mxu0 0
        %10027 = vmatmul.mubr.bf16.gmra.mrb[0].mxu0 %v9746
        %v10028 = vpop.f32.mrb[0].mxu0
        %v10029 = vadd.f32 0.0, %v10028
        %v10030 = vpop.f32.mrb[0].mxu0
        %v10031 = vadd.f32 0.0, %v10030
        %v10032 = vpop.f32.mrb[0].mxu0
        %v10033 = vadd.f32 0.0, %v10032
        %v10034 = vpop.f32.mrb[0].mxu0
        %v10035 = vadd.f32 0.0, %v10034
        %10036 = vmatprep.mubr.bf16.mxu0 0
        %10037 = vmatmul.mubr.bf16.gmra.mrb[0].mxu0 %v9747
        %v10038 = vpop.f32.mrb[0].mxu0
        %v10039 = vadd.f32 0.0, %v10038
        %v10040 = vpop.f32.mrb[0].mxu0
        %v10041 = vadd.f32 0.0, %v10040
        %v10042 = vpop.f32.mrb[0].mxu0
        %v10043 = vadd.f32 0.0, %v10042
        %v10044 = vpop.f32.mrb[0].mxu0
        %v10045 = vadd.f32 0.0, %v10044
        %10046 = vmatprep.mubr.bf16.mxu0 0
        %10047 = vmatmul.mubr.bf16.gmra.mrb[0].mxu0 %v9748
        %v10048 = vpop.f32.mrb[0].mxu0
        %v10049 = vadd.f32 0.0, %v10048
        %v10050 = vpop.f32.mrb[0].mxu0
        %v10051 = vadd.f32 0.0, %v10050
        %v10052 = vpop.f32.mrb[0].mxu0
        %v10053 = vadd.f32 0.0, %v10052
        %v10054 = vpop.f32.mrb[0].mxu0
        %v10055 = vadd.f32 0.0, %v10054
        %10056 = vmatprep.mubr.bf16.mxu0 0
        %10057 = vmatmul.mubr.bf16.gmra.mrb[0].mxu0 %v9749
        %v10058 = vpop.f32.mrb[0].mxu0
        %v10059 = vadd.f32 0.0, %v10058
        %v10060 = vpop.f32.mrb[0].mxu0
        %v10061 = vadd.f32 0.0, %v10060
        %v10062 = vpop.f32.mrb[0].mxu0
        %v10063 = vadd.f32 0.0, %v10062
        %v10064 = vpop.f32.mrb[0].mxu0
        %v10065 = vadd.f32 0.0, %v10064
        %10066 = vmatprep.mubr.bf16.mxu0 0
        %10067 = vmatmul.mubr.bf16.gmra.mrb[0].mxu0 %v9750
        %v10068 = vpop.f32.mrb[0].mxu0
        %v10069 = vadd.f32 0.0, %v10068
        %v10070 = vpop.f32.mrb[0].mxu0
        %v10071 = vadd.f32 0.0, %v10070
        %v10072 = vpop.f32.mrb[0].mxu0
        %v10073 = vadd.f32 0.0, %v10072
        %v10074 = vpop.f32.mrb[0].mxu0
        %v10075 = vadd.f32 0.0, %v10074
        %10076 = vmatprep.mubr.bf16.mxu0 0
        %10077 = vmatmul.mubr.bf16.gmra.mrb[0].mxu0 %v9751
        %v10078 = vpop.f32.mrb[0].mxu0
        %v10079 = vadd.f32 0.0, %v10078
        %v10080 = vpop.f32.mrb[0].mxu0
        %v10081 = vadd.f32 0.0, %v10080
        %v10082 = vpop.f32.mrb[0].mxu0
        %v10083 = vadd.f32 0.0, %v10082
        %v10084 = vpop.f32.mrb[0].mxu0
        %v10085 = vadd.f32 0.0, %v10084
        %10086 = vmatprep.mubr.bf16.mxu0 0
        %10087 = vmatmul.mubr.bf16.gmra.mrb[0].mxu0 %v9752
        %v10088 = vpop.f32.mrb[0].mxu0
        %v10089 = vadd.f32 0.0, %v10088
        %v10090 = vpop.f32.mrb[0].mxu0
        %v10091 = vadd.f32 0.0, %v10090
        %v10092 = vpop.f32.mrb[0].mxu0
        %v10093 = vadd.f32 0.0, %v10092
        %v10094 = vpop.f32.mrb[0].mxu0
        %v10095 = vadd.f32 0.0, %v10094
        %10096 = vmatprep.mubr.bf16.mxu0 0
        %10097 = vmatmul.mubr.bf16.gmra.mrb[0].mxu0 %v9753
        %v10098 = vpop.f32.mrb[0].mxu0
        %v10099 = vadd.f32 0.0, %v10098
        %v10100 = vpop.f32.mrb[0].mxu0
        %v10101 = vadd.f32 0.0, %v10100
        %v10102 = vpop.f32.mrb[0].mxu0
        %v10103 = vadd.f32 0.0, %v10102
        %v10104 = vpop.f32.mrb[0].mxu0
        %v10105 = vadd.f32 0.0, %v10104
        %10106 = vmatprep.mubr.bf16.mxu0 0
        %10107 = vmatmul.mubr.bf16.gmra.mrb[0].mxu0 %v9754
        %v10108 = vpop.f32.mrb[0].mxu0
        %v10109 = vadd.f32 0.0, %v10108
        %v10110 = vpop.f32.mrb[0].mxu0
        %v10111 = vadd.f32 0.0, %v10110
        %v10112 = vpop.f32.mrb[0].mxu0
        %v10113 = vadd.f32 0.0, %v10112
        %v10114 = vpop.f32.mrb[0].mxu0
        %v10115 = vadd.f32 0.0, %v10114
        %10116 = vmatprep.mubr.bf16.mxu0 0
        %10117 = vmatmul.mubr.bf16.gmra.mrb[0].mxu0 %v9755
        %v10118 = vpop.f32.mrb[0].mxu0
        %v10119 = vpop.f32.mrb[0].mxu0
        %v10120 = vpop.f32.mrb[0].mxu0
        %v10121 = vpop.f32.mrb[0].mxu0
        %10122 = vdwg.mxu0
        %10123 = vmatprep.subr.bf16.mxu0 0
        %10124 = vmatpush1.bf16.msra.mxu0 %v9871
        %10125 = vmatprep.subr.bf16.mxu0 0
        %10126 = vmatpush1.bf16.msra.mxu0 %v9874
        %10127 = vmatprep.subr.bf16.mxu0 0
        %10128 = vmatpush1.bf16.msra.mxu0 %v9877
        %10129 = vmatprep.subr.bf16.mxu0 0
        %10130 = vmatpush1.bf16.msra.mxu0 %v9880
        %10131 = vmatprep.subr.bf16.mxu0 0
        %10132 = vmatpush1.bf16.msra.mxu0 %v9883
        %10133 = vmatprep.subr.bf16.mxu0 0
        %10134 = vmatpush1.bf16.msra.mxu0 %v9886
        %10135 = vmatprep.subr.bf16.mxu0 0
        %10136 = vmatpush1.bf16.msra.mxu0 %v9889
        %10137 = vmatprep.subr.bf16.mxu0 0
        %10138 = vmatpush1.bf16.msra.mxu0 %v9892
        %10139 = vmatprep.subr.bf16.mxu0 0
        %10140 = vmatpush1.bf16.msra.mxu0 0
        %10141 = vmatprep.subr.bf16.mxu0 0
        %10142 = vmatpush1.bf16.msra.mxu0 0
        %10143 = vmatprep.subr.bf16.mxu0 0
        %10144 = vmatpush1.bf16.msra.mxu0 0
        %10145 = vmatprep.subr.bf16.mxu0 0
        %10146 = vmatpush1.bf16.msra.mxu0 0
        %10147 = vmatprep.subr.bf16.mxu0 0
        %10148 = vmatpush1.bf16.msra.mxu0 0
        %10149 = vmatprep.subr.bf16.mxu0 0
        %10150 = vmatpush1.bf16.msra.mxu0 0
        %10151 = vmatprep.subr.bf16.mxu0 0
        %10152 = vmatpush1.bf16.msra.mxu0 0
        %10153 = vmatprep.subr.bf16.mxu0 0
        %10154 = vmatpush1.bf16.msra.mxu0 0
        %10155 = vmatprep.mubr.bf16.mxu0 0
        %10156 = vmatmul.mubr.bf16.gmra.mrb[0].mxu0 %v9738
        %v10157 = vpop.f32.mrb[0].mxu0
        %v10158 = vpop.f32.mrb[0].mxu0
        %v10159 = vpop.f32.mrb[0].mxu0
        %v10160 = vpop.f32.mrb[0].mxu0
        %10161 = vmatprep.mubr.bf16.mxu0 0
        %10162 = vmatmul.mubr.bf16.gmra.mrb[0].mxu0 %v9739
        %v10163 = vpop.f32.mrb[0].mxu0
        %v10164 = vadd.f32 0.0, %v10163
        %v10165 = vpop.f32.mrb[0].mxu0
        %v10166 = vpop.f32.mrb[0].mxu0
        %v10167 = vadd.f32 0.0, %v10166
        %v10168 = vpop.f32.mrb[0].mxu0
        %10169 = vmatprep.mubr.bf16.mxu0 0
        %10170 = vmatmul.mubr.bf16.gmra.mrb[0].mxu0 %v9740
        %v10171 = vpop.f32.mrb[0].mxu0
        %v10172 = vadd.f32 0.0, %v10171
        %v10173 = vpop.f32.mrb[0].mxu0
        %v10174 = vpop.f32.mrb[0].mxu0
        %v10175 = vadd.f32 0.0, %v10174
        %v10176 = vpop.f32.mrb[0].mxu0
        %10177 = vmatprep.mubr.bf16.mxu0 0
        %10178 = vmatmul.mubr.bf16.gmra.mrb[0].mxu0 %v9741
        %v10179 = vpop.f32.mrb[0].mxu0
        %v10180 = vadd.f32 0.0, %v10179
        %v10181 = vpop.f32.mrb[0].mxu0
        %v10182 = vpop.f32.mrb[0].mxu0
        %v10183 = vadd.f32 0.0, %v10182
        %v10184 = vpop.f32.mrb[0].mxu0
        %10185 = vmatprep.mubr.bf16.mxu0 0
        %10186 = vmatmul.mubr.bf16.gmra.mrb[0].mxu0 %v9742
        %v10187 = vpop.f32.mrb[0].mxu0
        %v10188 = vadd.f32 0.0, %v10187
        %v10189 = vpop.f32.mrb[0].mxu0
        %v10190 = vpop.f32.mrb[0].mxu0
        %v10191 = vadd.f32 0.0, %v10190
        %v10192 = vpop.f32.mrb[0].mxu0
        %10193 = vmatprep.mubr.bf16.mxu0 0
        %10194 = vmatmul.mubr.bf16.gmra.mrb[0].mxu0 %v9743
        %v10195 = vpop.f32.mrb[0].mxu0
        %v10196 = vadd.f32 0.0, %v10195
        %v10197 = vpop.f32.mrb[0].mxu0
        %v10198 = vpop.f32.mrb[0].mxu0
        %v10199 = vadd.f32 0.0, %v10198
        %v10200 = vpop.f32.mrb[0].mxu0
        %10201 = vmatprep.mubr.bf16.mxu0 0
        %10202 = vmatmul.mubr.bf16.gmra.mrb[0].mxu0 %v9744
        %v10203 = vpop.f32.mrb[0].mxu0
        %v10204 = vadd.f32 0.0, %v10203
        %v10205 = vpop.f32.mrb[0].mxu0
        %v10206 = vpop.f32.mrb[0].mxu0
        %v10207 = vadd.f32 0.0, %v10206
        %v10208 = vpop.f32.mrb[0].mxu0
        %10209 = vmatprep.mubr.bf16.mxu0 0
        %10210 = vmatmul.mubr.bf16.gmra.mrb[0].mxu0 %v9745
        %v10211 = vpop.f32.mrb[0].mxu0
        %v10212 = vadd.f32 0.0, %v10211
        %v10213 = vpop.f32.mrb[0].mxu0
        %v10214 = vpop.f32.mrb[0].mxu0
        %v10215 = vadd.f32 0.0, %v10214
        %v10216 = vpop.f32.mrb[0].mxu0
        %10217 = vmatprep.mubr.bf16.mxu0 0
        %10218 = vmatmul.mubr.bf16.gmra.mrb[0].mxu0 %v9746
        %v10219 = vpop.f32.mrb[0].mxu0
        %v10220 = vadd.f32 0.0, %v10219
        %v10221 = vpop.f32.mrb[0].mxu0
        %v10222 = vpop.f32.mrb[0].mxu0
        %v10223 = vadd.f32 0.0, %v10222
        %v10224 = vpop.f32.mrb[0].mxu0
        %10225 = vmatprep.mubr.bf16.mxu0 0
        %10226 = vmatmul.mubr.bf16.gmra.mrb[0].mxu0 %v9747
        %v10227 = vpop.f32.mrb[0].mxu0
        %v10228 = vadd.f32 0.0, %v10227
        %v10229 = vpop.f32.mrb[0].mxu0
        %v10230 = vpop.f32.mrb[0].mxu0
        %v10231 = vadd.f32 0.0, %v10230
        %v10232 = vpop.f32.mrb[0].mxu0
        %10233 = vmatprep.mubr.bf16.mxu0 0
        %10234 = vmatmul.mubr.bf16.gmra.mrb[0].mxu0 %v9748
        %v10235 = vpop.f32.mrb[0].mxu0
        %v10236 = vadd.f32 0.0, %v10235
        %v10237 = vpop.f32.mrb[0].mxu0
        %v10238 = vpop.f32.mrb[0].mxu0
        %v10239 = vadd.f32 0.0, %v10238
        %v10240 = vpop.f32.mrb[0].mxu0
        %10241 = vmatprep.mubr.bf16.mxu0 0
        %10242 = vmatmul.mubr.bf16.gmra.mrb[0].mxu0 %v9749
        %v10243 = vpop.f32.mrb[0].mxu0
        %v10244 = vadd.f32 0.0, %v10243
        %v10245 = vpop.f32.mrb[0].mxu0
        %v10246 = vpop.f32.mrb[0].mxu0
        %v10247 = vadd.f32 0.0, %v10246
        %v10248 = vpop.f32.mrb[0].mxu0
        %10249 = vmatprep.mubr.bf16.mxu0 0
        %10250 = vmatmul.mubr.bf16.gmra.mrb[0].mxu0 %v9750
        %v10251 = vpop.f32.mrb[0].mxu0
        %v10252 = vadd.f32 0.0, %v10251
        %v10253 = vpop.f32.mrb[0].mxu0
        %v10254 = vpop.f32.mrb[0].mxu0
        %v10255 = vadd.f32 0.0, %v10254
        %v10256 = vpop.f32.mrb[0].mxu0
        %10257 = vmatprep.mubr.bf16.mxu0 0
        %10258 = vmatmul.mubr.bf16.gmra.mrb[0].mxu0 %v9751
        %v10259 = vpop.f32.mrb[0].mxu0
        %v10260 = vadd.f32 0.0, %v10259
        %v10261 = vpop.f32.mrb[0].mxu0
        %v10262 = vpop.f32.mrb[0].mxu0
        %v10263 = vadd.f32 0.0, %v10262
        %v10264 = vpop.f32.mrb[0].mxu0
        %10265 = vmatprep.mubr.bf16.mxu0 0
        %10266 = vmatmul.mubr.bf16.gmra.mrb[0].mxu0 %v9752
        %v10267 = vpop.f32.mrb[0].mxu0
        %v10268 = vadd.f32 0.0, %v10267
        %v10269 = vpop.f32.mrb[0].mxu0
        %v10270 = vpop.f32.mrb[0].mxu0
        %v10271 = vadd.f32 0.0, %v10270
        %v10272 = vpop.f32.mrb[0].mxu0
        %10273 = vmatprep.mubr.bf16.mxu0 0
        %10274 = vmatmul.mubr.bf16.gmra.mrb[0].mxu0 %v9753
        %v10275 = vpop.f32.mrb[0].mxu0
        %v10276 = vadd.f32 0.0, %v10275
        %v10277 = vpop.f32.mrb[0].mxu0
        %v10278 = vpop.f32.mrb[0].mxu0
        %v10279 = vadd.f32 0.0, %v10278
        %v10280 = vpop.f32.mrb[0].mxu0
        %10281 = vmatprep.mubr.bf16.mxu0 0
        %10282 = vmatmul.mubr.bf16.gmra.mrb[0].mxu0 %v9754
        %v10283 = vpop.f32.mrb[0].mxu0
        %v10284 = vadd.f32 0.0, %v10283
        %v10285 = vpop.f32.mrb[0].mxu0
        %v10286 = vpop.f32.mrb[0].mxu0
        %v10287 = vadd.f32 0.0, %v10286
        %v10288 = vpop.f32.mrb[0].mxu0
        %10289 = vmatprep.mubr.bf16.mxu0 0
        %10290 = vmatmul.mubr.bf16.gmra.mrb[0].mxu0 %v9755
        %v10291 = vpop.f32.mrb[0].mxu0
        %v10292 = vadd.f32 0.0, %v10291
        %v10293 = vpop.f32.mrb[0].mxu0
        %v10294 = vpop.f32.mrb[0].mxu0
        %v10295 = vpop.f32.mrb[0].mxu0
        %10296 = vdwg.mxu0
        %v10297 = vadd.f32 %v9395, %v9954
        %v10298 = vadd.f32 %v9400, %v9959
        %v10299 = vadd.f32 %v9402, %v9961
        %v10300 = vadd.f32 %v9605, %v10164
        %v10301 = vadd.f32 %v9404, %v9963
        %v10302 = vadd.f32 %v9406, %v9965
        %v10303 = vadd.f32 %v9608, %v10167
        %v10304 = vadd.f32 %v9410, %v9969
        %v10305 = vadd.f32 %v9412, %v9971
        %v10306 = vadd.f32 %v9613, %v10172
        %v10307 = vadd.f32 %v9414, %v9973
        %v10308 = vadd.f32 %v9416, %v9975
        %v10309 = vadd.f32 %v9616, %v10175
        %v10310 = vadd.f32 %v9420, %v9979
        %v10311 = vadd.f32 %v9422, %v9981
        %v10312 = vadd.f32 %v9621, %v10180
        %v10313 = vadd.f32 %v9424, %v9983
        %v10314 = vadd.f32 %v9426, %v9985
        %v10315 = vadd.f32 %v9624, %v10183
        %v10316 = vadd.f32 %v9430, %v9989
        %v10317 = vadd.f32 %v9432, %v9991
        %v10318 = vadd.f32 %v9629, %v10188
        %v10319 = vadd.f32 %v9434, %v9993
        %v10320 = vadd.f32 %v9436, %v9995
        %v10321 = vadd.f32 %v9632, %v10191
        %v10322 = vadd.f32 %v9440, %v9999
        %v10323 = vadd.f32 %v9442, %v10001
        %v10324 = vadd.f32 %v9637, %v10196
        %v10325 = vadd.f32 %v9444, %v10003
        %v10326 = vadd.f32 %v9446, %v10005
        %v10327 = vadd.f32 %v9640, %v10199
        %v10328 = vadd.f32 %v9450, %v10009
        %v10329 = vadd.f32 %v9452, %v10011
        %v10330 = vadd.f32 %v9645, %v10204
        %v10331 = vadd.f32 %v9454, %v10013
        %v10332 = vadd.f32 %v9456, %v10015
        %v10333 = vadd.f32 %v9648, %v10207
        %v10334 = vadd.f32 %v9460, %v10019
        %v10335 = vadd.f32 %v9462, %v10021
        %v10336 = vadd.f32 %v9653, %v10212
        %v10337 = vadd.f32 %v9464, %v10023
        %v10338 = vadd.f32 %v9466, %v10025
        %v10339 = vadd.f32 %v9656, %v10215
        %v10340 = vadd.f32 %v9470, %v10029
        %v10341 = vadd.f32 %v9472, %v10031
        %v10342 = vadd.f32 %v9661, %v10220
        %v10343 = vadd.f32 %v9474, %v10033
        %v10344 = vadd.f32 %v9476, %v10035
        %v10345 = vadd.f32 %v9664, %v10223
        %v10346 = vadd.f32 %v9480, %v10039
        %v10347 = vadd.f32 %v9482, %v10041
        %v10348 = vadd.f32 %v9669, %v10228
        %v10349 = vadd.f32 %v9484, %v10043
        %v10350 = vadd.f32 %v9486, %v10045
        %v10351 = vadd.f32 %v9672, %v10231
        %v10352 = vadd.f32 %v9490, %v10049
        %v10353 = vadd.f32 %v9492, %v10051
        %v10354 = vadd.f32 %v9677, %v10236
        %v10355 = vadd.f32 %v9494, %v10053
        %v10356 = vadd.f32 %v9496, %v10055
        %v10357 = vadd.f32 %v9680, %v10239
        %v10358 = vadd.f32 %v9500, %v10059
        %v10359 = vadd.f32 %v9502, %v10061
        %v10360 = vadd.f32 %v9685, %v10244
        %v10361 = vadd.f32 %v9504, %v10063
        %v10362 = vadd.f32 %v9506, %v10065
        %v10363 = vadd.f32 %v9688, %v10247
        %v10364 = vadd.f32 %v9510, %v10069
        %v10365 = vadd.f32 %v9512, %v10071
        %v10366 = vadd.f32 %v9693, %v10252
        %v10367 = vadd.f32 %v9514, %v10073
        %v10368 = vadd.f32 %v9516, %v10075
        %v10369 = vadd.f32 %v9696, %v10255
        %v10370 = vadd.f32 %v9520, %v10079
        %v10371 = vadd.f32 %v9522, %v10081
        %v10372 = vadd.f32 %v9701, %v10260
        %v10373 = vadd.f32 %v9524, %v10083
        %v10374 = vadd.f32 %v9526, %v10085
        %v10375 = vadd.f32 %v9704, %v10263
        %v10376 = vadd.f32 %v9530, %v10089
        %v10377 = vadd.f32 %v9532, %v10091
        %v10378 = vadd.f32 %v9709, %v10268
        %v10379 = vadd.f32 %v9534, %v10093
        %v10380 = vadd.f32 %v9536, %v10095
        %v10381 = vadd.f32 %v9712, %v10271
        %v10382 = vadd.f32 %v9540, %v10099
        %v10383 = vadd.f32 %v9542, %v10101
        %v10384 = vadd.f32 %v9717, %v10276
        %v10385 = vadd.f32 %v9544, %v10103
        %v10386 = vadd.f32 %v9546, %v10105
        %v10387 = vadd.f32 %v9720, %v10279
        %v10388 = vadd.f32 %v9550, %v10109
        %v10389 = vadd.f32 %v9552, %v10111
        %v10390 = vadd.f32 %v9725, %v10284
        %v10391 = vadd.f32 %v9554, %v10113
        %v10392 = vadd.f32 %v9556, %v10115
        %v10393 = vadd.f32 %v9728, %v10287
        %v10394 = vadd.f32 %v9733, %v10292
        %v10395 = vmul.f32 %v10297, %v4678
        %v10396 = vmul.f32 %v10298, %v4680
        %v10397 = vmul.f32 %v10301, %v4682
        %v10398 = vmul.f32 %v10304, %v4684
        %v10399 = vmul.f32 %v10307, %v4686
        %v10400 = vmul.f32 %v10310, %v4688
        %v10401 = vmul.f32 %v10313, %v4690
        %v10402 = vmul.f32 %v10316, %v4692
        %v10403 = vmul.f32 %v10319, %v4694
        %v10404 = vmul.f32 %v10322, %v4696
        %v10405 = vmul.f32 %v10325, %v4698
        %v10406 = vmul.f32 %v10328, %v4700
        %v10407 = vmul.f32 %v10331, %v4702
        %v10408 = vmul.f32 %v10334, %v4704
        %v10409 = vmul.f32 %v10337, %v4706
        %v10410 = vmul.f32 %v10340, %v4708
        %v10411 = vmul.f32 %v10343, %v4710
        %v10412 = vmul.f32 %v10346, %v4712
        %v10413 = vmul.f32 %v10349, %v4714
        %v10414 = vmul.f32 %v10352, %v4716
        %v10415 = vmul.f32 %v10355, %v4718
        %v10416 = vmul.f32 %v10358, %v4720
        %v10417 = vmul.f32 %v10361, %v4722
        %v10418 = vmul.f32 %v10364, %v4724
        %v10419 = vmul.f32 %v10367, %v4726
        %v10420 = vmul.f32 %v10370, %v4728
        %v10421 = vmul.f32 %v10373, %v4730
        %v10422 = vmul.f32 %v10376, %v4732
        %v10423 = vmul.f32 %v10379, %v4734
        %v10424 = vmul.f32 %v10382, %v4736
        %v10425 = vmul.f32 %v10385, %v4738
        %v10426 = vmul.f32 %v10388, %v4740
        %v10427 = vmul.f32 %v10391, %v4739
        %v10461 = vrot.slane %v10395, 7
        %v10462 = vrot.slane %v10396, 7
        %v10463 = vsel %vm4906, %v10461, %v10462
        %v10464 = vrot.slane %v10397, 7
        %v10465 = vsel %vm4906, %v10462, %v10464
        %v10466 = vrot.slane %v10398, 7
        %v10467 = vsel %vm4906, %v10464, %v10466
        %v10468 = vrot.slane %v10399, 7
        %v10469 = vsel %vm4906, %v10466, %v10468
        %v10470 = vrot.slane %v10400, 7
        %v10471 = vsel %vm4906, %v10468, %v10470
        %v10472 = vrot.slane %v10401, 7
        %v10473 = vsel %vm4906, %v10470, %v10472
        %v10474 = vrot.slane %v10402, 7
        %v10475 = vsel %vm4906, %v10472, %v10474
        %v10476 = vrot.slane %v10403, 7
        %v10477 = vsel %vm4906, %v10474, %v10476
        %v10478 = vrot.slane %v10404, 7
        %v10479 = vsel %vm4906, %v10476, %v10478
        %v10480 = vrot.slane %v10405, 7
        %v10481 = vsel %vm4906, %v10478, %v10480
        %v10482 = vrot.slane %v10406, 7
        %v10483 = vsel %vm4906, %v10480, %v10482
        %v10484 = vrot.slane %v10407, 7
        %v10485 = vsel %vm4906, %v10482, %v10484
        %v10486 = vrot.slane %v10408, 7
        %v10487 = vsel %vm4906, %v10484, %v10486
        %v10488 = vrot.slane %v10409, 7
        %v10489 = vsel %vm4906, %v10486, %v10488
        %v10490 = vrot.slane %v10410, 7
        %v10491 = vsel %vm4906, %v10488, %v10490
        %v10492 = vrot.slane %v10411, 7
        %v10493 = vsel %vm4906, %v10490, %v10492
        %v10494 = vrot.slane %v10412, 7
        %v10495 = vsel %vm4906, %v10492, %v10494
        %v10496 = vrot.slane %v10413, 7
        %v10497 = vsel %vm4906, %v10494, %v10496
        %v10498 = vrot.slane %v10414, 7
        %v10499 = vsel %vm4906, %v10496, %v10498
        %v10500 = vrot.slane %v10415, 7
        %v10501 = vsel %vm4906, %v10498, %v10500
        %v10502 = vrot.slane %v10416, 7
        %v10503 = vsel %vm4906, %v10500, %v10502
        %v10504 = vrot.slane %v10417, 7
        %v10505 = vsel %vm4906, %v10502, %v10504
        %v10506 = vrot.slane %v10418, 7
        %v10507 = vsel %vm4906, %v10504, %v10506
        %v10508 = vrot.slane %v10419, 7
        %v10509 = vsel %vm4906, %v10506, %v10508
        %v10510 = vrot.slane %v10420, 7
        %v10511 = vsel %vm4906, %v10508, %v10510
        %v10512 = vrot.slane %v10421, 7
        %v10513 = vsel %vm4906, %v10510, %v10512
        %v10514 = vrot.slane %v10422, 7
        %v10515 = vsel %vm4906, %v10512, %v10514
        %v10516 = vrot.slane %v10423, 7
        %v10517 = vsel %vm4906, %v10514, %v10516
        %v10518 = vrot.slane %v10424, 7
        %v10519 = vsel %vm4906, %v10516, %v10518
        %v10520 = vrot.slane %v10425, 7
        %v10521 = vsel %vm4906, %v10518, %v10520
        %v10522 = vrot.slane %v10426, 7
        %v10523 = vsel %vm4906, %v10520, %v10522
        %v10524 = vrot.slane %v10427, 7
        %v10525 = vsel %vm4906, %v10522, %v10524
        %v10558 = vadd.f32 %v10299, %v10463
        %v10559 = vadd.f32 %v10302, %v10465
        %v10560 = vadd.f32 %v10305, %v10467
        %v10561 = vadd.f32 %v10308, %v10469
        %v10562 = vadd.f32 %v10311, %v10471
        %v10563 = vadd.f32 %v10314, %v10473
        %v10564 = vadd.f32 %v10317, %v10475
        %v10565 = vadd.f32 %v10320, %v10477
        %v10566 = vadd.f32 %v10323, %v10479
        %v10567 = vadd.f32 %v10326, %v10481
        %v10568 = vadd.f32 %v10329, %v10483
        %v10569 = vadd.f32 %v10332, %v10485
        %v10570 = vadd.f32 %v10335, %v10487
        %v10571 = vadd.f32 %v10338, %v10489
        %v10572 = vadd.f32 %v10341, %v10491
        %v10573 = vadd.f32 %v10344, %v10493
        %v10574 = vadd.f32 %v10347, %v10495
        %v10575 = vadd.f32 %v10350, %v10497
        %v10576 = vadd.f32 %v10353, %v10499
        %v10577 = vadd.f32 %v10356, %v10501
        %v10578 = vadd.f32 %v10359, %v10503
        %v10579 = vadd.f32 %v10362, %v10505
        %v10580 = vadd.f32 %v10365, %v10507
        %v10581 = vadd.f32 %v10368, %v10509
        %v10582 = vadd.f32 %v10371, %v10511
        %v10583 = vadd.f32 %v10374, %v10513
        %v10584 = vadd.f32 %v10377, %v10515
        %v10585 = vadd.f32 %v10380, %v10517
        %v10586 = vadd.f32 %v10383, %v10519
        %v10587 = vadd.f32 %v10386, %v10521
        %v10588 = vadd.f32 %v10389, %v10523
        %v10589 = vadd.f32 %v10392, %v10525
        %v10590 = vmul.f32 %v10300, %v5293
        %v10591 = vmul.f32 %v10303, %v5295
        %v10592 = vmul.f32 %v10306, %v5297
        %v10593 = vmul.f32 %v10309, %v5299
        %v10594 = vmul.f32 %v10312, %v5301
        %v10595 = vmul.f32 %v10315, %v5303
        %v10596 = vmul.f32 %v10318, %v5305
        %v10597 = vmul.f32 %v10321, %v5307
        %v10598 = vmul.f32 %v10324, %v5309
        %v10599 = vmul.f32 %v10327, %v5311
        %v10600 = vmul.f32 %v10330, %v5313
        %v10601 = vmul.f32 %v10333, %v5315
        %v10602 = vmul.f32 %v10336, %v5317
        %v10603 = vmul.f32 %v10339, %v5319
        %v10604 = vmul.f32 %v10342, %v5321
        %v10605 = vmul.f32 %v10345, %v5323
        %v10606 = vmul.f32 %v10348, %v5325
        %v10607 = vmul.f32 %v10351, %v5327
        %v10608 = vmul.f32 %v10354, %v5329
        %v10609 = vmul.f32 %v10357, %v5331
        %v10610 = vmul.f32 %v10360, %v5333
        %v10611 = vmul.f32 %v10363, %v5335
        %v10612 = vmul.f32 %v10366, %v5337
        %v10613 = vmul.f32 %v10369, %v5339
        %v10614 = vmul.f32 %v10372, %v5341
        %v10615 = vmul.f32 %v10375, %v5343
        %v10616 = vmul.f32 %v10378, %v5345
        %v10617 = vmul.f32 %v10381, %v5347
        %v10618 = vmul.f32 %v10384, %v5349
        %v10619 = vmul.f32 %v10387, %v5351
        %v10620 = vmul.f32 %v10390, %v5353
        %v10621 = vmul.f32 %v10393, %v5355
        %v10622 = vmul.f32 %v10394, %v5354
        %v10656 = vrot.slane %v10590, 1
        %v10657 = vrot.slane %v10591, 1
        %v10658 = vsel %vm4677, %v10656, %v10657
        %v10659 = vrot.slane %v10592, 1
        %v10660 = vsel %vm4677, %v10657, %v10659
        %v10661 = vrot.slane %v10593, 1
        %v10662 = vsel %vm4677, %v10659, %v10661
        %v10663 = vrot.slane %v10594, 1
        %v10664 = vsel %vm4677, %v10661, %v10663
        %v10665 = vrot.slane %v10595, 1
        %v10666 = vsel %vm4677, %v10663, %v10665
        %v10667 = vrot.slane %v10596, 1
        %v10668 = vsel %vm4677, %v10665, %v10667
        %v10669 = vrot.slane %v10597, 1
        %v10670 = vsel %vm4677, %v10667, %v10669
        %v10671 = vrot.slane %v10598, 1
        %v10672 = vsel %vm4677, %v10669, %v10671
        %v10673 = vrot.slane %v10599, 1
        %v10674 = vsel %vm4677, %v10671, %v10673
        %v10675 = vrot.slane %v10600, 1
        %v10676 = vsel %vm4677, %v10673, %v10675
        %v10677 = vrot.slane %v10601, 1
        %v10678 = vsel %vm4677, %v10675, %v10677
        %v10679 = vrot.slane %v10602, 1
        %v10680 = vsel %vm4677, %v10677, %v10679
        %v10681 = vrot.slane %v10603, 1
        %v10682 = vsel %vm4677, %v10679, %v10681
        %v10683 = vrot.slane %v10604, 1
        %v10684 = vsel %vm4677, %v10681, %v10683
        %v10685 = vrot.slane %v10605, 1
        %v10686 = vsel %vm4677, %v10683, %v10685
        %v10687 = vrot.slane %v10606, 1
        %v10688 = vsel %vm4677, %v10685, %v10687
        %v10689 = vrot.slane %v10607, 1
        %v10690 = vsel %vm4677, %v10687, %v10689
        %v10691 = vrot.slane %v10608, 1
        %v10692 = vsel %vm4677, %v10689, %v10691
        %v10693 = vrot.slane %v10609, 1
        %v10694 = vsel %vm4677, %v10691, %v10693
        %v10695 = vrot.slane %v10610, 1
        %v10696 = vsel %vm4677, %v10693, %v10695
        %v10697 = vrot.slane %v10611, 1
        %v10698 = vsel %vm4677, %v10695, %v10697
        %v10699 = vrot.slane %v10612, 1
        %v10700 = vsel %vm4677, %v10697, %v10699
        %v10701 = vrot.slane %v10613, 1
        %v10702 = vsel %vm4677, %v10699, %v10701
        %v10703 = vrot.slane %v10614, 1
        %v10704 = vsel %vm4677, %v10701, %v10703
        %v10705 = vrot.slane %v10615, 1
        %v10706 = vsel %vm4677, %v10703, %v10705
        %v10707 = vrot.slane %v10616, 1
        %v10708 = vsel %vm4677, %v10705, %v10707
        %v10709 = vrot.slane %v10617, 1
        %v10710 = vsel %vm4677, %v10707, %v10709
        %v10711 = vrot.slane %v10618, 1
        %v10712 = vsel %vm4677, %v10709, %v10711
        %v10713 = vrot.slane %v10619, 1
        %v10714 = vsel %vm4677, %v10711, %v10713
        %v10715 = vrot.slane %v10620, 1
        %v10716 = vsel %vm4677, %v10713, %v10715
        %v10717 = vrot.slane %v10621, 1
        %v10718 = vsel %vm4677, %v10715, %v10717
        %v10719 = vrot.slane %v10622, 1
        %v10720 = vsel %vm4677, %v10717, %v10719
        %v10753 = vadd.f32 %v10558, %v10658
        %v10754 = vadd.f32 %v10559, %v10660
        %v10755 = vadd.f32 %v10560, %v10662
        %v10756 = vadd.f32 %v10561, %v10664
        %v10757 = vadd.f32 %v10562, %v10666
        %v10758 = vadd.f32 %v10563, %v10668
        %v10759 = vadd.f32 %v10564, %v10670
        %v10760 = vadd.f32 %v10565, %v10672
        %v10761 = vadd.f32 %v10566, %v10674
        %v10762 = vadd.f32 %v10567, %v10676
        %v10763 = vadd.f32 %v10568, %v10678
        %v10764 = vadd.f32 %v10569, %v10680
        %v10765 = vadd.f32 %v10570, %v10682
        %v10766 = vadd.f32 %v10571, %v10684
        %v10767 = vadd.f32 %v10572, %v10686
        %v10768 = vadd.f32 %v10573, %v10688
        %v10769 = vadd.f32 %v10574, %v10690
        %v10770 = vadd.f32 %v10575, %v10692
        %v10771 = vadd.f32 %v10576, %v10694
        %v10772 = vadd.f32 %v10577, %v10696
        %v10773 = vadd.f32 %v10578, %v10698
        %v10774 = vadd.f32 %v10579, %v10700
        %v10775 = vadd.f32 %v10580, %v10702
        %v10776 = vadd.f32 %v10581, %v10704
        %v10777 = vadd.f32 %v10582, %v10706
        %v10778 = vadd.f32 %v10583, %v10708
        %v10779 = vadd.f32 %v10584, %v10710
        %v10780 = vadd.f32 %v10585, %v10712
        %v10781 = vadd.f32 %v10586, %v10714
        %v10782 = vadd.f32 %v10587, %v10716
        %v10783 = vadd.f32 %v10588, %v10718
        %v10784 = vadd.f32 %v10589, %v10720
        %v10785 = vmax.f32 %v10753, 0.0
        %v10786 = vmax.f32 %v10754, 0.0
        %v10787 = vmax.f32 %v10755, 0.0
        %v10788 = vmax.f32 %v10756, 0.0
        %v10789 = vmax.f32 %v10757, 0.0
        %v10790 = vmax.f32 %v10758, 0.0
        %v10791 = vmax.f32 %v10759, 0.0
        %v10792 = vmax.f32 %v10760, 0.0
        %v10793 = vmax.f32 %v10761, 0.0
        %v10794 = vmax.f32 %v10762, 0.0
        %v10795 = vmax.f32 %v10763, 0.0
        %v10796 = vmax.f32 %v10764, 0.0
        %v10797 = vmax.f32 %v10765, 0.0
        %v10798 = vmax.f32 %v10766, 0.0
        %v10799 = vmax.f32 %v10767, 0.0
        %v10800 = vmax.f32 %v10768, 0.0
        %v10801 = vmax.f32 %v10769, 0.0
        %v10802 = vmax.f32 %v10770, 0.0
        %v10803 = vmax.f32 %v10771, 0.0
        %v10804 = vmax.f32 %v10772, 0.0
        %v10805 = vmax.f32 %v10773, 0.0
        %v10806 = vmax.f32 %v10774, 0.0
        %v10807 = vmax.f32 %v10775, 0.0
        %v10808 = vmax.f32 %v10776, 0.0
        %v10809 = vmax.f32 %v10777, 0.0
        %v10810 = vmax.f32 %v10778, 0.0
        %v10811 = vmax.f32 %v10779, 0.0
        %v10812 = vmax.f32 %v10780, 0.0
        %v10813 = vmax.f32 %v10781, 0.0
        %v10814 = vmax.f32 %v10782, 0.0
        %v10815 = vmax.f32 %v10783, 0.0
        %v10816 = vmax.f32 %v10784, 0.0
        %v10817 = vadd.f32 %v10785, %v10786
        %v10818 = vadd.f32 %v10817, %v10787
        %v10819 = vadd.f32 %v10818, %v10788
        %v10820 = vadd.f32 %v10819, %v10789
        %v10821 = vadd.f32 %v10820, %v10790
        %v10822 = vadd.f32 %v10821, %v10791
        %v10823 = vadd.f32 %v10822, %v10792
        %v10824 = vadd.f32 %v10823, %v10793
        %v10825 = vadd.f32 %v10824, %v10794
        %v10826 = vadd.f32 %v10825, %v10795
        %v10827 = vadd.f32 %v10826, %v10796
        %v10828 = vadd.f32 %v10827, %v10797
        %v10829 = vadd.f32 %v10828, %v10798
        %v10830 = vadd.f32 %v10829, %v10799
        %v10831 = vadd.f32 %v10830, %v10800
        %v10832 = vadd.f32 %v10831, %v10801
        %v10833 = vadd.f32 %v10832, %v10802
        %v10834 = vadd.f32 %v10833, %v10803
        %v10835 = vadd.f32 %v10834, %v10804
        %v10836 = vadd.f32 %v10835, %v10805
        %v10837 = vadd.f32 %v10836, %v10806
        %v10838 = vadd.f32 %v10837, %v10807
        %v10839 = vadd.f32 %v10838, %v10808
        %v10840 = vadd.f32 %v10839, %v10809
        %v10841 = vadd.f32 %v10840, %v10810
        %v10842 = vadd.f32 %v10841, %v10811
        %v10843 = vadd.f32 %v10842, %v10812
        %v10844 = vadd.f32 %v10843, %v10813
        %v10845 = vadd.f32 %v10844, %v10814
        %v10846 = vadd.f32 %v10845, %v10815
        %v10847 = vadd.f32 %v10846, %v10816
        %v10848 = vrot.slane %v10847, 4
        %v10849 = vadd.f32 %v10847, %v10848
        %v10850 = vrot.slane %v10849, 2
        %v10851 = vadd.f32 %v10849, %v10850
        %v10852 = vrot.slane %v10851, 1
        %v10853 = vadd.f32 %v10851, %v10852
        %v10854 = vmul.f32 %v10853, 0.00390625
        %10855 = vst [vmem:[%s243] sm:$0x1] %v10854
        %s10856 = sand.u32 %s159, 1
        %s10857 = scalar_lea.sflag [#allocation5], %s10856
        %s10858 = sand.u32 %s159, 1
        %s10859 = scalar_lea.vmem [#allocation4], %s10858
        // Predicated region
        $region45: #{netd_forward1.1} parent=43 // pred_check
          %p10860 = pneg %p169
        $region46: #{netd_forward1.1} parent=43 // pred_check_branch
          %10862 = sbr.rel (%p10860) target = $region48
        $region47: #{netd_forward1.1} parent=43 // pred_region
          %s10864 = ssub.s32 16, 16
          %10865 = vsyncadd %s10857, %s10864
          %s10866 = smul.addr %s20, 16
          %s10867 = scalar_lea.hbm %s6, %s10866
          %s10869 = sshll.u32 %s10859, 4
          %s10870 = int_to_ptr.vmem [resolvable:$true] %s10869
          %10872 = dma.vmem_to_hbm [thread:$0]  %s10870, 16, %s10867, %s10857
        $region48: #{netd_forward1.1} parent=43 // pred_fallthru
          _
      $region44: #{netd_forward1.1} parent=5 // pred_fallthru
        _
      %p10873 = scmp.le.s32.totalorder 2, %s15
      // Predicated region
      $region49: #{netd_forward1.1} parent=5 // pred_check
        %p10874 = pneg %p10873
      $region50: #{netd_forward1.1} parent=5 // pred_check_branch
        %10876 = sbr.rel (%p10874) target = $region52
      $region51: #{netd_forward1.1} parent=5 // pred_region
        %s10877 = ssub.s32 %s15, 2
        // Predicated region
        $region53: #{netd_forward1.1} parent=51 // pred_check
          %p10878 = pneg %p175
        $region54: #{netd_forward1.1} parent=51 // pred_check_branch
          %10880 = sbr.rel (%p10878) target = $region56
        $region55: #{netd_forward1.1} parent=51 // pred_region
          %s10881 = sand.u32 %s160, 1
          %s10882 = scalar_lea.sflag [#allocation5], %s10881
          %s10883 = sand.u32 %s160, 1
          %s10884 = scalar_lea.vmem [#allocation4], %s10883
          %10885 = dma.done %s10882, 16
        $region56: #{netd_forward1.1} parent=51 // pred_fallthru
          _
      $region52: #{netd_forward1.1} parent=5 // pred_fallthru
        _
    $region6: #{netd_forward1.1} parent=1 // loop_footer
      %s19 = sadd.s32 1, %s15
    $region7: #{netd_forward1.1} parent=1 // loop_footer_branch
      %14 = sbr.rel target = $region3
    $region8: #{netd_forward1.1} parent=1 // loop_exit
      _
    %10886 = vsyncpa [#allocation5], 1
    %s10887 = scalar_lea.sflag [#allocation5], 1
    %10888 = vsyncpa %s10887, 1

</llo_original>
